<compile_context>
chip_gen: v7x
topology: tpu7x:2x2x1
jax: 0.10.0
libtpu: 0.0.40
codegen_flags: <defaults>
</compile_context>

<pallas_src>
import math
import numpy as np
import jax
import jax.numpy as jnp
from jax import lax
from jax.experimental import pallas as pl
from jax.experimental.pallas import tpu as pltpu

LANE = 128


def _round_up(x, m):
    return ((x + m - 1) // m) * m


def _vmem_budget_bytes():
    """Per-core VMEM budget (bytes), derived from the chip when possible."""
    cap = None
    try:
        info = pltpu.get_tpu_info()
        for attr in ("vmem_capacity_bytes", "vmem_size_bytes", "vmem_bytes"):
            if hasattr(info, attr):
                cap = int(getattr(info, attr))
                break
    except Exception:
        cap = None
    if not cap:
        cap = 64 * 1024 * 1024          # conservative default: v7x physical VMEM
    return int(cap * 0.75)


# ----------------------------- fused BasicBlock kernel -----------------------------

def _make_block_kernel(B, Ho, Wo, Cpi, Cpo, packed, identity):
    """Kernel processing B images per grid step.

    packed=True: stride-2 block; the input is space-to-depth packed, spatial is
    already (Ho, Wo) and channels are 4*Cpi (parity planes on the lane axis).
    """
    M = B * Ho * Wo

    def kernel(*refs):
        if identity:
            x_ref, s1, b1, s2, b2, w1, w2, o_ref, a_scr, h_scr = refs
            wsc = None
        else:
            x_ref, s1, b1, s2, b2, w1, w2, wsc, o_ref, a_scr, h_scr = refs

        _, AR, WPA, CA = a_scr.shape          # haloed bn1 activation scratch
        _, HR, WQ, _ = h_scr.shape            # haloed bn2 activation scratch

        # ---- zero only the thin halo border (interior is fully rewritten below) ----
        zrow_a = jnp.zeros((B, 1, WPA, CA), jnp.bfloat16)
        zcol_a = jnp.zeros((B, AR, 1, CA), jnp.bfloat16)
        a_scr[:, 0:1, :, :] = zrow_a                       # top halo row
        a_scr[:, :, 7:8, :] = zcol_a                       # left halo col
        if not packed:
            a_scr[:, Ho + 1:Ho + 2, :, :] = zrow_a         # bottom halo row
            a_scr[:, :, Wo + 8:Wo + 9, :] = zcol_a         # right halo col
        zrow_h = jnp.zeros((B, 1, WQ, Cpo), jnp.bfloat16)
        zcol_h = jnp.zeros((B, HR, 1, Cpo), jnp.bfloat16)
        h_scr[:, 0:1, :, :] = zrow_h
        h_scr[:, Ho + 1:Ho + 2, :, :] = zrow_h
        h_scr[:, :, 7:8, :] = zcol_h
        h_scr[:, :, Wo + 8:Wo + 9, :] = zcol_h

        # ---- bn1 + relu prologue (f32), stored once as bf16 into haloed scratch ----
        # interior starts at sublane offset 8 -> aligned, unmasked stores
        x = x_ref[...].astype(jnp.float32)                 # (B, Ho, Wo, Cx)
        a = jnp.maximum(x * s1[...] + b1[...], 0.0)
        a_scr[:, 1:Ho + 1, 8:8 + Wo, :] = a.astype(jnp.bfloat16)

        # ---- conv1: 3 deep-K MXU dots (K = 3*Cpi), f32 accumulation ----
        def conv1_window(kh, kw):
            if packed:
                # stride-2: tap (kh,kw) reads parity plane (p_h,p_w) with a
                # shift of {0,1}; plane q occupies lanes [q*Cpi, (q+1)*Cpi).
                p_h = 0 if kh == 1 else 1
                p_w = 0 if kw == 1 else 1
                q = 2 * p_h + p_w
                rs = 0 if kh == 0 else 1
                cs = 7 if kw == 0 else 8
                win = a_scr[:, rs:rs + Ho, cs:cs + Wo, q * Cpi:(q + 1) * Cpi]
            else:
                win = a_scr[:, kh:kh + Ho, 7 + kw:7 + kw + Wo, :]
            return win.reshape(M, Cpi)                     # bf16

        acc1 = None
        for kw in range(3):
            lhs = jnp.concatenate([conv1_window(kh, kw) for kh in range(3)],
                                  axis=-1)                 # (M, 3*Cpi) bf16
            d = jnp.dot(lhs, w1[kw], preferred_element_type=jnp.float32)
            acc1 = d if acc1 is None else acc1 + d

        # ---- bn2 + relu, stored once as bf16 into haloed scratch ----
        h = jnp.maximum(acc1.reshape(B, Ho, Wo, Cpo) * s2[...] + b2[...], 0.0)
        h_scr[:, 1:Ho + 1, 8:8 + Wo, :] = h.astype(jnp.bfloat16)

        # ---- conv2 (3x3, stride 1): 3 deep-K MXU dots ----
        acc2 = None
        for kw in range(3):
            lhs = jnp.concatenate(
                [h_scr[:, kh:kh + Ho, 7 + kw:7 + kw + Wo, :].reshape(M, Cpo)
                 for kh in range(3)], axis=-1)             # (M, 3*Cpo) bf16
            d = jnp.dot(lhs, w2[kw], preferred_element_type=jnp.float32)
            acc2 = d if acc2 is None else acc2 + d

        # ---- shortcut + residual add (fused epilogue) ----
        if identity:
            sc = x.reshape(M, Cpo)                         # Cpi == Cpo, stride 1
        else:
            if packed:
                # strided 1x1 shortcut reads a[2i, 2j] = even/even parity plane
                a_sc = a_scr[:, 1:Ho + 1, 8:8 + Wo, 0:Cpi]
            else:
                a_sc = a_scr[:, 1:Ho + 1, 8:8 + Wo, :]
            sc = jnp.dot(a_sc.reshape(M, Cpi), wsc[...],
                         preferred_element_type=jnp.float32)

        o_ref[...] = (acc2 + sc).reshape(B, Ho, Wo, Cpo).astype(o_ref.dtype)

    return kernel


def basic_block_pallas(x, pp, stride):
    """x: (N, Ho, Wo, Cx) bf16 (channel-padded; space-to-depth packed if stride==2)."""
    N, Ho, Wo, Cx = x.shape
    Cpi, Cpo = pp["cpi"], pp["cpo"]
    packed = (stride == 2)
    identity = pp["wsc"] is None
    if packed:
        assert Cx == 4 * Cpi and not identity
    else:
        assert stride == 1 and Cx == Cpi

    a_rows = Ho + 1 if packed else Ho + 2          # packed needs only a top halo
    ca = 4 * Cpi if packed else Cpi
    wpa = _round_up(Wo + (8 if packed else 9), 8)  # interior cols start at 8
    wq = _round_up(Wo + 9, 8)

    budget = _vmem_budget_bytes()

    def vmem_est(b):
        scr = b * (a_rows * wpa * ca + (Ho + 2) * wq * Cpo) * 2
        io = 2 * b * Ho * Wo * (Cx * x.dtype.itemsize + Cpo * 2)
        tmp = 8 * b * Ho * Wo * Cpo * 4 + 2 * b * Ho * Wo * Cx * 4
        wts = 4 * (pp["w1"].size + pp["w2"].size +
                   (pp["wsc"].size if pp["wsc"] is not None else 0))
        return scr + io + tmp + wts

    # images per grid step, from the VMEM budget; keep >= 2 grid steps (v7x: 2 TCs)
    B = 1
    for b in range(1, N + 1):
        if N % b:
            continue
        if N >= 2 and N // b < 2:
            continue
        if vmem_est(b) <= 0.6 * budget:
            B = b

    kernel = _make_block_kernel(B, Ho, Wo, Cpi, Cpo, packed, identity)

    in_specs = [
        pl.BlockSpec((B, Ho, Wo, Cx), lambda n: (n, 0, 0, 0)),
        pl.BlockSpec((1, Cx), lambda n: (0, 0)),
        pl.BlockSpec((1, Cx), lambda n: (0, 0)),
        pl.BlockSpec((1, Cpo), lambda n: (0, 0)),
        pl.BlockSpec((1, Cpo), lambda n: (0, 0)),
        pl.BlockSpec((3, 3 * Cpi, Cpo), lambda n: (0, 0, 0)),
        pl.BlockSpec((3, 3 * Cpo, Cpo), lambda n: (0, 0, 0)),
    ]
    args = [x, pp["s1"], pp["b1"], pp["s2"], pp["b2"], pp["w1"], pp["w2"]]
    if not identity:
        in_specs.append(pl.BlockSpec((Cpi, Cpo), lambda n: (0, 0)))
        args.append(pp["wsc"])

    return pl.pallas_call(
        kernel,
        out_shape=jax.ShapeDtypeStruct((N, Ho, Wo, Cpo), jnp.bfloat16),
        grid=(N // B,),
        in_specs=in_specs,
        out_specs=pl.BlockSpec((B, Ho, Wo, Cpo), lambda n: (n, 0, 0, 0)),
        scratch_shapes=[
            pltpu.VMEM((B, a_rows, wpa, ca), jnp.bfloat16),     # haloed relu(bn1(x))
            pltpu.VMEM((B, Ho + 2, wq, Cpo), jnp.bfloat16),     # haloed relu(bn2(conv1))
        ],
        compiler_params=pltpu.CompilerParams(
            dimension_semantics=("parallel",),
            vmem_limit_bytes=budget,
        ),
    )(*args)


# ----------------------------- wrapper / param prep -----------------------------

def prepare_block_params(p, packed):
    """Pad channels to LANE multiples, rearrange conv weights to deep-K layout
    (kw, kh*Cpi + cin, cout) in bf16, and tile bn1 params over parity planes."""
    cin, cout = p["conv1"].shape[2], p["conv1"].shape[3]
    cpi, cpo = _round_up(cin, LANE), _round_up(cout, LANE)

    def conv_w(w, ci, cpad):
        w = jnp.transpose(w, (1, 0, 2, 3))                       # (kw, kh, ci, co)
        w = jnp.pad(w, ((0, 0), (0, 0), (0, cpad - ci), (0, cpo - cout)))
        return w.reshape(3, 3 * cpad, cpo).astype(jnp.bfloat16)  # K index = kh*cpad + c

    w1 = conv_w(p["conv1"], cin, cpi)
    w2 = conv_w(p["conv2"], cout, cpo)
    wsc = None
    if p["convsc"] is not None:
        wsc = jnp.pad(p["convsc"], ((0, cpi - cin), (0, cpo - cout))).astype(jnp.bfloat16)

    s1 = jnp.pad(p["scale1"], (0, cpi - cin)).reshape(1, cpi)
    b1 = jnp.pad(p["bias1"], (0, cpi - cin)).reshape(1, cpi)
    if packed:                       # replicate across the 4 parity planes
        s1 = jnp.tile(s1, (1, 4))
        b1 = jnp.tile(b1, (1, 4))
    s2 = jnp.pad(p["scale2"], (0, cpo - cout)).reshape(1, cpo)
    b2 = jnp.pad(p["bias2"], (0, cpo - cout)).reshape(1, cpo)
    return dict(w1=w1, w2=w2, wsc=wsc, s1=s1, b1=b1, s2=s2, b2=b2,
                cpi=cpi, cpo=cpo, cout=cout)


def network_block_forward(x_nchw, params, stride):
    if stride not in (1, 2):
        raise NotImplementedError("only stride 1 and 2 (as used by WideResNet)")
    x = jnp.transpose(x_nchw, (0, 2, 3, 1))                  # NCHW -> NHWC
    cin = x.shape[-1]
    cpi = _round_up(cin, LANE)
    x = jnp.pad(x, ((0, 0), (0, 0), (0, 0), (0, cpi - cin)))
    x = x.astype(jnp.bfloat16)           # inter-block activations travel in bf16
    cout = None
    for i, p in enumerate(params):
        s = stride if i == 0 else 1
        packed = (s == 2)
        pp = prepare_block_params(p, packed)
        if packed:
            # space-to-depth: (N,H,W,C) -> (N,H/2,W/2,4C), planes ordered (ph, pw)
            n, h, w, c = x.shape
            assert h % 2 == 0 and w % 2 == 0
            xs = x.reshape(n, h // 2, 2, w // 2, 2, c)
            x = jnp.transpose(xs, (0, 1, 3, 2, 4, 5)).reshape(n, h // 2, w // 2, 4 * c)
        x = basic_block_pallas(x, pp, s)
        cout = pp["cout"]
    x = x[..., :cout].astype(jnp.float32)                    # drop lane padding
    return jnp.transpose(x, (0, 3, 1, 2))                    # NHWC -> NCHW


# ---------------------- deterministic parameter init ----------------------

def _bn_fold(key, c, eps=1e-5):
    k = jax.random.split(key, 4)
    gamma = jax.random.uniform(k[0], (c,), jnp.float32, 0.5, 1.5)
    beta = 0.1 * jax.random.normal(k[1], (c,), jnp.float32)
    mean = 0.1 * jax.random.normal(k[2], (c,), jnp.float32)
    var = jax.random.uniform(k[3], (c,), jnp.float32, 0.5, 1.5)
    scale = gamma / jnp.sqrt(var + eps)
    bias = beta - mean * scale
    return scale, bias


def init_params(key, nb_layers, in_planes, out_planes):
    params = []
    for i in range(nb_layers):
        cin = in_planes if i == 0 else out_planes
        key, k1, k2, k3, k4, k5 = jax.random.split(key, 6)
        scale1, bias1 = _bn_fold(k1, cin)
        scale2, bias2 = _bn_fold(k2, out_planes)
        conv1 = jax.random.normal(k3, (3, 3, cin, out_planes), jnp.float32) * math.sqrt(2.0 / (9 * out_planes))
        conv2 = jax.random.normal(k4, (3, 3, out_planes, out_planes), jnp.float32) * math.sqrt(2.0 / (9 * out_planes))
        convsc = None
        if cin != out_planes:
            convsc = jax.random.normal(k5, (cin, out_planes), jnp.float32) * math.sqrt(2.0 / out_planes)
        params.append(dict(scale1=scale1, bias1=bias1, scale2=scale2, bias2=bias2,
                           conv1=conv1, conv2=conv2, convsc=convsc))
    return params


# ----------------------------- pure-JAX reference (f32) --------------------------

def reference_forward(x_nchw, params, stride):
    dn = ("NHWC", "HWIO", "NHWC")
    x = jnp.transpose(x_nchw, (0, 2, 3, 1))

    def bnrelu(t, s, b):
        return jnp.maximum(t * s.reshape(1, 1, 1, -1) + b.reshape(1, 1, 1, -1), 0.0)

    for i, p in enumerate(params):
        s = stride if i == 0 else 1
        a = bnrelu(x, p["scale1"], p["bias1"])
        h = lax.conv_general_dilated(a, p["conv1"], (s, s), ((1, 1), (1, 1)), dimension_numbers=dn)
        h = bnrelu(h, p["scale2"], p["bias2"])
        h = lax.conv_general_dilated(h, p["conv2"], (1, 1), ((1, 1), (1, 1)), dimension_numbers=dn)
        if p["convsc"] is None:
            sc = x
        else:
            wsc = p["convsc"].reshape(1, 1, *p["convsc"].shape)
            sc = lax.conv_general_dilated(a, wsc, (s, s), ((0, 0), (0, 0)), dimension_numbers=dn)
        x = sc + h
    return jnp.transpose(x, (0, 3, 1, 2))


# ----------------------------------- main ----------------------------------

if __name__ == "__main__":
    key = jax.random.PRNGKey(0)
    kx, kp = jax.random.split(key)

    # NetworkBlock(nb_layers=2, in_planes=4, out_planes=8, block=BasicBlock, stride=2)
    N, Cin, H, W = 2, 4, 16, 16
    nb_layers, out_planes, stride = 2, 8, 2

    x = jax.random.normal(kx, (N, Cin, H, W), jnp.float32)
    params = init_params(kp, nb_layers, Cin, out_planes)

    fwd = jax.jit(network_block_forward, static_argnums=2)
    y = jax.block_until_ready(fwd(x, params, stride))

    assert y.shape == (N, out_planes, H // stride, W // stride), y.shape

    # Reference is full f32; kernel uses bf16 MXU inputs / bf16 inter-block
    # activations with f32 accumulation, hence the relaxed tolerance.
    y_ref = reference_forward(x, params, stride)
    np.testing.assert_allclose(np.asarray(y), np.asarray(y_ref), rtol=5e-2, atol=5e-2)

    print("KERNEL_OK")
</pallas_src>

<mosaic_0001>
module attributes {stable_mosaic.version = 11 : i64} {
  func.func @kernel(%arg0: i32, %arg1: memref<1x8x8x512xbf16, #tpu.memory_space<vmem>>, %arg2: memref<1x512xf32, #tpu.memory_space<vmem>>, %arg3: memref<1x512xf32, #tpu.memory_space<vmem>>, %arg4: memref<1x128xf32, #tpu.memory_space<vmem>>, %arg5: memref<1x128xf32, #tpu.memory_space<vmem>>, %arg6: memref<3x384x128xbf16, #tpu.memory_space<vmem>>, %arg7: memref<3x384x128xbf16, #tpu.memory_space<vmem>>, %arg8: memref<128x128xbf16, #tpu.memory_space<vmem>>, %arg9: memref<1x8x8x128xbf16, #tpu.memory_space<vmem>>, %arg10: memref<1x9x16x512xbf16, #tpu.memory_space<vmem>>, %arg11: memref<1x10x24x128xbf16, #tpu.memory_space<vmem>>) attributes {dimension_semantics = [#tpu.dimension_semantics<parallel>], iteration_bounds = array<i64: 2>, scalar_prefetch = 0 : i64, scratch_operands = 2 : i64, tpu.core_type = #tpu.core_type<tc>, window_params = [{transform_indices = @transform_0, window_bounds = array<i64: 1, 8, 8, 512>}, {pipeline_mode = #tpu.pipeline_mode<synchronous>, transform_indices = @transform_1, window_bounds = array<i64: 1, 512>}, {pipeline_mode = #tpu.pipeline_mode<synchronous>, transform_indices = @transform_2, window_bounds = array<i64: 1, 512>}, {pipeline_mode = #tpu.pipeline_mode<synchronous>, transform_indices = @transform_3, window_bounds = array<i64: 1, 128>}, {pipeline_mode = #tpu.pipeline_mode<synchronous>, transform_indices = @transform_4, window_bounds = array<i64: 1, 128>}, {pipeline_mode = #tpu.pipeline_mode<synchronous>, transform_indices = @transform_5, window_bounds = array<i64: 3, 384, 128>}, {pipeline_mode = #tpu.pipeline_mode<synchronous>, transform_indices = @transform_6, window_bounds = array<i64: 3, 384, 128>}, {pipeline_mode = #tpu.pipeline_mode<synchronous>, transform_indices = @transform_7, window_bounds = array<i64: 128, 128>}, {transform_indices = @transform_8, window_bounds = array<i64: 1, 8, 8, 128>}]} {
    %cst = arith.constant 0.000000e+00 : bf16
    %0 = vector.broadcast %cst : bf16 to vector<1x1x16x512xbf16>
    %cst_0 = arith.constant 0.000000e+00 : bf16
    %1 = vector.broadcast %cst_0 : bf16 to vector<1x9x1x512xbf16>
    %c0 = arith.constant 0 : index
    %c0_1 = arith.constant 0 : index
    %c0_2 = arith.constant 0 : index
    %c0_3 = arith.constant 0 : index
    %2 = vector.load %arg10[%c0, %c0_1, %c0_2, %c0_3] : memref<1x9x16x512xbf16, #tpu.memory_space<vmem>>, vector<1x1x16x512xbf16>
    tpu.vector_store %arg10[%c0, %c0_1, %c0_2, %c0_3], %0 {strides = array<i32>} : memref<1x9x16x512xbf16, #tpu.memory_space<vmem>>, vector<1x1x16x512xbf16>,
    %c0_4 = arith.constant 0 : index
    %c0_5 = arith.constant 0 : index
    %c7 = arith.constant 7 : index
    %c0_6 = arith.constant 0 : index
    %3 = vector.load %arg10[%c0_4, %c0_5, %c7, %c0_6] : memref<1x9x16x512xbf16, #tpu.memory_space<vmem>>, vector<1x9x1x512xbf16>
    tpu.vector_store %arg10[%c0_4, %c0_5, %c7, %c0_6], %1 {strides = array<i32>} : memref<1x9x16x512xbf16, #tpu.memory_space<vmem>>, vector<1x9x1x512xbf16>,
    %cst_7 = arith.constant 0.000000e+00 : bf16
    %4 = vector.broadcast %cst_7 : bf16 to vector<1x1x24x128xbf16>
    %cst_8 = arith.constant 0.000000e+00 : bf16
    %5 = vector.broadcast %cst_8 : bf16 to vector<1x10x1x128xbf16>
    %c0_9 = arith.constant 0 : index
    %c0_10 = arith.constant 0 : index
    %c0_11 = arith.constant 0 : index
    %c0_12 = arith.constant 0 : index
    %6 = vector.load %arg11[%c0_9, %c0_10, %c0_11, %c0_12] : memref<1x10x24x128xbf16, #tpu.memory_space<vmem>>, vector<1x1x24x128xbf16>
    tpu.vector_store %arg11[%c0_9, %c0_10, %c0_11, %c0_12], %4 {strides = array<i32>} : memref<1x10x24x128xbf16, #tpu.memory_space<vmem>>, vector<1x1x24x128xbf16>,
    %c0_13 = arith.constant 0 : index
    %c9 = arith.constant 9 : index
    %c0_14 = arith.constant 0 : index
    %c0_15 = arith.constant 0 : index
    %7 = vector.load %arg11[%c0_13, %c9, %c0_14, %c0_15] : memref<1x10x24x128xbf16, #tpu.memory_space<vmem>>, vector<1x1x24x128xbf16>
    tpu.vector_store %arg11[%c0_13, %c9, %c0_14, %c0_15], %4 {strides = array<i32>} : memref<1x10x24x128xbf16, #tpu.memory_space<vmem>>, vector<1x1x24x128xbf16>,
    %c0_16 = arith.constant 0 : index
    %c0_17 = arith.constant 0 : index
    %c7_18 = arith.constant 7 : index
    %c0_19 = arith.constant 0 : index
    %8 = vector.load %arg11[%c0_16, %c0_17, %c7_18, %c0_19] : memref<1x10x24x128xbf16, #tpu.memory_space<vmem>>, vector<1x10x1x128xbf16>
    tpu.vector_store %arg11[%c0_16, %c0_17, %c7_18, %c0_19], %5 {strides = array<i32>} : memref<1x10x24x128xbf16, #tpu.memory_space<vmem>>, vector<1x10x1x128xbf16>,
    %c0_20 = arith.constant 0 : index
    %c0_21 = arith.constant 0 : index
    %c16 = arith.constant 16 : index
    %c0_22 = arith.constant 0 : index
    %9 = vector.load %arg11[%c0_20, %c0_21, %c16, %c0_22] : memref<1x10x24x128xbf16, #tpu.memory_space<vmem>>, vector<1x10x1x128xbf16>
    tpu.vector_store %arg11[%c0_20, %c0_21, %c16, %c0_22], %5 {strides = array<i32>} : memref<1x10x24x128xbf16, #tpu.memory_space<vmem>>, vector<1x10x1x128xbf16>,
    %c0_23 = arith.constant 0 : index
    %c0_24 = arith.constant 0 : index
    %c0_25 = arith.constant 0 : index
    %c0_26 = arith.constant 0 : index
    %10 = vector.load %arg1[%c0_23, %c0_24, %c0_25, %c0_26] : memref<1x8x8x512xbf16, #tpu.memory_space<vmem>>, vector<1x8x8x512xbf16>
    %11 = arith.extf %10 : vector<1x8x8x512xbf16> to vector<1x8x8x512xf32>
    %c0_27 = arith.constant 0 : index
    %c0_28 = arith.constant 0 : index
    %12 = vector.load %arg2[%c0_27, %c0_28] : memref<1x512xf32, #tpu.memory_space<vmem>>, vector<1x512xf32>
    %13 = vector.shape_cast %12 : vector<1x512xf32> to vector<1x1x1x512xf32>
    %14 = vector.broadcast %13 : vector<1x1x1x512xf32> to vector<1x8x8x512xf32>
    %15 = arith.mulf %11, %14 : vector<1x8x8x512xf32>
    %c0_29 = arith.constant 0 : index
    %c0_30 = arith.constant 0 : index
    %16 = vector.load %arg3[%c0_29, %c0_30] : memref<1x512xf32, #tpu.memory_space<vmem>>, vector<1x512xf32>
    %17 = vector.shape_cast %16 : vector<1x512xf32> to vector<1x1x1x512xf32>
    %18 = vector.broadcast %17 : vector<1x1x1x512xf32> to vector<1x8x8x512xf32>
    %19 = arith.addf %15, %18 : vector<1x8x8x512xf32>
    %cst_31 = arith.constant 0.000000e+00 : f32
    %20 = vector.broadcast %cst_31 : f32 to vector<1x8x8x512xf32>
    %21 = arith.maximumf %19, %20 : vector<1x8x8x512xf32>
    %22 = arith.truncf %21 : vector<1x8x8x512xf32> to vector<1x8x8x512xbf16>
    %c0_32 = arith.constant 0 : index
    %c1 = arith.constant 1 : index
    %c8 = arith.constant 8 : index
    %c0_33 = arith.constant 0 : index
    %23 = vector.load %arg10[%c0_32, %c1, %c8, %c0_33] : memref<1x9x16x512xbf16, #tpu.memory_space<vmem>>, vector<1x8x8x512xbf16>
    tpu.vector_store %arg10[%c0_32, %c1, %c8, %c0_33], %22 {strides = array<i32>} : memref<1x9x16x512xbf16, #tpu.memory_space<vmem>>, vector<1x8x8x512xbf16>,
    %c0_34 = arith.constant 0 : index
    %c0_35 = arith.constant 0 : index
    %c7_36 = arith.constant 7 : index
    %c384 = arith.constant 384 : index
    %24 = vector.load %arg10[%c0_34, %c0_35, %c7_36, %c384] : memref<1x9x16x512xbf16, #tpu.memory_space<vmem>>, vector<1x8x8x128xbf16>
    %25 = vector.shape_cast %24 : vector<1x8x8x128xbf16> to vector<64x128xbf16>
    %c0_37 = arith.constant 0 : index
    %c1_38 = arith.constant 1 : index
    %c7_39 = arith.constant 7 : index
    %c128 = arith.constant 128 : index
    %26 = vector.load %arg10[%c0_37, %c1_38, %c7_39, %c128] : memref<1x9x16x512xbf16, #tpu.memory_space<vmem>>, vector<1x8x8x128xbf16>
    %27 = vector.shape_cast %26 : vector<1x8x8x128xbf16> to vector<64x128xbf16>
    %c0_40 = arith.constant 0 : index
    %c1_41 = arith.constant 1 : index
    %c7_42 = arith.constant 7 : index
    %c384_43 = arith.constant 384 : index
    %28 = vector.load %arg10[%c0_40, %c1_41, %c7_42, %c384_43] : memref<1x9x16x512xbf16, #tpu.memory_space<vmem>>, vector<1x8x8x128xbf16>
    %29 = vector.shape_cast %28 : vector<1x8x8x128xbf16> to vector<64x128xbf16>
    %30 = tpu.concatenate %25, %27, %29 in 1 : vector<64x128xbf16>, vector<64x128xbf16>, vector<64x128xbf16> -> vector<64x384xbf16>
    %c0_44 = arith.constant 0 : index
    %c0_45 = arith.constant 0 : index
    %c0_46 = arith.constant 0 : index
    %31 = vector.load %arg6[%c0_44, %c0_45, %c0_46] : memref<3x384x128xbf16, #tpu.memory_space<vmem>>, vector<1x384x128xbf16>
    %32 = vector.shape_cast %31 : vector<1x384x128xbf16> to vector<384x128xbf16>
    %cst_47 = arith.constant dense<0.000000e+00> : vector<64x128xf32>
    %33 = tpu.matmul %30, %32, %cst_47 {dimension_numbers = #tpu.dot_dimension_numbers<[1], [0], [0], [1], [0, 0, 1, 1], [], []>} : vector<64x384xbf16>, vector<384x128xbf16>, vector<64x128xf32> -> vector<64x128xf32>
    %c0_48 = arith.constant 0 : index
    %c0_49 = arith.constant 0 : index
    %c8_50 = arith.constant 8 : index
    %c256 = arith.constant 256 : index
    %34 = vector.load %arg10[%c0_48, %c0_49, %c8_50, %c256] : memref<1x9x16x512xbf16, #tpu.memory_space<vmem>>, vector<1x8x8x128xbf16>
    %35 = vector.shape_cast %34 : vector<1x8x8x128xbf16> to vector<64x128xbf16>
    %c0_51 = arith.constant 0 : index
    %c1_52 = arith.constant 1 : index
    %c8_53 = arith.constant 8 : index
    %c0_54 = arith.constant 0 : index
    %36 = vector.load %arg10[%c0_51, %c1_52, %c8_53, %c0_54] : memref<1x9x16x512xbf16, #tpu.memory_space<vmem>>, vector<1x8x8x128xbf16>
    %37 = vector.shape_cast %36 : vector<1x8x8x128xbf16> to vector<64x128xbf16>
    %c0_55 = arith.constant 0 : index
    %c1_56 = arith.constant 1 : index
    %c8_57 = arith.constant 8 : index
    %c256_58 = arith.constant 256 : index
    %38 = vector.load %arg10[%c0_55, %c1_56, %c8_57, %c256_58] : memref<1x9x16x512xbf16, #tpu.memory_space<vmem>>, vector<1x8x8x128xbf16>
    %39 = vector.shape_cast %38 : vector<1x8x8x128xbf16> to vector<64x128xbf16>
    %40 = tpu.concatenate %35, %37, %39 in 1 : vector<64x128xbf16>, vector<64x128xbf16>, vector<64x128xbf16> -> vector<64x384xbf16>
    %c1_59 = arith.constant 1 : index
    %c0_60 = arith.constant 0 : index
    %c0_61 = arith.constant 0 : index
    %41 = vector.load %arg6[%c1_59, %c0_60, %c0_61] : memref<3x384x128xbf16, #tpu.memory_space<vmem>>, vector<1x384x128xbf16>
    %42 = vector.shape_cast %41 : vector<1x384x128xbf16> to vector<384x128xbf16>
    %cst_62 = arith.constant dense<0.000000e+00> : vector<64x128xf32>
    %43 = tpu.matmul %40, %42, %cst_62 {dimension_numbers = #tpu.dot_dimension_numbers<[1], [0], [0], [1], [0, 0, 1, 1], [], []>} : vector<64x384xbf16>, vector<384x128xbf16>, vector<64x128xf32> -> vector<64x128xf32>
    %44 = arith.addf %33, %43 : vector<64x128xf32>
    %c0_63 = arith.constant 0 : index
    %c0_64 = arith.constant 0 : index
    %c8_65 = arith.constant 8 : index
    %c384_66 = arith.constant 384 : index
    %45 = vector.load %arg10[%c0_63, %c0_64, %c8_65, %c384_66] : memref<1x9x16x512xbf16, #tpu.memory_space<vmem>>, vector<1x8x8x128xbf16>
    %46 = vector.shape_cast %45 : vector<1x8x8x128xbf16> to vector<64x128xbf16>
    %c0_67 = arith.constant 0 : index
    %c1_68 = arith.constant 1 : index
    %c8_69 = arith.constant 8 : index
    %c128_70 = arith.constant 128 : index
    %47 = vector.load %arg10[%c0_67, %c1_68, %c8_69, %c128_70] : memref<1x9x16x512xbf16, #tpu.memory_space<vmem>>, vector<1x8x8x128xbf16>
    %48 = vector.shape_cast %47 : vector<1x8x8x128xbf16> to vector<64x128xbf16>
    %c0_71 = arith.constant 0 : index
    %c1_72 = arith.constant 1 : index
    %c8_73 = arith.constant 8 : index
    %c384_74 = arith.constant 384 : index
    %49 = vector.load %arg10[%c0_71, %c1_72, %c8_73, %c384_74] : memref<1x9x16x512xbf16, #tpu.memory_space<vmem>>, vector<1x8x8x128xbf16>
    %50 = vector.shape_cast %49 : vector<1x8x8x128xbf16> to vector<64x128xbf16>
    %51 = tpu.concatenate %46, %48, %50 in 1 : vector<64x128xbf16>, vector<64x128xbf16>, vector<64x128xbf16> -> vector<64x384xbf16>
    %c2 = arith.constant 2 : index
    %c0_75 = arith.constant 0 : index
    %c0_76 = arith.constant 0 : index
    %52 = vector.load %arg6[%c2, %c0_75, %c0_76] : memref<3x384x128xbf16, #tpu.memory_space<vmem>>, vector<1x384x128xbf16>
    %53 = vector.shape_cast %52 : vector<1x384x128xbf16> to vector<384x128xbf16>
    %cst_77 = arith.constant dense<0.000000e+00> : vector<64x128xf32>
    %54 = tpu.matmul %51, %53, %cst_77 {dimension_numbers = #tpu.dot_dimension_numbers<[1], [0], [0], [1], [0, 0, 1, 1], [], []>} : vector<64x384xbf16>, vector<384x128xbf16>, vector<64x128xf32> -> vector<64x128xf32>
    %55 = arith.addf %44, %54 : vector<64x128xf32>
    %56 = vector.shape_cast %55 : vector<64x128xf32> to vector<1x8x8x128xf32>
    %c0_78 = arith.constant 0 : index
    %c0_79 = arith.constant 0 : index
    %57 = vector.load %arg4[%c0_78, %c0_79] : memref<1x128xf32, #tpu.memory_space<vmem>>, vector<1x128xf32>
    %58 = vector.shape_cast %57 : vector<1x128xf32> to vector<1x1x1x128xf32>
    %59 = vector.broadcast %58 : vector<1x1x1x128xf32> to vector<1x8x8x128xf32>
    %60 = arith.mulf %56, %59 : vector<1x8x8x128xf32>
    %c0_80 = arith.constant 0 : index
    %c0_81 = arith.constant 0 : index
    %61 = vector.load %arg5[%c0_80, %c0_81] : memref<1x128xf32, #tpu.memory_space<vmem>>, vector<1x128xf32>
    %62 = vector.shape_cast %61 : vector<1x128xf32> to vector<1x1x1x128xf32>
    %63 = vector.broadcast %62 : vector<1x1x1x128xf32> to vector<1x8x8x128xf32>
    %64 = arith.addf %60, %63 : vector<1x8x8x128xf32>
    %cst_82 = arith.constant 0.000000e+00 : f32
    %65 = vector.broadcast %cst_82 : f32 to vector<1x8x8x128xf32>
    %66 = arith.maximumf %64, %65 : vector<1x8x8x128xf32>
    %67 = arith.truncf %66 : vector<1x8x8x128xf32> to vector<1x8x8x128xbf16>
    %c0_83 = arith.constant 0 : index
    %c1_84 = arith.constant 1 : index
    %c8_85 = arith.constant 8 : index
    %c0_86 = arith.constant 0 : index
    %68 = vector.load %arg11[%c0_83, %c1_84, %c8_85, %c0_86] : memref<1x10x24x128xbf16, #tpu.memory_space<vmem>>, vector<1x8x8x128xbf16>
    tpu.vector_store %arg11[%c0_83, %c1_84, %c8_85, %c0_86], %67 {strides = array<i32>} : memref<1x10x24x128xbf16, #tpu.memory_space<vmem>>, vector<1x8x8x128xbf16>,
    %c0_87 = arith.constant 0 : index
    %c0_88 = arith.constant 0 : index
    %c7_89 = arith.constant 7 : index
    %c0_90 = arith.constant 0 : index
    %69 = vector.load %arg11[%c0_87, %c0_88, %c7_89, %c0_90] : memref<1x10x24x128xbf16, #tpu.memory_space<vmem>>, vector<1x8x8x128xbf16>
    %70 = vector.shape_cast %69 : vector<1x8x8x128xbf16> to vector<64x128xbf16>
    %c0_91 = arith.constant 0 : index
    %c1_92 = arith.constant 1 : index
    %c7_93 = arith.constant 7 : index
    %c0_94 = arith.constant 0 : index
    %71 = vector.load %arg11[%c0_91, %c1_92, %c7_93, %c0_94] : memref<1x10x24x128xbf16, #tpu.memory_space<vmem>>, vector<1x8x8x128xbf16>
    %72 = vector.shape_cast %71 : vector<1x8x8x128xbf16> to vector<64x128xbf16>
    %c0_95 = arith.constant 0 : index
    %c2_96 = arith.constant 2 : index
    %c7_97 = arith.constant 7 : index
    %c0_98 = arith.constant 0 : index
    %73 = vector.load %arg11[%c0_95, %c2_96, %c7_97, %c0_98] : memref<1x10x24x128xbf16, #tpu.memory_space<vmem>>, vector<1x8x8x128xbf16>
    %74 = vector.shape_cast %73 : vector<1x8x8x128xbf16> to vector<64x128xbf16>
    %75 = tpu.concatenate %70, %72, %74 in 1 : vector<64x128xbf16>, vector<64x128xbf16>, vector<64x128xbf16> -> vector<64x384xbf16>
    %c0_99 = arith.constant 0 : index
    %c0_100 = arith.constant 0 : index
    %c0_101 = arith.constant 0 : index
    %76 = vector.load %arg7[%c0_99, %c0_100, %c0_101] : memref<3x384x128xbf16, #tpu.memory_space<vmem>>, vector<1x384x128xbf16>
    %77 = vector.shape_cast %76 : vector<1x384x128xbf16> to vector<384x128xbf16>
    %cst_102 = arith.constant dense<0.000000e+00> : vector<64x128xf32>
    %78 = tpu.matmul %75, %77, %cst_102 {dimension_numbers = #tpu.dot_dimension_numbers<[1], [0], [0], [1], [0, 0, 1, 1], [], []>} : vector<64x384xbf16>, vector<384x128xbf16>, vector<64x128xf32> -> vector<64x128xf32>
    %c0_103 = arith.constant 0 : index
    %c0_104 = arith.constant 0 : index
    %c8_105 = arith.constant 8 : index
    %c0_106 = arith.constant 0 : index
    %79 = vector.load %arg11[%c0_103, %c0_104, %c8_105, %c0_106] : memref<1x10x24x128xbf16, #tpu.memory_space<vmem>>, vector<1x8x8x128xbf16>
    %80 = vector.shape_cast %79 : vector<1x8x8x128xbf16> to vector<64x128xbf16>
    %c0_107 = arith.constant 0 : index
    %c1_108 = arith.constant 1 : index
    %c8_109 = arith.constant 8 : index
    %c0_110 = arith.constant 0 : index
    %81 = vector.load %arg11[%c0_107, %c1_108, %c8_109, %c0_110] : memref<1x10x24x128xbf16, #tpu.memory_space<vmem>>, vector<1x8x8x128xbf16>
    %82 = vector.shape_cast %81 : vector<1x8x8x128xbf16> to vector<64x128xbf16>
    %c0_111 = arith.constant 0 : index
    %c2_112 = arith.constant 2 : index
    %c8_113 = arith.constant 8 : index
    %c0_114 = arith.constant 0 : index
    %83 = vector.load %arg11[%c0_111, %c2_112, %c8_113, %c0_114] : memref<1x10x24x128xbf16, #tpu.memory_space<vmem>>, vector<1x8x8x128xbf16>
    %84 = vector.shape_cast %83 : vector<1x8x8x128xbf16> to vector<64x128xbf16>
    %85 = tpu.concatenate %80, %82, %84 in 1 : vector<64x128xbf16>, vector<64x128xbf16>, vector<64x128xbf16> -> vector<64x384xbf16>
    %c1_115 = arith.constant 1 : index
    %c0_116 = arith.constant 0 : index
    %c0_117 = arith.constant 0 : index
    %86 = vector.load %arg7[%c1_115, %c0_116, %c0_117] : memref<3x384x128xbf16, #tpu.memory_space<vmem>>, vector<1x384x128xbf16>
    %87 = vector.shape_cast %86 : vector<1x384x128xbf16> to vector<384x128xbf16>
    %cst_118 = arith.constant dense<0.000000e+00> : vector<64x128xf32>
    %88 = tpu.matmul %85, %87, %cst_118 {dimension_numbers = #tpu.dot_dimension_numbers<[1], [0], [0], [1], [0, 0, 1, 1], [], []>} : vector<64x384xbf16>, vector<384x128xbf16>, vector<64x128xf32> -> vector<64x128xf32>
    %89 = arith.addf %78, %88 : vector<64x128xf32>
    %c0_119 = arith.constant 0 : index
    %c0_120 = arith.constant 0 : index
    %c9_121 = arith.constant 9 : index
    %c0_122 = arith.constant 0 : index
    %90 = vector.load %arg11[%c0_119, %c0_120, %c9_121, %c0_122] : memref<1x10x24x128xbf16, #tpu.memory_space<vmem>>, vector<1x8x8x128xbf16>
    %91 = vector.shape_cast %90 : vector<1x8x8x128xbf16> to vector<64x128xbf16>
    %c0_123 = arith.constant 0 : index
    %c1_124 = arith.constant 1 : index
    %c9_125 = arith.constant 9 : index
    %c0_126 = arith.constant 0 : index
    %92 = vector.load %arg11[%c0_123, %c1_124, %c9_125, %c0_126] : memref<1x10x24x128xbf16, #tpu.memory_space<vmem>>, vector<1x8x8x128xbf16>
    %93 = vector.shape_cast %92 : vector<1x8x8x128xbf16> to vector<64x128xbf16>
    %c0_127 = arith.constant 0 : index
    %c2_128 = arith.constant 2 : index
    %c9_129 = arith.constant 9 : index
    %c0_130 = arith.constant 0 : index
    %94 = vector.load %arg11[%c0_127, %c2_128, %c9_129, %c0_130] : memref<1x10x24x128xbf16, #tpu.memory_space<vmem>>, vector<1x8x8x128xbf16>
    %95 = vector.shape_cast %94 : vector<1x8x8x128xbf16> to vector<64x128xbf16>
    %96 = tpu.concatenate %91, %93, %95 in 1 : vector<64x128xbf16>, vector<64x128xbf16>, vector<64x128xbf16> -> vector<64x384xbf16>
    %c2_131 = arith.constant 2 : index
    %c0_132 = arith.constant 0 : index
    %c0_133 = arith.constant 0 : index
    %97 = vector.load %arg7[%c2_131, %c0_132, %c0_133] : memref<3x384x128xbf16, #tpu.memory_space<vmem>>, vector<1x384x128xbf16>
    %98 = vector.shape_cast %97 : vector<1x384x128xbf16> to vector<384x128xbf16>
    %cst_134 = arith.constant dense<0.000000e+00> : vector<64x128xf32>
    %99 = tpu.matmul %96, %98, %cst_134 {dimension_numbers = #tpu.dot_dimension_numbers<[1], [0], [0], [1], [0, 0, 1, 1], [], []>} : vector<64x384xbf16>, vector<384x128xbf16>, vector<64x128xf32> -> vector<64x128xf32>
    %100 = arith.addf %89, %99 : vector<64x128xf32>
    %c0_135 = arith.constant 0 : index
    %c1_136 = arith.constant 1 : index
    %c8_137 = arith.constant 8 : index
    %c0_138 = arith.constant 0 : index
    %101 = vector.load %arg10[%c0_135, %c1_136, %c8_137, %c0_138] : memref<1x9x16x512xbf16, #tpu.memory_space<vmem>>, vector<1x8x8x128xbf16>
    %102 = vector.shape_cast %101 : vector<1x8x8x128xbf16> to vector<64x128xbf16>
    %c0_139 = arith.constant 0 : index
    %c0_140 = arith.constant 0 : index
    %103 = vector.load %arg8[%c0_139, %c0_140] : memref<128x128xbf16, #tpu.memory_space<vmem>>, vector<128x128xbf16>
    %cst_141 = arith.constant dense<0.000000e+00> : vector<64x128xf32>
    %104 = tpu.matmul %102, %103, %cst_141 {dimension_numbers = #tpu.dot_dimension_numbers<[1], [0], [0], [1], [0, 0, 1, 1], [], []>} : vector<64x128xbf16>, vector<128x128xbf16>, vector<64x128xf32> -> vector<64x128xf32>
    %105 = arith.addf %100, %104 : vector<64x128xf32>
    %106 = vector.shape_cast %105 : vector<64x128xf32> to vector<1x8x8x128xf32>
    %107 = arith.truncf %106 : vector<1x8x8x128xf32> to vector<1x8x8x128xbf16>
    %c0_142 = arith.constant 0 : index
    %c0_143 = arith.constant 0 : index
    %c0_144 = arith.constant 0 : index
    %c0_145 = arith.constant 0 : index
    %108 = vector.load %arg9[%c0_142, %c0_143, %c0_144, %c0_145] : memref<1x8x8x128xbf16, #tpu.memory_space<vmem>>, vector<1x8x8x128xbf16>
    tpu.vector_store %arg9[%c0_142, %c0_143, %c0_144, %c0_145], %107 {strides = array<i32>} : memref<1x8x8x128xbf16, #tpu.memory_space<vmem>>, vector<1x8x8x128xbf16>,
    return
  }
  func.func @transform_0(%arg0: i32) -> (i32, i32, i32, i32) {
    %c0_i32 = arith.constant 0 : i32
    %c0_i32_0 = arith.constant 0 : i32
    %c0_i32_1 = arith.constant 0 : i32
    %c0_i32_2 = arith.constant 0 : i32
    return %arg0, %c0_i32, %c0_i32_0, %c0_i32_1 : i32, i32, i32, i32
  }
  func.func @transform_1(%arg0: i32) -> (i32, i32) {
    %c0_i32 = arith.constant 0 : i32
    %c0_i32_0 = arith.constant 0 : i32
    %c0_i32_1 = arith.constant 0 : i32
    return %c0_i32, %c0_i32_0 : i32, i32
  }
  func.func @transform_2(%arg0: i32) -> (i32, i32) {
    %c0_i32 = arith.constant 0 : i32
    %c0_i32_0 = arith.constant 0 : i32
    %c0_i32_1 = arith.constant 0 : i32
    return %c0_i32, %c0_i32_0 : i32, i32
  }
  func.func @transform_3(%arg0: i32) -> (i32, i32) {
    %c0_i32 = arith.constant 0 : i32
    %c0_i32_0 = arith.constant 0 : i32
    %c0_i32_1 = arith.constant 0 : i32
    return %c0_i32, %c0_i32_0 : i32, i32
  }
  func.func @transform_4(%arg0: i32) -> (i32, i32) {
    %c0_i32 = arith.constant 0 : i32
    %c0_i32_0 = arith.constant 0 : i32
    %c0_i32_1 = arith.constant 0 : i32
    return %c0_i32, %c0_i32_0 : i32, i32
  }
  func.func @transform_5(%arg0: i32) -> (i32, i32, i32) {
    %c0_i32 = arith.constant 0 : i32
    %c0_i32_0 = arith.constant 0 : i32
    %c0_i32_1 = arith.constant 0 : i32
    %c0_i32_2 = arith.constant 0 : i32
    return %c0_i32, %c0_i32_0, %c0_i32_1 : i32, i32, i32
  }
  func.func @transform_6(%arg0: i32) -> (i32, i32, i32) {
    %c0_i32 = arith.constant 0 : i32
    %c0_i32_0 = arith.constant 0 : i32
    %c0_i32_1 = arith.constant 0 : i32
    %c0_i32_2 = arith.constant 0 : i32
    return %c0_i32, %c0_i32_0, %c0_i32_1 : i32, i32, i32
  }
  func.func @transform_7(%arg0: i32) -> (i32, i32) {
    %c0_i32 = arith.constant 0 : i32
    %c0_i32_0 = arith.constant 0 : i32
    %c0_i32_1 = arith.constant 0 : i32
    return %c0_i32, %c0_i32_0 : i32, i32
  }
  func.func @transform_8(%arg0: i32) -> (i32, i32, i32, i32) {
    %c0_i32 = arith.constant 0 : i32
    %c0_i32_0 = arith.constant 0 : i32
    %c0_i32_1 = arith.constant 0 : i32
    %c0_i32_2 = arith.constant 0 : i32
    return %arg0, %c0_i32, %c0_i32_0, %c0_i32_1 : i32, i32, i32, i32
  }
}

module attributes {stable_mosaic.version = 11 : i64} {
  func.func @kernel(%arg0: i32, %arg1: memref<1x8x8x128xbf16, #tpu.memory_space<vmem>>, %arg2: memref<1x128xf32, #tpu.memory_space<vmem>>, %arg3: memref<1x128xf32, #tpu.memory_space<vmem>>, %arg4: memref<1x128xf32, #tpu.memory_space<vmem>>, %arg5: memref<1x128xf32, #tpu.memory_space<vmem>>, %arg6: memref<3x384x128xbf16, #tpu.memory_space<vmem>>, %arg7: memref<3x384x128xbf16, #tpu.memory_space<vmem>>, %arg8: memref<1x8x8x128xbf16, #tpu.memory_space<vmem>>, %arg9: memref<1x10x24x128xbf16, #tpu.memory_space<vmem>>, %arg10: memref<1x10x24x128xbf16, #tpu.memory_space<vmem>>) attributes {dimension_semantics = [#tpu.dimension_semantics<parallel>], iteration_bounds = array<i64: 2>, scalar_prefetch = 0 : i64, scratch_operands = 2 : i64, tpu.core_type = #tpu.core_type<tc>, window_params = [{transform_indices = @transform_0, window_bounds = array<i64: 1, 8, 8, 128>}, {pipeline_mode = #tpu.pipeline_mode<synchronous>, transform_indices = @transform_1, window_bounds = array<i64: 1, 128>}, {pipeline_mode = #tpu.pipeline_mode<synchronous>, transform_indices = @transform_2, window_bounds = array<i64: 1, 128>}, {pipeline_mode = #tpu.pipeline_mode<synchronous>, transform_indices = @transform_3, window_bounds = array<i64: 1, 128>}, {pipeline_mode = #tpu.pipeline_mode<synchronous>, transform_indices = @transform_4, window_bounds = array<i64: 1, 128>}, {pipeline_mode = #tpu.pipeline_mode<synchronous>, transform_indices = @transform_5, window_bounds = array<i64: 3, 384, 128>}, {pipeline_mode = #tpu.pipeline_mode<synchronous>, transform_indices = @transform_6, window_bounds = array<i64: 3, 384, 128>}, {transform_indices = @transform_7, window_bounds = array<i64: 1, 8, 8, 128>}]} {
    %cst = arith.constant 0.000000e+00 : bf16
    %0 = vector.broadcast %cst : bf16 to vector<1x1x24x128xbf16>
    %cst_0 = arith.constant 0.000000e+00 : bf16
    %1 = vector.broadcast %cst_0 : bf16 to vector<1x10x1x128xbf16>
    %c0 = arith.constant 0 : index
    %c0_1 = arith.constant 0 : index
    %c0_2 = arith.constant 0 : index
    %c0_3 = arith.constant 0 : index
    %2 = vector.load %arg9[%c0, %c0_1, %c0_2, %c0_3] : memref<1x10x24x128xbf16, #tpu.memory_space<vmem>>, vector<1x1x24x128xbf16>
    tpu.vector_store %arg9[%c0, %c0_1, %c0_2, %c0_3], %0 {strides = array<i32>} : memref<1x10x24x128xbf16, #tpu.memory_space<vmem>>, vector<1x1x24x128xbf16>,
    %c0_4 = arith.constant 0 : index
    %c0_5 = arith.constant 0 : index
    %c7 = arith.constant 7 : index
    %c0_6 = arith.constant 0 : index
    %3 = vector.load %arg9[%c0_4, %c0_5, %c7, %c0_6] : memref<1x10x24x128xbf16, #tpu.memory_space<vmem>>, vector<1x10x1x128xbf16>
    tpu.vector_store %arg9[%c0_4, %c0_5, %c7, %c0_6], %1 {strides = array<i32>} : memref<1x10x24x128xbf16, #tpu.memory_space<vmem>>, vector<1x10x1x128xbf16>,
    %c0_7 = arith.constant 0 : index
    %c9 = arith.constant 9 : index
    %c0_8 = arith.constant 0 : index
    %c0_9 = arith.constant 0 : index
    %4 = vector.load %arg9[%c0_7, %c9, %c0_8, %c0_9] : memref<1x10x24x128xbf16, #tpu.memory_space<vmem>>, vector<1x1x24x128xbf16>
    tpu.vector_store %arg9[%c0_7, %c9, %c0_8, %c0_9], %0 {strides = array<i32>} : memref<1x10x24x128xbf16, #tpu.memory_space<vmem>>, vector<1x1x24x128xbf16>,
    %c0_10 = arith.constant 0 : index
    %c0_11 = arith.constant 0 : index
    %c16 = arith.constant 16 : index
    %c0_12 = arith.constant 0 : index
    %5 = vector.load %arg9[%c0_10, %c0_11, %c16, %c0_12] : memref<1x10x24x128xbf16, #tpu.memory_space<vmem>>, vector<1x10x1x128xbf16>
    tpu.vector_store %arg9[%c0_10, %c0_11, %c16, %c0_12], %1 {strides = array<i32>} : memref<1x10x24x128xbf16, #tpu.memory_space<vmem>>, vector<1x10x1x128xbf16>,
    %cst_13 = arith.constant 0.000000e+00 : bf16
    %6 = vector.broadcast %cst_13 : bf16 to vector<1x1x24x128xbf16>
    %cst_14 = arith.constant 0.000000e+00 : bf16
    %7 = vector.broadcast %cst_14 : bf16 to vector<1x10x1x128xbf16>
    %c0_15 = arith.constant 0 : index
    %c0_16 = arith.constant 0 : index
    %c0_17 = arith.constant 0 : index
    %c0_18 = arith.constant 0 : index
    %8 = vector.load %arg10[%c0_15, %c0_16, %c0_17, %c0_18] : memref<1x10x24x128xbf16, #tpu.memory_space<vmem>>, vector<1x1x24x128xbf16>
    tpu.vector_store %arg10[%c0_15, %c0_16, %c0_17, %c0_18], %6 {strides = array<i32>} : memref<1x10x24x128xbf16, #tpu.memory_space<vmem>>, vector<1x1x24x128xbf16>,
    %c0_19 = arith.constant 0 : index
    %c9_20 = arith.constant 9 : index
    %c0_21 = arith.constant 0 : index
    %c0_22 = arith.constant 0 : index
    %9 = vector.load %arg10[%c0_19, %c9_20, %c0_21, %c0_22] : memref<1x10x24x128xbf16, #tpu.memory_space<vmem>>, vector<1x1x24x128xbf16>
    tpu.vector_store %arg10[%c0_19, %c9_20, %c0_21, %c0_22], %6 {strides = array<i32>} : memref<1x10x24x128xbf16, #tpu.memory_space<vmem>>, vector<1x1x24x128xbf16>,
    %c0_23 = arith.constant 0 : index
    %c0_24 = arith.constant 0 : index
    %c7_25 = arith.constant 7 : index
    %c0_26 = arith.constant 0 : index
    %10 = vector.load %arg10[%c0_23, %c0_24, %c7_25, %c0_26] : memref<1x10x24x128xbf16, #tpu.memory_space<vmem>>, vector<1x10x1x128xbf16>
    tpu.vector_store %arg10[%c0_23, %c0_24, %c7_25, %c0_26], %7 {strides = array<i32>} : memref<1x10x24x128xbf16, #tpu.memory_space<vmem>>, vector<1x10x1x128xbf16>,
    %c0_27 = arith.constant 0 : index
    %c0_28 = arith.constant 0 : index
    %c16_29 = arith.constant 16 : index
    %c0_30 = arith.constant 0 : index
    %11 = vector.load %arg10[%c0_27, %c0_28, %c16_29, %c0_30] : memref<1x10x24x128xbf16, #tpu.memory_space<vmem>>, vector<1x10x1x128xbf16>
    tpu.vector_store %arg10[%c0_27, %c0_28, %c16_29, %c0_30], %7 {strides = array<i32>} : memref<1x10x24x128xbf16, #tpu.memory_space<vmem>>, vector<1x10x1x128xbf16>,
    %c0_31 = arith.constant 0 : index
    %c0_32 = arith.constant 0 : index
    %c0_33 = arith.constant 0 : index
    %c0_34 = arith.constant 0 : index
    %12 = vector.load %arg1[%c0_31, %c0_32, %c0_33, %c0_34] : memref<1x8x8x128xbf16, #tpu.memory_space<vmem>>, vector<1x8x8x128xbf16>
    %13 = arith.extf %12 : vector<1x8x8x128xbf16> to vector<1x8x8x128xf32>
    %c0_35 = arith.constant 0 : index
    %c0_36 = arith.constant 0 : index
    %14 = vector.load %arg2[%c0_35, %c0_36] : memref<1x128xf32, #tpu.memory_space<vmem>>, vector<1x128xf32>
    %15 = vector.shape_cast %14 : vector<1x128xf32> to vector<1x1x1x128xf32>
    %16 = vector.broadcast %15 : vector<1x1x1x128xf32> to vector<1x8x8x128xf32>
    %17 = arith.mulf %13, %16 : vector<1x8x8x128xf32>
    %c0_37 = arith.constant 0 : index
    %c0_38 = arith.constant 0 : index
    %18 = vector.load %arg3[%c0_37, %c0_38] : memref<1x128xf32, #tpu.memory_space<vmem>>, vector<1x128xf32>
    %19 = vector.shape_cast %18 : vector<1x128xf32> to vector<1x1x1x128xf32>
    %20 = vector.broadcast %19 : vector<1x1x1x128xf32> to vector<1x8x8x128xf32>
    %21 = arith.addf %17, %20 : vector<1x8x8x128xf32>
    %cst_39 = arith.constant 0.000000e+00 : f32
    %22 = vector.broadcast %cst_39 : f32 to vector<1x8x8x128xf32>
    %23 = arith.maximumf %21, %22 : vector<1x8x8x128xf32>
    %24 = arith.truncf %23 : vector<1x8x8x128xf32> to vector<1x8x8x128xbf16>
    %c0_40 = arith.constant 0 : index
    %c1 = arith.constant 1 : index
    %c8 = arith.constant 8 : index
    %c0_41 = arith.constant 0 : index
    %25 = vector.load %arg9[%c0_40, %c1, %c8, %c0_41] : memref<1x10x24x128xbf16, #tpu.memory_space<vmem>>, vector<1x8x8x128xbf16>
    tpu.vector_store %arg9[%c0_40, %c1, %c8, %c0_41], %24 {strides = array<i32>} : memref<1x10x24x128xbf16, #tpu.memory_space<vmem>>, vector<1x8x8x128xbf16>,
    %c0_42 = arith.constant 0 : index
    %c0_43 = arith.constant 0 : index
    %c7_44 = arith.constant 7 : index
    %c0_45 = arith.constant 0 : index
    %26 = vector.load %arg9[%c0_42, %c0_43, %c7_44, %c0_45] : memref<1x10x24x128xbf16, #tpu.memory_space<vmem>>, vector<1x8x8x128xbf16>
    %27 = vector.shape_cast %26 : vector<1x8x8x128xbf16> to vector<64x128xbf16>
    %c0_46 = arith.constant 0 : index
    %c1_47 = arith.constant 1 : index
    %c7_48 = arith.constant 7 : index
    %c0_49 = arith.constant 0 : index
    %28 = vector.load %arg9[%c0_46, %c1_47, %c7_48, %c0_49] : memref<1x10x24x128xbf16, #tpu.memory_space<vmem>>, vector<1x8x8x128xbf16>
    %29 = vector.shape_cast %28 : vector<1x8x8x128xbf16> to vector<64x128xbf16>
    %c0_50 = arith.constant 0 : index
    %c2 = arith.constant 2 : index
    %c7_51 = arith.constant 7 : index
    %c0_52 = arith.constant 0 : index
    %30 = vector.load %arg9[%c0_50, %c2, %c7_51, %c0_52] : memref<1x10x24x128xbf16, #tpu.memory_space<vmem>>, vector<1x8x8x128xbf16>
    %31 = vector.shape_cast %30 : vector<1x8x8x128xbf16> to vector<64x128xbf16>
    %32 = tpu.concatenate %27, %29, %31 in 1 : vector<64x128xbf16>, vector<64x128xbf16>, vector<64x128xbf16> -> vector<64x384xbf16>
    %c0_53 = arith.constant 0 : index
    %c0_54 = arith.constant 0 : index
    %c0_55 = arith.constant 0 : index
    %33 = vector.load %arg6[%c0_53, %c0_54, %c0_55] : memref<3x384x128xbf16, #tpu.memory_space<vmem>>, vector<1x384x128xbf16>
    %34 = vector.shape_cast %33 : vector<1x384x128xbf16> to vector<384x128xbf16>
    %cst_56 = arith.constant dense<0.000000e+00> : vector<64x128xf32>
    %35 = tpu.matmul %32, %34, %cst_56 {dimension_numbers = #tpu.dot_dimension_numbers<[1], [0], [0], [1], [0, 0, 1, 1], [], []>} : vector<64x384xbf16>, vector<384x128xbf16>, vector<64x128xf32> -> vector<64x128xf32>
    %c0_57 = arith.constant 0 : index
    %c0_58 = arith.constant 0 : index
    %c8_59 = arith.constant 8 : index
    %c0_60 = arith.constant 0 : index
    %36 = vector.load %arg9[%c0_57, %c0_58, %c8_59, %c0_60] : memref<1x10x24x128xbf16, #tpu.memory_space<vmem>>, vector<1x8x8x128xbf16>
    %37 = vector.shape_cast %36 : vector<1x8x8x128xbf16> to vector<64x128xbf16>
    %c0_61 = arith.constant 0 : index
    %c1_62 = arith.constant 1 : index
    %c8_63 = arith.constant 8 : index
    %c0_64 = arith.constant 0 : index
    %38 = vector.load %arg9[%c0_61, %c1_62, %c8_63, %c0_64] : memref<1x10x24x128xbf16, #tpu.memory_space<vmem>>, vector<1x8x8x128xbf16>
    %39 = vector.shape_cast %38 : vector<1x8x8x128xbf16> to vector<64x128xbf16>
    %c0_65 = arith.constant 0 : index
    %c2_66 = arith.constant 2 : index
    %c8_67 = arith.constant 8 : index
    %c0_68 = arith.constant 0 : index
    %40 = vector.load %arg9[%c0_65, %c2_66, %c8_67, %c0_68] : memref<1x10x24x128xbf16, #tpu.memory_space<vmem>>, vector<1x8x8x128xbf16>
    %41 = vector.shape_cast %40 : vector<1x8x8x128xbf16> to vector<64x128xbf16>
    %42 = tpu.concatenate %37, %39, %41 in 1 : vector<64x128xbf16>, vector<64x128xbf16>, vector<64x128xbf16> -> vector<64x384xbf16>
    %c1_69 = arith.constant 1 : index
    %c0_70 = arith.constant 0 : index
    %c0_71 = arith.constant 0 : index
    %43 = vector.load %arg6[%c1_69, %c0_70, %c0_71] : memref<3x384x128xbf16, #tpu.memory_space<vmem>>, vector<1x384x128xbf16>
    %44 = vector.shape_cast %43 : vector<1x384x128xbf16> to vector<384x128xbf16>
    %cst_72 = arith.constant dense<0.000000e+00> : vector<64x128xf32>
    %45 = tpu.matmul %42, %44, %cst_72 {dimension_numbers = #tpu.dot_dimension_numbers<[1], [0], [0], [1], [0, 0, 1, 1], [], []>} : vector<64x384xbf16>, vector<384x128xbf16>, vector<64x128xf32> -> vector<64x128xf32>
    %46 = arith.addf %35, %45 : vector<64x128xf32>
    %c0_73 = arith.constant 0 : index
    %c0_74 = arith.constant 0 : index
    %c9_75 = arith.constant 9 : index
    %c0_76 = arith.constant 0 : index
    %47 = vector.load %arg9[%c0_73, %c0_74, %c9_75, %c0_76] : memref<1x10x24x128xbf16, #tpu.memory_space<vmem>>, vector<1x8x8x128xbf16>
    %48 = vector.shape_cast %47 : vector<1x8x8x128xbf16> to vector<64x128xbf16>
    %c0_77 = arith.constant 0 : index
    %c1_78 = arith.constant 1 : index
    %c9_79 = arith.constant 9 : index
    %c0_80 = arith.constant 0 : index
    %49 = vector.load %arg9[%c0_77, %c1_78, %c9_79, %c0_80] : memref<1x10x24x128xbf16, #tpu.memory_space<vmem>>, vector<1x8x8x128xbf16>
    %50 = vector.shape_cast %49 : vector<1x8x8x128xbf16> to vector<64x128xbf16>
    %c0_81 = arith.constant 0 : index
    %c2_82 = arith.constant 2 : index
    %c9_83 = arith.constant 9 : index
    %c0_84 = arith.constant 0 : index
    %51 = vector.load %arg9[%c0_81, %c2_82, %c9_83, %c0_84] : memref<1x10x24x128xbf16, #tpu.memory_space<vmem>>, vector<1x8x8x128xbf16>
    %52 = vector.shape_cast %51 : vector<1x8x8x128xbf16> to vector<64x128xbf16>
    %53 = tpu.concatenate %48, %50, %52 in 1 : vector<64x128xbf16>, vector<64x128xbf16>, vector<64x128xbf16> -> vector<64x384xbf16>
    %c2_85 = arith.constant 2 : index
    %c0_86 = arith.constant 0 : index
    %c0_87 = arith.constant 0 : index
    %54 = vector.load %arg6[%c2_85, %c0_86, %c0_87] : memref<3x384x128xbf16, #tpu.memory_space<vmem>>, vector<1x384x128xbf16>
    %55 = vector.shape_cast %54 : vector<1x384x128xbf16> to vector<384x128xbf16>
    %cst_88 = arith.constant dense<0.000000e+00> : vector<64x128xf32>
    %56 = tpu.matmul %53, %55, %cst_88 {dimension_numbers = #tpu.dot_dimension_numbers<[1], [0], [0], [1], [0, 0, 1, 1], [], []>} : vector<64x384xbf16>, vector<384x128xbf16>, vector<64x128xf32> -> vector<64x128xf32>
    %57 = arith.addf %46, %56 : vector<64x128xf32>
    %58 = vector.shape_cast %57 : vector<64x128xf32> to vector<1x8x8x128xf32>
    %c0_89 = arith.constant 0 : index
    %c0_90 = arith.constant 0 : index
    %59 = vector.load %arg4[%c0_89, %c0_90] : memref<1x128xf32, #tpu.memory_space<vmem>>, vector<1x128xf32>
    %60 = vector.shape_cast %59 : vector<1x128xf32> to vector<1x1x1x128xf32>
    %61 = vector.broadcast %60 : vector<1x1x1x128xf32> to vector<1x8x8x128xf32>
    %62 = arith.mulf %58, %61 : vector<1x8x8x128xf32>
    %c0_91 = arith.constant 0 : index
    %c0_92 = arith.constant 0 : index
    %63 = vector.load %arg5[%c0_91, %c0_92] : memref<1x128xf32, #tpu.memory_space<vmem>>, vector<1x128xf32>
    %64 = vector.shape_cast %63 : vector<1x128xf32> to vector<1x1x1x128xf32>
    %65 = vector.broadcast %64 : vector<1x1x1x128xf32> to vector<1x8x8x128xf32>
    %66 = arith.addf %62, %65 : vector<1x8x8x128xf32>
    %cst_93 = arith.constant 0.000000e+00 : f32
    %67 = vector.broadcast %cst_93 : f32 to vector<1x8x8x128xf32>
    %68 = arith.maximumf %66, %67 : vector<1x8x8x128xf32>
    %69 = arith.truncf %68 : vector<1x8x8x128xf32> to vector<1x8x8x128xbf16>
    %c0_94 = arith.constant 0 : index
    %c1_95 = arith.constant 1 : index
    %c8_96 = arith.constant 8 : index
    %c0_97 = arith.constant 0 : index
    %70 = vector.load %arg10[%c0_94, %c1_95, %c8_96, %c0_97] : memref<1x10x24x128xbf16, #tpu.memory_space<vmem>>, vector<1x8x8x128xbf16>
    tpu.vector_store %arg10[%c0_94, %c1_95, %c8_96, %c0_97], %69 {strides = array<i32>} : memref<1x10x24x128xbf16, #tpu.memory_space<vmem>>, vector<1x8x8x128xbf16>,
    %c0_98 = arith.constant 0 : index
    %c0_99 = arith.constant 0 : index
    %c7_100 = arith.constant 7 : index
    %c0_101 = arith.constant 0 : index
    %71 = vector.load %arg10[%c0_98, %c0_99, %c7_100, %c0_101] : memref<1x10x24x128xbf16, #tpu.memory_space<vmem>>, vector<1x8x8x128xbf16>
    %72 = vector.shape_cast %71 : vector<1x8x8x128xbf16> to vector<64x128xbf16>
    %c0_102 = arith.constant 0 : index
    %c1_103 = arith.constant 1 : index
    %c7_104 = arith.constant 7 : index
    %c0_105 = arith.constant 0 : index
    %73 = vector.load %arg10[%c0_102, %c1_103, %c7_104, %c0_105] : memref<1x10x24x128xbf16, #tpu.memory_space<vmem>>, vector<1x8x8x128xbf16>
    %74 = vector.shape_cast %73 : vector<1x8x8x128xbf16> to vector<64x128xbf16>
    %c0_106 = arith.constant 0 : index
    %c2_107 = arith.constant 2 : index
    %c7_108 = arith.constant 7 : index
    %c0_109 = arith.constant 0 : index
    %75 = vector.load %arg10[%c0_106, %c2_107, %c7_108, %c0_109] : memref<1x10x24x128xbf16, #tpu.memory_space<vmem>>, vector<1x8x8x128xbf16>
    %76 = vector.shape_cast %75 : vector<1x8x8x128xbf16> to vector<64x128xbf16>
    %77 = tpu.concatenate %72, %74, %76 in 1 : vector<64x128xbf16>, vector<64x128xbf16>, vector<64x128xbf16> -> vector<64x384xbf16>
    %c0_110 = arith.constant 0 : index
    %c0_111 = arith.constant 0 : index
    %c0_112 = arith.constant 0 : index
    %78 = vector.load %arg7[%c0_110, %c0_111, %c0_112] : memref<3x384x128xbf16, #tpu.memory_space<vmem>>, vector<1x384x128xbf16>
    %79 = vector.shape_cast %78 : vector<1x384x128xbf16> to vector<384x128xbf16>
    %cst_113 = arith.constant dense<0.000000e+00> : vector<64x128xf32>
    %80 = tpu.matmul %77, %79, %cst_113 {dimension_numbers = #tpu.dot_dimension_numbers<[1], [0], [0], [1], [0, 0, 1, 1], [], []>} : vector<64x384xbf16>, vector<384x128xbf16>, vector<64x128xf32> -> vector<64x128xf32>
    %c0_114 = arith.constant 0 : index
    %c0_115 = arith.constant 0 : index
    %c8_116 = arith.constant 8 : index
    %c0_117 = arith.constant 0 : index
    %81 = vector.load %arg10[%c0_114, %c0_115, %c8_116, %c0_117] : memref<1x10x24x128xbf16, #tpu.memory_space<vmem>>, vector<1x8x8x128xbf16>
    %82 = vector.shape_cast %81 : vector<1x8x8x128xbf16> to vector<64x128xbf16>
    %c0_118 = arith.constant 0 : index
    %c1_119 = arith.constant 1 : index
    %c8_120 = arith.constant 8 : index
    %c0_121 = arith.constant 0 : index
    %83 = vector.load %arg10[%c0_118, %c1_119, %c8_120, %c0_121] : memref<1x10x24x128xbf16, #tpu.memory_space<vmem>>, vector<1x8x8x128xbf16>
    %84 = vector.shape_cast %83 : vector<1x8x8x128xbf16> to vector<64x128xbf16>
    %c0_122 = arith.constant 0 : index
    %c2_123 = arith.constant 2 : index
    %c8_124 = arith.constant 8 : index
    %c0_125 = arith.constant 0 : index
    %85 = vector.load %arg10[%c0_122, %c2_123, %c8_124, %c0_125] : memref<1x10x24x128xbf16, #tpu.memory_space<vmem>>, vector<1x8x8x128xbf16>
    %86 = vector.shape_cast %85 : vector<1x8x8x128xbf16> to vector<64x128xbf16>
    %87 = tpu.concatenate %82, %84, %86 in 1 : vector<64x128xbf16>, vector<64x128xbf16>, vector<64x128xbf16> -> vector<64x384xbf16>
    %c1_126 = arith.constant 1 : index
    %c0_127 = arith.constant 0 : index
    %c0_128 = arith.constant 0 : index
    %88 = vector.load %arg7[%c1_126, %c0_127, %c0_128] : memref<3x384x128xbf16, #tpu.memory_space<vmem>>, vector<1x384x128xbf16>
    %89 = vector.shape_cast %88 : vector<1x384x128xbf16> to vector<384x128xbf16>
    %cst_129 = arith.constant dense<0.000000e+00> : vector<64x128xf32>
    %90 = tpu.matmul %87, %89, %cst_129 {dimension_numbers = #tpu.dot_dimension_numbers<[1], [0], [0], [1], [0, 0, 1, 1], [], []>} : vector<64x384xbf16>, vector<384x128xbf16>, vector<64x128xf32> -> vector<64x128xf32>
    %91 = arith.addf %80, %90 : vector<64x128xf32>
    %c0_130 = arith.constant 0 : index
    %c0_131 = arith.constant 0 : index
    %c9_132 = arith.constant 9 : index
    %c0_133 = arith.constant 0 : index
    %92 = vector.load %arg10[%c0_130, %c0_131, %c9_132, %c0_133] : memref<1x10x24x128xbf16, #tpu.memory_space<vmem>>, vector<1x8x8x128xbf16>
    %93 = vector.shape_cast %92 : vector<1x8x8x128xbf16> to vector<64x128xbf16>
    %c0_134 = arith.constant 0 : index
    %c1_135 = arith.constant 1 : index
    %c9_136 = arith.constant 9 : index
    %c0_137 = arith.constant 0 : index
    %94 = vector.load %arg10[%c0_134, %c1_135, %c9_136, %c0_137] : memref<1x10x24x128xbf16, #tpu.memory_space<vmem>>, vector<1x8x8x128xbf16>
    %95 = vector.shape_cast %94 : vector<1x8x8x128xbf16> to vector<64x128xbf16>
    %c0_138 = arith.constant 0 : index
    %c2_139 = arith.constant 2 : index
    %c9_140 = arith.constant 9 : index
    %c0_141 = arith.constant 0 : index
    %96 = vector.load %arg10[%c0_138, %c2_139, %c9_140, %c0_141] : memref<1x10x24x128xbf16, #tpu.memory_space<vmem>>, vector<1x8x8x128xbf16>
    %97 = vector.shape_cast %96 : vector<1x8x8x128xbf16> to vector<64x128xbf16>
    %98 = tpu.concatenate %93, %95, %97 in 1 : vector<64x128xbf16>, vector<64x128xbf16>, vector<64x128xbf16> -> vector<64x384xbf16>
    %c2_142 = arith.constant 2 : index
    %c0_143 = arith.constant 0 : index
    %c0_144 = arith.constant 0 : index
    %99 = vector.load %arg7[%c2_142, %c0_143, %c0_144] : memref<3x384x128xbf16, #tpu.memory_space<vmem>>, vector<1x384x128xbf16>
    %100 = vector.shape_cast %99 : vector<1x384x128xbf16> to vector<384x128xbf16>
    %cst_145 = arith.constant dense<0.000000e+00> : vector<64x128xf32>
    %101 = tpu.matmul %98, %100, %cst_145 {dimension_numbers = #tpu.dot_dimension_numbers<[1], [0], [0], [1], [0, 0, 1, 1], [], []>} : vector<64x384xbf16>, vector<384x128xbf16>, vector<64x128xf32> -> vector<64x128xf32>
    %102 = arith.addf %91, %101 : vector<64x128xf32>
    %103 = vector.shape_cast %13 : vector<1x8x8x128xf32> to vector<64x128xf32>
    %104 = arith.addf %102, %103 : vector<64x128xf32>
    %105 = vector.shape_cast %104 : vector<64x128xf32> to vector<1x8x8x128xf32>
    %106 = arith.truncf %105 : vector<1x8x8x128xf32> to vector<1x8x8x128xbf16>
    %c0_146 = arith.constant 0 : index
    %c0_147 = arith.constant 0 : index
    %c0_148 = arith.constant 0 : index
    %c0_149 = arith.constant 0 : index
    %107 = vector.load %arg8[%c0_146, %c0_147, %c0_148, %c0_149] : memref<1x8x8x128xbf16, #tpu.memory_space<vmem>>, vector<1x8x8x128xbf16>
    tpu.vector_store %arg8[%c0_146, %c0_147, %c0_148, %c0_149], %106 {strides = array<i32>} : memref<1x8x8x128xbf16, #tpu.memory_space<vmem>>, vector<1x8x8x128xbf16>,
    return
  }
  func.func @transform_0(%arg0: i32) -> (i32, i32, i32, i32) {
    %c0_i32 = arith.constant 0 : i32
    %c0_i32_0 = arith.constant 0 : i32
    %c0_i32_1 = arith.constant 0 : i32
    %c0_i32_2 = arith.constant 0 : i32
    return %arg0, %c0_i32, %c0_i32_0, %c0_i32_1 : i32, i32, i32, i32
  }
  func.func @transform_1(%arg0: i32) -> (i32, i32) {
    %c0_i32 = arith.constant 0 : i32
    %c0_i32_0 = arith.constant 0 : i32
    %c0_i32_1 = arith.constant 0 : i32
    return %c0_i32, %c0_i32_0 : i32, i32
  }
  func.func @transform_2(%arg0: i32) -> (i32, i32) {
    %c0_i32 = arith.constant 0 : i32
    %c0_i32_0 = arith.constant 0 : i32
    %c0_i32_1 = arith.constant 0 : i32
    return %c0_i32, %c0_i32_0 : i32, i32
  }
  func.func @transform_3(%arg0: i32) -> (i32, i32) {
    %c0_i32 = arith.constant 0 : i32
    %c0_i32_0 = arith.constant 0 : i32
    %c0_i32_1 = arith.constant 0 : i32
    return %c0_i32, %c0_i32_0 : i32, i32
  }
  func.func @transform_4(%arg0: i32) -> (i32, i32) {
    %c0_i32 = arith.constant 0 : i32
    %c0_i32_0 = arith.constant 0 : i32
    %c0_i32_1 = arith.constant 0 : i32
    return %c0_i32, %c0_i32_0 : i32, i32
  }
  func.func @transform_5(%arg0: i32) -> (i32, i32, i32) {
    %c0_i32 = arith.constant 0 : i32
    %c0_i32_0 = arith.constant 0 : i32
    %c0_i32_1 = arith.constant 0 : i32
    %c0_i32_2 = arith.constant 0 : i32
    return %c0_i32, %c0_i32_0, %c0_i32_1 : i32, i32, i32
  }
  func.func @transform_6(%arg0: i32) -> (i32, i32, i32) {
    %c0_i32 = arith.constant 0 : i32
    %c0_i32_0 = arith.constant 0 : i32
    %c0_i32_1 = arith.constant 0 : i32
    %c0_i32_2 = arith.constant 0 : i32
    return %c0_i32, %c0_i32_0, %c0_i32_1 : i32, i32, i32
  }
  func.func @transform_7(%arg0: i32) -> (i32, i32, i32, i32) {
    %c0_i32 = arith.constant 0 : i32
    %c0_i32_0 = arith.constant 0 : i32
    %c0_i32_1 = arith.constant 0 : i32
    %c0_i32_2 = arith.constant 0 : i32
    return %arg0, %c0_i32, %c0_i32_0, %c0_i32_1 : i32, i32, i32, i32
  }
}

</mosaic_0001>

<llo_original>
// kernel: network_block_forward.2
$region0: #{network_block_forward.2}
  #allocation0 [shape = 'u32[]', space=smem, size = 0x4, offset = 0x4, fixed_abs, tag = 'smem constant byte address 0x4 - core index']
  #allocation1 [shape = 'u32[144,128]{1,0:T(1,128)}', space=vmem, size = 0x12000, scoped, tag = 'internal scratch']
  #allocation2 [shape = 'bf16[1,9,16,512]{3,2,1,0:T(16,128)(2,1)}', space=vmem, size = 0x24000, scoped, tag = 'scratch operand']
  #allocation3 [shape = 'bf16[1,10,24,128]{3,2,1,0:T(8,128)(2,1)}', space=vmem, size = 0xf000, scoped, tag = 'scratch operand']
  %s0 = inlined_call_operand.vmem [shape: bf16[2,8,8,512], index: 0, kind: input, shape index: {}]
  %s1 = inlined_call_operand.vmem [shape: f32[1,512], index: 1, kind: input, shape index: {}]
  %s2 = inlined_call_operand.vmem [shape: f32[1,512], index: 2, kind: input, shape index: {}]
  %s3 = inlined_call_operand.vmem [shape: f32[1,128], index: 3, kind: input, shape index: {}]
  %s4 = inlined_call_operand.vmem [shape: f32[1,128], index: 4, kind: input, shape index: {}]
  %s5 = inlined_call_operand.vmem [shape: bf16[3,384,128], index: 5, kind: input, shape index: {}]
  %s6 = inlined_call_operand.vmem [shape: bf16[3,384,128], index: 6, kind: input, shape index: {}]
  %s7 = inlined_call_operand.vmem [shape: bf16[128,128], index: 7, kind: input, shape index: {}]
  %s8 = inlined_call_operand.vmem [shape: bf16[2,8,8,128], index: 8, kind: output, shape index: {}]
  %s9 = sld [smem:[#allocation0]]
  $region65: #{network_block_forward.2} parent=0
    _
  %s11 = ssub.s32 1, %s9
  %s12 = scalar_select 0, %s11, %s9
  loop: start=0, step=1, limit=4
  $region2: #{network_block_forward.2} parent=0 // loop_pre_header
    _
  $region3: #{network_block_forward.2} parent=0 // loop_header
    %s14 = sphi 0, %s18
    %p15 = scmp.ge.s32.totalorder %s14, 4
    %s24 = sphi 0, %s26
    %s27 = sphi 0, %s24
    %s28 = sphi 0, %s27
    %s44 = sphi 0, %s28
    %s48 = sphi 0, %s48
    %s50 = sphi 0, %s48
    %s51 = sphi 0, %s50
    %s65 = sphi 0, %s51
    %s69 = sphi 0, %s69
    %s71 = sphi 0, %s69
    %s72 = sphi 0, %s71
    %s86 = sphi 0, %s72
    %s90 = sphi 0, %s90
    %s92 = sphi 0, %s90
    %s93 = sphi 0, %s92
    %s107 = sphi 0, %s93
    %s111 = sphi 0, %s111
    %s113 = sphi 0, %s111
    %s114 = sphi 0, %s113
    %s128 = sphi 0, %s114
    %s132 = sphi 0, %s132
    %s134 = sphi 0, %s132
    %s135 = sphi 0, %s134
    %s149 = sphi 0, %s135
    %s153 = sphi 0, %s153
    %s155 = sphi 0, %s153
    %s156 = sphi 0, %s155
    %s170 = sphi 0, %s156
    %s174 = sphi 0, %s174
    %s176 = sphi 0, %s174
    %s177 = sphi 0, %s176
    %s191 = sphi 0, %s177
    %s197 = sphi 0, %s199
    %s200 = sphi 0, %s197
    %s201 = sphi 0, %s200
    %s217 = sphi 0, %s201
  $region4: #{network_block_forward.2} parent=0 // loop_header_branch
    %17 = sbr.rel (%p15) target = $region8
  $region5: #{network_block_forward.2} parent=0 // loop_body
    %s19 = ssub.s32 %s14, 1
    %s20 = ssub.s32 %s14, 2
    %s21 = sadd.s32 %s14, 1
    %s22 = ssub.s32 %s14, %s21
    %p23 = scmp.eq.s32.totalorder %s22, 0
    %s25 = sadd.s32 %s24, 1
    %s26 = scalar_select %p23, %s24, %s25
    %p29 = pneg %p23
    %p30 = scmp.eq.s32.totalorder %s14, 1
    %p31 = por %p29, %p30
    %p32 = scmp.ne.s32.totalorder %s24, %s27
    %p33 = scmp.eq.s32.totalorder %s14, 0
    %p34 = por %p32, %p33
    %p35 = scmp.ne.s32.totalorder %s24, %s27
    %p36 = scmp.eq.s32.totalorder %s19, 1
    %p37 = por %p35, %p36
    %p38 = scmp.ne.s32.totalorder %s27, %s28
    %p39 = scmp.eq.s32.totalorder %s19, 0
    %p40 = por %p38, %p39
    %p41 = scmp.ne.s32.totalorder %s27, %s28
    %p42 = scmp.eq.s32.totalorder %s20, 1
    %p43 = por %p41, %p42
    %p45 = scmp.ne.s32.totalorder %s28, %s44
    %p46 = scmp.eq.s32.totalorder %s20, 0
    %p47 = por %p45, %p46
    %s49 = sadd.s32 %s48, 1
    %p52 = scmp.eq.s32.totalorder %s14, 1
    %p53 = scmp.ne.s32.totalorder %s48, %s50
    %p54 = scmp.eq.s32.totalorder %s14, 0
    %p55 = por %p53, %p54
    %p56 = scmp.ne.s32.totalorder %s48, %s50
    %p57 = scmp.eq.s32.totalorder %s19, 1
    %p58 = por %p56, %p57
    %p59 = scmp.ne.s32.totalorder %s50, %s51
    %p60 = scmp.eq.s32.totalorder %s19, 0
    %p61 = por %p59, %p60
    %p62 = scmp.ne.s32.totalorder %s50, %s51
    %p63 = scmp.eq.s32.totalorder %s20, 1
    %p64 = por %p62, %p63
    %p66 = scmp.ne.s32.totalorder %s51, %s65
    %p67 = scmp.eq.s32.totalorder %s20, 0
    %p68 = por %p66, %p67
    %s70 = sadd.s32 %s69, 1
    %p73 = scmp.eq.s32.totalorder %s14, 1
    %p74 = scmp.ne.s32.totalorder %s69, %s71
    %p75 = scmp.eq.s32.totalorder %s14, 0
    %p76 = por %p74, %p75
    %p77 = scmp.ne.s32.totalorder %s69, %s71
    %p78 = scmp.eq.s32.totalorder %s19, 1
    %p79 = por %p77, %p78
    %p80 = scmp.ne.s32.totalorder %s71, %s72
    %p81 = scmp.eq.s32.totalorder %s19, 0
    %p82 = por %p80, %p81
    %p83 = scmp.ne.s32.totalorder %s71, %s72
    %p84 = scmp.eq.s32.totalorder %s20, 1
    %p85 = por %p83, %p84
    %p87 = scmp.ne.s32.totalorder %s72, %s86
    %p88 = scmp.eq.s32.totalorder %s20, 0
    %p89 = por %p87, %p88
    %s91 = sadd.s32 %s90, 1
    %p94 = scmp.eq.s32.totalorder %s14, 1
    %p95 = scmp.ne.s32.totalorder %s90, %s92
    %p96 = scmp.eq.s32.totalorder %s14, 0
    %p97 = por %p95, %p96
    %p98 = scmp.ne.s32.totalorder %s90, %s92
    %p99 = scmp.eq.s32.totalorder %s19, 1
    %p100 = por %p98, %p99
    %p101 = scmp.ne.s32.totalorder %s92, %s93
    %p102 = scmp.eq.s32.totalorder %s19, 0
    %p103 = por %p101, %p102
    %p104 = scmp.ne.s32.totalorder %s92, %s93
    %p105 = scmp.eq.s32.totalorder %s20, 1
    %p106 = por %p104, %p105
    %p108 = scmp.ne.s32.totalorder %s93, %s107
    %p109 = scmp.eq.s32.totalorder %s20, 0
    %p110 = por %p108, %p109
    %s112 = sadd.s32 %s111, 1
    %p115 = scmp.eq.s32.totalorder %s14, 1
    %p116 = scmp.ne.s32.totalorder %s111, %s113
    %p117 = scmp.eq.s32.totalorder %s14, 0
    %p118 = por %p116, %p117
    %p119 = scmp.ne.s32.totalorder %s111, %s113
    %p120 = scmp.eq.s32.totalorder %s19, 1
    %p121 = por %p119, %p120
    %p122 = scmp.ne.s32.totalorder %s113, %s114
    %p123 = scmp.eq.s32.totalorder %s19, 0
    %p124 = por %p122, %p123
    %p125 = scmp.ne.s32.totalorder %s113, %s114
    %p126 = scmp.eq.s32.totalorder %s20, 1
    %p127 = por %p125, %p126
    %p129 = scmp.ne.s32.totalorder %s114, %s128
    %p130 = scmp.eq.s32.totalorder %s20, 0
    %p131 = por %p129, %p130
    %s133 = sadd.s32 %s132, 1
    %p136 = scmp.eq.s32.totalorder %s14, 1
    %p137 = scmp.ne.s32.totalorder %s132, %s134
    %p138 = scmp.eq.s32.totalorder %s14, 0
    %p139 = por %p137, %p138
    %p140 = scmp.ne.s32.totalorder %s132, %s134
    %p141 = scmp.eq.s32.totalorder %s19, 1
    %p142 = por %p140, %p141
    %p143 = scmp.ne.s32.totalorder %s134, %s135
    %p144 = scmp.eq.s32.totalorder %s19, 0
    %p145 = por %p143, %p144
    %p146 = scmp.ne.s32.totalorder %s134, %s135
    %p147 = scmp.eq.s32.totalorder %s20, 1
    %p148 = por %p146, %p147
    %p150 = scmp.ne.s32.totalorder %s135, %s149
    %p151 = scmp.eq.s32.totalorder %s20, 0
    %p152 = por %p150, %p151
    %s154 = sadd.s32 %s153, 1
    %p157 = scmp.eq.s32.totalorder %s14, 1
    %p158 = scmp.ne.s32.totalorder %s153, %s155
    %p159 = scmp.eq.s32.totalorder %s14, 0
    %p160 = por %p158, %p159
    %p161 = scmp.ne.s32.totalorder %s153, %s155
    %p162 = scmp.eq.s32.totalorder %s19, 1
    %p163 = por %p161, %p162
    %p164 = scmp.ne.s32.totalorder %s155, %s156
    %p165 = scmp.eq.s32.totalorder %s19, 0
    %p166 = por %p164, %p165
    %p167 = scmp.ne.s32.totalorder %s155, %s156
    %p168 = scmp.eq.s32.totalorder %s20, 1
    %p169 = por %p167, %p168
    %p171 = scmp.ne.s32.totalorder %s156, %s170
    %p172 = scmp.eq.s32.totalorder %s20, 0
    %p173 = por %p171, %p172
    %s175 = sadd.s32 %s174, 1
    %p178 = scmp.eq.s32.totalorder %s14, 1
    %p179 = scmp.ne.s32.totalorder %s174, %s176
    %p180 = scmp.eq.s32.totalorder %s14, 0
    %p181 = por %p179, %p180
    %p182 = scmp.ne.s32.totalorder %s174, %s176
    %p183 = scmp.eq.s32.totalorder %s19, 1
    %p184 = por %p182, %p183
    %p185 = scmp.ne.s32.totalorder %s176, %s177
    %p186 = scmp.eq.s32.totalorder %s19, 0
    %p187 = por %p185, %p186
    %p188 = scmp.ne.s32.totalorder %s176, %s177
    %p189 = scmp.eq.s32.totalorder %s20, 1
    %p190 = por %p188, %p189
    %p192 = scmp.ne.s32.totalorder %s177, %s191
    %p193 = scmp.eq.s32.totalorder %s20, 0
    %p194 = por %p192, %p193
    %s195 = ssub.s32 %s14, %s21
    %p196 = scmp.eq.s32.totalorder %s195, 0
    %s198 = sadd.s32 %s197, 1
    %s199 = scalar_select %p196, %s197, %s198
    %p202 = pneg %p196
    %p203 = scmp.eq.s32.totalorder %s14, 1
    %p204 = por %p202, %p203
    %p205 = scmp.ne.s32.totalorder %s197, %s200
    %p206 = scmp.eq.s32.totalorder %s14, 0
    %p207 = por %p205, %p206
    %p208 = scmp.ne.s32.totalorder %s197, %s200
    %p209 = scmp.eq.s32.totalorder %s19, 1
    %p210 = por %p208, %p209
    %p211 = scmp.ne.s32.totalorder %s200, %s201
    %p212 = scmp.eq.s32.totalorder %s19, 0
    %p213 = por %p211, %p212
    %p214 = scmp.ne.s32.totalorder %s200, %s201
    %p215 = scmp.eq.s32.totalorder %s20, 1
    %p216 = por %p214, %p215
    %p218 = scmp.ne.s32.totalorder %s201, %s217
    %p219 = scmp.eq.s32.totalorder %s20, 0
    %p220 = por %p218, %p219
    %p221 = scmp.le.s32.totalorder 1, %s14
    %p222 = scmp.lt.s32.totalorder %s14, 3
    %p223 = pnand %p221, %p222
    %p224 = pneg %p223
    // Predicated region
    $region9: #{network_block_forward.2} parent=5 // pred_check
      _
    $region10: #{network_block_forward.2} parent=5 // pred_check_branch
      %226 = sbr.rel (%p223) target = $region12
    $region11: #{network_block_forward.2} parent=5 // pred_region
      %s227 = ssub.s32 %s14, 1
      // Predicated region
      $region13: #{network_block_forward.2} parent=11 // pred_check
        %p228 = pneg %p61
      $region14: #{network_block_forward.2} parent=11 // pred_check_branch
        %230 = sbr.rel (%p228) target = $region16
      $region15: #{network_block_forward.2} parent=11 // pred_region
        _
      $region16: #{network_block_forward.2} parent=11 // pred_fallthru
        _
      // Predicated region
      $region17: #{network_block_forward.2} parent=11 // pred_check
        %p231 = pneg %p82
      $region18: #{network_block_forward.2} parent=11 // pred_check_branch
        %233 = sbr.rel (%p231) target = $region20
      $region19: #{network_block_forward.2} parent=11 // pred_region
        _
      $region20: #{network_block_forward.2} parent=11 // pred_fallthru
        _
      // Predicated region
      $region21: #{network_block_forward.2} parent=11 // pred_check
        %p234 = pneg %p103
      $region22: #{network_block_forward.2} parent=11 // pred_check_branch
        %236 = sbr.rel (%p234) target = $region24
      $region23: #{network_block_forward.2} parent=11 // pred_region
        _
      $region24: #{network_block_forward.2} parent=11 // pred_fallthru
        _
      // Predicated region
      $region25: #{network_block_forward.2} parent=11 // pred_check
        %p237 = pneg %p124
      $region26: #{network_block_forward.2} parent=11 // pred_check_branch
        %239 = sbr.rel (%p237) target = $region28
      $region27: #{network_block_forward.2} parent=11 // pred_region
        _
      $region28: #{network_block_forward.2} parent=11 // pred_fallthru
        _
      // Predicated region
      $region29: #{network_block_forward.2} parent=11 // pred_check
        %p240 = pneg %p145
      $region30: #{network_block_forward.2} parent=11 // pred_check_branch
        %242 = sbr.rel (%p240) target = $region32
      $region31: #{network_block_forward.2} parent=11 // pred_region
        _
      $region32: #{network_block_forward.2} parent=11 // pred_fallthru
        _
      // Predicated region
      $region33: #{network_block_forward.2} parent=11 // pred_check
        %p243 = pneg %p166
      $region34: #{network_block_forward.2} parent=11 // pred_check_branch
        %245 = sbr.rel (%p243) target = $region36
      $region35: #{network_block_forward.2} parent=11 // pred_region
        _
      $region36: #{network_block_forward.2} parent=11 // pred_fallthru
        _
      // Predicated region
      $region37: #{network_block_forward.2} parent=11 // pred_check
        %p246 = pneg %p187
      $region38: #{network_block_forward.2} parent=11 // pred_check_branch
        %248 = sbr.rel (%p246) target = $region40
      $region39: #{network_block_forward.2} parent=11 // pred_region
        _
      $region40: #{network_block_forward.2} parent=11 // pred_fallthru
        _
    $region12: #{network_block_forward.2} parent=5 // pred_fallthru
      _
    %p249 = scmp.lt.s32.totalorder %s14, 2
    // Predicated region
    $region41: #{network_block_forward.2} parent=5 // pred_check
      %p250 = pneg %p249
    $region42: #{network_block_forward.2} parent=5 // pred_check_branch
      %252 = sbr.rel (%p250) target = $region44
    $region43: #{network_block_forward.2} parent=5 // pred_region
      // Predicated region
      $region45: #{network_block_forward.2} parent=43 // pred_check
        %p253 = pneg %p34
      $region46: #{network_block_forward.2} parent=43 // pred_check_branch
        %255 = sbr.rel (%p253) target = $region48
      $region47: #{network_block_forward.2} parent=43 // pred_region
        %p256 = scmp.lt.s32.totalorder %s14, 1
        %s257 = scalar_select %p256, %s14, 1
        %s258 = smul.addr %s257, 32
        %s259 = smul.addr %s258, 4
        %s260 = scalar_lea.vmem %s0, %s259
      $region48: #{network_block_forward.2} parent=43 // pred_fallthru
        _
    $region44: #{network_block_forward.2} parent=5 // pred_fallthru
      _
    %p261 = scmp.le.s32.totalorder 1, %s14
    %p262 = scmp.lt.s32.totalorder %s14, 3
    %p263 = pnand %p261, %p262
    %p264 = pneg %p263
    // Predicated region
    $region49: #{network_block_forward.2} parent=5 // pred_check
      _
    $region50: #{network_block_forward.2} parent=5 // pred_check_branch
      %266 = sbr.rel (%p263) target = $region52
    $region51: #{network_block_forward.2} parent=5 // pred_region
      %s267 = ssub.s32 %s14, 1
      %p268 = scmp.lt.s32.totalorder %s19, 1
      %s269 = scalar_select %p268, %s19, 1
      %s270 = smul.addr %s269, 32
      %s271 = smul.addr %s270, 4
      %s272 = scalar_lea.vmem %s0, %s271
      %p273 = pneg %p40
      %p274 = pneg %p37
      %p275 = pneg %p61
      %p276 = pneg %p58
      %p277 = pneg %p82
      %p278 = pneg %p79
      %p279 = pneg %p103
      %p280 = pneg %p100
      %p281 = pneg %p124
      %p282 = pneg %p121
      %p283 = pneg %p145
      %p284 = pneg %p142
      %p285 = pneg %p166
      %p286 = pneg %p163
      %p287 = pneg %p187
      %p288 = pneg %p184
      %p289 = pneg %p213
      %p290 = pneg %p210
      %p291 = scmp.lt.s32.totalorder %s19, 1
      %s292 = scalar_select %p291, %s19, 1
      %s293 = smul.addr %s292, 8
      %s294 = smul.addr %s293, 4
      %s295 = scalar_lea.vmem %s8, %s294
      %p296 = scmp.lt.s32.totalorder %s19, 1
      %s297 = scalar_select %p296, %s19, 1
      %s298 = smul.addr %s297, 32
      %s299 = smul.addr %s298, 4
      %s300 = scalar_lea.vmem %s0, %s299
      %p301 = scmp.lt.s32.totalorder %s19, 1
      %s302 = scalar_select %p301, %s19, 1
      %s303 = smul.addr %s302, 8
      %s304 = smul.addr %s303, 4
      %s305 = scalar_lea.vmem %s8, %s304
      %307 = vst [vmem:[#allocation2] sm:$0xff] 0
      %308 = vst [vmem:[#allocation2 + $0x8] sm:$0xff] 0
      %309 = vst [vmem:[#allocation2 + $0x10] sm:$0xff] 0
      %310 = vst [vmem:[#allocation2 + $0x18] sm:$0xff] 0
      %vm311 = vcmask 1043459
      %vm312 = vsmask.f32 7950
      %vm313 = vmand %vm311, %vm312
      %v314 = vld [vmem:[#allocation2] sm:$0x8]
      %v315 = vsel %vm313, 0, %v314
      %316 = vst [vmem:[#allocation2] sm:$0x8] %v315
      %v317 = vld [vmem:[#allocation2 + $0x8] sm:$0x8]
      %v318 = vsel %vm313, 0, %v317
      %319 = vst [vmem:[#allocation2 + $0x8] sm:$0x8] %v318
      %v320 = vld [vmem:[#allocation2 + $0x10] sm:$0x8]
      %v321 = vsel %vm313, 0, %v320
      %322 = vst [vmem:[#allocation2 + $0x10] sm:$0x8] %v321
      %v323 = vld [vmem:[#allocation2 + $0x18] sm:$0x8]
      %v324 = vsel %vm313, 0, %v323
      %325 = vst [vmem:[#allocation2 + $0x18] sm:$0x8] %v324
      %v326 = vld [vmem:[#allocation2 + $0x20] sm:$0x8]
      %v327 = vsel %vm313, 0, %v326
      %328 = vst [vmem:[#allocation2 + $0x20] sm:$0x8] %v327
      %v329 = vld [vmem:[#allocation2 + $0x28] sm:$0x8]
      %v330 = vsel %vm313, 0, %v329
      %331 = vst [vmem:[#allocation2 + $0x28] sm:$0x8] %v330
      %v332 = vld [vmem:[#allocation2 + $0x30] sm:$0x8]
      %v333 = vsel %vm313, 0, %v332
      %334 = vst [vmem:[#allocation2 + $0x30] sm:$0x8] %v333
      %v335 = vld [vmem:[#allocation2 + $0x38] sm:$0x8]
      %v336 = vsel %vm313, 0, %v335
      %337 = vst [vmem:[#allocation2 + $0x38] sm:$0x8] %v336
      %v338 = vld [vmem:[#allocation2 + $0x40] sm:$0x8]
      %v339 = vsel %vm313, 0, %v338
      %340 = vst [vmem:[#allocation2 + $0x40] sm:$0x8] %v339
      %v341 = vld [vmem:[#allocation2 + $0x48] sm:$0x8]
      %v342 = vsel %vm313, 0, %v341
      %343 = vst [vmem:[#allocation2 + $0x48] sm:$0x8] %v342
      %v344 = vld [vmem:[#allocation2 + $0x50] sm:$0x8]
      %v345 = vsel %vm313, 0, %v344
      %346 = vst [vmem:[#allocation2 + $0x50] sm:$0x8] %v345
      %v347 = vld [vmem:[#allocation2 + $0x58] sm:$0x8]
      %v348 = vsel %vm313, 0, %v347
      %349 = vst [vmem:[#allocation2 + $0x58] sm:$0x8] %v348
      %v350 = vld [vmem:[#allocation2 + $0x60] sm:$0x8]
      %v351 = vsel %vm313, 0, %v350
      %352 = vst [vmem:[#allocation2 + $0x60] sm:$0x8] %v351
      %v353 = vld [vmem:[#allocation2 + $0x68] sm:$0x8]
      %v354 = vsel %vm313, 0, %v353
      %355 = vst [vmem:[#allocation2 + $0x68] sm:$0x8] %v354
      %v356 = vld [vmem:[#allocation2 + $0x70] sm:$0x8]
      %v357 = vsel %vm313, 0, %v356
      %358 = vst [vmem:[#allocation2 + $0x70] sm:$0x8] %v357
      %v359 = vld [vmem:[#allocation2 + $0x78] sm:$0x8]
      %v360 = vsel %vm313, 0, %v359
      %361 = vst [vmem:[#allocation2 + $0x78] sm:$0x8] %v360
      %v362 = vld [vmem:[#allocation2 + $0x80] sm:$0x8]
      %v363 = vsel %vm313, 0, %v362
      %364 = vst [vmem:[#allocation2 + $0x80] sm:$0x8] %v363
      %v365 = vld [vmem:[#allocation2 + $0x88] sm:$0x8]
      %v366 = vsel %vm313, 0, %v365
      %367 = vst [vmem:[#allocation2 + $0x88] sm:$0x8] %v366
      %v368 = vld [vmem:[#allocation2 + $0x90] sm:$0x8]
      %v369 = vsel %vm313, 0, %v368
      %370 = vst [vmem:[#allocation2 + $0x90] sm:$0x8] %v369
      %v371 = vld [vmem:[#allocation2 + $0x98] sm:$0x8]
      %v372 = vsel %vm313, 0, %v371
      %373 = vst [vmem:[#allocation2 + $0x98] sm:$0x8] %v372
      %v374 = vld [vmem:[#allocation2 + $0xa0] sm:$0x8]
      %v375 = vsel %vm313, 0, %v374
      %376 = vst [vmem:[#allocation2 + $0xa0] sm:$0x8] %v375
      %v377 = vld [vmem:[#allocation2 + $0xa8] sm:$0x8]
      %v378 = vsel %vm313, 0, %v377
      %379 = vst [vmem:[#allocation2 + $0xa8] sm:$0x8] %v378
      %v380 = vld [vmem:[#allocation2 + $0xb0] sm:$0x8]
      %v381 = vsel %vm313, 0, %v380
      %382 = vst [vmem:[#allocation2 + $0xb0] sm:$0x8] %v381
      %v383 = vld [vmem:[#allocation2 + $0xb8] sm:$0x8]
      %v384 = vsel %vm313, 0, %v383
      %385 = vst [vmem:[#allocation2 + $0xb8] sm:$0x8] %v384
      %v386 = vld [vmem:[#allocation2 + $0xc0] sm:$0x8]
      %v387 = vsel %vm313, 0, %v386
      %388 = vst [vmem:[#allocation2 + $0xc0] sm:$0x8] %v387
      %v389 = vld [vmem:[#allocation2 + $0xc8] sm:$0x8]
      %v390 = vsel %vm313, 0, %v389
      %391 = vst [vmem:[#allocation2 + $0xc8] sm:$0x8] %v390
      %v392 = vld [vmem:[#allocation2 + $0xd0] sm:$0x8]
      %v393 = vsel %vm313, 0, %v392
      %394 = vst [vmem:[#allocation2 + $0xd0] sm:$0x8] %v393
      %v395 = vld [vmem:[#allocation2 + $0xd8] sm:$0x8]
      %v396 = vsel %vm313, 0, %v395
      %397 = vst [vmem:[#allocation2 + $0xd8] sm:$0x8] %v396
      %v398 = vld [vmem:[#allocation2 + $0xe0] sm:$0x8]
      %v399 = vsel %vm313, 0, %v398
      %400 = vst [vmem:[#allocation2 + $0xe0] sm:$0x8] %v399
      %v401 = vld [vmem:[#allocation2 + $0xe8] sm:$0x8]
      %v402 = vsel %vm313, 0, %v401
      %403 = vst [vmem:[#allocation2 + $0xe8] sm:$0x8] %v402
      %v404 = vld [vmem:[#allocation2 + $0xf0] sm:$0x8]
      %v405 = vsel %vm313, 0, %v404
      %406 = vst [vmem:[#allocation2 + $0xf0] sm:$0x8] %v405
      %v407 = vld [vmem:[#allocation2 + $0xf8] sm:$0x8]
      %v408 = vsel %vm313, 0, %v407
      %409 = vst [vmem:[#allocation2 + $0xf8] sm:$0x8] %v408
      %v410 = vld [vmem:[#allocation2 + $0x100] sm:$0x8]
      %v411 = vsel %vm313, 0, %v410
      %412 = vst [vmem:[#allocation2 + $0x100] sm:$0x8] %v411
      %v413 = vld [vmem:[#allocation2 + $0x108] sm:$0x8]
      %v414 = vsel %vm313, 0, %v413
      %415 = vst [vmem:[#allocation2 + $0x108] sm:$0x8] %v414
      %v416 = vld [vmem:[#allocation2 + $0x110] sm:$0x8]
      %v417 = vsel %vm313, 0, %v416
      %418 = vst [vmem:[#allocation2 + $0x110] sm:$0x8] %v417
      %v419 = vld [vmem:[#allocation2 + $0x118] sm:$0x8]
      %v420 = vsel %vm313, 0, %v419
      %421 = vst [vmem:[#allocation2 + $0x118] sm:$0x8] %v420
      %422 = vst [vmem:[#allocation3] sm:$0xf] 0
      %423 = vst [vmem:[#allocation3 + $0x4] sm:$0xf] 0
      %424 = vst [vmem:[#allocation3 + $0x8] sm:$0xf] 0
      %s425 = scalar_lea.vmem [#allocation3], 108
      %426 = vst [vmem:[%s425] sm:$0xf] 0
      %427 = vst [vmem:[%s425 + $0x4] sm:$0xf] 0
      %428 = vst [vmem:[%s425 + $0x8] sm:$0xf] 0
      %v429 = vld [vmem:[#allocation3] sm:$0x8]
      %v430 = vsel %vm313, 0, %v429
      %431 = vst [vmem:[#allocation3] sm:$0x8] %v430
      %v432 = vld [vmem:[#allocation3 + $0xc] sm:$0x8]
      %v433 = vsel %vm313, 0, %v432
      %434 = vst [vmem:[#allocation3 + $0xc] sm:$0x8] %v433
      %v435 = vld [vmem:[#allocation3 + $0x18] sm:$0x8]
      %v436 = vsel %vm313, 0, %v435
      %437 = vst [vmem:[#allocation3 + $0x18] sm:$0x8] %v436
      %v438 = vld [vmem:[#allocation3 + $0x24] sm:$0x8]
      %v439 = vsel %vm313, 0, %v438
      %440 = vst [vmem:[#allocation3 + $0x24] sm:$0x8] %v439
      %v441 = vld [vmem:[#allocation3 + $0x30] sm:$0x8]
      %v442 = vsel %vm313, 0, %v441
      %443 = vst [vmem:[#allocation3 + $0x30] sm:$0x8] %v442
      %v444 = vld [vmem:[#allocation3 + $0x3c] sm:$0x8]
      %v445 = vsel %vm313, 0, %v444
      %446 = vst [vmem:[#allocation3 + $0x3c] sm:$0x8] %v445
      %v447 = vld [vmem:[#allocation3 + $0x48] sm:$0x8]
      %v448 = vsel %vm313, 0, %v447
      %449 = vst [vmem:[#allocation3 + $0x48] sm:$0x8] %v448
      %v450 = vld [vmem:[#allocation3 + $0x54] sm:$0x8]
      %v451 = vsel %vm313, 0, %v450
      %452 = vst [vmem:[#allocation3 + $0x54] sm:$0x8] %v451
      %v453 = vld [vmem:[#allocation3 + $0x60] sm:$0x8]
      %v454 = vsel %vm313, 0, %v453
      %455 = vst [vmem:[#allocation3 + $0x60] sm:$0x8] %v454
      %v456 = vld [vmem:[#allocation3 + $0x6c] sm:$0x8]
      %v457 = vsel %vm313, 0, %v456
      %458 = vst [vmem:[#allocation3 + $0x6c] sm:$0x8] %v457
      %vm459 = vcmask 1040384
      %vm460 = vsmask.f32 256
      %vm461 = vmand %vm459, %vm460
      %v462 = vld [vmem:[#allocation3 + $0x8] sm:$0x1]
      %v463 = vsel %vm461, 0, %v462
      %464 = vst [vmem:[#allocation3 + $0x8] sm:$0x1] %v463
      %v465 = vld [vmem:[#allocation3 + $0x14] sm:$0x1]
      %v466 = vsel %vm461, 0, %v465
      %467 = vst [vmem:[#allocation3 + $0x14] sm:$0x1] %v466
      %v468 = vld [vmem:[#allocation3 + $0x20] sm:$0x1]
      %v469 = vsel %vm461, 0, %v468
      %470 = vst [vmem:[#allocation3 + $0x20] sm:$0x1] %v469
      %v471 = vld [vmem:[#allocation3 + $0x2c] sm:$0x1]
      %v472 = vsel %vm461, 0, %v471
      %473 = vst [vmem:[#allocation3 + $0x2c] sm:$0x1] %v472
      %v474 = vld [vmem:[#allocation3 + $0x38] sm:$0x1]
      %v475 = vsel %vm461, 0, %v474
      %476 = vst [vmem:[#allocation3 + $0x38] sm:$0x1] %v475
      %v477 = vld [vmem:[#allocation3 + $0x44] sm:$0x1]
      %v478 = vsel %vm461, 0, %v477
      %479 = vst [vmem:[#allocation3 + $0x44] sm:$0x1] %v478
      %v480 = vld [vmem:[#allocation3 + $0x50] sm:$0x1]
      %v481 = vsel %vm461, 0, %v480
      %482 = vst [vmem:[#allocation3 + $0x50] sm:$0x1] %v481
      %v483 = vld [vmem:[#allocation3 + $0x5c] sm:$0x1]
      %v484 = vsel %vm461, 0, %v483
      %485 = vst [vmem:[#allocation3 + $0x5c] sm:$0x1] %v484
      %v486 = vld [vmem:[#allocation3 + $0x68] sm:$0x1]
      %v487 = vsel %vm461, 0, %v486
      %488 = vst [vmem:[#allocation3 + $0x68] sm:$0x1] %v487
      %v489 = vld [vmem:[#allocation3 + $0x74] sm:$0x1]
      %v490 = vsel %vm461, 0, %v489
      %491 = vst [vmem:[#allocation3 + $0x74] sm:$0x1] %v490
      %v492 = vld [vmem:[%s300] sm:$0xff]
      %v493 = vld [vmem:[%s300 + $0x8] sm:$0xff]
      %v494 = vld [vmem:[%s300 + $0x10] sm:$0xff]
      %v495 = vld [vmem:[%s300 + $0x18] sm:$0xff]
      %v496 = vld [vmem:[%s300 + $0x20] sm:$0xff]
      %v497 = vld [vmem:[%s300 + $0x28] sm:$0xff]
      %v498 = vld [vmem:[%s300 + $0x30] sm:$0xff]
      %v499 = vld [vmem:[%s300 + $0x38] sm:$0xff]
      %v500 = vld [vmem:[%s300 + $0x40] sm:$0xff]
      %v501 = vld [vmem:[%s300 + $0x48] sm:$0xff]
      %v502 = vld [vmem:[%s300 + $0x50] sm:$0xff]
      %v503 = vld [vmem:[%s300 + $0x58] sm:$0xff]
      %v504 = vld [vmem:[%s300 + $0x60] sm:$0xff]
      %v505 = vld [vmem:[%s300 + $0x68] sm:$0xff]
      %v506 = vld [vmem:[%s300 + $0x70] sm:$0xff]
      %v507 = vld [vmem:[%s300 + $0x78] sm:$0xff]
      %v508 = vunpack.c.l.bf16 %v492
      %v509 = vunpack.c.h.bf16 %v492
      %v510 = vunpack.c.l.bf16 %v493
      %v511 = vunpack.c.h.bf16 %v493
      %v512 = vunpack.c.l.bf16 %v494
      %v513 = vunpack.c.h.bf16 %v494
      %v514 = vunpack.c.l.bf16 %v495
      %v515 = vunpack.c.h.bf16 %v495
      %v516 = vunpack.c.l.bf16 %v496
      %v517 = vunpack.c.h.bf16 %v496
      %v518 = vunpack.c.l.bf16 %v497
      %v519 = vunpack.c.h.bf16 %v497
      %v520 = vunpack.c.l.bf16 %v498
      %v521 = vunpack.c.h.bf16 %v498
      %v522 = vunpack.c.l.bf16 %v499
      %v523 = vunpack.c.h.bf16 %v499
      %v524 = vunpack.c.l.bf16 %v500
      %v525 = vunpack.c.h.bf16 %v500
      %v526 = vunpack.c.l.bf16 %v501
      %v527 = vunpack.c.h.bf16 %v501
      %v528 = vunpack.c.l.bf16 %v502
      %v529 = vunpack.c.h.bf16 %v502
      %v530 = vunpack.c.l.bf16 %v503
      %v531 = vunpack.c.h.bf16 %v503
      %v532 = vunpack.c.l.bf16 %v504
      %v533 = vunpack.c.h.bf16 %v504
      %v534 = vunpack.c.l.bf16 %v505
      %v535 = vunpack.c.h.bf16 %v505
      %v536 = vunpack.c.l.bf16 %v506
      %v537 = vunpack.c.h.bf16 %v506
      %v538 = vunpack.c.l.bf16 %v507
      %v539 = vunpack.c.h.bf16 %v507
      %v540 = vld [vmem:[%s1] sm:$0xf]
      %v542 = vlaneseq
      %v543 = vshrl.u32 %v542, 7
      %v544 = vsub.s32 0, %v543
      %v545 = vrot.slane %v540, %v544
      %v546 = vlaneseq
      %v547 = vshrl.u32 %v546, 7
      %v548 = vsub.s32 1, %v547
      %v549 = vrot.slane %v540, %v548
      %v550 = vlaneseq
      %v551 = vshrl.u32 %v550, 7
      %v552 = vsub.s32 2, %v551
      %v553 = vrot.slane %v540, %v552
      %v554 = vlaneseq
      %v555 = vshrl.u32 %v554, 7
      %v556 = vsub.s32 3, %v555
      %v557 = vrot.slane %v540, %v556
      %v562 = vmul.f32 %v508, %v545
      %v563 = vmul.f32 %v509, %v549
      %v564 = vmul.f32 %v510, %v553
      %v565 = vmul.f32 %v511, %v557
      %v566 = vmul.f32 %v512, %v545
      %v567 = vmul.f32 %v513, %v549
      %v568 = vmul.f32 %v514, %v553
      %v569 = vmul.f32 %v515, %v557
      %v570 = vmul.f32 %v516, %v545
      %v571 = vmul.f32 %v517, %v549
      %v572 = vmul.f32 %v518, %v553
      %v573 = vmul.f32 %v519, %v557
      %v574 = vmul.f32 %v520, %v545
      %v575 = vmul.f32 %v521, %v549
      %v576 = vmul.f32 %v522, %v553
      %v577 = vmul.f32 %v523, %v557
      %v578 = vmul.f32 %v524, %v545
      %v579 = vmul.f32 %v525, %v549
      %v580 = vmul.f32 %v526, %v553
      %v581 = vmul.f32 %v527, %v557
      %v582 = vmul.f32 %v528, %v545
      %v583 = vmul.f32 %v529, %v549
      %v584 = vmul.f32 %v530, %v553
      %v585 = vmul.f32 %v531, %v557
      %v586 = vmul.f32 %v532, %v545
      %v587 = vmul.f32 %v533, %v549
      %v588 = vmul.f32 %v534, %v553
      %v589 = vmul.f32 %v535, %v557
      %v590 = vmul.f32 %v536, %v545
      %v591 = vmul.f32 %v537, %v549
      %v592 = vmul.f32 %v538, %v553
      %v593 = vmul.f32 %v539, %v557
      %v594 = vld [vmem:[%s2] sm:$0xf]
      %v596 = vlaneseq
      %v597 = vshrl.u32 %v596, 7
      %v598 = vsub.s32 0, %v597
      %v599 = vrot.slane %v594, %v598
      %v600 = vlaneseq
      %v601 = vshrl.u32 %v600, 7
      %v602 = vsub.s32 1, %v601
      %v603 = vrot.slane %v594, %v602
      %v604 = vlaneseq
      %v605 = vshrl.u32 %v604, 7
      %v606 = vsub.s32 2, %v605
      %v607 = vrot.slane %v594, %v606
      %v608 = vlaneseq
      %v609 = vshrl.u32 %v608, 7
      %v610 = vsub.s32 3, %v609
      %v611 = vrot.slane %v594, %v610
      %v616 = vadd.f32 %v562, %v599
      %v617 = vadd.f32 %v563, %v603
      %v618 = vadd.f32 %v564, %v607
      %v619 = vadd.f32 %v565, %v611
      %v620 = vadd.f32 %v566, %v599
      %v621 = vadd.f32 %v567, %v603
      %v622 = vadd.f32 %v568, %v607
      %v623 = vadd.f32 %v569, %v611
      %v624 = vadd.f32 %v570, %v599
      %v625 = vadd.f32 %v571, %v603
      %v626 = vadd.f32 %v572, %v607
      %v627 = vadd.f32 %v573, %v611
      %v628 = vadd.f32 %v574, %v599
      %v629 = vadd.f32 %v575, %v603
      %v630 = vadd.f32 %v576, %v607
      %v631 = vadd.f32 %v577, %v611
      %v632 = vadd.f32 %v578, %v599
      %v633 = vadd.f32 %v579, %v603
      %v634 = vadd.f32 %v580, %v607
      %v635 = vadd.f32 %v581, %v611
      %v636 = vadd.f32 %v582, %v599
      %v637 = vadd.f32 %v583, %v603
      %v638 = vadd.f32 %v584, %v607
      %v639 = vadd.f32 %v585, %v611
      %v640 = vadd.f32 %v586, %v599
      %v641 = vadd.f32 %v587, %v603
      %v642 = vadd.f32 %v588, %v607
      %v643 = vadd.f32 %v589, %v611
      %v644 = vadd.f32 %v590, %v599
      %v645 = vadd.f32 %v591, %v603
      %v646 = vadd.f32 %v592, %v607
      %v647 = vadd.f32 %v593, %v611
      %v648 = vmax.f32 %v616, 0.0
      %v649 = vmax.f32 %v617, 0.0
      %v650 = vmax.f32 %v618, 0.0
      %v651 = vmax.f32 %v619, 0.0
      %v652 = vmax.f32 %v620, 0.0
      %v653 = vmax.f32 %v621, 0.0
      %v654 = vmax.f32 %v622, 0.0
      %v655 = vmax.f32 %v623, 0.0
      %v656 = vmax.f32 %v624, 0.0
      %v657 = vmax.f32 %v625, 0.0
      %v658 = vmax.f32 %v626, 0.0
      %v659 = vmax.f32 %v627, 0.0
      %v660 = vmax.f32 %v628, 0.0
      %v661 = vmax.f32 %v629, 0.0
      %v662 = vmax.f32 %v630, 0.0
      %v663 = vmax.f32 %v631, 0.0
      %v664 = vmax.f32 %v632, 0.0
      %v665 = vmax.f32 %v633, 0.0
      %v666 = vmax.f32 %v634, 0.0
      %v667 = vmax.f32 %v635, 0.0
      %v668 = vmax.f32 %v636, 0.0
      %v669 = vmax.f32 %v637, 0.0
      %v670 = vmax.f32 %v638, 0.0
      %v671 = vmax.f32 %v639, 0.0
      %v672 = vmax.f32 %v640, 0.0
      %v673 = vmax.f32 %v641, 0.0
      %v674 = vmax.f32 %v642, 0.0
      %v675 = vmax.f32 %v643, 0.0
      %v676 = vmax.f32 %v644, 0.0
      %v677 = vmax.f32 %v645, 0.0
      %v678 = vmax.f32 %v646, 0.0
      %v679 = vmax.f32 %v647, 0.0
      %v680 = vpack.c.bf16 %v648, %v648
      %v681 = vpack.c.bf16 %v649, %v649
      %v682 = vpack.c.bf16 %v650, %v650
      %v683 = vpack.c.bf16 %v651, %v651
      %v684 = vpack.c.bf16 %v652, %v652
      %v685 = vpack.c.bf16 %v653, %v653
      %v686 = vpack.c.bf16 %v654, %v654
      %v687 = vpack.c.bf16 %v655, %v655
      %v688 = vpack.c.bf16 %v656, %v656
      %v689 = vpack.c.bf16 %v657, %v657
      %v690 = vpack.c.bf16 %v658, %v658
      %v691 = vpack.c.bf16 %v659, %v659
      %v692 = vpack.c.bf16 %v660, %v660
      %v693 = vpack.c.bf16 %v661, %v661
      %v694 = vpack.c.bf16 %v662, %v662
      %v695 = vpack.c.bf16 %v663, %v663
      %v696 = vpack.c.bf16 %v664, %v664
      %v697 = vpack.c.bf16 %v665, %v665
      %v698 = vpack.c.bf16 %v666, %v666
      %v699 = vpack.c.bf16 %v667, %v667
      %v700 = vpack.c.bf16 %v668, %v668
      %v701 = vpack.c.bf16 %v669, %v669
      %v702 = vpack.c.bf16 %v670, %v670
      %v703 = vpack.c.bf16 %v671, %v671
      %v704 = vpack.c.bf16 %v672, %v672
      %v705 = vpack.c.bf16 %v673, %v673
      %v706 = vpack.c.bf16 %v674, %v674
      %v707 = vpack.c.bf16 %v675, %v675
      %v708 = vpack.c.bf16 %v676, %v676
      %v709 = vpack.c.bf16 %v677, %v677
      %v710 = vpack.c.bf16 %v678, %v678
      %v711 = vpack.c.bf16 %v679, %v679
      %v744 = vrot.slane %v680, 4
      %v745 = vrot.slane %v681, 4
      %v746 = vrot.slane %v682, 4
      %v747 = vrot.slane %v683, 4
      %v748 = vrot.slane %v684, 4
      %v749 = vrot.slane %v685, 4
      %v750 = vrot.slane %v686, 4
      %v751 = vrot.slane %v687, 4
      %v752 = vrot.slane %v688, 4
      %v753 = vrot.slane %v689, 4
      %v754 = vrot.slane %v690, 4
      %v755 = vrot.slane %v691, 4
      %v756 = vrot.slane %v692, 4
      %v757 = vrot.slane %v693, 4
      %v758 = vrot.slane %v694, 4
      %v759 = vrot.slane %v695, 4
      %v760 = vrot.slane %v696, 4
      %v761 = vrot.slane %v697, 4
      %v762 = vrot.slane %v698, 4
      %v763 = vrot.slane %v699, 4
      %v764 = vrot.slane %v700, 4
      %v765 = vrot.slane %v701, 4
      %v766 = vrot.slane %v702, 4
      %v767 = vrot.slane %v703, 4
      %v768 = vrot.slane %v704, 4
      %v769 = vrot.slane %v705, 4
      %v770 = vrot.slane %v706, 4
      %v771 = vrot.slane %v707, 4
      %v772 = vrot.slane %v708, 4
      %v773 = vrot.slane %v709, 4
      %v774 = vrot.slane %v710, 4
      %v775 = vrot.slane %v711, 4
      %s808 = scalar_lea.vmem [#allocation2], 32
      %809 = vst [vmem:[%s808] sm:$0xf0] %v744
      %810 = vst [vmem:[%s808 + $0x8] sm:$0xf0] %v745
      %811 = vst [vmem:[%s808 + $0x10] sm:$0xf0] %v746
      %812 = vst [vmem:[%s808 + $0x18] sm:$0xf0] %v747
      %813 = vst [vmem:[%s808 + $0x20] sm:$0xf0] %v748
      %814 = vst [vmem:[%s808 + $0x28] sm:$0xf0] %v749
      %815 = vst [vmem:[%s808 + $0x30] sm:$0xf0] %v750
      %816 = vst [vmem:[%s808 + $0x38] sm:$0xf0] %v751
      %817 = vst [vmem:[%s808 + $0x40] sm:$0xf0] %v752
      %818 = vst [vmem:[%s808 + $0x48] sm:$0xf0] %v753
      %819 = vst [vmem:[%s808 + $0x50] sm:$0xf0] %v754
      %820 = vst [vmem:[%s808 + $0x58] sm:$0xf0] %v755
      %821 = vst [vmem:[%s808 + $0x60] sm:$0xf0] %v756
      %822 = vst [vmem:[%s808 + $0x68] sm:$0xf0] %v757
      %823 = vst [vmem:[%s808 + $0x70] sm:$0xf0] %v758
      %824 = vst [vmem:[%s808 + $0x78] sm:$0xf0] %v759
      %825 = vst [vmem:[%s808 + $0x80] sm:$0xf0] %v760
      %826 = vst [vmem:[%s808 + $0x88] sm:$0xf0] %v761
      %827 = vst [vmem:[%s808 + $0x90] sm:$0xf0] %v762
      %828 = vst [vmem:[%s808 + $0x98] sm:$0xf0] %v763
      %829 = vst [vmem:[%s808 + $0xa0] sm:$0xf0] %v764
      %830 = vst [vmem:[%s808 + $0xa8] sm:$0xf0] %v765
      %831 = vst [vmem:[%s808 + $0xb0] sm:$0xf0] %v766
      %832 = vst [vmem:[%s808 + $0xb8] sm:$0xf0] %v767
      %833 = vst [vmem:[%s808 + $0xc0] sm:$0xf0] %v768
      %834 = vst [vmem:[%s808 + $0xc8] sm:$0xf0] %v769
      %835 = vst [vmem:[%s808 + $0xd0] sm:$0xf0] %v770
      %836 = vst [vmem:[%s808 + $0xd8] sm:$0xf0] %v771
      %837 = vst [vmem:[%s808 + $0xe0] sm:$0xf0] %v772
      %838 = vst [vmem:[%s808 + $0xe8] sm:$0xf0] %v773
      %839 = vst [vmem:[%s808 + $0xf0] sm:$0xf0] %v774
      %840 = vst [vmem:[%s808 + $0xf8] sm:$0xf0] %v775
      %v841 = vld [vmem:[#allocation2 + $0x18] sm:$0xf8]
      %v842 = vld [vmem:[#allocation2 + $0x38] sm:$0xf8]
      %v843 = vld [vmem:[#allocation2 + $0x58] sm:$0xf8]
      %v844 = vld [vmem:[#allocation2 + $0x78] sm:$0xf8]
      %v845 = vld [vmem:[#allocation2 + $0x98] sm:$0xf8]
      %v846 = vld [vmem:[#allocation2 + $0xb8] sm:$0xf8]
      %v847 = vld [vmem:[#allocation2 + $0xd8] sm:$0xf8]
      %v848 = vld [vmem:[#allocation2 + $0xf8] sm:$0xf8]
      %v857 = vunpack.c.l.b16 %v841
      %v858 = vunpack.c.h.b16 %v841
      %v859 = vunpack.c.l.b16 %v842
      %v860 = vunpack.c.h.b16 %v842
      %v861 = vunpack.c.l.b16 %v843
      %v862 = vunpack.c.h.b16 %v843
      %v863 = vunpack.c.l.b16 %v844
      %v864 = vunpack.c.h.b16 %v844
      %v865 = vunpack.c.l.b16 %v845
      %v866 = vunpack.c.h.b16 %v845
      %v867 = vunpack.c.l.b16 %v846
      %v868 = vunpack.c.h.b16 %v846
      %v869 = vunpack.c.l.b16 %v847
      %v870 = vunpack.c.h.b16 %v847
      %v871 = vunpack.c.l.b16 %v848
      %v872 = vunpack.c.h.b16 %v848
      %v873 = vpack.c.b16 %v857, %v857
      %v874 = vpack.c.b16 %v858, %v858
      %v875 = vpack.c.b16 %v859, %v859
      %v876 = vpack.c.b16 %v860, %v860
      %v877 = vpack.c.b16 %v861, %v861
      %v878 = vpack.c.b16 %v862, %v862
      %v879 = vpack.c.b16 %v863, %v863
      %v880 = vpack.c.b16 %v864, %v864
      %v881 = vpack.c.b16 %v865, %v865
      %v882 = vpack.c.b16 %v866, %v866
      %v883 = vpack.c.b16 %v867, %v867
      %v884 = vpack.c.b16 %v868, %v868
      %v885 = vpack.c.b16 %v869, %v869
      %v886 = vpack.c.b16 %v870, %v870
      %v887 = vpack.c.b16 %v871, %v871
      %v888 = vpack.c.b16 %v872, %v872
      %vm889 = vsmask.f32 4368
      %vm890 = vmor %vm460, %vm889
      %v892 = vshrl.u32 %v873, 16
      %v894 = vrot.slane %v892, 7
      %v895 = vrot.slane %v894, 4
      %v897 = vshrl.u32 %v874, 16
      %v899 = vrot.slane %v897, 7
      %v900 = vshll.u32 %v874, 16
      %v902 = vor.u32 %v899, %v900
      %v903 = vsel %vm890, %v895, %v902
      %v905 = vshrl.u32 %v875, 16
      %v907 = vrot.slane %v905, 7
      %v908 = vrot.slane %v907, 4
      %v910 = vshrl.u32 %v876, 16
      %v912 = vrot.slane %v910, 7
      %v913 = vshll.u32 %v876, 16
      %v915 = vor.u32 %v912, %v913
      %v916 = vsel %vm890, %v908, %v915
      %v918 = vshrl.u32 %v877, 16
      %v920 = vrot.slane %v918, 7
      %v921 = vrot.slane %v920, 4
      %v923 = vshrl.u32 %v878, 16
      %v925 = vrot.slane %v923, 7
      %v926 = vshll.u32 %v878, 16
      %v928 = vor.u32 %v925, %v926
      %v929 = vsel %vm890, %v921, %v928
      %v931 = vshrl.u32 %v879, 16
      %v933 = vrot.slane %v931, 7
      %v934 = vrot.slane %v933, 4
      %v936 = vshrl.u32 %v880, 16
      %v938 = vrot.slane %v936, 7
      %v939 = vshll.u32 %v880, 16
      %v941 = vor.u32 %v938, %v939
      %v942 = vsel %vm890, %v934, %v941
      %v944 = vshrl.u32 %v881, 16
      %v946 = vrot.slane %v944, 7
      %v947 = vrot.slane %v946, 4
      %v949 = vshrl.u32 %v882, 16
      %v951 = vrot.slane %v949, 7
      %v952 = vshll.u32 %v882, 16
      %v954 = vor.u32 %v951, %v952
      %v955 = vsel %vm890, %v947, %v954
      %v957 = vshrl.u32 %v883, 16
      %v959 = vrot.slane %v957, 7
      %v960 = vrot.slane %v959, 4
      %v962 = vshrl.u32 %v884, 16
      %v964 = vrot.slane %v962, 7
      %v965 = vshll.u32 %v884, 16
      %v967 = vor.u32 %v964, %v965
      %v968 = vsel %vm890, %v960, %v967
      %v970 = vshrl.u32 %v885, 16
      %v972 = vrot.slane %v970, 7
      %v973 = vrot.slane %v972, 4
      %v975 = vshrl.u32 %v886, 16
      %v977 = vrot.slane %v975, 7
      %v978 = vshll.u32 %v886, 16
      %v980 = vor.u32 %v977, %v978
      %v981 = vsel %vm890, %v973, %v980
      %v983 = vshrl.u32 %v887, 16
      %v985 = vrot.slane %v983, 7
      %v986 = vrot.slane %v985, 4
      %v988 = vshrl.u32 %v888, 16
      %v990 = vrot.slane %v988, 7
      %v991 = vshll.u32 %v888, 16
      %v993 = vor.u32 %v990, %v991
      %v994 = vsel %vm890, %v986, %v993
      %v995 = vld [vmem:[%s808 + $0x8] sm:$0xf8]
      %v996 = vld [vmem:[%s808 + $0x28] sm:$0xf8]
      %v997 = vld [vmem:[%s808 + $0x48] sm:$0xf8]
      %v998 = vld [vmem:[%s808 + $0x68] sm:$0xf8]
      %v999 = vld [vmem:[%s808 + $0x88] sm:$0xf8]
      %v1000 = vld [vmem:[%s808 + $0xa8] sm:$0xf8]
      %v1001 = vld [vmem:[%s808 + $0xc8] sm:$0xf8]
      %v1002 = vld [vmem:[%s808 + $0xe8] sm:$0xf8]
      %v1011 = vunpack.c.l.b16 %v995
      %v1012 = vunpack.c.h.b16 %v995
      %v1013 = vunpack.c.l.b16 %v996
      %v1014 = vunpack.c.h.b16 %v996
      %v1015 = vunpack.c.l.b16 %v997
      %v1016 = vunpack.c.h.b16 %v997
      %v1017 = vunpack.c.l.b16 %v998
      %v1018 = vunpack.c.h.b16 %v998
      %v1019 = vunpack.c.l.b16 %v999
      %v1020 = vunpack.c.h.b16 %v999
      %v1021 = vunpack.c.l.b16 %v1000
      %v1022 = vunpack.c.h.b16 %v1000
      %v1023 = vunpack.c.l.b16 %v1001
      %v1024 = vunpack.c.h.b16 %v1001
      %v1025 = vunpack.c.l.b16 %v1002
      %v1026 = vunpack.c.h.b16 %v1002
      %v1027 = vpack.c.b16 %v1011, %v1011
      %v1028 = vpack.c.b16 %v1012, %v1012
      %v1029 = vpack.c.b16 %v1013, %v1013
      %v1030 = vpack.c.b16 %v1014, %v1014
      %v1031 = vpack.c.b16 %v1015, %v1015
      %v1032 = vpack.c.b16 %v1016, %v1016
      %v1033 = vpack.c.b16 %v1017, %v1017
      %v1034 = vpack.c.b16 %v1018, %v1018
      %v1035 = vpack.c.b16 %v1019, %v1019
      %v1036 = vpack.c.b16 %v1020, %v1020
      %v1037 = vpack.c.b16 %v1021, %v1021
      %v1038 = vpack.c.b16 %v1022, %v1022
      %v1039 = vpack.c.b16 %v1023, %v1023
      %v1040 = vpack.c.b16 %v1024, %v1024
      %v1041 = vpack.c.b16 %v1025, %v1025
      %v1042 = vpack.c.b16 %v1026, %v1026
      %v1044 = vshrl.u32 %v1027, 16
      %v1046 = vrot.slane %v1044, 7
      %v1047 = vrot.slane %v1046, 4
      %v1049 = vshrl.u32 %v1028, 16
      %v1051 = vrot.slane %v1049, 7
      %v1052 = vshll.u32 %v1028, 16
      %v1054 = vor.u32 %v1051, %v1052
      %v1055 = vsel %vm890, %v1047, %v1054
      %v1057 = vshrl.u32 %v1029, 16
      %v1059 = vrot.slane %v1057, 7
      %v1060 = vrot.slane %v1059, 4
      %v1062 = vshrl.u32 %v1030, 16
      %v1064 = vrot.slane %v1062, 7
      %v1065 = vshll.u32 %v1030, 16
      %v1067 = vor.u32 %v1064, %v1065
      %v1068 = vsel %vm890, %v1060, %v1067
      %v1070 = vshrl.u32 %v1031, 16
      %v1072 = vrot.slane %v1070, 7
      %v1073 = vrot.slane %v1072, 4
      %v1075 = vshrl.u32 %v1032, 16
      %v1077 = vrot.slane %v1075, 7
      %v1078 = vshll.u32 %v1032, 16
      %v1080 = vor.u32 %v1077, %v1078
      %v1081 = vsel %vm890, %v1073, %v1080
      %v1083 = vshrl.u32 %v1033, 16
      %v1085 = vrot.slane %v1083, 7
      %v1086 = vrot.slane %v1085, 4
      %v1088 = vshrl.u32 %v1034, 16
      %v1090 = vrot.slane %v1088, 7
      %v1091 = vshll.u32 %v1034, 16
      %v1093 = vor.u32 %v1090, %v1091
      %v1094 = vsel %vm890, %v1086, %v1093
      %v1096 = vshrl.u32 %v1035, 16
      %v1098 = vrot.slane %v1096, 7
      %v1099 = vrot.slane %v1098, 4
      %v1101 = vshrl.u32 %v1036, 16
      %v1103 = vrot.slane %v1101, 7
      %v1104 = vshll.u32 %v1036, 16
      %v1106 = vor.u32 %v1103, %v1104
      %v1107 = vsel %vm890, %v1099, %v1106
      %v1109 = vshrl.u32 %v1037, 16
      %v1111 = vrot.slane %v1109, 7
      %v1112 = vrot.slane %v1111, 4
      %v1114 = vshrl.u32 %v1038, 16
      %v1116 = vrot.slane %v1114, 7
      %v1117 = vshll.u32 %v1038, 16
      %v1119 = vor.u32 %v1116, %v1117
      %v1120 = vsel %vm890, %v1112, %v1119
      %v1122 = vshrl.u32 %v1039, 16
      %v1124 = vrot.slane %v1122, 7
      %v1125 = vrot.slane %v1124, 4
      %v1127 = vshrl.u32 %v1040, 16
      %v1129 = vrot.slane %v1127, 7
      %v1130 = vshll.u32 %v1040, 16
      %v1132 = vor.u32 %v1129, %v1130
      %v1133 = vsel %vm890, %v1125, %v1132
      %v1135 = vshrl.u32 %v1041, 16
      %v1137 = vrot.slane %v1135, 7
      %v1138 = vrot.slane %v1137, 4
      %v1140 = vshrl.u32 %v1042, 16
      %v1142 = vrot.slane %v1140, 7
      %v1143 = vshll.u32 %v1042, 16
      %v1145 = vor.u32 %v1142, %v1143
      %v1146 = vsel %vm890, %v1138, %v1145
      %v1147 = vld [vmem:[%s808 + $0x18] sm:$0xf8]
      %v1148 = vld [vmem:[%s808 + $0x38] sm:$0xf8]
      %v1149 = vld [vmem:[%s808 + $0x58] sm:$0xf8]
      %v1150 = vld [vmem:[%s808 + $0x78] sm:$0xf8]
      %v1151 = vld [vmem:[%s808 + $0x98] sm:$0xf8]
      %v1152 = vld [vmem:[%s808 + $0xb8] sm:$0xf8]
      %v1153 = vld [vmem:[%s808 + $0xd8] sm:$0xf8]
      %v1154 = vld [vmem:[%s808 + $0xf8] sm:$0xf8]
      %v1163 = vunpack.c.l.b16 %v1147
      %v1164 = vunpack.c.h.b16 %v1147
      %v1165 = vunpack.c.l.b16 %v1148
      %v1166 = vunpack.c.h.b16 %v1148
      %v1167 = vunpack.c.l.b16 %v1149
      %v1168 = vunpack.c.h.b16 %v1149
      %v1169 = vunpack.c.l.b16 %v1150
      %v1170 = vunpack.c.h.b16 %v1150
      %v1171 = vunpack.c.l.b16 %v1151
      %v1172 = vunpack.c.h.b16 %v1151
      %v1173 = vunpack.c.l.b16 %v1152
      %v1174 = vunpack.c.h.b16 %v1152
      %v1175 = vunpack.c.l.b16 %v1153
      %v1176 = vunpack.c.h.b16 %v1153
      %v1177 = vunpack.c.l.b16 %v1154
      %v1178 = vunpack.c.h.b16 %v1154
      %v1179 = vpack.c.b16 %v1163, %v1163
      %v1180 = vpack.c.b16 %v1164, %v1164
      %v1181 = vpack.c.b16 %v1165, %v1165
      %v1182 = vpack.c.b16 %v1166, %v1166
      %v1183 = vpack.c.b16 %v1167, %v1167
      %v1184 = vpack.c.b16 %v1168, %v1168
      %v1185 = vpack.c.b16 %v1169, %v1169
      %v1186 = vpack.c.b16 %v1170, %v1170
      %v1187 = vpack.c.b16 %v1171, %v1171
      %v1188 = vpack.c.b16 %v1172, %v1172
      %v1189 = vpack.c.b16 %v1173, %v1173
      %v1190 = vpack.c.b16 %v1174, %v1174
      %v1191 = vpack.c.b16 %v1175, %v1175
      %v1192 = vpack.c.b16 %v1176, %v1176
      %v1193 = vpack.c.b16 %v1177, %v1177
      %v1194 = vpack.c.b16 %v1178, %v1178
      %v1196 = vshrl.u32 %v1179, 16
      %v1198 = vrot.slane %v1196, 7
      %v1199 = vrot.slane %v1198, 4
      %v1201 = vshrl.u32 %v1180, 16
      %v1203 = vrot.slane %v1201, 7
      %v1204 = vshll.u32 %v1180, 16
      %v1206 = vor.u32 %v1203, %v1204
      %v1207 = vsel %vm890, %v1199, %v1206
      %v1209 = vshrl.u32 %v1181, 16
      %v1211 = vrot.slane %v1209, 7
      %v1212 = vrot.slane %v1211, 4
      %v1214 = vshrl.u32 %v1182, 16
      %v1216 = vrot.slane %v1214, 7
      %v1217 = vshll.u32 %v1182, 16
      %v1219 = vor.u32 %v1216, %v1217
      %v1220 = vsel %vm890, %v1212, %v1219
      %v1222 = vshrl.u32 %v1183, 16
      %v1224 = vrot.slane %v1222, 7
      %v1225 = vrot.slane %v1224, 4
      %v1227 = vshrl.u32 %v1184, 16
      %v1229 = vrot.slane %v1227, 7
      %v1230 = vshll.u32 %v1184, 16
      %v1232 = vor.u32 %v1229, %v1230
      %v1233 = vsel %vm890, %v1225, %v1232
      %v1235 = vshrl.u32 %v1185, 16
      %v1237 = vrot.slane %v1235, 7
      %v1238 = vrot.slane %v1237, 4
      %v1240 = vshrl.u32 %v1186, 16
      %v1242 = vrot.slane %v1240, 7
      %v1243 = vshll.u32 %v1186, 16
      %v1245 = vor.u32 %v1242, %v1243
      %v1246 = vsel %vm890, %v1238, %v1245
      %v1248 = vshrl.u32 %v1187, 16
      %v1250 = vrot.slane %v1248, 7
      %v1251 = vrot.slane %v1250, 4
      %v1253 = vshrl.u32 %v1188, 16
      %v1255 = vrot.slane %v1253, 7
      %v1256 = vshll.u32 %v1188, 16
      %v1258 = vor.u32 %v1255, %v1256
      %v1259 = vsel %vm890, %v1251, %v1258
      %v1261 = vshrl.u32 %v1189, 16
      %v1263 = vrot.slane %v1261, 7
      %v1264 = vrot.slane %v1263, 4
      %v1266 = vshrl.u32 %v1190, 16
      %v1268 = vrot.slane %v1266, 7
      %v1269 = vshll.u32 %v1190, 16
      %v1271 = vor.u32 %v1268, %v1269
      %v1272 = vsel %vm890, %v1264, %v1271
      %v1274 = vshrl.u32 %v1191, 16
      %v1276 = vrot.slane %v1274, 7
      %v1277 = vrot.slane %v1276, 4
      %v1279 = vshrl.u32 %v1192, 16
      %v1281 = vrot.slane %v1279, 7
      %v1282 = vshll.u32 %v1192, 16
      %v1284 = vor.u32 %v1281, %v1282
      %v1285 = vsel %vm890, %v1277, %v1284
      %v1287 = vshrl.u32 %v1193, 16
      %v1289 = vrot.slane %v1287, 7
      %v1290 = vrot.slane %v1289, 4
      %v1292 = vshrl.u32 %v1194, 16
      %v1294 = vrot.slane %v1292, 7
      %v1295 = vshll.u32 %v1194, 16
      %v1297 = vor.u32 %v1294, %v1295
      %v1298 = vsel %vm890, %v1290, %v1297
      %v1299 = vunpack.c.l.b16 %v903
      %v1300 = vunpack.c.l.b16 %v916
      %v1301 = vunpack.c.l.b16 %v929
      %v1302 = vunpack.c.l.b16 %v942
      %v1303 = vunpack.c.l.b16 %v955
      %v1304 = vunpack.c.l.b16 %v968
      %v1305 = vunpack.c.l.b16 %v981
      %v1306 = vunpack.c.l.b16 %v994
      %v1307 = vpack.c.b16 %v1300, %v1299
      %v1308 = vpack.c.b16 %v1302, %v1301
      %v1309 = vpack.c.b16 %v1304, %v1303
      %v1310 = vpack.c.b16 %v1306, %v1305
      %v1315 = vunpack.c.l.b16 %v1055
      %v1316 = vunpack.c.l.b16 %v1068
      %v1317 = vunpack.c.l.b16 %v1081
      %v1318 = vunpack.c.l.b16 %v1094
      %v1319 = vunpack.c.l.b16 %v1107
      %v1320 = vunpack.c.l.b16 %v1120
      %v1321 = vunpack.c.l.b16 %v1133
      %v1322 = vunpack.c.l.b16 %v1146
      %v1323 = vpack.c.b16 %v1316, %v1315
      %v1324 = vpack.c.b16 %v1318, %v1317
      %v1325 = vpack.c.b16 %v1320, %v1319
      %v1326 = vpack.c.b16 %v1322, %v1321
      %v1331 = vunpack.c.l.b16 %v1207
      %v1332 = vunpack.c.l.b16 %v1220
      %v1333 = vunpack.c.l.b16 %v1233
      %v1334 = vunpack.c.l.b16 %v1246
      %v1335 = vunpack.c.l.b16 %v1259
      %v1336 = vunpack.c.l.b16 %v1272
      %v1337 = vunpack.c.l.b16 %v1285
      %v1338 = vunpack.c.l.b16 %v1298
      %v1339 = vpack.c.b16 %v1332, %v1331
      %v1340 = vpack.c.b16 %v1334, %v1333
      %v1341 = vpack.c.b16 %v1336, %v1335
      %v1342 = vpack.c.b16 %v1338, %v1337
      %v1347 = vld [vmem:[%s5] sm:$0xf]
      %v1348 = vld [vmem:[%s5 + $0x4] sm:$0xf]
      %v1349 = vld [vmem:[%s5 + $0x8] sm:$0xf]
      %v1350 = vld [vmem:[%s5 + $0xc] sm:$0xf]
      %v1351 = vld [vmem:[%s5 + $0x10] sm:$0xf]
      %v1352 = vld [vmem:[%s5 + $0x14] sm:$0xf]
      %v1353 = vld [vmem:[%s5 + $0x18] sm:$0xf]
      %v1354 = vld [vmem:[%s5 + $0x1c] sm:$0xf]
      %v1355 = vld [vmem:[%s5 + $0x20] sm:$0xf]
      %v1356 = vld [vmem:[%s5 + $0x24] sm:$0xf]
      %v1357 = vld [vmem:[%s5 + $0x28] sm:$0xf]
      %v1358 = vld [vmem:[%s5 + $0x2c] sm:$0xf]
      %v1359 = vld [vmem:[%s5 + $0x30] sm:$0xf]
      %v1360 = vld [vmem:[%s5 + $0x34] sm:$0xf]
      %v1361 = vld [vmem:[%s5 + $0x38] sm:$0xf]
      %v1362 = vld [vmem:[%s5 + $0x3c] sm:$0xf]
      %v1363 = vld [vmem:[%s5 + $0x40] sm:$0xf]
      %v1364 = vld [vmem:[%s5 + $0x44] sm:$0xf]
      %v1365 = vld [vmem:[%s5 + $0x48] sm:$0xf]
      %v1366 = vld [vmem:[%s5 + $0x4c] sm:$0xf]
      %v1367 = vld [vmem:[%s5 + $0x50] sm:$0xf]
      %v1368 = vld [vmem:[%s5 + $0x54] sm:$0xf]
      %v1369 = vld [vmem:[%s5 + $0x58] sm:$0xf]
      %v1370 = vld [vmem:[%s5 + $0x5c] sm:$0xf]
      %v1371 = vld [vmem:[%s5 + $0x60] sm:$0xf]
      %v1372 = vld [vmem:[%s5 + $0x64] sm:$0xf]
      %v1373 = vld [vmem:[%s5 + $0x68] sm:$0xf]
      %v1374 = vld [vmem:[%s5 + $0x6c] sm:$0xf]
      %v1375 = vld [vmem:[%s5 + $0x70] sm:$0xf]
      %v1376 = vld [vmem:[%s5 + $0x74] sm:$0xf]
      %v1377 = vld [vmem:[%s5 + $0x78] sm:$0xf]
      %v1378 = vld [vmem:[%s5 + $0x7c] sm:$0xf]
      %v1379 = vld [vmem:[%s5 + $0x80] sm:$0xf]
      %v1380 = vld [vmem:[%s5 + $0x84] sm:$0xf]
      %v1381 = vld [vmem:[%s5 + $0x88] sm:$0xf]
      %v1382 = vld [vmem:[%s5 + $0x8c] sm:$0xf]
      %v1383 = vld [vmem:[%s5 + $0x90] sm:$0xf]
      %v1384 = vld [vmem:[%s5 + $0x94] sm:$0xf]
      %v1385 = vld [vmem:[%s5 + $0x98] sm:$0xf]
      %v1386 = vld [vmem:[%s5 + $0x9c] sm:$0xf]
      %v1387 = vld [vmem:[%s5 + $0xa0] sm:$0xf]
      %v1388 = vld [vmem:[%s5 + $0xa4] sm:$0xf]
      %v1389 = vld [vmem:[%s5 + $0xa8] sm:$0xf]
      %v1390 = vld [vmem:[%s5 + $0xac] sm:$0xf]
      %v1391 = vld [vmem:[%s5 + $0xb0] sm:$0xf]
      %v1392 = vld [vmem:[%s5 + $0xb4] sm:$0xf]
      %v1393 = vld [vmem:[%s5 + $0xb8] sm:$0xf]
      %v1394 = vld [vmem:[%s5 + $0xbc] sm:$0xf]
      %v1395 = vld [vmem:[#allocation2 + $0x10] sm:$0xf0]
      %v1396 = vld [vmem:[#allocation2 + $0x30] sm:$0xf0]
      %v1397 = vld [vmem:[#allocation2 + $0x50] sm:$0xf0]
      %v1398 = vld [vmem:[#allocation2 + $0x70] sm:$0xf0]
      %v1399 = vld [vmem:[#allocation2 + $0x90] sm:$0xf0]
      %v1400 = vld [vmem:[#allocation2 + $0xb0] sm:$0xf0]
      %v1401 = vld [vmem:[#allocation2 + $0xd0] sm:$0xf0]
      %v1402 = vld [vmem:[#allocation2 + $0xf0] sm:$0xf0]
      %v1411 = vunpack.c.h.b16 %v1395
      %v1412 = vunpack.c.h.b16 %v1396
      %v1413 = vunpack.c.h.b16 %v1397
      %v1414 = vunpack.c.h.b16 %v1398
      %v1415 = vunpack.c.h.b16 %v1399
      %v1416 = vunpack.c.h.b16 %v1400
      %v1417 = vunpack.c.h.b16 %v1401
      %v1418 = vunpack.c.h.b16 %v1402
      %v1419 = vld [vmem:[%s808] sm:$0xf0]
      %v1420 = vld [vmem:[%s808 + $0x20] sm:$0xf0]
      %v1421 = vld [vmem:[%s808 + $0x40] sm:$0xf0]
      %v1422 = vld [vmem:[%s808 + $0x60] sm:$0xf0]
      %v1423 = vld [vmem:[%s808 + $0x80] sm:$0xf0]
      %v1424 = vld [vmem:[%s808 + $0xa0] sm:$0xf0]
      %v1425 = vld [vmem:[%s808 + $0xc0] sm:$0xf0]
      %v1426 = vld [vmem:[%s808 + $0xe0] sm:$0xf0]
      %v1435 = vunpack.c.h.b16 %v1419
      %v1436 = vunpack.c.h.b16 %v1420
      %v1437 = vunpack.c.h.b16 %v1421
      %v1438 = vunpack.c.h.b16 %v1422
      %v1439 = vunpack.c.h.b16 %v1423
      %v1440 = vunpack.c.h.b16 %v1424
      %v1441 = vunpack.c.h.b16 %v1425
      %v1442 = vunpack.c.h.b16 %v1426
      %v1443 = vld [vmem:[%s808 + $0x10] sm:$0xf0]
      %v1444 = vld [vmem:[%s808 + $0x30] sm:$0xf0]
      %v1445 = vld [vmem:[%s808 + $0x50] sm:$0xf0]
      %v1446 = vld [vmem:[%s808 + $0x70] sm:$0xf0]
      %v1447 = vld [vmem:[%s808 + $0x90] sm:$0xf0]
      %v1448 = vld [vmem:[%s808 + $0xb0] sm:$0xf0]
      %v1449 = vld [vmem:[%s808 + $0xd0] sm:$0xf0]
      %v1450 = vld [vmem:[%s808 + $0xf0] sm:$0xf0]
      %v1459 = vunpack.c.h.b16 %v1443
      %v1460 = vunpack.c.h.b16 %v1444
      %v1461 = vunpack.c.h.b16 %v1445
      %v1462 = vunpack.c.h.b16 %v1446
      %v1463 = vunpack.c.h.b16 %v1447
      %v1464 = vunpack.c.h.b16 %v1448
      %v1465 = vunpack.c.h.b16 %v1449
      %v1466 = vunpack.c.h.b16 %v1450
      %v1467 = vpack.c.b16 %v1412, %v1411
      %v1468 = vpack.c.b16 %v1414, %v1413
      %v1469 = vpack.c.b16 %v1416, %v1415
      %v1470 = vpack.c.b16 %v1418, %v1417
      %v1475 = vpack.c.b16 %v1436, %v1435
      %v1476 = vpack.c.b16 %v1438, %v1437
      %v1477 = vpack.c.b16 %v1440, %v1439
      %v1478 = vpack.c.b16 %v1442, %v1441
      %v1483 = vpack.c.b16 %v1460, %v1459
      %v1484 = vpack.c.b16 %v1462, %v1461
      %v1485 = vpack.c.b16 %v1464, %v1463
      %v1486 = vpack.c.b16 %v1466, %v1465
      %s1491 = scalar_lea.vmem %s5, 192
      %v1492 = vld [vmem:[%s1491] sm:$0xf]
      %v1493 = vld [vmem:[%s1491 + $0x4] sm:$0xf]
      %v1494 = vld [vmem:[%s1491 + $0x8] sm:$0xf]
      %v1495 = vld [vmem:[%s1491 + $0xc] sm:$0xf]
      %v1496 = vld [vmem:[%s1491 + $0x10] sm:$0xf]
      %v1497 = vld [vmem:[%s1491 + $0x14] sm:$0xf]
      %v1498 = vld [vmem:[%s1491 + $0x18] sm:$0xf]
      %v1499 = vld [vmem:[%s1491 + $0x1c] sm:$0xf]
      %v1500 = vld [vmem:[%s1491 + $0x20] sm:$0xf]
      %v1501 = vld [vmem:[%s1491 + $0x24] sm:$0xf]
      %v1502 = vld [vmem:[%s1491 + $0x28] sm:$0xf]
      %v1503 = vld [vmem:[%s1491 + $0x2c] sm:$0xf]
      %v1504 = vld [vmem:[%s1491 + $0x30] sm:$0xf]
      %v1505 = vld [vmem:[%s1491 + $0x34] sm:$0xf]
      %v1506 = vld [vmem:[%s1491 + $0x38] sm:$0xf]
      %v1507 = vld [vmem:[%s1491 + $0x3c] sm:$0xf]
      %v1508 = vld [vmem:[%s1491 + $0x40] sm:$0xf]
      %v1509 = vld [vmem:[%s1491 + $0x44] sm:$0xf]
      %v1510 = vld [vmem:[%s1491 + $0x48] sm:$0xf]
      %v1511 = vld [vmem:[%s1491 + $0x4c] sm:$0xf]
      %v1512 = vld [vmem:[%s1491 + $0x50] sm:$0xf]
      %v1513 = vld [vmem:[%s1491 + $0x54] sm:$0xf]
      %v1514 = vld [vmem:[%s1491 + $0x58] sm:$0xf]
      %v1515 = vld [vmem:[%s1491 + $0x5c] sm:$0xf]
      %v1516 = vld [vmem:[%s1491 + $0x60] sm:$0xf]
      %v1517 = vld [vmem:[%s1491 + $0x64] sm:$0xf]
      %v1518 = vld [vmem:[%s1491 + $0x68] sm:$0xf]
      %v1519 = vld [vmem:[%s1491 + $0x6c] sm:$0xf]
      %v1520 = vld [vmem:[%s1491 + $0x70] sm:$0xf]
      %v1521 = vld [vmem:[%s1491 + $0x74] sm:$0xf]
      %v1522 = vld [vmem:[%s1491 + $0x78] sm:$0xf]
      %v1523 = vld [vmem:[%s1491 + $0x7c] sm:$0xf]
      %v1524 = vld [vmem:[%s1491 + $0x80] sm:$0xf]
      %v1525 = vld [vmem:[%s1491 + $0x84] sm:$0xf]
      %v1526 = vld [vmem:[%s1491 + $0x88] sm:$0xf]
      %v1527 = vld [vmem:[%s1491 + $0x8c] sm:$0xf]
      %v1528 = vld [vmem:[%s1491 + $0x90] sm:$0xf]
      %v1529 = vld [vmem:[%s1491 + $0x94] sm:$0xf]
      %v1530 = vld [vmem:[%s1491 + $0x98] sm:$0xf]
      %v1531 = vld [vmem:[%s1491 + $0x9c] sm:$0xf]
      %v1532 = vld [vmem:[%s1491 + $0xa0] sm:$0xf]
      %v1533 = vld [vmem:[%s1491 + $0xa4] sm:$0xf]
      %v1534 = vld [vmem:[%s1491 + $0xa8] sm:$0xf]
      %v1535 = vld [vmem:[%s1491 + $0xac] sm:$0xf]
      %v1536 = vld [vmem:[%s1491 + $0xb0] sm:$0xf]
      %v1537 = vld [vmem:[%s1491 + $0xb4] sm:$0xf]
      %v1538 = vld [vmem:[%s1491 + $0xb8] sm:$0xf]
      %v1539 = vld [vmem:[%s1491 + $0xbc] sm:$0xf]
      %v1588 = vunpack.c.l.b16 %v1492
      %v1589 = vunpack.c.l.b16 %v1493
      %v1590 = vunpack.c.l.b16 %v1494
      %v1591 = vunpack.c.l.b16 %v1495
      %v1592 = vunpack.c.l.b16 %v1496
      %v1593 = vunpack.c.l.b16 %v1497
      %v1594 = vunpack.c.l.b16 %v1498
      %v1595 = vunpack.c.l.b16 %v1499
      %v1596 = vunpack.c.l.b16 %v1500
      %v1597 = vunpack.c.l.b16 %v1501
      %v1598 = vunpack.c.l.b16 %v1502
      %v1599 = vunpack.c.l.b16 %v1503
      %v1600 = vunpack.c.l.b16 %v1504
      %v1601 = vunpack.c.l.b16 %v1505
      %v1602 = vunpack.c.l.b16 %v1506
      %v1603 = vunpack.c.l.b16 %v1507
      %v1604 = vunpack.c.l.b16 %v1508
      %v1605 = vunpack.c.l.b16 %v1509
      %v1606 = vunpack.c.l.b16 %v1510
      %v1607 = vunpack.c.l.b16 %v1511
      %v1608 = vunpack.c.l.b16 %v1512
      %v1609 = vunpack.c.l.b16 %v1513
      %v1610 = vunpack.c.l.b16 %v1514
      %v1611 = vunpack.c.l.b16 %v1515
      %v1612 = vunpack.c.l.b16 %v1516
      %v1613 = vunpack.c.l.b16 %v1517
      %v1614 = vunpack.c.l.b16 %v1518
      %v1615 = vunpack.c.l.b16 %v1519
      %v1616 = vunpack.c.l.b16 %v1520
      %v1617 = vunpack.c.l.b16 %v1521
      %v1618 = vunpack.c.l.b16 %v1522
      %v1619 = vunpack.c.l.b16 %v1523
      %v1620 = vunpack.c.l.b16 %v1524
      %v1621 = vunpack.c.l.b16 %v1525
      %v1622 = vunpack.c.l.b16 %v1526
      %v1623 = vunpack.c.l.b16 %v1527
      %v1624 = vunpack.c.l.b16 %v1528
      %v1625 = vunpack.c.l.b16 %v1529
      %v1626 = vunpack.c.l.b16 %v1530
      %v1627 = vunpack.c.l.b16 %v1531
      %v1628 = vunpack.c.l.b16 %v1532
      %v1629 = vunpack.c.l.b16 %v1533
      %v1630 = vunpack.c.l.b16 %v1534
      %v1631 = vunpack.c.l.b16 %v1535
      %v1632 = vunpack.c.l.b16 %v1536
      %v1633 = vunpack.c.l.b16 %v1537
      %v1634 = vunpack.c.l.b16 %v1538
      %v1635 = vunpack.c.l.b16 %v1539
      %v1636 = vpack.c.b16 %v1589, %v1588
      %v1637 = vpack.c.b16 %v1591, %v1590
      %v1638 = vpack.c.b16 %v1593, %v1592
      %v1639 = vpack.c.b16 %v1595, %v1594
      %v1640 = vpack.c.b16 %v1597, %v1596
      %v1641 = vpack.c.b16 %v1599, %v1598
      %v1642 = vpack.c.b16 %v1601, %v1600
      %v1643 = vpack.c.b16 %v1603, %v1602
      %v1644 = vpack.c.b16 %v1605, %v1604
      %v1645 = vpack.c.b16 %v1607, %v1606
      %v1646 = vpack.c.b16 %v1609, %v1608
      %v1647 = vpack.c.b16 %v1611, %v1610
      %v1648 = vpack.c.b16 %v1613, %v1612
      %v1649 = vpack.c.b16 %v1615, %v1614
      %v1650 = vpack.c.b16 %v1617, %v1616
      %v1651 = vpack.c.b16 %v1619, %v1618
      %v1652 = vpack.c.b16 %v1621, %v1620
      %v1653 = vpack.c.b16 %v1623, %v1622
      %v1654 = vpack.c.b16 %v1625, %v1624
      %v1655 = vpack.c.b16 %v1627, %v1626
      %v1656 = vpack.c.b16 %v1629, %v1628
      %v1657 = vpack.c.b16 %v1631, %v1630
      %v1658 = vpack.c.b16 %v1633, %v1632
      %v1659 = vpack.c.b16 %v1635, %v1634
      %1684 = vmatprep.subr.bf16.mxu0 0
      %1685 = vmatpush1.bf16.msra.mxu0 %v1636
      %1686 = vmatprep.subr.bf16.mxu0 0
      %1687 = vmatpush1.bf16.msra.mxu0 %v1637
      %1688 = vmatprep.subr.bf16.mxu0 0
      %1689 = vmatpush1.bf16.msra.mxu0 %v1638
      %1690 = vmatprep.subr.bf16.mxu0 0
      %1691 = vmatpush1.bf16.msra.mxu0 %v1639
      %1692 = vmatprep.subr.bf16.mxu0 0
      %1693 = vmatpush1.bf16.msra.mxu0 %v1640
      %1694 = vmatprep.subr.bf16.mxu0 0
      %1695 = vmatpush1.bf16.msra.mxu0 %v1641
      %1696 = vmatprep.subr.bf16.mxu0 0
      %1697 = vmatpush1.bf16.msra.mxu0 %v1642
      %1698 = vmatprep.subr.bf16.mxu0 0
      %1699 = vmatpush1.bf16.msra.mxu0 %v1643
      %1700 = vmatprep.subr.bf16.mxu0 0
      %1701 = vmatpush1.bf16.msra.mxu0 %v1644
      %1702 = vmatprep.subr.bf16.mxu0 0
      %1703 = vmatpush1.bf16.msra.mxu0 %v1645
      %1704 = vmatprep.subr.bf16.mxu0 0
      %1705 = vmatpush1.bf16.msra.mxu0 %v1646
      %1706 = vmatprep.subr.bf16.mxu0 0
      %1707 = vmatpush1.bf16.msra.mxu0 %v1647
      %1708 = vmatprep.subr.bf16.mxu0 0
      %1709 = vmatpush1.bf16.msra.mxu0 %v1648
      %1710 = vmatprep.subr.bf16.mxu0 0
      %1711 = vmatpush1.bf16.msra.mxu0 %v1649
      %1712 = vmatprep.subr.bf16.mxu0 0
      %1713 = vmatpush1.bf16.msra.mxu0 %v1650
      %1714 = vmatprep.subr.bf16.mxu0 0
      %1715 = vmatpush1.bf16.msra.mxu0 %v1651
      %1716 = vmatprep.mubr.bf16.mxu0 %v1475
      %1717 = vmatmul.mubr.bf16.gmra.mrb[0].mxu0 %v1467
      %v1718 = vpop.f32.mrb[0].mxu0
      %v1719 = vadd.f32 0.0, %v1718
      %v1720 = vpop.f32.mrb[0].mxu0
      %v1721 = vpop.f32.mrb[0].mxu0
      %v1722 = vadd.f32 0.0, %v1721
      %v1723 = vpop.f32.mrb[0].mxu0
      %1724 = vmatprep.mubr.bf16.mxu0 %v1476
      %1725 = vmatmul.mubr.bf16.gmra.mrb[0].mxu0 %v1468
      %v1726 = vpop.f32.mrb[0].mxu0
      %v1727 = vadd.f32 0.0, %v1726
      %v1728 = vpop.f32.mrb[0].mxu0
      %v1729 = vpop.f32.mrb[0].mxu0
      %v1730 = vadd.f32 0.0, %v1729
      %v1731 = vpop.f32.mrb[0].mxu0
      %1732 = vmatprep.mubr.bf16.mxu0 %v1477
      %1733 = vmatmul.mubr.bf16.gmra.mrb[0].mxu0 %v1469
      %v1734 = vpop.f32.mrb[0].mxu0
      %v1735 = vadd.f32 0.0, %v1734
      %v1736 = vpop.f32.mrb[0].mxu0
      %v1737 = vpop.f32.mrb[0].mxu0
      %v1738 = vadd.f32 0.0, %v1737
      %v1739 = vpop.f32.mrb[0].mxu0
      %1740 = vmatprep.mubr.bf16.mxu0 %v1478
      %1741 = vmatmul.mubr.bf16.gmra.mrb[0].mxu0 %v1470
      %v1742 = vpop.f32.mrb[0].mxu0
      %v1743 = vadd.f32 0.0, %v1742
      %v1744 = vpop.f32.mrb[0].mxu0
      %v1745 = vpop.f32.mrb[0].mxu0
      %v1746 = vadd.f32 0.0, %v1745
      %v1747 = vpop.f32.mrb[0].mxu0
      %1748 = vdwg.mxu0
      %1749 = vmatprep.subr.bf16.mxu0 0
      %1750 = vmatpush1.bf16.msra.mxu0 %v1652
      %1751 = vmatprep.subr.bf16.mxu0 0
      %1752 = vmatpush1.bf16.msra.mxu0 %v1653
      %1753 = vmatprep.subr.bf16.mxu0 0
      %1754 = vmatpush1.bf16.msra.mxu0 %v1654
      %1755 = vmatprep.subr.bf16.mxu0 0
      %1756 = vmatpush1.bf16.msra.mxu0 %v1655
      %1757 = vmatprep.subr.bf16.mxu0 0
      %1758 = vmatpush1.bf16.msra.mxu0 %v1656
      %1759 = vmatprep.subr.bf16.mxu0 0
      %1760 = vmatpush1.bf16.msra.mxu0 %v1657
      %1761 = vmatprep.subr.bf16.mxu0 0
      %1762 = vmatpush1.bf16.msra.mxu0 %v1658
      %1763 = vmatprep.subr.bf16.mxu0 0
      %1764 = vmatpush1.bf16.msra.mxu0 %v1659
      %1765 = vmatprep.subr.bf16.mxu0 0
      %1766 = vmatpush1.bf16.msra.mxu0 0
      %1767 = vmatprep.subr.bf16.mxu0 0
      %1768 = vmatpush1.bf16.msra.mxu0 0
      %1769 = vmatprep.subr.bf16.mxu0 0
      %1770 = vmatpush1.bf16.msra.mxu0 0
      %1771 = vmatprep.subr.bf16.mxu0 0
      %1772 = vmatpush1.bf16.msra.mxu0 0
      %1773 = vmatprep.subr.bf16.mxu0 0
      %1774 = vmatpush1.bf16.msra.mxu0 0
      %1775 = vmatprep.subr.bf16.mxu0 0
      %1776 = vmatpush1.bf16.msra.mxu0 0
      %1777 = vmatprep.subr.bf16.mxu0 0
      %1778 = vmatpush1.bf16.msra.mxu0 0
      %1779 = vmatprep.subr.bf16.mxu0 0
      %1780 = vmatpush1.bf16.msra.mxu0 0
      %1781 = vmatprep.mubr.bf16.mxu0 0
      %1782 = vmatmul.mubr.bf16.gmra.mrb[0].mxu0 %v1483
      %v1783 = vpop.f32.mrb[0].mxu0
      %v1784 = vadd.f32 %v1719, %v1783
      %v1785 = vpop.f32.mrb[0].mxu0
      %v1786 = vpop.f32.mrb[0].mxu0
      %v1787 = vadd.f32 %v1722, %v1786
      %v1788 = vpop.f32.mrb[0].mxu0
      %1789 = vmatprep.mubr.bf16.mxu0 0
      %1790 = vmatmul.mubr.bf16.gmra.mrb[0].mxu0 %v1484
      %v1791 = vpop.f32.mrb[0].mxu0
      %v1792 = vadd.f32 %v1727, %v1791
      %v1793 = vpop.f32.mrb[0].mxu0
      %v1794 = vpop.f32.mrb[0].mxu0
      %v1795 = vadd.f32 %v1730, %v1794
      %v1796 = vpop.f32.mrb[0].mxu0
      %1797 = vmatprep.mubr.bf16.mxu0 0
      %1798 = vmatmul.mubr.bf16.gmra.mrb[0].mxu0 %v1485
      %v1799 = vpop.f32.mrb[0].mxu0
      %v1800 = vadd.f32 %v1735, %v1799
      %v1801 = vpop.f32.mrb[0].mxu0
      %v1802 = vpop.f32.mrb[0].mxu0
      %v1803 = vadd.f32 %v1738, %v1802
      %v1804 = vpop.f32.mrb[0].mxu0
      %1805 = vmatprep.mubr.bf16.mxu0 0
      %1806 = vmatmul.mubr.bf16.gmra.mrb[0].mxu0 %v1486
      %v1807 = vpop.f32.mrb[0].mxu0
      %v1808 = vadd.f32 %v1743, %v1807
      %v1809 = vpop.f32.mrb[0].mxu0
      %v1810 = vpop.f32.mrb[0].mxu0
      %v1811 = vadd.f32 %v1746, %v1810
      %v1812 = vpop.f32.mrb[0].mxu0
      %1813 = vdwg.mxu0
      %v1862 = vunpack.c.l.b16 %v1347
      %v1863 = vunpack.c.l.b16 %v1348
      %v1864 = vunpack.c.l.b16 %v1349
      %v1865 = vunpack.c.l.b16 %v1350
      %v1866 = vunpack.c.l.b16 %v1351
      %v1867 = vunpack.c.l.b16 %v1352
      %v1868 = vunpack.c.l.b16 %v1353
      %v1869 = vunpack.c.l.b16 %v1354
      %v1870 = vunpack.c.l.b16 %v1355
      %v1871 = vunpack.c.l.b16 %v1356
      %v1872 = vunpack.c.l.b16 %v1357
      %v1873 = vunpack.c.l.b16 %v1358
      %v1874 = vunpack.c.l.b16 %v1359
      %v1875 = vunpack.c.l.b16 %v1360
      %v1876 = vunpack.c.l.b16 %v1361
      %v1877 = vunpack.c.l.b16 %v1362
      %v1878 = vunpack.c.l.b16 %v1363
      %v1879 = vunpack.c.l.b16 %v1364
      %v1880 = vunpack.c.l.b16 %v1365
      %v1881 = vunpack.c.l.b16 %v1366
      %v1882 = vunpack.c.l.b16 %v1367
      %v1883 = vunpack.c.l.b16 %v1368
      %v1884 = vunpack.c.l.b16 %v1369
      %v1885 = vunpack.c.l.b16 %v1370
      %v1886 = vunpack.c.l.b16 %v1371
      %v1887 = vunpack.c.l.b16 %v1372
      %v1888 = vunpack.c.l.b16 %v1373
      %v1889 = vunpack.c.l.b16 %v1374
      %v1890 = vunpack.c.l.b16 %v1375
      %v1891 = vunpack.c.l.b16 %v1376
      %v1892 = vunpack.c.l.b16 %v1377
      %v1893 = vunpack.c.l.b16 %v1378
      %v1894 = vunpack.c.l.b16 %v1379
      %v1895 = vunpack.c.l.b16 %v1380
      %v1896 = vunpack.c.l.b16 %v1381
      %v1897 = vunpack.c.l.b16 %v1382
      %v1898 = vunpack.c.l.b16 %v1383
      %v1899 = vunpack.c.l.b16 %v1384
      %v1900 = vunpack.c.l.b16 %v1385
      %v1901 = vunpack.c.l.b16 %v1386
      %v1902 = vunpack.c.l.b16 %v1387
      %v1903 = vunpack.c.l.b16 %v1388
      %v1904 = vunpack.c.l.b16 %v1389
      %v1905 = vunpack.c.l.b16 %v1390
      %v1906 = vunpack.c.l.b16 %v1391
      %v1907 = vunpack.c.l.b16 %v1392
      %v1908 = vunpack.c.l.b16 %v1393
      %v1909 = vunpack.c.l.b16 %v1394
      %v1910 = vpack.c.b16 %v1863, %v1862
      %v1911 = vpack.c.b16 %v1865, %v1864
      %v1912 = vpack.c.b16 %v1867, %v1866
      %v1913 = vpack.c.b16 %v1869, %v1868
      %v1914 = vpack.c.b16 %v1871, %v1870
      %v1915 = vpack.c.b16 %v1873, %v1872
      %v1916 = vpack.c.b16 %v1875, %v1874
      %v1917 = vpack.c.b16 %v1877, %v1876
      %v1918 = vpack.c.b16 %v1879, %v1878
      %v1919 = vpack.c.b16 %v1881, %v1880
      %v1920 = vpack.c.b16 %v1883, %v1882
      %v1921 = vpack.c.b16 %v1885, %v1884
      %v1922 = vpack.c.b16 %v1887, %v1886
      %v1923 = vpack.c.b16 %v1889, %v1888
      %v1924 = vpack.c.b16 %v1891, %v1890
      %v1925 = vpack.c.b16 %v1893, %v1892
      %v1926 = vpack.c.b16 %v1895, %v1894
      %v1927 = vpack.c.b16 %v1897, %v1896
      %v1928 = vpack.c.b16 %v1899, %v1898
      %v1929 = vpack.c.b16 %v1901, %v1900
      %v1930 = vpack.c.b16 %v1903, %v1902
      %v1931 = vpack.c.b16 %v1905, %v1904
      %v1932 = vpack.c.b16 %v1907, %v1906
      %v1933 = vpack.c.b16 %v1909, %v1908
      %1958 = vmatprep.subr.bf16.mxu0 0
      %1959 = vmatpush1.bf16.msra.mxu0 %v1910
      %1960 = vmatprep.subr.bf16.mxu0 0
      %1961 = vmatpush1.bf16.msra.mxu0 %v1911
      %1962 = vmatprep.subr.bf16.mxu0 0
      %1963 = vmatpush1.bf16.msra.mxu0 %v1912
      %1964 = vmatprep.subr.bf16.mxu0 0
      %1965 = vmatpush1.bf16.msra.mxu0 %v1913
      %1966 = vmatprep.subr.bf16.mxu0 0
      %1967 = vmatpush1.bf16.msra.mxu0 %v1914
      %1968 = vmatprep.subr.bf16.mxu0 0
      %1969 = vmatpush1.bf16.msra.mxu0 %v1915
      %1970 = vmatprep.subr.bf16.mxu0 0
      %1971 = vmatpush1.bf16.msra.mxu0 %v1916
      %1972 = vmatprep.subr.bf16.mxu0 0
      %1973 = vmatpush1.bf16.msra.mxu0 %v1917
      %1974 = vmatprep.subr.bf16.mxu0 0
      %1975 = vmatpush1.bf16.msra.mxu0 %v1918
      %1976 = vmatprep.subr.bf16.mxu0 0
      %1977 = vmatpush1.bf16.msra.mxu0 %v1919
      %1978 = vmatprep.subr.bf16.mxu0 0
      %1979 = vmatpush1.bf16.msra.mxu0 %v1920
      %1980 = vmatprep.subr.bf16.mxu0 0
      %1981 = vmatpush1.bf16.msra.mxu0 %v1921
      %1982 = vmatprep.subr.bf16.mxu0 0
      %1983 = vmatpush1.bf16.msra.mxu0 %v1922
      %1984 = vmatprep.subr.bf16.mxu0 0
      %1985 = vmatpush1.bf16.msra.mxu0 %v1923
      %1986 = vmatprep.subr.bf16.mxu0 0
      %1987 = vmatpush1.bf16.msra.mxu0 %v1924
      %1988 = vmatprep.subr.bf16.mxu0 0
      %1989 = vmatpush1.bf16.msra.mxu0 %v1925
      %1990 = vmatprep.mubr.bf16.mxu0 %v1323
      %1991 = vmatmul.mubr.bf16.gmra.mrb[0].mxu0 %v1307
      %v1992 = vpop.f32.mrb[0].mxu0
      %v1993 = vadd.f32 %v1784, %v1992
      %v1994 = vpop.f32.mrb[0].mxu0
      %v1995 = vpop.f32.mrb[0].mxu0
      %v1996 = vadd.f32 %v1787, %v1995
      %v1997 = vpop.f32.mrb[0].mxu0
      %1998 = vmatprep.mubr.bf16.mxu0 %v1324
      %1999 = vmatmul.mubr.bf16.gmra.mrb[0].mxu0 %v1308
      %v2000 = vpop.f32.mrb[0].mxu0
      %v2001 = vadd.f32 %v1792, %v2000
      %v2002 = vpop.f32.mrb[0].mxu0
      %v2003 = vpop.f32.mrb[0].mxu0
      %v2004 = vadd.f32 %v1795, %v2003
      %v2005 = vpop.f32.mrb[0].mxu0
      %2006 = vmatprep.mubr.bf16.mxu0 %v1325
      %2007 = vmatmul.mubr.bf16.gmra.mrb[0].mxu0 %v1309
      %v2008 = vpop.f32.mrb[0].mxu0
      %v2009 = vadd.f32 %v1800, %v2008
      %v2010 = vpop.f32.mrb[0].mxu0
      %v2011 = vpop.f32.mrb[0].mxu0
      %v2012 = vadd.f32 %v1803, %v2011
      %v2013 = vpop.f32.mrb[0].mxu0
      %2014 = vmatprep.mubr.bf16.mxu0 %v1326
      %2015 = vmatmul.mubr.bf16.gmra.mrb[0].mxu0 %v1310
      %v2016 = vpop.f32.mrb[0].mxu0
      %v2017 = vadd.f32 %v1808, %v2016
      %v2018 = vpop.f32.mrb[0].mxu0
      %v2019 = vpop.f32.mrb[0].mxu0
      %v2020 = vadd.f32 %v1811, %v2019
      %v2021 = vpop.f32.mrb[0].mxu0
      %2022 = vdwg.mxu0
      %2023 = vmatprep.subr.bf16.mxu0 0
      %2024 = vmatpush1.bf16.msra.mxu0 %v1926
      %2025 = vmatprep.subr.bf16.mxu0 0
      %2026 = vmatpush1.bf16.msra.mxu0 %v1927
      %2027 = vmatprep.subr.bf16.mxu0 0
      %2028 = vmatpush1.bf16.msra.mxu0 %v1928
      %2029 = vmatprep.subr.bf16.mxu0 0
      %2030 = vmatpush1.bf16.msra.mxu0 %v1929
      %2031 = vmatprep.subr.bf16.mxu0 0
      %2032 = vmatpush1.bf16.msra.mxu0 %v1930
      %2033 = vmatprep.subr.bf16.mxu0 0
      %2034 = vmatpush1.bf16.msra.mxu0 %v1931
      %2035 = vmatprep.subr.bf16.mxu0 0
      %2036 = vmatpush1.bf16.msra.mxu0 %v1932
      %2037 = vmatprep.subr.bf16.mxu0 0
      %2038 = vmatpush1.bf16.msra.mxu0 %v1933
      %2039 = vmatprep.subr.bf16.mxu0 0
      %2040 = vmatpush1.bf16.msra.mxu0 0
      %2041 = vmatprep.subr.bf16.mxu0 0
      %2042 = vmatpush1.bf16.msra.mxu0 0
      %2043 = vmatprep.subr.bf16.mxu0 0
      %2044 = vmatpush1.bf16.msra.mxu0 0
      %2045 = vmatprep.subr.bf16.mxu0 0
      %2046 = vmatpush1.bf16.msra.mxu0 0
      %2047 = vmatprep.subr.bf16.mxu0 0
      %2048 = vmatpush1.bf16.msra.mxu0 0
      %2049 = vmatprep.subr.bf16.mxu0 0
      %2050 = vmatpush1.bf16.msra.mxu0 0
      %2051 = vmatprep.subr.bf16.mxu0 0
      %2052 = vmatpush1.bf16.msra.mxu0 0
      %2053 = vmatprep.subr.bf16.mxu0 0
      %2054 = vmatpush1.bf16.msra.mxu0 0
      %2055 = vmatprep.mubr.bf16.mxu0 0
      %2056 = vmatmul.mubr.bf16.gmra.mrb[0].mxu0 %v1339
      %v2057 = vpop.f32.mrb[0].mxu0
      %v2058 = vadd.f32 %v1993, %v2057
      %v2059 = vpop.f32.mrb[0].mxu0
      %v2060 = vpop.f32.mrb[0].mxu0
      %v2061 = vadd.f32 %v1996, %v2060
      %v2062 = vpop.f32.mrb[0].mxu0
      %2063 = vmatprep.mubr.bf16.mxu0 0
      %2064 = vmatmul.mubr.bf16.gmra.mrb[0].mxu0 %v1340
      %v2065 = vpop.f32.mrb[0].mxu0
      %v2066 = vadd.f32 %v2001, %v2065
      %v2067 = vpop.f32.mrb[0].mxu0
      %v2068 = vpop.f32.mrb[0].mxu0
      %v2069 = vadd.f32 %v2004, %v2068
      %v2070 = vpop.f32.mrb[0].mxu0
      %2071 = vmatprep.mubr.bf16.mxu0 0
      %2072 = vmatmul.mubr.bf16.gmra.mrb[0].mxu0 %v1341
      %v2073 = vpop.f32.mrb[0].mxu0
      %v2074 = vadd.f32 %v2009, %v2073
      %v2075 = vpop.f32.mrb[0].mxu0
      %v2076 = vpop.f32.mrb[0].mxu0
      %v2077 = vadd.f32 %v2012, %v2076
      %v2078 = vpop.f32.mrb[0].mxu0
      %2079 = vmatprep.mubr.bf16.mxu0 0
      %2080 = vmatmul.mubr.bf16.gmra.mrb[0].mxu0 %v1342
      %v2081 = vpop.f32.mrb[0].mxu0
      %v2082 = vadd.f32 %v2017, %v2081
      %v2083 = vpop.f32.mrb[0].mxu0
      %v2084 = vpop.f32.mrb[0].mxu0
      %v2085 = vadd.f32 %v2020, %v2084
      %v2086 = vpop.f32.mrb[0].mxu0
      %2087 = vdwg.mxu0
      %v2088 = vld [vmem:[#allocation2 + $0x18] sm:$0xf0]
      %v2089 = vld [vmem:[#allocation2 + $0x38] sm:$0xf0]
      %v2090 = vld [vmem:[#allocation2 + $0x58] sm:$0xf0]
      %v2091 = vld [vmem:[#allocation2 + $0x78] sm:$0xf0]
      %v2092 = vld [vmem:[#allocation2 + $0x98] sm:$0xf0]
      %v2093 = vld [vmem:[#allocation2 + $0xb8] sm:$0xf0]
      %v2094 = vld [vmem:[#allocation2 + $0xd8] sm:$0xf0]
      %v2095 = vld [vmem:[#allocation2 + $0xf8] sm:$0xf0]
      %v2104 = vunpack.c.h.b16 %v2088
      %v2105 = vunpack.c.h.b16 %v2089
      %v2106 = vunpack.c.h.b16 %v2090
      %v2107 = vunpack.c.h.b16 %v2091
      %v2108 = vunpack.c.h.b16 %v2092
      %v2109 = vunpack.c.h.b16 %v2093
      %v2110 = vunpack.c.h.b16 %v2094
      %v2111 = vunpack.c.h.b16 %v2095
      %v2112 = vld [vmem:[%s808 + $0x8] sm:$0xf0]
      %v2113 = vld [vmem:[%s808 + $0x28] sm:$0xf0]
      %v2114 = vld [vmem:[%s808 + $0x48] sm:$0xf0]
      %v2115 = vld [vmem:[%s808 + $0x68] sm:$0xf0]
      %v2116 = vld [vmem:[%s808 + $0x88] sm:$0xf0]
      %v2117 = vld [vmem:[%s808 + $0xa8] sm:$0xf0]
      %v2118 = vld [vmem:[%s808 + $0xc8] sm:$0xf0]
      %v2119 = vld [vmem:[%s808 + $0xe8] sm:$0xf0]
      %v2128 = vunpack.c.h.b16 %v2112
      %v2129 = vunpack.c.h.b16 %v2113
      %v2130 = vunpack.c.h.b16 %v2114
      %v2131 = vunpack.c.h.b16 %v2115
      %v2132 = vunpack.c.h.b16 %v2116
      %v2133 = vunpack.c.h.b16 %v2117
      %v2134 = vunpack.c.h.b16 %v2118
      %v2135 = vunpack.c.h.b16 %v2119
      %v2136 = vld [vmem:[%s808 + $0x18] sm:$0xf0]
      %v2137 = vld [vmem:[%s808 + $0x38] sm:$0xf0]
      %v2138 = vld [vmem:[%s808 + $0x58] sm:$0xf0]
      %v2139 = vld [vmem:[%s808 + $0x78] sm:$0xf0]
      %v2140 = vld [vmem:[%s808 + $0x98] sm:$0xf0]
      %v2141 = vld [vmem:[%s808 + $0xb8] sm:$0xf0]
      %v2142 = vld [vmem:[%s808 + $0xd8] sm:$0xf0]
      %v2143 = vld [vmem:[%s808 + $0xf8] sm:$0xf0]
      %v2152 = vunpack.c.h.b16 %v2136
      %v2153 = vunpack.c.h.b16 %v2137
      %v2154 = vunpack.c.h.b16 %v2138
      %v2155 = vunpack.c.h.b16 %v2139
      %v2156 = vunpack.c.h.b16 %v2140
      %v2157 = vunpack.c.h.b16 %v2141
      %v2158 = vunpack.c.h.b16 %v2142
      %v2159 = vunpack.c.h.b16 %v2143
      %v2160 = vpack.c.b16 %v2105, %v2104
      %v2161 = vpack.c.b16 %v2107, %v2106
      %v2162 = vpack.c.b16 %v2109, %v2108
      %v2163 = vpack.c.b16 %v2111, %v2110
      %v2168 = vpack.c.b16 %v2129, %v2128
      %v2169 = vpack.c.b16 %v2131, %v2130
      %v2170 = vpack.c.b16 %v2133, %v2132
      %v2171 = vpack.c.b16 %v2135, %v2134
      %v2176 = vpack.c.b16 %v2153, %v2152
      %v2177 = vpack.c.b16 %v2155, %v2154
      %v2178 = vpack.c.b16 %v2157, %v2156
      %v2179 = vpack.c.b16 %v2159, %v2158
      %s2184 = scalar_lea.vmem %s5, 384
      %v2185 = vld [vmem:[%s2184] sm:$0xf]
      %v2186 = vld [vmem:[%s2184 + $0x4] sm:$0xf]
      %v2187 = vld [vmem:[%s2184 + $0x8] sm:$0xf]
      %v2188 = vld [vmem:[%s2184 + $0xc] sm:$0xf]
      %v2189 = vld [vmem:[%s2184 + $0x10] sm:$0xf]
      %v2190 = vld [vmem:[%s2184 + $0x14] sm:$0xf]
      %v2191 = vld [vmem:[%s2184 + $0x18] sm:$0xf]
      %v2192 = vld [vmem:[%s2184 + $0x1c] sm:$0xf]
      %v2193 = vld [vmem:[%s2184 + $0x20] sm:$0xf]
      %v2194 = vld [vmem:[%s2184 + $0x24] sm:$0xf]
      %v2195 = vld [vmem:[%s2184 + $0x28] sm:$0xf]
      %v2196 = vld [vmem:[%s2184 + $0x2c] sm:$0xf]
      %v2197 = vld [vmem:[%s2184 + $0x30] sm:$0xf]
      %v2198 = vld [vmem:[%s2184 + $0x34] sm:$0xf]
      %v2199 = vld [vmem:[%s2184 + $0x38] sm:$0xf]
      %v2200 = vld [vmem:[%s2184 + $0x3c] sm:$0xf]
      %v2201 = vld [vmem:[%s2184 + $0x40] sm:$0xf]
      %v2202 = vld [vmem:[%s2184 + $0x44] sm:$0xf]
      %v2203 = vld [vmem:[%s2184 + $0x48] sm:$0xf]
      %v2204 = vld [vmem:[%s2184 + $0x4c] sm:$0xf]
      %v2205 = vld [vmem:[%s2184 + $0x50] sm:$0xf]
      %v2206 = vld [vmem:[%s2184 + $0x54] sm:$0xf]
      %v2207 = vld [vmem:[%s2184 + $0x58] sm:$0xf]
      %v2208 = vld [vmem:[%s2184 + $0x5c] sm:$0xf]
      %v2209 = vld [vmem:[%s2184 + $0x60] sm:$0xf]
      %v2210 = vld [vmem:[%s2184 + $0x64] sm:$0xf]
      %v2211 = vld [vmem:[%s2184 + $0x68] sm:$0xf]
      %v2212 = vld [vmem:[%s2184 + $0x6c] sm:$0xf]
      %v2213 = vld [vmem:[%s2184 + $0x70] sm:$0xf]
      %v2214 = vld [vmem:[%s2184 + $0x74] sm:$0xf]
      %v2215 = vld [vmem:[%s2184 + $0x78] sm:$0xf]
      %v2216 = vld [vmem:[%s2184 + $0x7c] sm:$0xf]
      %v2217 = vld [vmem:[%s2184 + $0x80] sm:$0xf]
      %v2218 = vld [vmem:[%s2184 + $0x84] sm:$0xf]
      %v2219 = vld [vmem:[%s2184 + $0x88] sm:$0xf]
      %v2220 = vld [vmem:[%s2184 + $0x8c] sm:$0xf]
      %v2221 = vld [vmem:[%s2184 + $0x90] sm:$0xf]
      %v2222 = vld [vmem:[%s2184 + $0x94] sm:$0xf]
      %v2223 = vld [vmem:[%s2184 + $0x98] sm:$0xf]
      %v2224 = vld [vmem:[%s2184 + $0x9c] sm:$0xf]
      %v2225 = vld [vmem:[%s2184 + $0xa0] sm:$0xf]
      %v2226 = vld [vmem:[%s2184 + $0xa4] sm:$0xf]
      %v2227 = vld [vmem:[%s2184 + $0xa8] sm:$0xf]
      %v2228 = vld [vmem:[%s2184 + $0xac] sm:$0xf]
      %v2229 = vld [vmem:[%s2184 + $0xb0] sm:$0xf]
      %v2230 = vld [vmem:[%s2184 + $0xb4] sm:$0xf]
      %v2231 = vld [vmem:[%s2184 + $0xb8] sm:$0xf]
      %v2232 = vld [vmem:[%s2184 + $0xbc] sm:$0xf]
      %v2281 = vunpack.c.l.b16 %v2185
      %v2282 = vunpack.c.l.b16 %v2186
      %v2283 = vunpack.c.l.b16 %v2187
      %v2284 = vunpack.c.l.b16 %v2188
      %v2285 = vunpack.c.l.b16 %v2189
      %v2286 = vunpack.c.l.b16 %v2190
      %v2287 = vunpack.c.l.b16 %v2191
      %v2288 = vunpack.c.l.b16 %v2192
      %v2289 = vunpack.c.l.b16 %v2193
      %v2290 = vunpack.c.l.b16 %v2194
      %v2291 = vunpack.c.l.b16 %v2195
      %v2292 = vunpack.c.l.b16 %v2196
      %v2293 = vunpack.c.l.b16 %v2197
      %v2294 = vunpack.c.l.b16 %v2198
      %v2295 = vunpack.c.l.b16 %v2199
      %v2296 = vunpack.c.l.b16 %v2200
      %v2297 = vunpack.c.l.b16 %v2201
      %v2298 = vunpack.c.l.b16 %v2202
      %v2299 = vunpack.c.l.b16 %v2203
      %v2300 = vunpack.c.l.b16 %v2204
      %v2301 = vunpack.c.l.b16 %v2205
      %v2302 = vunpack.c.l.b16 %v2206
      %v2303 = vunpack.c.l.b16 %v2207
      %v2304 = vunpack.c.l.b16 %v2208
      %v2305 = vunpack.c.l.b16 %v2209
      %v2306 = vunpack.c.l.b16 %v2210
      %v2307 = vunpack.c.l.b16 %v2211
      %v2308 = vunpack.c.l.b16 %v2212
      %v2309 = vunpack.c.l.b16 %v2213
      %v2310 = vunpack.c.l.b16 %v2214
      %v2311 = vunpack.c.l.b16 %v2215
      %v2312 = vunpack.c.l.b16 %v2216
      %v2313 = vunpack.c.l.b16 %v2217
      %v2314 = vunpack.c.l.b16 %v2218
      %v2315 = vunpack.c.l.b16 %v2219
      %v2316 = vunpack.c.l.b16 %v2220
      %v2317 = vunpack.c.l.b16 %v2221
      %v2318 = vunpack.c.l.b16 %v2222
      %v2319 = vunpack.c.l.b16 %v2223
      %v2320 = vunpack.c.l.b16 %v2224
      %v2321 = vunpack.c.l.b16 %v2225
      %v2322 = vunpack.c.l.b16 %v2226
      %v2323 = vunpack.c.l.b16 %v2227
      %v2324 = vunpack.c.l.b16 %v2228
      %v2325 = vunpack.c.l.b16 %v2229
      %v2326 = vunpack.c.l.b16 %v2230
      %v2327 = vunpack.c.l.b16 %v2231
      %v2328 = vunpack.c.l.b16 %v2232
      %v2329 = vpack.c.b16 %v2282, %v2281
      %v2330 = vpack.c.b16 %v2284, %v2283
      %v2331 = vpack.c.b16 %v2286, %v2285
      %v2332 = vpack.c.b16 %v2288, %v2287
      %v2333 = vpack.c.b16 %v2290, %v2289
      %v2334 = vpack.c.b16 %v2292, %v2291
      %v2335 = vpack.c.b16 %v2294, %v2293
      %v2336 = vpack.c.b16 %v2296, %v2295
      %v2337 = vpack.c.b16 %v2298, %v2297
      %v2338 = vpack.c.b16 %v2300, %v2299
      %v2339 = vpack.c.b16 %v2302, %v2301
      %v2340 = vpack.c.b16 %v2304, %v2303
      %v2341 = vpack.c.b16 %v2306, %v2305
      %v2342 = vpack.c.b16 %v2308, %v2307
      %v2343 = vpack.c.b16 %v2310, %v2309
      %v2344 = vpack.c.b16 %v2312, %v2311
      %v2345 = vpack.c.b16 %v2314, %v2313
      %v2346 = vpack.c.b16 %v2316, %v2315
      %v2347 = vpack.c.b16 %v2318, %v2317
      %v2348 = vpack.c.b16 %v2320, %v2319
      %v2349 = vpack.c.b16 %v2322, %v2321
      %v2350 = vpack.c.b16 %v2324, %v2323
      %v2351 = vpack.c.b16 %v2326, %v2325
      %v2352 = vpack.c.b16 %v2328, %v2327
      %2377 = vmatprep.subr.bf16.mxu0 0
      %2378 = vmatpush1.bf16.msra.mxu0 %v2329
      %2379 = vmatprep.subr.bf16.mxu0 0
      %2380 = vmatpush1.bf16.msra.mxu0 %v2330
      %2381 = vmatprep.subr.bf16.mxu0 0
      %2382 = vmatpush1.bf16.msra.mxu0 %v2331
      %2383 = vmatprep.subr.bf16.mxu0 0
      %2384 = vmatpush1.bf16.msra.mxu0 %v2332
      %2385 = vmatprep.subr.bf16.mxu0 0
      %2386 = vmatpush1.bf16.msra.mxu0 %v2333
      %2387 = vmatprep.subr.bf16.mxu0 0
      %2388 = vmatpush1.bf16.msra.mxu0 %v2334
      %2389 = vmatprep.subr.bf16.mxu0 0
      %2390 = vmatpush1.bf16.msra.mxu0 %v2335
      %2391 = vmatprep.subr.bf16.mxu0 0
      %2392 = vmatpush1.bf16.msra.mxu0 %v2336
      %2393 = vmatprep.subr.bf16.mxu0 0
      %2394 = vmatpush1.bf16.msra.mxu0 %v2337
      %2395 = vmatprep.subr.bf16.mxu0 0
      %2396 = vmatpush1.bf16.msra.mxu0 %v2338
      %2397 = vmatprep.subr.bf16.mxu0 0
      %2398 = vmatpush1.bf16.msra.mxu0 %v2339
      %2399 = vmatprep.subr.bf16.mxu0 0
      %2400 = vmatpush1.bf16.msra.mxu0 %v2340
      %2401 = vmatprep.subr.bf16.mxu0 0
      %2402 = vmatpush1.bf16.msra.mxu0 %v2341
      %2403 = vmatprep.subr.bf16.mxu0 0
      %2404 = vmatpush1.bf16.msra.mxu0 %v2342
      %2405 = vmatprep.subr.bf16.mxu0 0
      %2406 = vmatpush1.bf16.msra.mxu0 %v2343
      %2407 = vmatprep.subr.bf16.mxu0 0
      %2408 = vmatpush1.bf16.msra.mxu0 %v2344
      %2409 = vmatprep.mubr.bf16.mxu0 %v2168
      %2410 = vmatmul.mubr.bf16.gmra.mrb[0].mxu0 %v2160
      %v2411 = vpop.f32.mrb[0].mxu0
      %v2412 = vadd.f32 0.0, %v2411
      %v2413 = vpop.f32.mrb[0].mxu0
      %v2414 = vpop.f32.mrb[0].mxu0
      %v2415 = vadd.f32 0.0, %v2414
      %v2416 = vpop.f32.mrb[0].mxu0
      %2417 = vmatprep.mubr.bf16.mxu0 %v2169
      %2418 = vmatmul.mubr.bf16.gmra.mrb[0].mxu0 %v2161
      %v2419 = vpop.f32.mrb[0].mxu0
      %v2420 = vadd.f32 0.0, %v2419
      %v2421 = vpop.f32.mrb[0].mxu0
      %v2422 = vpop.f32.mrb[0].mxu0
      %v2423 = vadd.f32 0.0, %v2422
      %v2424 = vpop.f32.mrb[0].mxu0
      %2425 = vmatprep.mubr.bf16.mxu0 %v2170
      %2426 = vmatmul.mubr.bf16.gmra.mrb[0].mxu0 %v2162
      %v2427 = vpop.f32.mrb[0].mxu0
      %v2428 = vadd.f32 0.0, %v2427
      %v2429 = vpop.f32.mrb[0].mxu0
      %v2430 = vpop.f32.mrb[0].mxu0
      %v2431 = vadd.f32 0.0, %v2430
      %v2432 = vpop.f32.mrb[0].mxu0
      %2433 = vmatprep.mubr.bf16.mxu0 %v2171
      %2434 = vmatmul.mubr.bf16.gmra.mrb[0].mxu0 %v2163
      %v2435 = vpop.f32.mrb[0].mxu0
      %v2436 = vadd.f32 0.0, %v2435
      %v2437 = vpop.f32.mrb[0].mxu0
      %v2438 = vpop.f32.mrb[0].mxu0
      %v2439 = vadd.f32 0.0, %v2438
      %v2440 = vpop.f32.mrb[0].mxu0
      %2441 = vdwg.mxu0
      %2442 = vmatprep.subr.bf16.mxu0 0
      %2443 = vmatpush1.bf16.msra.mxu0 %v2345
      %2444 = vmatprep.subr.bf16.mxu0 0
      %2445 = vmatpush1.bf16.msra.mxu0 %v2346
      %2446 = vmatprep.subr.bf16.mxu0 0
      %2447 = vmatpush1.bf16.msra.mxu0 %v2347
      %2448 = vmatprep.subr.bf16.mxu0 0
      %2449 = vmatpush1.bf16.msra.mxu0 %v2348
      %2450 = vmatprep.subr.bf16.mxu0 0
      %2451 = vmatpush1.bf16.msra.mxu0 %v2349
      %2452 = vmatprep.subr.bf16.mxu0 0
      %2453 = vmatpush1.bf16.msra.mxu0 %v2350
      %2454 = vmatprep.subr.bf16.mxu0 0
      %2455 = vmatpush1.bf16.msra.mxu0 %v2351
      %2456 = vmatprep.subr.bf16.mxu0 0
      %2457 = vmatpush1.bf16.msra.mxu0 %v2352
      %2458 = vmatprep.subr.bf16.mxu0 0
      %2459 = vmatpush1.bf16.msra.mxu0 0
      %2460 = vmatprep.subr.bf16.mxu0 0
      %2461 = vmatpush1.bf16.msra.mxu0 0
      %2462 = vmatprep.subr.bf16.mxu0 0
      %2463 = vmatpush1.bf16.msra.mxu0 0
      %2464 = vmatprep.subr.bf16.mxu0 0
      %2465 = vmatpush1.bf16.msra.mxu0 0
      %2466 = vmatprep.subr.bf16.mxu0 0
      %2467 = vmatpush1.bf16.msra.mxu0 0
      %2468 = vmatprep.subr.bf16.mxu0 0
      %2469 = vmatpush1.bf16.msra.mxu0 0
      %2470 = vmatprep.subr.bf16.mxu0 0
      %2471 = vmatpush1.bf16.msra.mxu0 0
      %2472 = vmatprep.subr.bf16.mxu0 0
      %2473 = vmatpush1.bf16.msra.mxu0 0
      %2474 = vmatprep.mubr.bf16.mxu0 0
      %2475 = vmatmul.mubr.bf16.gmra.mrb[0].mxu0 %v2176
      %v2476 = vpop.f32.mrb[0].mxu0
      %v2477 = vadd.f32 %v2412, %v2476
      %v2478 = vpop.f32.mrb[0].mxu0
      %v2479 = vpop.f32.mrb[0].mxu0
      %v2480 = vadd.f32 %v2415, %v2479
      %v2481 = vpop.f32.mrb[0].mxu0
      %2482 = vmatprep.mubr.bf16.mxu0 0
      %2483 = vmatmul.mubr.bf16.gmra.mrb[0].mxu0 %v2177
      %v2484 = vpop.f32.mrb[0].mxu0
      %v2485 = vadd.f32 %v2420, %v2484
      %v2486 = vpop.f32.mrb[0].mxu0
      %v2487 = vpop.f32.mrb[0].mxu0
      %v2488 = vadd.f32 %v2423, %v2487
      %v2489 = vpop.f32.mrb[0].mxu0
      %2490 = vmatprep.mubr.bf16.mxu0 0
      %2491 = vmatmul.mubr.bf16.gmra.mrb[0].mxu0 %v2178
      %v2492 = vpop.f32.mrb[0].mxu0
      %v2493 = vadd.f32 %v2428, %v2492
      %v2494 = vpop.f32.mrb[0].mxu0
      %v2495 = vpop.f32.mrb[0].mxu0
      %v2496 = vadd.f32 %v2431, %v2495
      %v2497 = vpop.f32.mrb[0].mxu0
      %2498 = vmatprep.mubr.bf16.mxu0 0
      %2499 = vmatmul.mubr.bf16.gmra.mrb[0].mxu0 %v2179
      %v2500 = vpop.f32.mrb[0].mxu0
      %v2501 = vadd.f32 %v2436, %v2500
      %v2502 = vpop.f32.mrb[0].mxu0
      %v2503 = vpop.f32.mrb[0].mxu0
      %v2504 = vadd.f32 %v2439, %v2503
      %v2505 = vpop.f32.mrb[0].mxu0
      %2506 = vdwg.mxu0
      %v2507 = vadd.f32 %v2058, %v2477
      %v2508 = vadd.f32 %v2061, %v2480
      %v2509 = vadd.f32 %v2066, %v2485
      %v2510 = vadd.f32 %v2069, %v2488
      %v2511 = vadd.f32 %v2074, %v2493
      %v2512 = vadd.f32 %v2077, %v2496
      %v2513 = vadd.f32 %v2082, %v2501
      %v2514 = vadd.f32 %v2085, %v2504
      %v2515 = vld [vmem:[%s3] sm:$0x1]
      %v2517 = vlaneseq
      %v2518 = vshrl.u32 %v2517, 7
      %v2519 = vsub.s32 0, %v2518
      %v2520 = vrot.slane %v2515, %v2519
      %v2522 = vmul.f32 %v2507, %v2520
      %v2523 = vmul.f32 %v2508, %v2520
      %v2524 = vmul.f32 %v2509, %v2520
      %v2525 = vmul.f32 %v2510, %v2520
      %v2526 = vmul.f32 %v2511, %v2520
      %v2527 = vmul.f32 %v2512, %v2520
      %v2528 = vmul.f32 %v2513, %v2520
      %v2529 = vmul.f32 %v2514, %v2520
      %v2530 = vld [vmem:[%s4] sm:$0x1]
      %v2532 = vlaneseq
      %v2533 = vshrl.u32 %v2532, 7
      %v2534 = vsub.s32 0, %v2533
      %v2535 = vrot.slane %v2530, %v2534
      %v2537 = vadd.f32 %v2522, %v2535
      %v2538 = vadd.f32 %v2523, %v2535
      %v2539 = vadd.f32 %v2524, %v2535
      %v2540 = vadd.f32 %v2525, %v2535
      %v2541 = vadd.f32 %v2526, %v2535
      %v2542 = vadd.f32 %v2527, %v2535
      %v2543 = vadd.f32 %v2528, %v2535
      %v2544 = vadd.f32 %v2529, %v2535
      %v2545 = vmax.f32 %v2537, 0.0
      %v2546 = vmax.f32 %v2538, 0.0
      %v2547 = vmax.f32 %v2539, 0.0
      %v2548 = vmax.f32 %v2540, 0.0
      %v2549 = vmax.f32 %v2541, 0.0
      %v2550 = vmax.f32 %v2542, 0.0
      %v2551 = vmax.f32 %v2543, 0.0
      %v2552 = vmax.f32 %v2544, 0.0
      %v2553 = vpack.c.bf16 %v2545, %v2545
      %v2554 = vpack.c.bf16 %v2546, %v2546
      %v2555 = vpack.c.bf16 %v2547, %v2547
      %v2556 = vpack.c.bf16 %v2548, %v2548
      %v2557 = vpack.c.bf16 %v2549, %v2549
      %v2558 = vpack.c.bf16 %v2550, %v2550
      %v2559 = vpack.c.bf16 %v2551, %v2551
      %v2560 = vpack.c.bf16 %v2552, %v2552
      %s2561 = scalar_lea.vmem [#allocation3], 12
      %2562 = vst [vmem:[%s2561 + $0x4] sm:$0xf] %v2553
      %2563 = vst [vmem:[%s2561 + $0x10] sm:$0xf] %v2554
      %2564 = vst [vmem:[%s2561 + $0x1c] sm:$0xf] %v2555
      %2565 = vst [vmem:[%s2561 + $0x28] sm:$0xf] %v2556
      %2566 = vst [vmem:[%s2561 + $0x34] sm:$0xf] %v2557
      %2567 = vst [vmem:[%s2561 + $0x40] sm:$0xf] %v2558
      %2568 = vst [vmem:[%s2561 + $0x4c] sm:$0xf] %v2559
      %2569 = vst [vmem:[%s2561 + $0x58] sm:$0xf] %v2560
      %v2570 = vld [vmem:[#allocation3] sm:$0x8]
      %v2571 = vld [vmem:[#allocation3 + $0x4] sm:$0xf]
      %v2572 = vld [vmem:[#allocation3 + $0xc] sm:$0x8]
      %v2573 = vld [vmem:[#allocation3 + $0x10] sm:$0xf]
      %v2574 = vld [vmem:[#allocation3 + $0x18] sm:$0x8]
      %v2575 = vld [vmem:[#allocation3 + $0x1c] sm:$0xf]
      %v2576 = vld [vmem:[#allocation3 + $0x24] sm:$0x8]
      %v2577 = vld [vmem:[#allocation3 + $0x28] sm:$0xf]
      %v2578 = vld [vmem:[#allocation3 + $0x30] sm:$0x8]
      %v2579 = vld [vmem:[#allocation3 + $0x34] sm:$0xf]
      %v2580 = vld [vmem:[#allocation3 + $0x3c] sm:$0x8]
      %v2581 = vld [vmem:[#allocation3 + $0x40] sm:$0xf]
      %v2582 = vld [vmem:[#allocation3 + $0x48] sm:$0x8]
      %v2583 = vld [vmem:[#allocation3 + $0x4c] sm:$0xf]
      %v2584 = vld [vmem:[#allocation3 + $0x54] sm:$0x8]
      %v2585 = vld [vmem:[#allocation3 + $0x58] sm:$0xf]
      %v2587 = vshrl.u32 %v2570, 16
      %v2589 = vrot.slane %v2587, 7
      %v2590 = vrot.slane %v2589, 4
      %v2592 = vshrl.u32 %v2571, 16
      %v2594 = vrot.slane %v2592, 7
      %v2595 = vshll.u32 %v2571, 16
      %v2597 = vor.u32 %v2594, %v2595
      %v2598 = vsel %vm890, %v2590, %v2597
      %v2600 = vshrl.u32 %v2572, 16
      %v2602 = vrot.slane %v2600, 7
      %v2603 = vrot.slane %v2602, 4
      %v2605 = vshrl.u32 %v2573, 16
      %v2607 = vrot.slane %v2605, 7
      %v2608 = vshll.u32 %v2573, 16
      %v2610 = vor.u32 %v2607, %v2608
      %v2611 = vsel %vm890, %v2603, %v2610
      %v2613 = vshrl.u32 %v2574, 16
      %v2615 = vrot.slane %v2613, 7
      %v2616 = vrot.slane %v2615, 4
      %v2618 = vshrl.u32 %v2575, 16
      %v2620 = vrot.slane %v2618, 7
      %v2621 = vshll.u32 %v2575, 16
      %v2623 = vor.u32 %v2620, %v2621
      %v2624 = vsel %vm890, %v2616, %v2623
      %v2626 = vshrl.u32 %v2576, 16
      %v2628 = vrot.slane %v2626, 7
      %v2629 = vrot.slane %v2628, 4
      %v2631 = vshrl.u32 %v2577, 16
      %v2633 = vrot.slane %v2631, 7
      %v2634 = vshll.u32 %v2577, 16
      %v2636 = vor.u32 %v2633, %v2634
      %v2637 = vsel %vm890, %v2629, %v2636
      %v2639 = vshrl.u32 %v2578, 16
      %v2641 = vrot.slane %v2639, 7
      %v2642 = vrot.slane %v2641, 4
      %v2644 = vshrl.u32 %v2579, 16
      %v2646 = vrot.slane %v2644, 7
      %v2647 = vshll.u32 %v2579, 16
      %v2649 = vor.u32 %v2646, %v2647
      %v2650 = vsel %vm890, %v2642, %v2649
      %v2652 = vshrl.u32 %v2580, 16
      %v2654 = vrot.slane %v2652, 7
      %v2655 = vrot.slane %v2654, 4
      %v2657 = vshrl.u32 %v2581, 16
      %v2659 = vrot.slane %v2657, 7
      %v2660 = vshll.u32 %v2581, 16
      %v2662 = vor.u32 %v2659, %v2660
      %v2663 = vsel %vm890, %v2655, %v2662
      %v2665 = vshrl.u32 %v2582, 16
      %v2667 = vrot.slane %v2665, 7
      %v2668 = vrot.slane %v2667, 4
      %v2670 = vshrl.u32 %v2583, 16
      %v2672 = vrot.slane %v2670, 7
      %v2673 = vshll.u32 %v2583, 16
      %v2675 = vor.u32 %v2672, %v2673
      %v2676 = vsel %vm890, %v2668, %v2675
      %v2678 = vshrl.u32 %v2584, 16
      %v2680 = vrot.slane %v2678, 7
      %v2681 = vrot.slane %v2680, 4
      %v2683 = vshrl.u32 %v2585, 16
      %v2685 = vrot.slane %v2683, 7
      %v2686 = vshll.u32 %v2585, 16
      %v2688 = vor.u32 %v2685, %v2686
      %v2689 = vsel %vm890, %v2681, %v2688
      %v2690 = vld [vmem:[%s2561] sm:$0x8]
      %v2691 = vld [vmem:[%s2561 + $0x4] sm:$0xf]
      %v2692 = vld [vmem:[%s2561 + $0xc] sm:$0x8]
      %v2693 = vld [vmem:[%s2561 + $0x10] sm:$0xf]
      %v2694 = vld [vmem:[%s2561 + $0x18] sm:$0x8]
      %v2695 = vld [vmem:[%s2561 + $0x1c] sm:$0xf]
      %v2696 = vld [vmem:[%s2561 + $0x24] sm:$0x8]
      %v2697 = vld [vmem:[%s2561 + $0x28] sm:$0xf]
      %v2698 = vld [vmem:[%s2561 + $0x30] sm:$0x8]
      %v2699 = vld [vmem:[%s2561 + $0x34] sm:$0xf]
      %v2700 = vld [vmem:[%s2561 + $0x3c] sm:$0x8]
      %v2701 = vld [vmem:[%s2561 + $0x40] sm:$0xf]
      %v2702 = vld [vmem:[%s2561 + $0x48] sm:$0x8]
      %v2703 = vld [vmem:[%s2561 + $0x4c] sm:$0xf]
      %v2704 = vld [vmem:[%s2561 + $0x54] sm:$0x8]
      %v2705 = vld [vmem:[%s2561 + $0x58] sm:$0xf]
      %v2707 = vshrl.u32 %v2690, 16
      %v2709 = vrot.slane %v2707, 7
      %v2710 = vrot.slane %v2709, 4
      %v2712 = vshrl.u32 %v2691, 16
      %v2714 = vrot.slane %v2712, 7
      %v2715 = vshll.u32 %v2691, 16
      %v2717 = vor.u32 %v2714, %v2715
      %v2718 = vsel %vm890, %v2710, %v2717
      %v2720 = vshrl.u32 %v2692, 16
      %v2722 = vrot.slane %v2720, 7
      %v2723 = vrot.slane %v2722, 4
      %v2725 = vshrl.u32 %v2693, 16
      %v2727 = vrot.slane %v2725, 7
      %v2728 = vshll.u32 %v2693, 16
      %v2730 = vor.u32 %v2727, %v2728
      %v2731 = vsel %vm890, %v2723, %v2730
      %v2733 = vshrl.u32 %v2694, 16
      %v2735 = vrot.slane %v2733, 7
      %v2736 = vrot.slane %v2735, 4
      %v2738 = vshrl.u32 %v2695, 16
      %v2740 = vrot.slane %v2738, 7
      %v2741 = vshll.u32 %v2695, 16
      %v2743 = vor.u32 %v2740, %v2741
      %v2744 = vsel %vm890, %v2736, %v2743
      %v2746 = vshrl.u32 %v2696, 16
      %v2748 = vrot.slane %v2746, 7
      %v2749 = vrot.slane %v2748, 4
      %v2751 = vshrl.u32 %v2697, 16
      %v2753 = vrot.slane %v2751, 7
      %v2754 = vshll.u32 %v2697, 16
      %v2756 = vor.u32 %v2753, %v2754
      %v2757 = vsel %vm890, %v2749, %v2756
      %v2759 = vshrl.u32 %v2698, 16
      %v2761 = vrot.slane %v2759, 7
      %v2762 = vrot.slane %v2761, 4
      %v2764 = vshrl.u32 %v2699, 16
      %v2766 = vrot.slane %v2764, 7
      %v2767 = vshll.u32 %v2699, 16
      %v2769 = vor.u32 %v2766, %v2767
      %v2770 = vsel %vm890, %v2762, %v2769
      %v2772 = vshrl.u32 %v2700, 16
      %v2774 = vrot.slane %v2772, 7
      %v2775 = vrot.slane %v2774, 4
      %v2777 = vshrl.u32 %v2701, 16
      %v2779 = vrot.slane %v2777, 7
      %v2780 = vshll.u32 %v2701, 16
      %v2782 = vor.u32 %v2779, %v2780
      %v2783 = vsel %vm890, %v2775, %v2782
      %v2785 = vshrl.u32 %v2702, 16
      %v2787 = vrot.slane %v2785, 7
      %v2788 = vrot.slane %v2787, 4
      %v2790 = vshrl.u32 %v2703, 16
      %v2792 = vrot.slane %v2790, 7
      %v2793 = vshll.u32 %v2703, 16
      %v2795 = vor.u32 %v2792, %v2793
      %v2796 = vsel %vm890, %v2788, %v2795
      %v2798 = vshrl.u32 %v2704, 16
      %v2800 = vrot.slane %v2798, 7
      %v2801 = vrot.slane %v2800, 4
      %v2803 = vshrl.u32 %v2705, 16
      %v2805 = vrot.slane %v2803, 7
      %v2806 = vshll.u32 %v2705, 16
      %v2808 = vor.u32 %v2805, %v2806
      %v2809 = vsel %vm890, %v2801, %v2808
      %s2810 = scalar_lea.vmem [#allocation3], 24
      %v2811 = vld [vmem:[%s2810] sm:$0x8]
      %v2812 = vld [vmem:[%s2810 + $0x4] sm:$0xf]
      %v2813 = vld [vmem:[%s2810 + $0xc] sm:$0x8]
      %v2814 = vld [vmem:[%s2810 + $0x10] sm:$0xf]
      %v2815 = vld [vmem:[%s2810 + $0x18] sm:$0x8]
      %v2816 = vld [vmem:[%s2810 + $0x1c] sm:$0xf]
      %v2817 = vld [vmem:[%s2810 + $0x24] sm:$0x8]
      %v2818 = vld [vmem:[%s2810 + $0x28] sm:$0xf]
      %v2819 = vld [vmem:[%s2810 + $0x30] sm:$0x8]
      %v2820 = vld [vmem:[%s2810 + $0x34] sm:$0xf]
      %v2821 = vld [vmem:[%s2810 + $0x3c] sm:$0x8]
      %v2822 = vld [vmem:[%s2810 + $0x40] sm:$0xf]
      %v2823 = vld [vmem:[%s2810 + $0x48] sm:$0x8]
      %v2824 = vld [vmem:[%s2810 + $0x4c] sm:$0xf]
      %v2825 = vld [vmem:[%s2810 + $0x54] sm:$0x8]
      %v2826 = vld [vmem:[%s2810 + $0x58] sm:$0xf]
      %v2828 = vshrl.u32 %v2811, 16
      %v2830 = vrot.slane %v2828, 7
      %v2831 = vrot.slane %v2830, 4
      %v2833 = vshrl.u32 %v2812, 16
      %v2835 = vrot.slane %v2833, 7
      %v2836 = vshll.u32 %v2812, 16
      %v2838 = vor.u32 %v2835, %v2836
      %v2839 = vsel %vm890, %v2831, %v2838
      %v2841 = vshrl.u32 %v2813, 16
      %v2843 = vrot.slane %v2841, 7
      %v2844 = vrot.slane %v2843, 4
      %v2846 = vshrl.u32 %v2814, 16
      %v2848 = vrot.slane %v2846, 7
      %v2849 = vshll.u32 %v2814, 16
      %v2851 = vor.u32 %v2848, %v2849
      %v2852 = vsel %vm890, %v2844, %v2851
      %v2854 = vshrl.u32 %v2815, 16
      %v2856 = vrot.slane %v2854, 7
      %v2857 = vrot.slane %v2856, 4
      %v2859 = vshrl.u32 %v2816, 16
      %v2861 = vrot.slane %v2859, 7
      %v2862 = vshll.u32 %v2816, 16
      %v2864 = vor.u32 %v2861, %v2862
      %v2865 = vsel %vm890, %v2857, %v2864
      %v2867 = vshrl.u32 %v2817, 16
      %v2869 = vrot.slane %v2867, 7
      %v2870 = vrot.slane %v2869, 4
      %v2872 = vshrl.u32 %v2818, 16
      %v2874 = vrot.slane %v2872, 7
      %v2875 = vshll.u32 %v2818, 16
      %v2877 = vor.u32 %v2874, %v2875
      %v2878 = vsel %vm890, %v2870, %v2877
      %v2880 = vshrl.u32 %v2819, 16
      %v2882 = vrot.slane %v2880, 7
      %v2883 = vrot.slane %v2882, 4
      %v2885 = vshrl.u32 %v2820, 16
      %v2887 = vrot.slane %v2885, 7
      %v2888 = vshll.u32 %v2820, 16
      %v2890 = vor.u32 %v2887, %v2888
      %v2891 = vsel %vm890, %v2883, %v2890
      %v2893 = vshrl.u32 %v2821, 16
      %v2895 = vrot.slane %v2893, 7
      %v2896 = vrot.slane %v2895, 4
      %v2898 = vshrl.u32 %v2822, 16
      %v2900 = vrot.slane %v2898, 7
      %v2901 = vshll.u32 %v2822, 16
      %v2903 = vor.u32 %v2900, %v2901
      %v2904 = vsel %vm890, %v2896, %v2903
      %v2906 = vshrl.u32 %v2823, 16
      %v2908 = vrot.slane %v2906, 7
      %v2909 = vrot.slane %v2908, 4
      %v2911 = vshrl.u32 %v2824, 16
      %v2913 = vrot.slane %v2911, 7
      %v2914 = vshll.u32 %v2824, 16
      %v2916 = vor.u32 %v2913, %v2914
      %v2917 = vsel %vm890, %v2909, %v2916
      %v2919 = vshrl.u32 %v2825, 16
      %v2921 = vrot.slane %v2919, 7
      %v2922 = vrot.slane %v2921, 4
      %v2924 = vshrl.u32 %v2826, 16
      %v2926 = vrot.slane %v2924, 7
      %v2927 = vshll.u32 %v2826, 16
      %v2929 = vor.u32 %v2926, %v2927
      %v2930 = vsel %vm890, %v2922, %v2929
      %v2931 = vunpack.c.l.b16 %v2598
      %v2932 = vunpack.c.l.b16 %v2611
      %v2933 = vunpack.c.l.b16 %v2624
      %v2934 = vunpack.c.l.b16 %v2637
      %v2935 = vunpack.c.l.b16 %v2650
      %v2936 = vunpack.c.l.b16 %v2663
      %v2937 = vunpack.c.l.b16 %v2676
      %v2938 = vunpack.c.l.b16 %v2689
      %v2939 = vpack.c.b16 %v2932, %v2931
      %v2940 = vpack.c.b16 %v2934, %v2933
      %v2941 = vpack.c.b16 %v2936, %v2935
      %v2942 = vpack.c.b16 %v2938, %v2937
      %v2947 = vunpack.c.l.b16 %v2718
      %v2948 = vunpack.c.l.b16 %v2731
      %v2949 = vunpack.c.l.b16 %v2744
      %v2950 = vunpack.c.l.b16 %v2757
      %v2951 = vunpack.c.l.b16 %v2770
      %v2952 = vunpack.c.l.b16 %v2783
      %v2953 = vunpack.c.l.b16 %v2796
      %v2954 = vunpack.c.l.b16 %v2809
      %v2955 = vpack.c.b16 %v2948, %v2947
      %v2956 = vpack.c.b16 %v2950, %v2949
      %v2957 = vpack.c.b16 %v2952, %v2951
      %v2958 = vpack.c.b16 %v2954, %v2953
      %v2963 = vunpack.c.l.b16 %v2839
      %v2964 = vunpack.c.l.b16 %v2852
      %v2965 = vunpack.c.l.b16 %v2865
      %v2966 = vunpack.c.l.b16 %v2878
      %v2967 = vunpack.c.l.b16 %v2891
      %v2968 = vunpack.c.l.b16 %v2904
      %v2969 = vunpack.c.l.b16 %v2917
      %v2970 = vunpack.c.l.b16 %v2930
      %v2971 = vpack.c.b16 %v2964, %v2963
      %v2972 = vpack.c.b16 %v2966, %v2965
      %v2973 = vpack.c.b16 %v2968, %v2967
      %v2974 = vpack.c.b16 %v2970, %v2969
      %v2979 = vld [vmem:[%s6] sm:$0xf]
      %v2980 = vld [vmem:[%s6 + $0x4] sm:$0xf]
      %v2981 = vld [vmem:[%s6 + $0x8] sm:$0xf]
      %v2982 = vld [vmem:[%s6 + $0xc] sm:$0xf]
      %v2983 = vld [vmem:[%s6 + $0x10] sm:$0xf]
      %v2984 = vld [vmem:[%s6 + $0x14] sm:$0xf]
      %v2985 = vld [vmem:[%s6 + $0x18] sm:$0xf]
      %v2986 = vld [vmem:[%s6 + $0x1c] sm:$0xf]
      %v2987 = vld [vmem:[%s6 + $0x20] sm:$0xf]
      %v2988 = vld [vmem:[%s6 + $0x24] sm:$0xf]
      %v2989 = vld [vmem:[%s6 + $0x28] sm:$0xf]
      %v2990 = vld [vmem:[%s6 + $0x2c] sm:$0xf]
      %v2991 = vld [vmem:[%s6 + $0x30] sm:$0xf]
      %v2992 = vld [vmem:[%s6 + $0x34] sm:$0xf]
      %v2993 = vld [vmem:[%s6 + $0x38] sm:$0xf]
      %v2994 = vld [vmem:[%s6 + $0x3c] sm:$0xf]
      %v2995 = vld [vmem:[%s6 + $0x40] sm:$0xf]
      %v2996 = vld [vmem:[%s6 + $0x44] sm:$0xf]
      %v2997 = vld [vmem:[%s6 + $0x48] sm:$0xf]
      %v2998 = vld [vmem:[%s6 + $0x4c] sm:$0xf]
      %v2999 = vld [vmem:[%s6 + $0x50] sm:$0xf]
      %v3000 = vld [vmem:[%s6 + $0x54] sm:$0xf]
      %v3001 = vld [vmem:[%s6 + $0x58] sm:$0xf]
      %v3002 = vld [vmem:[%s6 + $0x5c] sm:$0xf]
      %v3003 = vld [vmem:[%s6 + $0x60] sm:$0xf]
      %v3004 = vld [vmem:[%s6 + $0x64] sm:$0xf]
      %v3005 = vld [vmem:[%s6 + $0x68] sm:$0xf]
      %v3006 = vld [vmem:[%s6 + $0x6c] sm:$0xf]
      %v3007 = vld [vmem:[%s6 + $0x70] sm:$0xf]
      %v3008 = vld [vmem:[%s6 + $0x74] sm:$0xf]
      %v3009 = vld [vmem:[%s6 + $0x78] sm:$0xf]
      %v3010 = vld [vmem:[%s6 + $0x7c] sm:$0xf]
      %v3011 = vld [vmem:[%s6 + $0x80] sm:$0xf]
      %v3012 = vld [vmem:[%s6 + $0x84] sm:$0xf]
      %v3013 = vld [vmem:[%s6 + $0x88] sm:$0xf]
      %v3014 = vld [vmem:[%s6 + $0x8c] sm:$0xf]
      %v3015 = vld [vmem:[%s6 + $0x90] sm:$0xf]
      %v3016 = vld [vmem:[%s6 + $0x94] sm:$0xf]
      %v3017 = vld [vmem:[%s6 + $0x98] sm:$0xf]
      %v3018 = vld [vmem:[%s6 + $0x9c] sm:$0xf]
      %v3019 = vld [vmem:[%s6 + $0xa0] sm:$0xf]
      %v3020 = vld [vmem:[%s6 + $0xa4] sm:$0xf]
      %v3021 = vld [vmem:[%s6 + $0xa8] sm:$0xf]
      %v3022 = vld [vmem:[%s6 + $0xac] sm:$0xf]
      %v3023 = vld [vmem:[%s6 + $0xb0] sm:$0xf]
      %v3024 = vld [vmem:[%s6 + $0xb4] sm:$0xf]
      %v3025 = vld [vmem:[%s6 + $0xb8] sm:$0xf]
      %v3026 = vld [vmem:[%s6 + $0xbc] sm:$0xf]
      %v3035 = vunpack.c.l.b16 %v2571
      %v3036 = vunpack.c.l.b16 %v2573
      %v3037 = vunpack.c.l.b16 %v2575
      %v3038 = vunpack.c.l.b16 %v2577
      %v3039 = vunpack.c.l.b16 %v2579
      %v3040 = vunpack.c.l.b16 %v2581
      %v3041 = vunpack.c.l.b16 %v2583
      %v3042 = vunpack.c.l.b16 %v2585
      %v3043 = vpack.c.b16 %v3036, %v3035
      %v3044 = vpack.c.b16 %v3038, %v3037
      %v3045 = vpack.c.b16 %v3040, %v3039
      %v3046 = vpack.c.b16 %v3042, %v3041
      %v3059 = vunpack.c.l.b16 %v2691
      %v3060 = vunpack.c.l.b16 %v2693
      %v3061 = vunpack.c.l.b16 %v2695
      %v3062 = vunpack.c.l.b16 %v2697
      %v3063 = vunpack.c.l.b16 %v2699
      %v3064 = vunpack.c.l.b16 %v2701
      %v3065 = vunpack.c.l.b16 %v2703
      %v3066 = vunpack.c.l.b16 %v2705
      %v3067 = vpack.c.b16 %v3060, %v3059
      %v3068 = vpack.c.b16 %v3062, %v3061
      %v3069 = vpack.c.b16 %v3064, %v3063
      %v3070 = vpack.c.b16 %v3066, %v3065
      %v3083 = vunpack.c.l.b16 %v2812
      %v3084 = vunpack.c.l.b16 %v2814
      %v3085 = vunpack.c.l.b16 %v2816
      %v3086 = vunpack.c.l.b16 %v2818
      %v3087 = vunpack.c.l.b16 %v2820
      %v3088 = vunpack.c.l.b16 %v2822
      %v3089 = vunpack.c.l.b16 %v2824
      %v3090 = vunpack.c.l.b16 %v2826
      %v3091 = vpack.c.b16 %v3084, %v3083
      %v3092 = vpack.c.b16 %v3086, %v3085
      %v3093 = vpack.c.b16 %v3088, %v3087
      %v3094 = vpack.c.b16 %v3090, %v3089
      %s3099 = scalar_lea.vmem %s6, 192
      %v3100 = vld [vmem:[%s3099] sm:$0xf]
      %v3101 = vld [vmem:[%s3099 + $0x4] sm:$0xf]
      %v3102 = vld [vmem:[%s3099 + $0x8] sm:$0xf]
      %v3103 = vld [vmem:[%s3099 + $0xc] sm:$0xf]
      %v3104 = vld [vmem:[%s3099 + $0x10] sm:$0xf]
      %v3105 = vld [vmem:[%s3099 + $0x14] sm:$0xf]
      %v3106 = vld [vmem:[%s3099 + $0x18] sm:$0xf]
      %v3107 = vld [vmem:[%s3099 + $0x1c] sm:$0xf]
      %v3108 = vld [vmem:[%s3099 + $0x20] sm:$0xf]
      %v3109 = vld [vmem:[%s3099 + $0x24] sm:$0xf]
      %v3110 = vld [vmem:[%s3099 + $0x28] sm:$0xf]
      %v3111 = vld [vmem:[%s3099 + $0x2c] sm:$0xf]
      %v3112 = vld [vmem:[%s3099 + $0x30] sm:$0xf]
      %v3113 = vld [vmem:[%s3099 + $0x34] sm:$0xf]
      %v3114 = vld [vmem:[%s3099 + $0x38] sm:$0xf]
      %v3115 = vld [vmem:[%s3099 + $0x3c] sm:$0xf]
      %v3116 = vld [vmem:[%s3099 + $0x40] sm:$0xf]
      %v3117 = vld [vmem:[%s3099 + $0x44] sm:$0xf]
      %v3118 = vld [vmem:[%s3099 + $0x48] sm:$0xf]
      %v3119 = vld [vmem:[%s3099 + $0x4c] sm:$0xf]
      %v3120 = vld [vmem:[%s3099 + $0x50] sm:$0xf]
      %v3121 = vld [vmem:[%s3099 + $0x54] sm:$0xf]
      %v3122 = vld [vmem:[%s3099 + $0x58] sm:$0xf]
      %v3123 = vld [vmem:[%s3099 + $0x5c] sm:$0xf]
      %v3124 = vld [vmem:[%s3099 + $0x60] sm:$0xf]
      %v3125 = vld [vmem:[%s3099 + $0x64] sm:$0xf]
      %v3126 = vld [vmem:[%s3099 + $0x68] sm:$0xf]
      %v3127 = vld [vmem:[%s3099 + $0x6c] sm:$0xf]
      %v3128 = vld [vmem:[%s3099 + $0x70] sm:$0xf]
      %v3129 = vld [vmem:[%s3099 + $0x74] sm:$0xf]
      %v3130 = vld [vmem:[%s3099 + $0x78] sm:$0xf]
      %v3131 = vld [vmem:[%s3099 + $0x7c] sm:$0xf]
      %v3132 = vld [vmem:[%s3099 + $0x80] sm:$0xf]
      %v3133 = vld [vmem:[%s3099 + $0x84] sm:$0xf]
      %v3134 = vld [vmem:[%s3099 + $0x88] sm:$0xf]
      %v3135 = vld [vmem:[%s3099 + $0x8c] sm:$0xf]
      %v3136 = vld [vmem:[%s3099 + $0x90] sm:$0xf]
      %v3137 = vld [vmem:[%s3099 + $0x94] sm:$0xf]
      %v3138 = vld [vmem:[%s3099 + $0x98] sm:$0xf]
      %v3139 = vld [vmem:[%s3099 + $0x9c] sm:$0xf]
      %v3140 = vld [vmem:[%s3099 + $0xa0] sm:$0xf]
      %v3141 = vld [vmem:[%s3099 + $0xa4] sm:$0xf]
      %v3142 = vld [vmem:[%s3099 + $0xa8] sm:$0xf]
      %v3143 = vld [vmem:[%s3099 + $0xac] sm:$0xf]
      %v3144 = vld [vmem:[%s3099 + $0xb0] sm:$0xf]
      %v3145 = vld [vmem:[%s3099 + $0xb4] sm:$0xf]
      %v3146 = vld [vmem:[%s3099 + $0xb8] sm:$0xf]
      %v3147 = vld [vmem:[%s3099 + $0xbc] sm:$0xf]
      %v3196 = vunpack.c.l.b16 %v3100
      %v3197 = vunpack.c.l.b16 %v3101
      %v3198 = vunpack.c.l.b16 %v3102
      %v3199 = vunpack.c.l.b16 %v3103
      %v3200 = vunpack.c.l.b16 %v3104
      %v3201 = vunpack.c.l.b16 %v3105
      %v3202 = vunpack.c.l.b16 %v3106
      %v3203 = vunpack.c.l.b16 %v3107
      %v3204 = vunpack.c.l.b16 %v3108
      %v3205 = vunpack.c.l.b16 %v3109
      %v3206 = vunpack.c.l.b16 %v3110
      %v3207 = vunpack.c.l.b16 %v3111
      %v3208 = vunpack.c.l.b16 %v3112
      %v3209 = vunpack.c.l.b16 %v3113
      %v3210 = vunpack.c.l.b16 %v3114
      %v3211 = vunpack.c.l.b16 %v3115
      %v3212 = vunpack.c.l.b16 %v3116
      %v3213 = vunpack.c.l.b16 %v3117
      %v3214 = vunpack.c.l.b16 %v3118
      %v3215 = vunpack.c.l.b16 %v3119
      %v3216 = vunpack.c.l.b16 %v3120
      %v3217 = vunpack.c.l.b16 %v3121
      %v3218 = vunpack.c.l.b16 %v3122
      %v3219 = vunpack.c.l.b16 %v3123
      %v3220 = vunpack.c.l.b16 %v3124
      %v3221 = vunpack.c.l.b16 %v3125
      %v3222 = vunpack.c.l.b16 %v3126
      %v3223 = vunpack.c.l.b16 %v3127
      %v3224 = vunpack.c.l.b16 %v3128
      %v3225 = vunpack.c.l.b16 %v3129
      %v3226 = vunpack.c.l.b16 %v3130
      %v3227 = vunpack.c.l.b16 %v3131
      %v3228 = vunpack.c.l.b16 %v3132
      %v3229 = vunpack.c.l.b16 %v3133
      %v3230 = vunpack.c.l.b16 %v3134
      %v3231 = vunpack.c.l.b16 %v3135
      %v3232 = vunpack.c.l.b16 %v3136
      %v3233 = vunpack.c.l.b16 %v3137
      %v3234 = vunpack.c.l.b16 %v3138
      %v3235 = vunpack.c.l.b16 %v3139
      %v3236 = vunpack.c.l.b16 %v3140
      %v3237 = vunpack.c.l.b16 %v3141
      %v3238 = vunpack.c.l.b16 %v3142
      %v3239 = vunpack.c.l.b16 %v3143
      %v3240 = vunpack.c.l.b16 %v3144
      %v3241 = vunpack.c.l.b16 %v3145
      %v3242 = vunpack.c.l.b16 %v3146
      %v3243 = vunpack.c.l.b16 %v3147
      %v3244 = vpack.c.b16 %v3197, %v3196
      %v3245 = vpack.c.b16 %v3199, %v3198
      %v3246 = vpack.c.b16 %v3201, %v3200
      %v3247 = vpack.c.b16 %v3203, %v3202
      %v3248 = vpack.c.b16 %v3205, %v3204
      %v3249 = vpack.c.b16 %v3207, %v3206
      %v3250 = vpack.c.b16 %v3209, %v3208
      %v3251 = vpack.c.b16 %v3211, %v3210
      %v3252 = vpack.c.b16 %v3213, %v3212
      %v3253 = vpack.c.b16 %v3215, %v3214
      %v3254 = vpack.c.b16 %v3217, %v3216
      %v3255 = vpack.c.b16 %v3219, %v3218
      %v3256 = vpack.c.b16 %v3221, %v3220
      %v3257 = vpack.c.b16 %v3223, %v3222
      %v3258 = vpack.c.b16 %v3225, %v3224
      %v3259 = vpack.c.b16 %v3227, %v3226
      %v3260 = vpack.c.b16 %v3229, %v3228
      %v3261 = vpack.c.b16 %v3231, %v3230
      %v3262 = vpack.c.b16 %v3233, %v3232
      %v3263 = vpack.c.b16 %v3235, %v3234
      %v3264 = vpack.c.b16 %v3237, %v3236
      %v3265 = vpack.c.b16 %v3239, %v3238
      %v3266 = vpack.c.b16 %v3241, %v3240
      %v3267 = vpack.c.b16 %v3243, %v3242
      %3292 = vmatprep.subr.bf16.mxu0 0
      %3293 = vmatpush1.bf16.msra.mxu0 %v3244
      %3294 = vmatprep.subr.bf16.mxu0 0
      %3295 = vmatpush1.bf16.msra.mxu0 %v3245
      %3296 = vmatprep.subr.bf16.mxu0 0
      %3297 = vmatpush1.bf16.msra.mxu0 %v3246
      %3298 = vmatprep.subr.bf16.mxu0 0
      %3299 = vmatpush1.bf16.msra.mxu0 %v3247
      %3300 = vmatprep.subr.bf16.mxu0 0
      %3301 = vmatpush1.bf16.msra.mxu0 %v3248
      %3302 = vmatprep.subr.bf16.mxu0 0
      %3303 = vmatpush1.bf16.msra.mxu0 %v3249
      %3304 = vmatprep.subr.bf16.mxu0 0
      %3305 = vmatpush1.bf16.msra.mxu0 %v3250
      %3306 = vmatprep.subr.bf16.mxu0 0
      %3307 = vmatpush1.bf16.msra.mxu0 %v3251
      %3308 = vmatprep.subr.bf16.mxu0 0
      %3309 = vmatpush1.bf16.msra.mxu0 %v3252
      %3310 = vmatprep.subr.bf16.mxu0 0
      %3311 = vmatpush1.bf16.msra.mxu0 %v3253
      %3312 = vmatprep.subr.bf16.mxu0 0
      %3313 = vmatpush1.bf16.msra.mxu0 %v3254
      %3314 = vmatprep.subr.bf16.mxu0 0
      %3315 = vmatpush1.bf16.msra.mxu0 %v3255
      %3316 = vmatprep.subr.bf16.mxu0 0
      %3317 = vmatpush1.bf16.msra.mxu0 %v3256
      %3318 = vmatprep.subr.bf16.mxu0 0
      %3319 = vmatpush1.bf16.msra.mxu0 %v3257
      %3320 = vmatprep.subr.bf16.mxu0 0
      %3321 = vmatpush1.bf16.msra.mxu0 %v3258
      %3322 = vmatprep.subr.bf16.mxu0 0
      %3323 = vmatpush1.bf16.msra.mxu0 %v3259
      %3324 = vmatprep.mubr.bf16.mxu0 %v3067
      %3325 = vmatmul.mubr.bf16.gmra.mrb[0].mxu0 %v3043
      %v3326 = vpop.f32.mrb[0].mxu0
      %v3327 = vadd.f32 0.0, %v3326
      %v3328 = vpop.f32.mrb[0].mxu0
      %v3329 = vpop.f32.mrb[0].mxu0
      %v3330 = vadd.f32 0.0, %v3329
      %v3331 = vpop.f32.mrb[0].mxu0
      %3332 = vmatprep.mubr.bf16.mxu0 %v3068
      %3333 = vmatmul.mubr.bf16.gmra.mrb[0].mxu0 %v3044
      %v3334 = vpop.f32.mrb[0].mxu0
      %v3335 = vadd.f32 0.0, %v3334
      %v3336 = vpop.f32.mrb[0].mxu0
      %v3337 = vpop.f32.mrb[0].mxu0
      %v3338 = vadd.f32 0.0, %v3337
      %v3339 = vpop.f32.mrb[0].mxu0
      %3340 = vmatprep.mubr.bf16.mxu0 %v3069
      %3341 = vmatmul.mubr.bf16.gmra.mrb[0].mxu0 %v3045
      %v3342 = vpop.f32.mrb[0].mxu0
      %v3343 = vadd.f32 0.0, %v3342
      %v3344 = vpop.f32.mrb[0].mxu0
      %v3345 = vpop.f32.mrb[0].mxu0
      %v3346 = vadd.f32 0.0, %v3345
      %v3347 = vpop.f32.mrb[0].mxu0
      %3348 = vmatprep.mubr.bf16.mxu0 %v3070
      %3349 = vmatmul.mubr.bf16.gmra.mrb[0].mxu0 %v3046
      %v3350 = vpop.f32.mrb[0].mxu0
      %v3351 = vadd.f32 0.0, %v3350
      %v3352 = vpop.f32.mrb[0].mxu0
      %v3353 = vpop.f32.mrb[0].mxu0
      %v3354 = vadd.f32 0.0, %v3353
      %v3355 = vpop.f32.mrb[0].mxu0
      %3356 = vdwg.mxu0
      %3357 = vmatprep.subr.bf16.mxu0 0
      %3358 = vmatpush1.bf16.msra.mxu0 %v3260
      %3359 = vmatprep.subr.bf16.mxu0 0
      %3360 = vmatpush1.bf16.msra.mxu0 %v3261
      %3361 = vmatprep.subr.bf16.mxu0 0
      %3362 = vmatpush1.bf16.msra.mxu0 %v3262
      %3363 = vmatprep.subr.bf16.mxu0 0
      %3364 = vmatpush1.bf16.msra.mxu0 %v3263
      %3365 = vmatprep.subr.bf16.mxu0 0
      %3366 = vmatpush1.bf16.msra.mxu0 %v3264
      %3367 = vmatprep.subr.bf16.mxu0 0
      %3368 = vmatpush1.bf16.msra.mxu0 %v3265
      %3369 = vmatprep.subr.bf16.mxu0 0
      %3370 = vmatpush1.bf16.msra.mxu0 %v3266
      %3371 = vmatprep.subr.bf16.mxu0 0
      %3372 = vmatpush1.bf16.msra.mxu0 %v3267
      %3373 = vmatprep.subr.bf16.mxu0 0
      %3374 = vmatpush1.bf16.msra.mxu0 0
      %3375 = vmatprep.subr.bf16.mxu0 0
      %3376 = vmatpush1.bf16.msra.mxu0 0
      %3377 = vmatprep.subr.bf16.mxu0 0
      %3378 = vmatpush1.bf16.msra.mxu0 0
      %3379 = vmatprep.subr.bf16.mxu0 0
      %3380 = vmatpush1.bf16.msra.mxu0 0
      %3381 = vmatprep.subr.bf16.mxu0 0
      %3382 = vmatpush1.bf16.msra.mxu0 0
      %3383 = vmatprep.subr.bf16.mxu0 0
      %3384 = vmatpush1.bf16.msra.mxu0 0
      %3385 = vmatprep.subr.bf16.mxu0 0
      %3386 = vmatpush1.bf16.msra.mxu0 0
      %3387 = vmatprep.subr.bf16.mxu0 0
      %3388 = vmatpush1.bf16.msra.mxu0 0
      %3389 = vmatprep.mubr.bf16.mxu0 0
      %3390 = vmatmul.mubr.bf16.gmra.mrb[0].mxu0 %v3091
      %v3391 = vpop.f32.mrb[0].mxu0
      %v3392 = vadd.f32 %v3327, %v3391
      %v3393 = vpop.f32.mrb[0].mxu0
      %v3394 = vpop.f32.mrb[0].mxu0
      %v3395 = vadd.f32 %v3330, %v3394
      %v3396 = vpop.f32.mrb[0].mxu0
      %3397 = vmatprep.mubr.bf16.mxu0 0
      %3398 = vmatmul.mubr.bf16.gmra.mrb[0].mxu0 %v3092
      %v3399 = vpop.f32.mrb[0].mxu0
      %v3400 = vadd.f32 %v3335, %v3399
      %v3401 = vpop.f32.mrb[0].mxu0
      %v3402 = vpop.f32.mrb[0].mxu0
      %v3403 = vadd.f32 %v3338, %v3402
      %v3404 = vpop.f32.mrb[0].mxu0
      %3405 = vmatprep.mubr.bf16.mxu0 0
      %3406 = vmatmul.mubr.bf16.gmra.mrb[0].mxu0 %v3093
      %v3407 = vpop.f32.mrb[0].mxu0
      %v3408 = vadd.f32 %v3343, %v3407
      %v3409 = vpop.f32.mrb[0].mxu0
      %v3410 = vpop.f32.mrb[0].mxu0
      %v3411 = vadd.f32 %v3346, %v3410
      %v3412 = vpop.f32.mrb[0].mxu0
      %3413 = vmatprep.mubr.bf16.mxu0 0
      %3414 = vmatmul.mubr.bf16.gmra.mrb[0].mxu0 %v3094
      %v3415 = vpop.f32.mrb[0].mxu0
      %v3416 = vadd.f32 %v3351, %v3415
      %v3417 = vpop.f32.mrb[0].mxu0
      %v3418 = vpop.f32.mrb[0].mxu0
      %v3419 = vadd.f32 %v3354, %v3418
      %v3420 = vpop.f32.mrb[0].mxu0
      %3421 = vdwg.mxu0
      %v3470 = vunpack.c.l.b16 %v2979
      %v3471 = vunpack.c.l.b16 %v2980
      %v3472 = vunpack.c.l.b16 %v2981
      %v3473 = vunpack.c.l.b16 %v2982
      %v3474 = vunpack.c.l.b16 %v2983
      %v3475 = vunpack.c.l.b16 %v2984
      %v3476 = vunpack.c.l.b16 %v2985
      %v3477 = vunpack.c.l.b16 %v2986
      %v3478 = vunpack.c.l.b16 %v2987
      %v3479 = vunpack.c.l.b16 %v2988
      %v3480 = vunpack.c.l.b16 %v2989
      %v3481 = vunpack.c.l.b16 %v2990
      %v3482 = vunpack.c.l.b16 %v2991
      %v3483 = vunpack.c.l.b16 %v2992
      %v3484 = vunpack.c.l.b16 %v2993
      %v3485 = vunpack.c.l.b16 %v2994
      %v3486 = vunpack.c.l.b16 %v2995
      %v3487 = vunpack.c.l.b16 %v2996
      %v3488 = vunpack.c.l.b16 %v2997
      %v3489 = vunpack.c.l.b16 %v2998
      %v3490 = vunpack.c.l.b16 %v2999
      %v3491 = vunpack.c.l.b16 %v3000
      %v3492 = vunpack.c.l.b16 %v3001
      %v3493 = vunpack.c.l.b16 %v3002
      %v3494 = vunpack.c.l.b16 %v3003
      %v3495 = vunpack.c.l.b16 %v3004
      %v3496 = vunpack.c.l.b16 %v3005
      %v3497 = vunpack.c.l.b16 %v3006
      %v3498 = vunpack.c.l.b16 %v3007
      %v3499 = vunpack.c.l.b16 %v3008
      %v3500 = vunpack.c.l.b16 %v3009
      %v3501 = vunpack.c.l.b16 %v3010
      %v3502 = vunpack.c.l.b16 %v3011
      %v3503 = vunpack.c.l.b16 %v3012
      %v3504 = vunpack.c.l.b16 %v3013
      %v3505 = vunpack.c.l.b16 %v3014
      %v3506 = vunpack.c.l.b16 %v3015
      %v3507 = vunpack.c.l.b16 %v3016
      %v3508 = vunpack.c.l.b16 %v3017
      %v3509 = vunpack.c.l.b16 %v3018
      %v3510 = vunpack.c.l.b16 %v3019
      %v3511 = vunpack.c.l.b16 %v3020
      %v3512 = vunpack.c.l.b16 %v3021
      %v3513 = vunpack.c.l.b16 %v3022
      %v3514 = vunpack.c.l.b16 %v3023
      %v3515 = vunpack.c.l.b16 %v3024
      %v3516 = vunpack.c.l.b16 %v3025
      %v3517 = vunpack.c.l.b16 %v3026
      %v3518 = vpack.c.b16 %v3471, %v3470
      %v3519 = vpack.c.b16 %v3473, %v3472
      %v3520 = vpack.c.b16 %v3475, %v3474
      %v3521 = vpack.c.b16 %v3477, %v3476
      %v3522 = vpack.c.b16 %v3479, %v3478
      %v3523 = vpack.c.b16 %v3481, %v3480
      %v3524 = vpack.c.b16 %v3483, %v3482
      %v3525 = vpack.c.b16 %v3485, %v3484
      %v3526 = vpack.c.b16 %v3487, %v3486
      %v3527 = vpack.c.b16 %v3489, %v3488
      %v3528 = vpack.c.b16 %v3491, %v3490
      %v3529 = vpack.c.b16 %v3493, %v3492
      %v3530 = vpack.c.b16 %v3495, %v3494
      %v3531 = vpack.c.b16 %v3497, %v3496
      %v3532 = vpack.c.b16 %v3499, %v3498
      %v3533 = vpack.c.b16 %v3501, %v3500
      %v3534 = vpack.c.b16 %v3503, %v3502
      %v3535 = vpack.c.b16 %v3505, %v3504
      %v3536 = vpack.c.b16 %v3507, %v3506
      %v3537 = vpack.c.b16 %v3509, %v3508
      %v3538 = vpack.c.b16 %v3511, %v3510
      %v3539 = vpack.c.b16 %v3513, %v3512
      %v3540 = vpack.c.b16 %v3515, %v3514
      %v3541 = vpack.c.b16 %v3517, %v3516
      %3566 = vmatprep.subr.bf16.mxu0 0
      %3567 = vmatpush1.bf16.msra.mxu0 %v3518
      %3568 = vmatprep.subr.bf16.mxu0 0
      %3569 = vmatpush1.bf16.msra.mxu0 %v3519
      %3570 = vmatprep.subr.bf16.mxu0 0
      %3571 = vmatpush1.bf16.msra.mxu0 %v3520
      %3572 = vmatprep.subr.bf16.mxu0 0
      %3573 = vmatpush1.bf16.msra.mxu0 %v3521
      %3574 = vmatprep.subr.bf16.mxu0 0
      %3575 = vmatpush1.bf16.msra.mxu0 %v3522
      %3576 = vmatprep.subr.bf16.mxu0 0
      %3577 = vmatpush1.bf16.msra.mxu0 %v3523
      %3578 = vmatprep.subr.bf16.mxu0 0
      %3579 = vmatpush1.bf16.msra.mxu0 %v3524
      %3580 = vmatprep.subr.bf16.mxu0 0
      %3581 = vmatpush1.bf16.msra.mxu0 %v3525
      %3582 = vmatprep.subr.bf16.mxu0 0
      %3583 = vmatpush1.bf16.msra.mxu0 %v3526
      %3584 = vmatprep.subr.bf16.mxu0 0
      %3585 = vmatpush1.bf16.msra.mxu0 %v3527
      %3586 = vmatprep.subr.bf16.mxu0 0
      %3587 = vmatpush1.bf16.msra.mxu0 %v3528
      %3588 = vmatprep.subr.bf16.mxu0 0
      %3589 = vmatpush1.bf16.msra.mxu0 %v3529
      %3590 = vmatprep.subr.bf16.mxu0 0
      %3591 = vmatpush1.bf16.msra.mxu0 %v3530
      %3592 = vmatprep.subr.bf16.mxu0 0
      %3593 = vmatpush1.bf16.msra.mxu0 %v3531
      %3594 = vmatprep.subr.bf16.mxu0 0
      %3595 = vmatpush1.bf16.msra.mxu0 %v3532
      %3596 = vmatprep.subr.bf16.mxu0 0
      %3597 = vmatpush1.bf16.msra.mxu0 %v3533
      %3598 = vmatprep.mubr.bf16.mxu0 %v2955
      %3599 = vmatmul.mubr.bf16.gmra.mrb[0].mxu0 %v2939
      %v3600 = vpop.f32.mrb[0].mxu0
      %v3601 = vadd.f32 %v3392, %v3600
      %v3602 = vpop.f32.mrb[0].mxu0
      %v3603 = vpop.f32.mrb[0].mxu0
      %v3604 = vadd.f32 %v3395, %v3603
      %v3605 = vpop.f32.mrb[0].mxu0
      %3606 = vmatprep.mubr.bf16.mxu0 %v2956
      %3607 = vmatmul.mubr.bf16.gmra.mrb[0].mxu0 %v2940
      %v3608 = vpop.f32.mrb[0].mxu0
      %v3609 = vadd.f32 %v3400, %v3608
      %v3610 = vpop.f32.mrb[0].mxu0
      %v3611 = vpop.f32.mrb[0].mxu0
      %v3612 = vadd.f32 %v3403, %v3611
      %v3613 = vpop.f32.mrb[0].mxu0
      %3614 = vmatprep.mubr.bf16.mxu0 %v2957
      %3615 = vmatmul.mubr.bf16.gmra.mrb[0].mxu0 %v2941
      %v3616 = vpop.f32.mrb[0].mxu0
      %v3617 = vadd.f32 %v3408, %v3616
      %v3618 = vpop.f32.mrb[0].mxu0
      %v3619 = vpop.f32.mrb[0].mxu0
      %v3620 = vadd.f32 %v3411, %v3619
      %v3621 = vpop.f32.mrb[0].mxu0
      %3622 = vmatprep.mubr.bf16.mxu0 %v2958
      %3623 = vmatmul.mubr.bf16.gmra.mrb[0].mxu0 %v2942
      %v3624 = vpop.f32.mrb[0].mxu0
      %v3625 = vadd.f32 %v3416, %v3624
      %v3626 = vpop.f32.mrb[0].mxu0
      %v3627 = vpop.f32.mrb[0].mxu0
      %v3628 = vadd.f32 %v3419, %v3627
      %v3629 = vpop.f32.mrb[0].mxu0
      %3630 = vdwg.mxu0
      %3631 = vmatprep.subr.bf16.mxu0 0
      %3632 = vmatpush1.bf16.msra.mxu0 %v3534
      %3633 = vmatprep.subr.bf16.mxu0 0
      %3634 = vmatpush1.bf16.msra.mxu0 %v3535
      %3635 = vmatprep.subr.bf16.mxu0 0
      %3636 = vmatpush1.bf16.msra.mxu0 %v3536
      %3637 = vmatprep.subr.bf16.mxu0 0
      %3638 = vmatpush1.bf16.msra.mxu0 %v3537
      %3639 = vmatprep.subr.bf16.mxu0 0
      %3640 = vmatpush1.bf16.msra.mxu0 %v3538
      %3641 = vmatprep.subr.bf16.mxu0 0
      %3642 = vmatpush1.bf16.msra.mxu0 %v3539
      %3643 = vmatprep.subr.bf16.mxu0 0
      %3644 = vmatpush1.bf16.msra.mxu0 %v3540
      %3645 = vmatprep.subr.bf16.mxu0 0
      %3646 = vmatpush1.bf16.msra.mxu0 %v3541
      %3647 = vmatprep.subr.bf16.mxu0 0
      %3648 = vmatpush1.bf16.msra.mxu0 0
      %3649 = vmatprep.subr.bf16.mxu0 0
      %3650 = vmatpush1.bf16.msra.mxu0 0
      %3651 = vmatprep.subr.bf16.mxu0 0
      %3652 = vmatpush1.bf16.msra.mxu0 0
      %3653 = vmatprep.subr.bf16.mxu0 0
      %3654 = vmatpush1.bf16.msra.mxu0 0
      %3655 = vmatprep.subr.bf16.mxu0 0
      %3656 = vmatpush1.bf16.msra.mxu0 0
      %3657 = vmatprep.subr.bf16.mxu0 0
      %3658 = vmatpush1.bf16.msra.mxu0 0
      %3659 = vmatprep.subr.bf16.mxu0 0
      %3660 = vmatpush1.bf16.msra.mxu0 0
      %3661 = vmatprep.subr.bf16.mxu0 0
      %3662 = vmatpush1.bf16.msra.mxu0 0
      %3663 = vmatprep.mubr.bf16.mxu0 0
      %3664 = vmatmul.mubr.bf16.gmra.mrb[0].mxu0 %v2971
      %v3665 = vpop.f32.mrb[0].mxu0
      %v3666 = vadd.f32 %v3601, %v3665
      %v3667 = vpop.f32.mrb[0].mxu0
      %v3668 = vpop.f32.mrb[0].mxu0
      %v3669 = vadd.f32 %v3604, %v3668
      %v3670 = vpop.f32.mrb[0].mxu0
      %3671 = vmatprep.mubr.bf16.mxu0 0
      %3672 = vmatmul.mubr.bf16.gmra.mrb[0].mxu0 %v2972
      %v3673 = vpop.f32.mrb[0].mxu0
      %v3674 = vadd.f32 %v3609, %v3673
      %v3675 = vpop.f32.mrb[0].mxu0
      %v3676 = vpop.f32.mrb[0].mxu0
      %v3677 = vadd.f32 %v3612, %v3676
      %v3678 = vpop.f32.mrb[0].mxu0
      %3679 = vmatprep.mubr.bf16.mxu0 0
      %3680 = vmatmul.mubr.bf16.gmra.mrb[0].mxu0 %v2973
      %v3681 = vpop.f32.mrb[0].mxu0
      %v3682 = vadd.f32 %v3617, %v3681
      %v3683 = vpop.f32.mrb[0].mxu0
      %v3684 = vpop.f32.mrb[0].mxu0
      %v3685 = vadd.f32 %v3620, %v3684
      %v3686 = vpop.f32.mrb[0].mxu0
      %3687 = vmatprep.mubr.bf16.mxu0 0
      %3688 = vmatmul.mubr.bf16.gmra.mrb[0].mxu0 %v2974
      %v3689 = vpop.f32.mrb[0].mxu0
      %v3690 = vadd.f32 %v3625, %v3689
      %v3691 = vpop.f32.mrb[0].mxu0
      %v3692 = vpop.f32.mrb[0].mxu0
      %v3693 = vadd.f32 %v3628, %v3692
      %v3694 = vpop.f32.mrb[0].mxu0
      %3695 = vdwg.mxu0
      %v3696 = vld [vmem:[#allocation3 + $0x4] sm:$0xf]
      %v3697 = vld [vmem:[#allocation3 + $0x8] sm:$0x1]
      %v3698 = vld [vmem:[#allocation3 + $0x10] sm:$0xf]
      %v3699 = vld [vmem:[#allocation3 + $0x14] sm:$0x1]
      %v3700 = vld [vmem:[#allocation3 + $0x1c] sm:$0xf]
      %v3701 = vld [vmem:[#allocation3 + $0x20] sm:$0x1]
      %v3702 = vld [vmem:[#allocation3 + $0x28] sm:$0xf]
      %v3703 = vld [vmem:[#allocation3 + $0x2c] sm:$0x1]
      %v3704 = vld [vmem:[#allocation3 + $0x34] sm:$0xf]
      %v3705 = vld [vmem:[#allocation3 + $0x38] sm:$0x1]
      %v3706 = vld [vmem:[#allocation3 + $0x40] sm:$0xf]
      %v3707 = vld [vmem:[#allocation3 + $0x44] sm:$0x1]
      %v3708 = vld [vmem:[#allocation3 + $0x4c] sm:$0xf]
      %v3709 = vld [vmem:[#allocation3 + $0x50] sm:$0x1]
      %v3710 = vld [vmem:[#allocation3 + $0x58] sm:$0xf]
      %v3711 = vld [vmem:[#allocation3 + $0x5c] sm:$0x1]
      %vm3712 = vsmask.f32 3328
      %vm3713 = vsmask.f32 7440
      %vm3714 = vmor %vm3712, %vm3713
      %v3716 = vshrl.u32 %v3696, 16
      %v3718 = vrot.slane %v3716, 4
      %v3719 = vshll.u32 %v3696, 16
      %v3721 = vrot.slane %v3719, 5
      %v3722 = vor.u32 %v3718, %v3721
      %v3723 = vrot.slane %v3722, 4
      %v3725 = vshll.u32 %v3697, 16
      %v3727 = vrot.slane %v3725, 5
      %v3728 = vsel %vm3714, %v3723, %v3727
      %v3730 = vshrl.u32 %v3698, 16
      %v3732 = vrot.slane %v3730, 4
      %v3733 = vshll.u32 %v3698, 16
      %v3735 = vrot.slane %v3733, 5
      %v3736 = vor.u32 %v3732, %v3735
      %v3737 = vrot.slane %v3736, 4
      %v3739 = vshll.u32 %v3699, 16
      %v3741 = vrot.slane %v3739, 5
      %v3742 = vsel %vm3714, %v3737, %v3741
      %v3744 = vshrl.u32 %v3700, 16
      %v3746 = vrot.slane %v3744, 4
      %v3747 = vshll.u32 %v3700, 16
      %v3749 = vrot.slane %v3747, 5
      %v3750 = vor.u32 %v3746, %v3749
      %v3751 = vrot.slane %v3750, 4
      %v3753 = vshll.u32 %v3701, 16
      %v3755 = vrot.slane %v3753, 5
      %v3756 = vsel %vm3714, %v3751, %v3755
      %v3758 = vshrl.u32 %v3702, 16
      %v3760 = vrot.slane %v3758, 4
      %v3761 = vshll.u32 %v3702, 16
      %v3763 = vrot.slane %v3761, 5
      %v3764 = vor.u32 %v3760, %v3763
      %v3765 = vrot.slane %v3764, 4
      %v3767 = vshll.u32 %v3703, 16
      %v3769 = vrot.slane %v3767, 5
      %v3770 = vsel %vm3714, %v3765, %v3769
      %v3772 = vshrl.u32 %v3704, 16
      %v3774 = vrot.slane %v3772, 4
      %v3775 = vshll.u32 %v3704, 16
      %v3777 = vrot.slane %v3775, 5
      %v3778 = vor.u32 %v3774, %v3777
      %v3779 = vrot.slane %v3778, 4
      %v3781 = vshll.u32 %v3705, 16
      %v3783 = vrot.slane %v3781, 5
      %v3784 = vsel %vm3714, %v3779, %v3783
      %v3786 = vshrl.u32 %v3706, 16
      %v3788 = vrot.slane %v3786, 4
      %v3789 = vshll.u32 %v3706, 16
      %v3791 = vrot.slane %v3789, 5
      %v3792 = vor.u32 %v3788, %v3791
      %v3793 = vrot.slane %v3792, 4
      %v3795 = vshll.u32 %v3707, 16
      %v3797 = vrot.slane %v3795, 5
      %v3798 = vsel %vm3714, %v3793, %v3797
      %v3800 = vshrl.u32 %v3708, 16
      %v3802 = vrot.slane %v3800, 4
      %v3803 = vshll.u32 %v3708, 16
      %v3805 = vrot.slane %v3803, 5
      %v3806 = vor.u32 %v3802, %v3805
      %v3807 = vrot.slane %v3806, 4
      %v3809 = vshll.u32 %v3709, 16
      %v3811 = vrot.slane %v3809, 5
      %v3812 = vsel %vm3714, %v3807, %v3811
      %v3814 = vshrl.u32 %v3710, 16
      %v3816 = vrot.slane %v3814, 4
      %v3817 = vshll.u32 %v3710, 16
      %v3819 = vrot.slane %v3817, 5
      %v3820 = vor.u32 %v3816, %v3819
      %v3821 = vrot.slane %v3820, 4
      %v3823 = vshll.u32 %v3711, 16
      %v3825 = vrot.slane %v3823, 5
      %v3826 = vsel %vm3714, %v3821, %v3825
      %v3827 = vld [vmem:[%s2561 + $0x4] sm:$0xf]
      %v3828 = vld [vmem:[%s2561 + $0x8] sm:$0x1]
      %v3829 = vld [vmem:[%s2561 + $0x10] sm:$0xf]
      %v3830 = vld [vmem:[%s2561 + $0x14] sm:$0x1]
      %v3831 = vld [vmem:[%s2561 + $0x1c] sm:$0xf]
      %v3832 = vld [vmem:[%s2561 + $0x20] sm:$0x1]
      %v3833 = vld [vmem:[%s2561 + $0x28] sm:$0xf]
      %v3834 = vld [vmem:[%s2561 + $0x2c] sm:$0x1]
      %v3835 = vld [vmem:[%s2561 + $0x34] sm:$0xf]
      %v3836 = vld [vmem:[%s2561 + $0x38] sm:$0x1]
      %v3837 = vld [vmem:[%s2561 + $0x40] sm:$0xf]
      %v3838 = vld [vmem:[%s2561 + $0x44] sm:$0x1]
      %v3839 = vld [vmem:[%s2561 + $0x4c] sm:$0xf]
      %v3840 = vld [vmem:[%s2561 + $0x50] sm:$0x1]
      %v3841 = vld [vmem:[%s2561 + $0x58] sm:$0xf]
      %v3842 = vld [vmem:[%s2561 + $0x5c] sm:$0x1]
      %v3844 = vshrl.u32 %v3827, 16
      %v3846 = vrot.slane %v3844, 4
      %v3847 = vshll.u32 %v3827, 16
      %v3849 = vrot.slane %v3847, 5
      %v3850 = vor.u32 %v3846, %v3849
      %v3851 = vrot.slane %v3850, 4
      %v3853 = vshll.u32 %v3828, 16
      %v3855 = vrot.slane %v3853, 5
      %v3856 = vsel %vm3714, %v3851, %v3855
      %v3858 = vshrl.u32 %v3829, 16
      %v3860 = vrot.slane %v3858, 4
      %v3861 = vshll.u32 %v3829, 16
      %v3863 = vrot.slane %v3861, 5
      %v3864 = vor.u32 %v3860, %v3863
      %v3865 = vrot.slane %v3864, 4
      %v3867 = vshll.u32 %v3830, 16
      %v3869 = vrot.slane %v3867, 5
      %v3870 = vsel %vm3714, %v3865, %v3869
      %v3872 = vshrl.u32 %v3831, 16
      %v3874 = vrot.slane %v3872, 4
      %v3875 = vshll.u32 %v3831, 16
      %v3877 = vrot.slane %v3875, 5
      %v3878 = vor.u32 %v3874, %v3877
      %v3879 = vrot.slane %v3878, 4
      %v3881 = vshll.u32 %v3832, 16
      %v3883 = vrot.slane %v3881, 5
      %v3884 = vsel %vm3714, %v3879, %v3883
      %v3886 = vshrl.u32 %v3833, 16
      %v3888 = vrot.slane %v3886, 4
      %v3889 = vshll.u32 %v3833, 16
      %v3891 = vrot.slane %v3889, 5
      %v3892 = vor.u32 %v3888, %v3891
      %v3893 = vrot.slane %v3892, 4
      %v3895 = vshll.u32 %v3834, 16
      %v3897 = vrot.slane %v3895, 5
      %v3898 = vsel %vm3714, %v3893, %v3897
      %v3900 = vshrl.u32 %v3835, 16
      %v3902 = vrot.slane %v3900, 4
      %v3903 = vshll.u32 %v3835, 16
      %v3905 = vrot.slane %v3903, 5
      %v3906 = vor.u32 %v3902, %v3905
      %v3907 = vrot.slane %v3906, 4
      %v3909 = vshll.u32 %v3836, 16
      %v3911 = vrot.slane %v3909, 5
      %v3912 = vsel %vm3714, %v3907, %v3911
      %v3914 = vshrl.u32 %v3837, 16
      %v3916 = vrot.slane %v3914, 4
      %v3917 = vshll.u32 %v3837, 16
      %v3919 = vrot.slane %v3917, 5
      %v3920 = vor.u32 %v3916, %v3919
      %v3921 = vrot.slane %v3920, 4
      %v3923 = vshll.u32 %v3838, 16
      %v3925 = vrot.slane %v3923, 5
      %v3926 = vsel %vm3714, %v3921, %v3925
      %v3928 = vshrl.u32 %v3839, 16
      %v3930 = vrot.slane %v3928, 4
      %v3931 = vshll.u32 %v3839, 16
      %v3933 = vrot.slane %v3931, 5
      %v3934 = vor.u32 %v3930, %v3933
      %v3935 = vrot.slane %v3934, 4
      %v3937 = vshll.u32 %v3840, 16
      %v3939 = vrot.slane %v3937, 5
      %v3940 = vsel %vm3714, %v3935, %v3939
      %v3942 = vshrl.u32 %v3841, 16
      %v3944 = vrot.slane %v3942, 4
      %v3945 = vshll.u32 %v3841, 16
      %v3947 = vrot.slane %v3945, 5
      %v3948 = vor.u32 %v3944, %v3947
      %v3949 = vrot.slane %v3948, 4
      %v3951 = vshll.u32 %v3842, 16
      %v3953 = vrot.slane %v3951, 5
      %v3954 = vsel %vm3714, %v3949, %v3953
      %v3955 = vld [vmem:[%s2810 + $0x4] sm:$0xf]
      %v3956 = vld [vmem:[%s2810 + $0x8] sm:$0x1]
      %v3957 = vld [vmem:[%s2810 + $0x10] sm:$0xf]
      %v3958 = vld [vmem:[%s2810 + $0x14] sm:$0x1]
      %v3959 = vld [vmem:[%s2810 + $0x1c] sm:$0xf]
      %v3960 = vld [vmem:[%s2810 + $0x20] sm:$0x1]
      %v3961 = vld [vmem:[%s2810 + $0x28] sm:$0xf]
      %v3962 = vld [vmem:[%s2810 + $0x2c] sm:$0x1]
      %v3963 = vld [vmem:[%s2810 + $0x34] sm:$0xf]
      %v3964 = vld [vmem:[%s2810 + $0x38] sm:$0x1]
      %v3965 = vld [vmem:[%s2810 + $0x40] sm:$0xf]
      %v3966 = vld [vmem:[%s2810 + $0x44] sm:$0x1]
      %v3967 = vld [vmem:[%s2810 + $0x4c] sm:$0xf]
      %v3968 = vld [vmem:[%s2810 + $0x50] sm:$0x1]
      %v3969 = vld [vmem:[%s2810 + $0x58] sm:$0xf]
      %v3970 = vld [vmem:[%s2810 + $0x5c] sm:$0x1]
      %v3972 = vshrl.u32 %v3955, 16
      %v3974 = vrot.slane %v3972, 4
      %v3975 = vshll.u32 %v3955, 16
      %v3977 = vrot.slane %v3975, 5
      %v3978 = vor.u32 %v3974, %v3977
      %v3979 = vrot.slane %v3978, 4
      %v3981 = vshll.u32 %v3956, 16
      %v3983 = vrot.slane %v3981, 5
      %v3984 = vsel %vm3714, %v3979, %v3983
      %v3986 = vshrl.u32 %v3957, 16
      %v3988 = vrot.slane %v3986, 4
      %v3989 = vshll.u32 %v3957, 16
      %v3991 = vrot.slane %v3989, 5
      %v3992 = vor.u32 %v3988, %v3991
      %v3993 = vrot.slane %v3992, 4
      %v3995 = vshll.u32 %v3958, 16
      %v3997 = vrot.slane %v3995, 5
      %v3998 = vsel %vm3714, %v3993, %v3997
      %v4000 = vshrl.u32 %v3959, 16
      %v4002 = vrot.slane %v4000, 4
      %v4003 = vshll.u32 %v3959, 16
      %v4005 = vrot.slane %v4003, 5
      %v4006 = vor.u32 %v4002, %v4005
      %v4007 = vrot.slane %v4006, 4
      %v4009 = vshll.u32 %v3960, 16
      %v4011 = vrot.slane %v4009, 5
      %v4012 = vsel %vm3714, %v4007, %v4011
      %v4014 = vshrl.u32 %v3961, 16
      %v4016 = vrot.slane %v4014, 4
      %v4017 = vshll.u32 %v3961, 16
      %v4019 = vrot.slane %v4017, 5
      %v4020 = vor.u32 %v4016, %v4019
      %v4021 = vrot.slane %v4020, 4
      %v4023 = vshll.u32 %v3962, 16
      %v4025 = vrot.slane %v4023, 5
      %v4026 = vsel %vm3714, %v4021, %v4025
      %v4028 = vshrl.u32 %v3963, 16
      %v4030 = vrot.slane %v4028, 4
      %v4031 = vshll.u32 %v3963, 16
      %v4033 = vrot.slane %v4031, 5
      %v4034 = vor.u32 %v4030, %v4033
      %v4035 = vrot.slane %v4034, 4
      %v4037 = vshll.u32 %v3964, 16
      %v4039 = vrot.slane %v4037, 5
      %v4040 = vsel %vm3714, %v4035, %v4039
      %v4042 = vshrl.u32 %v3965, 16
      %v4044 = vrot.slane %v4042, 4
      %v4045 = vshll.u32 %v3965, 16
      %v4047 = vrot.slane %v4045, 5
      %v4048 = vor.u32 %v4044, %v4047
      %v4049 = vrot.slane %v4048, 4
      %v4051 = vshll.u32 %v3966, 16
      %v4053 = vrot.slane %v4051, 5
      %v4054 = vsel %vm3714, %v4049, %v4053
      %v4056 = vshrl.u32 %v3967, 16
      %v4058 = vrot.slane %v4056, 4
      %v4059 = vshll.u32 %v3967, 16
      %v4061 = vrot.slane %v4059, 5
      %v4062 = vor.u32 %v4058, %v4061
      %v4063 = vrot.slane %v4062, 4
      %v4065 = vshll.u32 %v3968, 16
      %v4067 = vrot.slane %v4065, 5
      %v4068 = vsel %vm3714, %v4063, %v4067
      %v4070 = vshrl.u32 %v3969, 16
      %v4072 = vrot.slane %v4070, 4
      %v4073 = vshll.u32 %v3969, 16
      %v4075 = vrot.slane %v4073, 5
      %v4076 = vor.u32 %v4072, %v4075
      %v4077 = vrot.slane %v4076, 4
      %v4079 = vshll.u32 %v3970, 16
      %v4081 = vrot.slane %v4079, 5
      %v4082 = vsel %vm3714, %v4077, %v4081
      %v4083 = vunpack.c.l.b16 %v3728
      %v4084 = vunpack.c.l.b16 %v3742
      %v4085 = vunpack.c.l.b16 %v3756
      %v4086 = vunpack.c.l.b16 %v3770
      %v4087 = vunpack.c.l.b16 %v3784
      %v4088 = vunpack.c.l.b16 %v3798
      %v4089 = vunpack.c.l.b16 %v3812
      %v4090 = vunpack.c.l.b16 %v3826
      %v4091 = vpack.c.b16 %v4084, %v4083
      %v4092 = vpack.c.b16 %v4086, %v4085
      %v4093 = vpack.c.b16 %v4088, %v4087
      %v4094 = vpack.c.b16 %v4090, %v4089
      %v4099 = vunpack.c.l.b16 %v3856
      %v4100 = vunpack.c.l.b16 %v3870
      %v4101 = vunpack.c.l.b16 %v3884
      %v4102 = vunpack.c.l.b16 %v3898
      %v4103 = vunpack.c.l.b16 %v3912
      %v4104 = vunpack.c.l.b16 %v3926
      %v4105 = vunpack.c.l.b16 %v3940
      %v4106 = vunpack.c.l.b16 %v3954
      %v4107 = vpack.c.b16 %v4100, %v4099
      %v4108 = vpack.c.b16 %v4102, %v4101
      %v4109 = vpack.c.b16 %v4104, %v4103
      %v4110 = vpack.c.b16 %v4106, %v4105
      %v4115 = vunpack.c.l.b16 %v3984
      %v4116 = vunpack.c.l.b16 %v3998
      %v4117 = vunpack.c.l.b16 %v4012
      %v4118 = vunpack.c.l.b16 %v4026
      %v4119 = vunpack.c.l.b16 %v4040
      %v4120 = vunpack.c.l.b16 %v4054
      %v4121 = vunpack.c.l.b16 %v4068
      %v4122 = vunpack.c.l.b16 %v4082
      %v4123 = vpack.c.b16 %v4116, %v4115
      %v4124 = vpack.c.b16 %v4118, %v4117
      %v4125 = vpack.c.b16 %v4120, %v4119
      %v4126 = vpack.c.b16 %v4122, %v4121
      %s4131 = scalar_lea.vmem %s6, 384
      %v4132 = vld [vmem:[%s4131] sm:$0xf]
      %v4133 = vld [vmem:[%s4131 + $0x4] sm:$0xf]
      %v4134 = vld [vmem:[%s4131 + $0x8] sm:$0xf]
      %v4135 = vld [vmem:[%s4131 + $0xc] sm:$0xf]
      %v4136 = vld [vmem:[%s4131 + $0x10] sm:$0xf]
      %v4137 = vld [vmem:[%s4131 + $0x14] sm:$0xf]
      %v4138 = vld [vmem:[%s4131 + $0x18] sm:$0xf]
      %v4139 = vld [vmem:[%s4131 + $0x1c] sm:$0xf]
      %v4140 = vld [vmem:[%s4131 + $0x20] sm:$0xf]
      %v4141 = vld [vmem:[%s4131 + $0x24] sm:$0xf]
      %v4142 = vld [vmem:[%s4131 + $0x28] sm:$0xf]
      %v4143 = vld [vmem:[%s4131 + $0x2c] sm:$0xf]
      %v4144 = vld [vmem:[%s4131 + $0x30] sm:$0xf]
      %v4145 = vld [vmem:[%s4131 + $0x34] sm:$0xf]
      %v4146 = vld [vmem:[%s4131 + $0x38] sm:$0xf]
      %v4147 = vld [vmem:[%s4131 + $0x3c] sm:$0xf]
      %v4148 = vld [vmem:[%s4131 + $0x40] sm:$0xf]
      %v4149 = vld [vmem:[%s4131 + $0x44] sm:$0xf]
      %v4150 = vld [vmem:[%s4131 + $0x48] sm:$0xf]
      %v4151 = vld [vmem:[%s4131 + $0x4c] sm:$0xf]
      %v4152 = vld [vmem:[%s4131 + $0x50] sm:$0xf]
      %v4153 = vld [vmem:[%s4131 + $0x54] sm:$0xf]
      %v4154 = vld [vmem:[%s4131 + $0x58] sm:$0xf]
      %v4155 = vld [vmem:[%s4131 + $0x5c] sm:$0xf]
      %v4156 = vld [vmem:[%s4131 + $0x60] sm:$0xf]
      %v4157 = vld [vmem:[%s4131 + $0x64] sm:$0xf]
      %v4158 = vld [vmem:[%s4131 + $0x68] sm:$0xf]
      %v4159 = vld [vmem:[%s4131 + $0x6c] sm:$0xf]
      %v4160 = vld [vmem:[%s4131 + $0x70] sm:$0xf]
      %v4161 = vld [vmem:[%s4131 + $0x74] sm:$0xf]
      %v4162 = vld [vmem:[%s4131 + $0x78] sm:$0xf]
      %v4163 = vld [vmem:[%s4131 + $0x7c] sm:$0xf]
      %v4164 = vld [vmem:[%s4131 + $0x80] sm:$0xf]
      %v4165 = vld [vmem:[%s4131 + $0x84] sm:$0xf]
      %v4166 = vld [vmem:[%s4131 + $0x88] sm:$0xf]
      %v4167 = vld [vmem:[%s4131 + $0x8c] sm:$0xf]
      %v4168 = vld [vmem:[%s4131 + $0x90] sm:$0xf]
      %v4169 = vld [vmem:[%s4131 + $0x94] sm:$0xf]
      %v4170 = vld [vmem:[%s4131 + $0x98] sm:$0xf]
      %v4171 = vld [vmem:[%s4131 + $0x9c] sm:$0xf]
      %v4172 = vld [vmem:[%s4131 + $0xa0] sm:$0xf]
      %v4173 = vld [vmem:[%s4131 + $0xa4] sm:$0xf]
      %v4174 = vld [vmem:[%s4131 + $0xa8] sm:$0xf]
      %v4175 = vld [vmem:[%s4131 + $0xac] sm:$0xf]
      %v4176 = vld [vmem:[%s4131 + $0xb0] sm:$0xf]
      %v4177 = vld [vmem:[%s4131 + $0xb4] sm:$0xf]
      %v4178 = vld [vmem:[%s4131 + $0xb8] sm:$0xf]
      %v4179 = vld [vmem:[%s4131 + $0xbc] sm:$0xf]
      %v4228 = vunpack.c.l.b16 %v4132
      %v4229 = vunpack.c.l.b16 %v4133
      %v4230 = vunpack.c.l.b16 %v4134
      %v4231 = vunpack.c.l.b16 %v4135
      %v4232 = vunpack.c.l.b16 %v4136
      %v4233 = vunpack.c.l.b16 %v4137
      %v4234 = vunpack.c.l.b16 %v4138
      %v4235 = vunpack.c.l.b16 %v4139
      %v4236 = vunpack.c.l.b16 %v4140
      %v4237 = vunpack.c.l.b16 %v4141
      %v4238 = vunpack.c.l.b16 %v4142
      %v4239 = vunpack.c.l.b16 %v4143
      %v4240 = vunpack.c.l.b16 %v4144
      %v4241 = vunpack.c.l.b16 %v4145
      %v4242 = vunpack.c.l.b16 %v4146
      %v4243 = vunpack.c.l.b16 %v4147
      %v4244 = vunpack.c.l.b16 %v4148
      %v4245 = vunpack.c.l.b16 %v4149
      %v4246 = vunpack.c.l.b16 %v4150
      %v4247 = vunpack.c.l.b16 %v4151
      %v4248 = vunpack.c.l.b16 %v4152
      %v4249 = vunpack.c.l.b16 %v4153
      %v4250 = vunpack.c.l.b16 %v4154
      %v4251 = vunpack.c.l.b16 %v4155
      %v4252 = vunpack.c.l.b16 %v4156
      %v4253 = vunpack.c.l.b16 %v4157
      %v4254 = vunpack.c.l.b16 %v4158
      %v4255 = vunpack.c.l.b16 %v4159
      %v4256 = vunpack.c.l.b16 %v4160
      %v4257 = vunpack.c.l.b16 %v4161
      %v4258 = vunpack.c.l.b16 %v4162
      %v4259 = vunpack.c.l.b16 %v4163
      %v4260 = vunpack.c.l.b16 %v4164
      %v4261 = vunpack.c.l.b16 %v4165
      %v4262 = vunpack.c.l.b16 %v4166
      %v4263 = vunpack.c.l.b16 %v4167
      %v4264 = vunpack.c.l.b16 %v4168
      %v4265 = vunpack.c.l.b16 %v4169
      %v4266 = vunpack.c.l.b16 %v4170
      %v4267 = vunpack.c.l.b16 %v4171
      %v4268 = vunpack.c.l.b16 %v4172
      %v4269 = vunpack.c.l.b16 %v4173
      %v4270 = vunpack.c.l.b16 %v4174
      %v4271 = vunpack.c.l.b16 %v4175
      %v4272 = vunpack.c.l.b16 %v4176
      %v4273 = vunpack.c.l.b16 %v4177
      %v4274 = vunpack.c.l.b16 %v4178
      %v4275 = vunpack.c.l.b16 %v4179
      %v4276 = vpack.c.b16 %v4229, %v4228
      %v4277 = vpack.c.b16 %v4231, %v4230
      %v4278 = vpack.c.b16 %v4233, %v4232
      %v4279 = vpack.c.b16 %v4235, %v4234
      %v4280 = vpack.c.b16 %v4237, %v4236
      %v4281 = vpack.c.b16 %v4239, %v4238
      %v4282 = vpack.c.b16 %v4241, %v4240
      %v4283 = vpack.c.b16 %v4243, %v4242
      %v4284 = vpack.c.b16 %v4245, %v4244
      %v4285 = vpack.c.b16 %v4247, %v4246
      %v4286 = vpack.c.b16 %v4249, %v4248
      %v4287 = vpack.c.b16 %v4251, %v4250
      %v4288 = vpack.c.b16 %v4253, %v4252
      %v4289 = vpack.c.b16 %v4255, %v4254
      %v4290 = vpack.c.b16 %v4257, %v4256
      %v4291 = vpack.c.b16 %v4259, %v4258
      %v4292 = vpack.c.b16 %v4261, %v4260
      %v4293 = vpack.c.b16 %v4263, %v4262
      %v4294 = vpack.c.b16 %v4265, %v4264
      %v4295 = vpack.c.b16 %v4267, %v4266
      %v4296 = vpack.c.b16 %v4269, %v4268
      %v4297 = vpack.c.b16 %v4271, %v4270
      %v4298 = vpack.c.b16 %v4273, %v4272
      %v4299 = vpack.c.b16 %v4275, %v4274
      %4324 = vmatprep.subr.bf16.mxu0 0
      %4325 = vmatpush1.bf16.msra.mxu0 %v4276
      %4326 = vmatprep.subr.bf16.mxu0 0
      %4327 = vmatpush1.bf16.msra.mxu0 %v4277
      %4328 = vmatprep.subr.bf16.mxu0 0
      %4329 = vmatpush1.bf16.msra.mxu0 %v4278
      %4330 = vmatprep.subr.bf16.mxu0 0
      %4331 = vmatpush1.bf16.msra.mxu0 %v4279
      %4332 = vmatprep.subr.bf16.mxu0 0
      %4333 = vmatpush1.bf16.msra.mxu0 %v4280
      %4334 = vmatprep.subr.bf16.mxu0 0
      %4335 = vmatpush1.bf16.msra.mxu0 %v4281
      %4336 = vmatprep.subr.bf16.mxu0 0
      %4337 = vmatpush1.bf16.msra.mxu0 %v4282
      %4338 = vmatprep.subr.bf16.mxu0 0
      %4339 = vmatpush1.bf16.msra.mxu0 %v4283
      %4340 = vmatprep.subr.bf16.mxu0 0
      %4341 = vmatpush1.bf16.msra.mxu0 %v4284
      %4342 = vmatprep.subr.bf16.mxu0 0
      %4343 = vmatpush1.bf16.msra.mxu0 %v4285
      %4344 = vmatprep.subr.bf16.mxu0 0
      %4345 = vmatpush1.bf16.msra.mxu0 %v4286
      %4346 = vmatprep.subr.bf16.mxu0 0
      %4347 = vmatpush1.bf16.msra.mxu0 %v4287
      %4348 = vmatprep.subr.bf16.mxu0 0
      %4349 = vmatpush1.bf16.msra.mxu0 %v4288
      %4350 = vmatprep.subr.bf16.mxu0 0
      %4351 = vmatpush1.bf16.msra.mxu0 %v4289
      %4352 = vmatprep.subr.bf16.mxu0 0
      %4353 = vmatpush1.bf16.msra.mxu0 %v4290
      %4354 = vmatprep.subr.bf16.mxu0 0
      %4355 = vmatpush1.bf16.msra.mxu0 %v4291
      %4356 = vmatprep.mubr.bf16.mxu0 %v4107
      %4357 = vmatmul.mubr.bf16.gmra.mrb[0].mxu0 %v4091
      %v4358 = vpop.f32.mrb[0].mxu0
      %v4359 = vadd.f32 0.0, %v4358
      %v4360 = vpop.f32.mrb[0].mxu0
      %v4361 = vpop.f32.mrb[0].mxu0
      %v4362 = vadd.f32 0.0, %v4361
      %v4363 = vpop.f32.mrb[0].mxu0
      %4364 = vmatprep.mubr.bf16.mxu0 %v4108
      %4365 = vmatmul.mubr.bf16.gmra.mrb[0].mxu0 %v4092
      %v4366 = vpop.f32.mrb[0].mxu0
      %v4367 = vadd.f32 0.0, %v4366
      %v4368 = vpop.f32.mrb[0].mxu0
      %v4369 = vpop.f32.mrb[0].mxu0
      %v4370 = vadd.f32 0.0, %v4369
      %v4371 = vpop.f32.mrb[0].mxu0
      %4372 = vmatprep.mubr.bf16.mxu0 %v4109
      %4373 = vmatmul.mubr.bf16.gmra.mrb[0].mxu0 %v4093
      %v4374 = vpop.f32.mrb[0].mxu0
      %v4375 = vadd.f32 0.0, %v4374
      %v4376 = vpop.f32.mrb[0].mxu0
      %v4377 = vpop.f32.mrb[0].mxu0
      %v4378 = vadd.f32 0.0, %v4377
      %v4379 = vpop.f32.mrb[0].mxu0
      %4380 = vmatprep.mubr.bf16.mxu0 %v4110
      %4381 = vmatmul.mubr.bf16.gmra.mrb[0].mxu0 %v4094
      %v4382 = vpop.f32.mrb[0].mxu0
      %v4383 = vadd.f32 0.0, %v4382
      %v4384 = vpop.f32.mrb[0].mxu0
      %v4385 = vpop.f32.mrb[0].mxu0
      %v4386 = vadd.f32 0.0, %v4385
      %v4387 = vpop.f32.mrb[0].mxu0
      %4388 = vdwg.mxu0
      %4389 = vmatprep.subr.bf16.mxu0 0
      %4390 = vmatpush1.bf16.msra.mxu0 %v4292
      %4391 = vmatprep.subr.bf16.mxu0 0
      %4392 = vmatpush1.bf16.msra.mxu0 %v4293
      %4393 = vmatprep.subr.bf16.mxu0 0
      %4394 = vmatpush1.bf16.msra.mxu0 %v4294
      %4395 = vmatprep.subr.bf16.mxu0 0
      %4396 = vmatpush1.bf16.msra.mxu0 %v4295
      %4397 = vmatprep.subr.bf16.mxu0 0
      %4398 = vmatpush1.bf16.msra.mxu0 %v4296
      %4399 = vmatprep.subr.bf16.mxu0 0
      %4400 = vmatpush1.bf16.msra.mxu0 %v4297
      %4401 = vmatprep.subr.bf16.mxu0 0
      %4402 = vmatpush1.bf16.msra.mxu0 %v4298
      %4403 = vmatprep.subr.bf16.mxu0 0
      %4404 = vmatpush1.bf16.msra.mxu0 %v4299
      %4405 = vmatprep.subr.bf16.mxu0 0
      %4406 = vmatpush1.bf16.msra.mxu0 0
      %4407 = vmatprep.subr.bf16.mxu0 0
      %4408 = vmatpush1.bf16.msra.mxu0 0
      %4409 = vmatprep.subr.bf16.mxu0 0
      %4410 = vmatpush1.bf16.msra.mxu0 0
      %4411 = vmatprep.subr.bf16.mxu0 0
      %4412 = vmatpush1.bf16.msra.mxu0 0
      %4413 = vmatprep.subr.bf16.mxu0 0
      %4414 = vmatpush1.bf16.msra.mxu0 0
      %4415 = vmatprep.subr.bf16.mxu0 0
      %4416 = vmatpush1.bf16.msra.mxu0 0
      %4417 = vmatprep.subr.bf16.mxu0 0
      %4418 = vmatpush1.bf16.msra.mxu0 0
      %4419 = vmatprep.subr.bf16.mxu0 0
      %4420 = vmatpush1.bf16.msra.mxu0 0
      %4421 = vmatprep.mubr.bf16.mxu0 0
      %4422 = vmatmul.mubr.bf16.gmra.mrb[0].mxu0 %v4123
      %v4423 = vpop.f32.mrb[0].mxu0
      %v4424 = vadd.f32 %v4359, %v4423
      %v4425 = vpop.f32.mrb[0].mxu0
      %v4426 = vpop.f32.mrb[0].mxu0
      %v4427 = vadd.f32 %v4362, %v4426
      %v4428 = vpop.f32.mrb[0].mxu0
      %4429 = vmatprep.mubr.bf16.mxu0 0
      %4430 = vmatmul.mubr.bf16.gmra.mrb[0].mxu0 %v4124
      %v4431 = vpop.f32.mrb[0].mxu0
      %v4432 = vadd.f32 %v4367, %v4431
      %v4433 = vpop.f32.mrb[0].mxu0
      %v4434 = vpop.f32.mrb[0].mxu0
      %v4435 = vadd.f32 %v4370, %v4434
      %v4436 = vpop.f32.mrb[0].mxu0
      %4437 = vmatprep.mubr.bf16.mxu0 0
      %4438 = vmatmul.mubr.bf16.gmra.mrb[0].mxu0 %v4125
      %v4439 = vpop.f32.mrb[0].mxu0
      %v4440 = vadd.f32 %v4375, %v4439
      %v4441 = vpop.f32.mrb[0].mxu0
      %v4442 = vpop.f32.mrb[0].mxu0
      %v4443 = vadd.f32 %v4378, %v4442
      %v4444 = vpop.f32.mrb[0].mxu0
      %4445 = vmatprep.mubr.bf16.mxu0 0
      %4446 = vmatmul.mubr.bf16.gmra.mrb[0].mxu0 %v4126
      %v4447 = vpop.f32.mrb[0].mxu0
      %v4448 = vadd.f32 %v4383, %v4447
      %v4449 = vpop.f32.mrb[0].mxu0
      %v4450 = vpop.f32.mrb[0].mxu0
      %v4451 = vadd.f32 %v4386, %v4450
      %v4452 = vpop.f32.mrb[0].mxu0
      %4453 = vdwg.mxu0
      %v4454 = vadd.f32 %v3666, %v4424
      %v4455 = vadd.f32 %v3669, %v4427
      %v4456 = vadd.f32 %v3674, %v4432
      %v4457 = vadd.f32 %v3677, %v4435
      %v4458 = vadd.f32 %v3682, %v4440
      %v4459 = vadd.f32 %v3685, %v4443
      %v4460 = vadd.f32 %v3690, %v4448
      %v4461 = vadd.f32 %v3693, %v4451
      %v4462 = vld [vmem:[%s808] sm:$0xf0]
      %v4463 = vld [vmem:[%s808 + $0x20] sm:$0xf0]
      %v4464 = vld [vmem:[%s808 + $0x40] sm:$0xf0]
      %v4465 = vld [vmem:[%s808 + $0x60] sm:$0xf0]
      %v4466 = vld [vmem:[%s808 + $0x80] sm:$0xf0]
      %v4467 = vld [vmem:[%s808 + $0xa0] sm:$0xf0]
      %v4468 = vld [vmem:[%s808 + $0xc0] sm:$0xf0]
      %v4469 = vld [vmem:[%s808 + $0xe0] sm:$0xf0]
      %v4478 = vunpack.c.h.b16 %v4462
      %v4479 = vunpack.c.h.b16 %v4463
      %v4480 = vunpack.c.h.b16 %v4464
      %v4481 = vunpack.c.h.b16 %v4465
      %v4482 = vunpack.c.h.b16 %v4466
      %v4483 = vunpack.c.h.b16 %v4467
      %v4484 = vunpack.c.h.b16 %v4468
      %v4485 = vunpack.c.h.b16 %v4469
      %v4486 = vld [vmem:[%s7] sm:$0xf]
      %v4487 = vld [vmem:[%s7 + $0x4] sm:$0xf]
      %v4488 = vld [vmem:[%s7 + $0x8] sm:$0xf]
      %v4489 = vld [vmem:[%s7 + $0xc] sm:$0xf]
      %v4490 = vld [vmem:[%s7 + $0x10] sm:$0xf]
      %v4491 = vld [vmem:[%s7 + $0x14] sm:$0xf]
      %v4492 = vld [vmem:[%s7 + $0x18] sm:$0xf]
      %v4493 = vld [vmem:[%s7 + $0x1c] sm:$0xf]
      %v4494 = vld [vmem:[%s7 + $0x20] sm:$0xf]
      %v4495 = vld [vmem:[%s7 + $0x24] sm:$0xf]
      %v4496 = vld [vmem:[%s7 + $0x28] sm:$0xf]
      %v4497 = vld [vmem:[%s7 + $0x2c] sm:$0xf]
      %v4498 = vld [vmem:[%s7 + $0x30] sm:$0xf]
      %v4499 = vld [vmem:[%s7 + $0x34] sm:$0xf]
      %v4500 = vld [vmem:[%s7 + $0x38] sm:$0xf]
      %v4501 = vld [vmem:[%s7 + $0x3c] sm:$0xf]
      %v4502 = vpack.c.b16 %v4479, %v4478
      %v4503 = vpack.c.b16 %v4481, %v4480
      %v4504 = vpack.c.b16 %v4483, %v4482
      %v4505 = vpack.c.b16 %v4485, %v4484
      %v4526 = vunpack.c.l.b16 %v4486
      %v4527 = vunpack.c.l.b16 %v4487
      %v4528 = vunpack.c.l.b16 %v4488
      %v4529 = vunpack.c.l.b16 %v4489
      %v4530 = vunpack.c.l.b16 %v4490
      %v4531 = vunpack.c.l.b16 %v4491
      %v4532 = vunpack.c.l.b16 %v4492
      %v4533 = vunpack.c.l.b16 %v4493
      %v4534 = vunpack.c.l.b16 %v4494
      %v4535 = vunpack.c.l.b16 %v4495
      %v4536 = vunpack.c.l.b16 %v4496
      %v4537 = vunpack.c.l.b16 %v4497
      %v4538 = vunpack.c.l.b16 %v4498
      %v4539 = vunpack.c.l.b16 %v4499
      %v4540 = vunpack.c.l.b16 %v4500
      %v4541 = vunpack.c.l.b16 %v4501
      %v4542 = vpack.c.b16 %v4527, %v4526
      %v4543 = vpack.c.b16 %v4529, %v4528
      %v4544 = vpack.c.b16 %v4531, %v4530
      %v4545 = vpack.c.b16 %v4533, %v4532
      %v4546 = vpack.c.b16 %v4535, %v4534
      %v4547 = vpack.c.b16 %v4537, %v4536
      %v4548 = vpack.c.b16 %v4539, %v4538
      %v4549 = vpack.c.b16 %v4541, %v4540
      %4558 = vmatprep.subr.bf16.mxu0 0
      %4559 = vmatpush1.bf16.msra.mxu0 %v4542
      %4560 = vmatprep.subr.bf16.mxu0 0
      %4561 = vmatpush1.bf16.msra.mxu0 %v4543
      %4562 = vmatprep.subr.bf16.mxu0 0
      %4563 = vmatpush1.bf16.msra.mxu0 %v4544
      %4564 = vmatprep.subr.bf16.mxu0 0
      %4565 = vmatpush1.bf16.msra.mxu0 %v4545
      %4566 = vmatprep.subr.bf16.mxu0 0
      %4567 = vmatpush1.bf16.msra.mxu0 %v4546
      %4568 = vmatprep.subr.bf16.mxu0 0
      %4569 = vmatpush1.bf16.msra.mxu0 %v4547
      %4570 = vmatprep.subr.bf16.mxu0 0
      %4571 = vmatpush1.bf16.msra.mxu0 %v4548
      %4572 = vmatprep.subr.bf16.mxu0 0
      %4573 = vmatpush1.bf16.msra.mxu0 %v4549
      %4574 = vmatprep.subr.bf16.mxu0 0
      %4575 = vmatpush1.bf16.msra.mxu0 0
      %4576 = vmatprep.subr.bf16.mxu0 0
      %4577 = vmatpush1.bf16.msra.mxu0 0
      %4578 = vmatprep.subr.bf16.mxu0 0
      %4579 = vmatpush1.bf16.msra.mxu0 0
      %4580 = vmatprep.subr.bf16.mxu0 0
      %4581 = vmatpush1.bf16.msra.mxu0 0
      %4582 = vmatprep.subr.bf16.mxu0 0
      %4583 = vmatpush1.bf16.msra.mxu0 0
      %4584 = vmatprep.subr.bf16.mxu0 0
      %4585 = vmatpush1.bf16.msra.mxu0 0
      %4586 = vmatprep.subr.bf16.mxu0 0
      %4587 = vmatpush1.bf16.msra.mxu0 0
      %4588 = vmatprep.subr.bf16.mxu0 0
      %4589 = vmatpush1.bf16.msra.mxu0 0
      %4590 = vmatprep.mubr.bf16.mxu0 0
      %4591 = vmatmul.mubr.bf16.gmra.mrb[0].mxu0 %v4502
      %v4592 = vpop.f32.mrb[0].mxu0
      %v4593 = vadd.f32 0.0, %v4592
      %v4594 = vpop.f32.mrb[0].mxu0
      %v4595 = vpop.f32.mrb[0].mxu0
      %v4596 = vadd.f32 0.0, %v4595
      %v4597 = vpop.f32.mrb[0].mxu0
      %4598 = vmatprep.mubr.bf16.mxu0 0
      %4599 = vmatmul.mubr.bf16.gmra.mrb[0].mxu0 %v4503
      %v4600 = vpop.f32.mrb[0].mxu0
      %v4601 = vadd.f32 0.0, %v4600
      %v4602 = vpop.f32.mrb[0].mxu0
      %v4603 = vpop.f32.mrb[0].mxu0
      %v4604 = vadd.f32 0.0, %v4603
      %v4605 = vpop.f32.mrb[0].mxu0
      %4606 = vmatprep.mubr.bf16.mxu0 0
      %4607 = vmatmul.mubr.bf16.gmra.mrb[0].mxu0 %v4504
      %v4608 = vpop.f32.mrb[0].mxu0
      %v4609 = vadd.f32 0.0, %v4608
      %v4610 = vpop.f32.mrb[0].mxu0
      %v4611 = vpop.f32.mrb[0].mxu0
      %v4612 = vadd.f32 0.0, %v4611
      %v4613 = vpop.f32.mrb[0].mxu0
      %4614 = vmatprep.mubr.bf16.mxu0 0
      %4615 = vmatmul.mubr.bf16.gmra.mrb[0].mxu0 %v4505
      %v4616 = vpop.f32.mrb[0].mxu0
      %v4617 = vadd.f32 0.0, %v4616
      %v4618 = vpop.f32.mrb[0].mxu0
      %v4619 = vpop.f32.mrb[0].mxu0
      %v4620 = vadd.f32 0.0, %v4619
      %v4621 = vpop.f32.mrb[0].mxu0
      %4622 = vdwg.mxu0
      %v4623 = vadd.f32 %v4454, %v4593
      %v4624 = vadd.f32 %v4455, %v4596
      %v4625 = vadd.f32 %v4456, %v4601
      %v4626 = vadd.f32 %v4457, %v4604
      %v4627 = vadd.f32 %v4458, %v4609
      %v4628 = vadd.f32 %v4459, %v4612
      %v4629 = vadd.f32 %v4460, %v4617
      %v4630 = vadd.f32 %v4461, %v4620
      %v4631 = vpack.c.bf16 %v4623, %v4623
      %v4632 = vpack.c.bf16 %v4624, %v4624
      %v4633 = vpack.c.bf16 %v4625, %v4625
      %v4634 = vpack.c.bf16 %v4626, %v4626
      %v4635 = vpack.c.bf16 %v4627, %v4627
      %v4636 = vpack.c.bf16 %v4628, %v4628
      %v4637 = vpack.c.bf16 %v4629, %v4629
      %v4638 = vpack.c.bf16 %v4630, %v4630
      %4639 = vst [vmem:[%s305] sm:$0xf] %v4631
      %4640 = vst [vmem:[%s305 + $0x4] sm:$0xf] %v4632
      %4641 = vst [vmem:[%s305 + $0x8] sm:$0xf] %v4633
      %4642 = vst [vmem:[%s305 + $0xc] sm:$0xf] %v4634
      %4643 = vst [vmem:[%s305 + $0x10] sm:$0xf] %v4635
      %4644 = vst [vmem:[%s305 + $0x14] sm:$0xf] %v4636
      %4645 = vst [vmem:[%s305 + $0x18] sm:$0xf] %v4637
      %4646 = vst [vmem:[%s305 + $0x1c] sm:$0xf] %v4638
      %p4647 = scmp.lt.s32.totalorder %s19, 1
      %s4648 = scalar_select %p4647, %s19, 1
      %s4649 = smul.addr %s4648, 8
      %s4650 = smul.addr %s4649, 4
      %s4651 = scalar_lea.vmem %s8, %s4650
      // Predicated region
      $region53: #{network_block_forward.2} parent=51 // pred_check
        %p4652 = pneg %p210
      $region54: #{network_block_forward.2} parent=51 // pred_check_branch
        %4654 = sbr.rel (%p4652) target = $region56
      $region55: #{network_block_forward.2} parent=51 // pred_region
        _
      $region56: #{network_block_forward.2} parent=51 // pred_fallthru
        _
    $region52: #{network_block_forward.2} parent=5 // pred_fallthru
      _
    %p4655 = scmp.le.s32.totalorder 2, %s14
    // Predicated region
    $region57: #{network_block_forward.2} parent=5 // pred_check
      %p4656 = pneg %p4655
    $region58: #{network_block_forward.2} parent=5 // pred_check_branch
      %4658 = sbr.rel (%p4656) target = $region60
    $region59: #{network_block_forward.2} parent=5 // pred_region
      %s4659 = ssub.s32 %s14, 2
      // Predicated region
      $region61: #{network_block_forward.2} parent=59 // pred_check
        %p4660 = pneg %p216
      $region62: #{network_block_forward.2} parent=59 // pred_check_branch
        %4662 = sbr.rel (%p4660) target = $region64
      $region63: #{network_block_forward.2} parent=59 // pred_region
        %p4663 = scmp.lt.s32.totalorder %s20, 1
        %s4664 = scalar_select %p4663, %s20, 1
        %s4665 = smul.addr %s4664, 8
        %s4666 = smul.addr %s4665, 4
        %s4667 = scalar_lea.vmem %s8, %s4666
      $region64: #{network_block_forward.2} parent=59 // pred_fallthru
        _
    $region60: #{network_block_forward.2} parent=5 // pred_fallthru
      _
  $region6: #{network_block_forward.2} parent=0 // loop_footer
    %s18 = sadd.s32 1, %s14
  $region7: #{network_block_forward.2} parent=0 // loop_footer_branch
    %13 = sbr.rel target = $region3
  $region8: #{network_block_forward.2} parent=0 // loop_exit
    _

// kernel: network_block_forward.3
$region0: #{network_block_forward.3}
  #allocation0 [shape = 'u32[]', space=smem, size = 0x4, offset = 0x4, fixed_abs, tag = 'smem constant byte address 0x4 - core index']
  #allocation1 [shape = 'u32[144,128]{1,0:T(1,128)}', space=vmem, size = 0x12000, scoped, tag = 'internal scratch']
  #allocation2 [shape = 'bf16[1,10,24,128]{3,2,1,0:T(8,128)(2,1)}', space=vmem, size = 0xf000, scoped, tag = 'scratch operand']
  #allocation3 [shape = 'bf16[1,10,24,128]{3,2,1,0:T(8,128)(2,1)}', space=vmem, size = 0xf000, scoped, tag = 'scratch operand']
  %s0 = inlined_call_operand.vmem [shape: bf16[2,8,8,128], index: 0, kind: input, shape index: {}]
  %s1 = inlined_call_operand.vmem [shape: f32[1,128], index: 1, kind: input, shape index: {}]
  %s2 = inlined_call_operand.vmem [shape: f32[1,128], index: 2, kind: input, shape index: {}]
  %s3 = inlined_call_operand.vmem [shape: f32[1,128], index: 3, kind: input, shape index: {}]
  %s4 = inlined_call_operand.vmem [shape: f32[1,128], index: 4, kind: input, shape index: {}]
  %s5 = inlined_call_operand.vmem [shape: bf16[3,384,128], index: 5, kind: input, shape index: {}]
  %s6 = inlined_call_operand.vmem [shape: bf16[3,384,128], index: 6, kind: input, shape index: {}]
  %s7 = inlined_call_operand.vmem [shape: bf16[2,8,8,128], index: 7, kind: output, shape index: {}]
  %s8 = sld [smem:[#allocation0]]
  $region61: #{network_block_forward.3} parent=0
    _
  %s10 = ssub.s32 1, %s8
  %s11 = scalar_select 0, %s10, %s8
  loop: start=0, step=1, limit=4
  $region2: #{network_block_forward.3} parent=0 // loop_pre_header
    _
  $region3: #{network_block_forward.3} parent=0 // loop_header
    %s13 = sphi 0, %s17
    %p14 = scmp.ge.s32.totalorder %s13, 4
    %s23 = sphi 0, %s25
    %s26 = sphi 0, %s23
    %s27 = sphi 0, %s26
    %s43 = sphi 0, %s27
    %s47 = sphi 0, %s47
    %s49 = sphi 0, %s47
    %s50 = sphi 0, %s49
    %s64 = sphi 0, %s50
    %s68 = sphi 0, %s68
    %s70 = sphi 0, %s68
    %s71 = sphi 0, %s70
    %s85 = sphi 0, %s71
    %s89 = sphi 0, %s89
    %s91 = sphi 0, %s89
    %s92 = sphi 0, %s91
    %s106 = sphi 0, %s92
    %s110 = sphi 0, %s110
    %s112 = sphi 0, %s110
    %s113 = sphi 0, %s112
    %s127 = sphi 0, %s113
    %s131 = sphi 0, %s131
    %s133 = sphi 0, %s131
    %s134 = sphi 0, %s133
    %s148 = sphi 0, %s134
    %s152 = sphi 0, %s152
    %s154 = sphi 0, %s152
    %s155 = sphi 0, %s154
    %s169 = sphi 0, %s155
    %s175 = sphi 0, %s177
    %s178 = sphi 0, %s175
    %s179 = sphi 0, %s178
    %s195 = sphi 0, %s179
  $region4: #{network_block_forward.3} parent=0 // loop_header_branch
    %16 = sbr.rel (%p14) target = $region8
  $region5: #{network_block_forward.3} parent=0 // loop_body
    %s18 = ssub.s32 %s13, 1
    %s19 = ssub.s32 %s13, 2
    %s20 = sadd.s32 %s13, 1
    %s21 = ssub.s32 %s13, %s20
    %p22 = scmp.eq.s32.totalorder %s21, 0
    %s24 = sadd.s32 %s23, 1
    %s25 = scalar_select %p22, %s23, %s24
    %p28 = pneg %p22
    %p29 = scmp.eq.s32.totalorder %s13, 1
    %p30 = por %p28, %p29
    %p31 = scmp.ne.s32.totalorder %s23, %s26
    %p32 = scmp.eq.s32.totalorder %s13, 0
    %p33 = por %p31, %p32
    %p34 = scmp.ne.s32.totalorder %s23, %s26
    %p35 = scmp.eq.s32.totalorder %s18, 1
    %p36 = por %p34, %p35
    %p37 = scmp.ne.s32.totalorder %s26, %s27
    %p38 = scmp.eq.s32.totalorder %s18, 0
    %p39 = por %p37, %p38
    %p40 = scmp.ne.s32.totalorder %s26, %s27
    %p41 = scmp.eq.s32.totalorder %s19, 1
    %p42 = por %p40, %p41
    %p44 = scmp.ne.s32.totalorder %s27, %s43
    %p45 = scmp.eq.s32.totalorder %s19, 0
    %p46 = por %p44, %p45
    %s48 = sadd.s32 %s47, 1
    %p51 = scmp.eq.s32.totalorder %s13, 1
    %p52 = scmp.ne.s32.totalorder %s47, %s49
    %p53 = scmp.eq.s32.totalorder %s13, 0
    %p54 = por %p52, %p53
    %p55 = scmp.ne.s32.totalorder %s47, %s49
    %p56 = scmp.eq.s32.totalorder %s18, 1
    %p57 = por %p55, %p56
    %p58 = scmp.ne.s32.totalorder %s49, %s50
    %p59 = scmp.eq.s32.totalorder %s18, 0
    %p60 = por %p58, %p59
    %p61 = scmp.ne.s32.totalorder %s49, %s50
    %p62 = scmp.eq.s32.totalorder %s19, 1
    %p63 = por %p61, %p62
    %p65 = scmp.ne.s32.totalorder %s50, %s64
    %p66 = scmp.eq.s32.totalorder %s19, 0
    %p67 = por %p65, %p66
    %s69 = sadd.s32 %s68, 1
    %p72 = scmp.eq.s32.totalorder %s13, 1
    %p73 = scmp.ne.s32.totalorder %s68, %s70
    %p74 = scmp.eq.s32.totalorder %s13, 0
    %p75 = por %p73, %p74
    %p76 = scmp.ne.s32.totalorder %s68, %s70
    %p77 = scmp.eq.s32.totalorder %s18, 1
    %p78 = por %p76, %p77
    %p79 = scmp.ne.s32.totalorder %s70, %s71
    %p80 = scmp.eq.s32.totalorder %s18, 0
    %p81 = por %p79, %p80
    %p82 = scmp.ne.s32.totalorder %s70, %s71
    %p83 = scmp.eq.s32.totalorder %s19, 1
    %p84 = por %p82, %p83
    %p86 = scmp.ne.s32.totalorder %s71, %s85
    %p87 = scmp.eq.s32.totalorder %s19, 0
    %p88 = por %p86, %p87
    %s90 = sadd.s32 %s89, 1
    %p93 = scmp.eq.s32.totalorder %s13, 1
    %p94 = scmp.ne.s32.totalorder %s89, %s91
    %p95 = scmp.eq.s32.totalorder %s13, 0
    %p96 = por %p94, %p95
    %p97 = scmp.ne.s32.totalorder %s89, %s91
    %p98 = scmp.eq.s32.totalorder %s18, 1
    %p99 = por %p97, %p98
    %p100 = scmp.ne.s32.totalorder %s91, %s92
    %p101 = scmp.eq.s32.totalorder %s18, 0
    %p102 = por %p100, %p101
    %p103 = scmp.ne.s32.totalorder %s91, %s92
    %p104 = scmp.eq.s32.totalorder %s19, 1
    %p105 = por %p103, %p104
    %p107 = scmp.ne.s32.totalorder %s92, %s106
    %p108 = scmp.eq.s32.totalorder %s19, 0
    %p109 = por %p107, %p108
    %s111 = sadd.s32 %s110, 1
    %p114 = scmp.eq.s32.totalorder %s13, 1
    %p115 = scmp.ne.s32.totalorder %s110, %s112
    %p116 = scmp.eq.s32.totalorder %s13, 0
    %p117 = por %p115, %p116
    %p118 = scmp.ne.s32.totalorder %s110, %s112
    %p119 = scmp.eq.s32.totalorder %s18, 1
    %p120 = por %p118, %p119
    %p121 = scmp.ne.s32.totalorder %s112, %s113
    %p122 = scmp.eq.s32.totalorder %s18, 0
    %p123 = por %p121, %p122
    %p124 = scmp.ne.s32.totalorder %s112, %s113
    %p125 = scmp.eq.s32.totalorder %s19, 1
    %p126 = por %p124, %p125
    %p128 = scmp.ne.s32.totalorder %s113, %s127
    %p129 = scmp.eq.s32.totalorder %s19, 0
    %p130 = por %p128, %p129
    %s132 = sadd.s32 %s131, 1
    %p135 = scmp.eq.s32.totalorder %s13, 1
    %p136 = scmp.ne.s32.totalorder %s131, %s133
    %p137 = scmp.eq.s32.totalorder %s13, 0
    %p138 = por %p136, %p137
    %p139 = scmp.ne.s32.totalorder %s131, %s133
    %p140 = scmp.eq.s32.totalorder %s18, 1
    %p141 = por %p139, %p140
    %p142 = scmp.ne.s32.totalorder %s133, %s134
    %p143 = scmp.eq.s32.totalorder %s18, 0
    %p144 = por %p142, %p143
    %p145 = scmp.ne.s32.totalorder %s133, %s134
    %p146 = scmp.eq.s32.totalorder %s19, 1
    %p147 = por %p145, %p146
    %p149 = scmp.ne.s32.totalorder %s134, %s148
    %p150 = scmp.eq.s32.totalorder %s19, 0
    %p151 = por %p149, %p150
    %s153 = sadd.s32 %s152, 1
    %p156 = scmp.eq.s32.totalorder %s13, 1
    %p157 = scmp.ne.s32.totalorder %s152, %s154
    %p158 = scmp.eq.s32.totalorder %s13, 0
    %p159 = por %p157, %p158
    %p160 = scmp.ne.s32.totalorder %s152, %s154
    %p161 = scmp.eq.s32.totalorder %s18, 1
    %p162 = por %p160, %p161
    %p163 = scmp.ne.s32.totalorder %s154, %s155
    %p164 = scmp.eq.s32.totalorder %s18, 0
    %p165 = por %p163, %p164
    %p166 = scmp.ne.s32.totalorder %s154, %s155
    %p167 = scmp.eq.s32.totalorder %s19, 1
    %p168 = por %p166, %p167
    %p170 = scmp.ne.s32.totalorder %s155, %s169
    %p171 = scmp.eq.s32.totalorder %s19, 0
    %p172 = por %p170, %p171
    %s173 = ssub.s32 %s13, %s20
    %p174 = scmp.eq.s32.totalorder %s173, 0
    %s176 = sadd.s32 %s175, 1
    %s177 = scalar_select %p174, %s175, %s176
    %p180 = pneg %p174
    %p181 = scmp.eq.s32.totalorder %s13, 1
    %p182 = por %p180, %p181
    %p183 = scmp.ne.s32.totalorder %s175, %s178
    %p184 = scmp.eq.s32.totalorder %s13, 0
    %p185 = por %p183, %p184
    %p186 = scmp.ne.s32.totalorder %s175, %s178
    %p187 = scmp.eq.s32.totalorder %s18, 1
    %p188 = por %p186, %p187
    %p189 = scmp.ne.s32.totalorder %s178, %s179
    %p190 = scmp.eq.s32.totalorder %s18, 0
    %p191 = por %p189, %p190
    %p192 = scmp.ne.s32.totalorder %s178, %s179
    %p193 = scmp.eq.s32.totalorder %s19, 1
    %p194 = por %p192, %p193
    %p196 = scmp.ne.s32.totalorder %s179, %s195
    %p197 = scmp.eq.s32.totalorder %s19, 0
    %p198 = por %p196, %p197
    %p199 = scmp.le.s32.totalorder 1, %s13
    %p200 = scmp.lt.s32.totalorder %s13, 3
    %p201 = pnand %p199, %p200
    %p202 = pneg %p201
    // Predicated region
    $region9: #{network_block_forward.3} parent=5 // pred_check
      _
    $region10: #{network_block_forward.3} parent=5 // pred_check_branch
      %204 = sbr.rel (%p201) target = $region12
    $region11: #{network_block_forward.3} parent=5 // pred_region
      %s205 = ssub.s32 %s13, 1
      // Predicated region
      $region13: #{network_block_forward.3} parent=11 // pred_check
        %p206 = pneg %p60
      $region14: #{network_block_forward.3} parent=11 // pred_check_branch
        %208 = sbr.rel (%p206) target = $region16
      $region15: #{network_block_forward.3} parent=11 // pred_region
        _
      $region16: #{network_block_forward.3} parent=11 // pred_fallthru
        _
      // Predicated region
      $region17: #{network_block_forward.3} parent=11 // pred_check
        %p209 = pneg %p81
      $region18: #{network_block_forward.3} parent=11 // pred_check_branch
        %211 = sbr.rel (%p209) target = $region20
      $region19: #{network_block_forward.3} parent=11 // pred_region
        _
      $region20: #{network_block_forward.3} parent=11 // pred_fallthru
        _
      // Predicated region
      $region21: #{network_block_forward.3} parent=11 // pred_check
        %p212 = pneg %p102
      $region22: #{network_block_forward.3} parent=11 // pred_check_branch
        %214 = sbr.rel (%p212) target = $region24
      $region23: #{network_block_forward.3} parent=11 // pred_region
        _
      $region24: #{network_block_forward.3} parent=11 // pred_fallthru
        _
      // Predicated region
      $region25: #{network_block_forward.3} parent=11 // pred_check
        %p215 = pneg %p123
      $region26: #{network_block_forward.3} parent=11 // pred_check_branch
        %217 = sbr.rel (%p215) target = $region28
      $region27: #{network_block_forward.3} parent=11 // pred_region
        _
      $region28: #{network_block_forward.3} parent=11 // pred_fallthru
        _
      // Predicated region
      $region29: #{network_block_forward.3} parent=11 // pred_check
        %p218 = pneg %p144
      $region30: #{network_block_forward.3} parent=11 // pred_check_branch
        %220 = sbr.rel (%p218) target = $region32
      $region31: #{network_block_forward.3} parent=11 // pred_region
        _
      $region32: #{network_block_forward.3} parent=11 // pred_fallthru
        _
      // Predicated region
      $region33: #{network_block_forward.3} parent=11 // pred_check
        %p221 = pneg %p165
      $region34: #{network_block_forward.3} parent=11 // pred_check_branch
        %223 = sbr.rel (%p221) target = $region36
      $region35: #{network_block_forward.3} parent=11 // pred_region
        _
      $region36: #{network_block_forward.3} parent=11 // pred_fallthru
        _
    $region12: #{network_block_forward.3} parent=5 // pred_fallthru
      _
    %p224 = scmp.lt.s32.totalorder %s13, 2
    // Predicated region
    $region37: #{network_block_forward.3} parent=5 // pred_check
      %p225 = pneg %p224
    $region38: #{network_block_forward.3} parent=5 // pred_check_branch
      %227 = sbr.rel (%p225) target = $region40
    $region39: #{network_block_forward.3} parent=5 // pred_region
      // Predicated region
      $region41: #{network_block_forward.3} parent=39 // pred_check
        %p228 = pneg %p33
      $region42: #{network_block_forward.3} parent=39 // pred_check_branch
        %230 = sbr.rel (%p228) target = $region44
      $region43: #{network_block_forward.3} parent=39 // pred_region
        %p231 = scmp.lt.s32.totalorder %s13, 1
        %s232 = scalar_select %p231, %s13, 1
        %s233 = smul.addr %s232, 8
        %s234 = smul.addr %s233, 4
        %s235 = scalar_lea.vmem %s0, %s234
      $region44: #{network_block_forward.3} parent=39 // pred_fallthru
        _
    $region40: #{network_block_forward.3} parent=5 // pred_fallthru
      _
    %p236 = scmp.le.s32.totalorder 1, %s13
    %p237 = scmp.lt.s32.totalorder %s13, 3
    %p238 = pnand %p236, %p237
    %p239 = pneg %p238
    // Predicated region
    $region45: #{network_block_forward.3} parent=5 // pred_check
      _
    $region46: #{network_block_forward.3} parent=5 // pred_check_branch
      %241 = sbr.rel (%p238) target = $region48
    $region47: #{network_block_forward.3} parent=5 // pred_region
      %s242 = ssub.s32 %s13, 1
      %p243 = scmp.lt.s32.totalorder %s18, 1
      %s244 = scalar_select %p243, %s18, 1
      %s245 = smul.addr %s244, 8
      %s246 = smul.addr %s245, 4
      %s247 = scalar_lea.vmem %s0, %s246
      %p248 = pneg %p39
      %p249 = pneg %p36
      %p250 = pneg %p60
      %p251 = pneg %p57
      %p252 = pneg %p81
      %p253 = pneg %p78
      %p254 = pneg %p102
      %p255 = pneg %p99
      %p256 = pneg %p123
      %p257 = pneg %p120
      %p258 = pneg %p144
      %p259 = pneg %p141
      %p260 = pneg %p165
      %p261 = pneg %p162
      %p262 = pneg %p191
      %p263 = pneg %p188
      %p264 = scmp.lt.s32.totalorder %s18, 1
      %s265 = scalar_select %p264, %s18, 1
      %s266 = smul.addr %s265, 8
      %s267 = smul.addr %s266, 4
      %s268 = scalar_lea.vmem %s7, %s267
      %p269 = scmp.lt.s32.totalorder %s18, 1
      %s270 = scalar_select %p269, %s18, 1
      %s271 = smul.addr %s270, 8
      %s272 = smul.addr %s271, 4
      %s273 = scalar_lea.vmem %s0, %s272
      %p274 = scmp.lt.s32.totalorder %s18, 1
      %s275 = scalar_select %p274, %s18, 1
      %s276 = smul.addr %s275, 8
      %s277 = smul.addr %s276, 4
      %s278 = scalar_lea.vmem %s7, %s277
      %280 = vst [vmem:[#allocation2] sm:$0xf] 0
      %281 = vst [vmem:[#allocation2 + $0x4] sm:$0xf] 0
      %282 = vst [vmem:[#allocation2 + $0x8] sm:$0xf] 0
      %vm283 = vcmask 1043459
      %vm284 = vsmask.f32 7950
      %vm285 = vmand %vm283, %vm284
      %v286 = vld [vmem:[#allocation2] sm:$0x8]
      %v287 = vsel %vm285, 0, %v286
      %288 = vst [vmem:[#allocation2] sm:$0x8] %v287
      %v289 = vld [vmem:[#allocation2 + $0xc] sm:$0x8]
      %v290 = vsel %vm285, 0, %v289
      %291 = vst [vmem:[#allocation2 + $0xc] sm:$0x8] %v290
      %v292 = vld [vmem:[#allocation2 + $0x18] sm:$0x8]
      %v293 = vsel %vm285, 0, %v292
      %294 = vst [vmem:[#allocation2 + $0x18] sm:$0x8] %v293
      %v295 = vld [vmem:[#allocation2 + $0x24] sm:$0x8]
      %v296 = vsel %vm285, 0, %v295
      %297 = vst [vmem:[#allocation2 + $0x24] sm:$0x8] %v296
      %v298 = vld [vmem:[#allocation2 + $0x30] sm:$0x8]
      %v299 = vsel %vm285, 0, %v298
      %300 = vst [vmem:[#allocation2 + $0x30] sm:$0x8] %v299
      %v301 = vld [vmem:[#allocation2 + $0x3c] sm:$0x8]
      %v302 = vsel %vm285, 0, %v301
      %303 = vst [vmem:[#allocation2 + $0x3c] sm:$0x8] %v302
      %v304 = vld [vmem:[#allocation2 + $0x48] sm:$0x8]
      %v305 = vsel %vm285, 0, %v304
      %306 = vst [vmem:[#allocation2 + $0x48] sm:$0x8] %v305
      %v307 = vld [vmem:[#allocation2 + $0x54] sm:$0x8]
      %v308 = vsel %vm285, 0, %v307
      %309 = vst [vmem:[#allocation2 + $0x54] sm:$0x8] %v308
      %v310 = vld [vmem:[#allocation2 + $0x60] sm:$0x8]
      %v311 = vsel %vm285, 0, %v310
      %312 = vst [vmem:[#allocation2 + $0x60] sm:$0x8] %v311
      %v313 = vld [vmem:[#allocation2 + $0x6c] sm:$0x8]
      %v314 = vsel %vm285, 0, %v313
      %315 = vst [vmem:[#allocation2 + $0x6c] sm:$0x8] %v314
      %s316 = scalar_lea.vmem [#allocation2], 108
      %317 = vst [vmem:[%s316] sm:$0xf] 0
      %318 = vst [vmem:[%s316 + $0x4] sm:$0xf] 0
      %319 = vst [vmem:[%s316 + $0x8] sm:$0xf] 0
      %vm320 = vcmask 1040384
      %vm321 = vsmask.f32 256
      %vm322 = vmand %vm320, %vm321
      %v323 = vld [vmem:[#allocation2 + $0x8] sm:$0x1]
      %v324 = vsel %vm322, 0, %v323
      %325 = vst [vmem:[#allocation2 + $0x8] sm:$0x1] %v324
      %v326 = vld [vmem:[#allocation2 + $0x14] sm:$0x1]
      %v327 = vsel %vm322, 0, %v326
      %328 = vst [vmem:[#allocation2 + $0x14] sm:$0x1] %v327
      %v329 = vld [vmem:[#allocation2 + $0x20] sm:$0x1]
      %v330 = vsel %vm322, 0, %v329
      %331 = vst [vmem:[#allocation2 + $0x20] sm:$0x1] %v330
      %v332 = vld [vmem:[#allocation2 + $0x2c] sm:$0x1]
      %v333 = vsel %vm322, 0, %v332
      %334 = vst [vmem:[#allocation2 + $0x2c] sm:$0x1] %v333
      %v335 = vld [vmem:[#allocation2 + $0x38] sm:$0x1]
      %v336 = vsel %vm322, 0, %v335
      %337 = vst [vmem:[#allocation2 + $0x38] sm:$0x1] %v336
      %v338 = vld [vmem:[#allocation2 + $0x44] sm:$0x1]
      %v339 = vsel %vm322, 0, %v338
      %340 = vst [vmem:[#allocation2 + $0x44] sm:$0x1] %v339
      %v341 = vld [vmem:[#allocation2 + $0x50] sm:$0x1]
      %v342 = vsel %vm322, 0, %v341
      %343 = vst [vmem:[#allocation2 + $0x50] sm:$0x1] %v342
      %v344 = vld [vmem:[#allocation2 + $0x5c] sm:$0x1]
      %v345 = vsel %vm322, 0, %v344
      %346 = vst [vmem:[#allocation2 + $0x5c] sm:$0x1] %v345
      %v347 = vld [vmem:[#allocation2 + $0x68] sm:$0x1]
      %v348 = vsel %vm322, 0, %v347
      %349 = vst [vmem:[#allocation2 + $0x68] sm:$0x1] %v348
      %v350 = vld [vmem:[#allocation2 + $0x74] sm:$0x1]
      %v351 = vsel %vm322, 0, %v350
      %352 = vst [vmem:[#allocation2 + $0x74] sm:$0x1] %v351
      %353 = vst [vmem:[#allocation3] sm:$0xf] 0
      %354 = vst [vmem:[#allocation3 + $0x4] sm:$0xf] 0
      %355 = vst [vmem:[#allocation3 + $0x8] sm:$0xf] 0
      %s356 = scalar_lea.vmem [#allocation3], 108
      %357 = vst [vmem:[%s356] sm:$0xf] 0
      %358 = vst [vmem:[%s356 + $0x4] sm:$0xf] 0
      %359 = vst [vmem:[%s356 + $0x8] sm:$0xf] 0
      %v360 = vld [vmem:[#allocation3] sm:$0x8]
      %v361 = vsel %vm285, 0, %v360
      %362 = vst [vmem:[#allocation3] sm:$0x8] %v361
      %v363 = vld [vmem:[#allocation3 + $0xc] sm:$0x8]
      %v364 = vsel %vm285, 0, %v363
      %365 = vst [vmem:[#allocation3 + $0xc] sm:$0x8] %v364
      %v366 = vld [vmem:[#allocation3 + $0x18] sm:$0x8]
      %v367 = vsel %vm285, 0, %v366
      %368 = vst [vmem:[#allocation3 + $0x18] sm:$0x8] %v367
      %v369 = vld [vmem:[#allocation3 + $0x24] sm:$0x8]
      %v370 = vsel %vm285, 0, %v369
      %371 = vst [vmem:[#allocation3 + $0x24] sm:$0x8] %v370
      %v372 = vld [vmem:[#allocation3 + $0x30] sm:$0x8]
      %v373 = vsel %vm285, 0, %v372
      %374 = vst [vmem:[#allocation3 + $0x30] sm:$0x8] %v373
      %v375 = vld [vmem:[#allocation3 + $0x3c] sm:$0x8]
      %v376 = vsel %vm285, 0, %v375
      %377 = vst [vmem:[#allocation3 + $0x3c] sm:$0x8] %v376
      %v378 = vld [vmem:[#allocation3 + $0x48] sm:$0x8]
      %v379 = vsel %vm285, 0, %v378
      %380 = vst [vmem:[#allocation3 + $0x48] sm:$0x8] %v379
      %v381 = vld [vmem:[#allocation3 + $0x54] sm:$0x8]
      %v382 = vsel %vm285, 0, %v381
      %383 = vst [vmem:[#allocation3 + $0x54] sm:$0x8] %v382
      %v384 = vld [vmem:[#allocation3 + $0x60] sm:$0x8]
      %v385 = vsel %vm285, 0, %v384
      %386 = vst [vmem:[#allocation3 + $0x60] sm:$0x8] %v385
      %v387 = vld [vmem:[#allocation3 + $0x6c] sm:$0x8]
      %v388 = vsel %vm285, 0, %v387
      %389 = vst [vmem:[#allocation3 + $0x6c] sm:$0x8] %v388
      %v390 = vld [vmem:[#allocation3 + $0x8] sm:$0x1]
      %v391 = vsel %vm322, 0, %v390
      %392 = vst [vmem:[#allocation3 + $0x8] sm:$0x1] %v391
      %v393 = vld [vmem:[#allocation3 + $0x14] sm:$0x1]
      %v394 = vsel %vm322, 0, %v393
      %395 = vst [vmem:[#allocation3 + $0x14] sm:$0x1] %v394
      %v396 = vld [vmem:[#allocation3 + $0x20] sm:$0x1]
      %v397 = vsel %vm322, 0, %v396
      %398 = vst [vmem:[#allocation3 + $0x20] sm:$0x1] %v397
      %v399 = vld [vmem:[#allocation3 + $0x2c] sm:$0x1]
      %v400 = vsel %vm322, 0, %v399
      %401 = vst [vmem:[#allocation3 + $0x2c] sm:$0x1] %v400
      %v402 = vld [vmem:[#allocation3 + $0x38] sm:$0x1]
      %v403 = vsel %vm322, 0, %v402
      %404 = vst [vmem:[#allocation3 + $0x38] sm:$0x1] %v403
      %v405 = vld [vmem:[#allocation3 + $0x44] sm:$0x1]
      %v406 = vsel %vm322, 0, %v405
      %407 = vst [vmem:[#allocation3 + $0x44] sm:$0x1] %v406
      %v408 = vld [vmem:[#allocation3 + $0x50] sm:$0x1]
      %v409 = vsel %vm322, 0, %v408
      %410 = vst [vmem:[#allocation3 + $0x50] sm:$0x1] %v409
      %v411 = vld [vmem:[#allocation3 + $0x5c] sm:$0x1]
      %v412 = vsel %vm322, 0, %v411
      %413 = vst [vmem:[#allocation3 + $0x5c] sm:$0x1] %v412
      %v414 = vld [vmem:[#allocation3 + $0x68] sm:$0x1]
      %v415 = vsel %vm322, 0, %v414
      %416 = vst [vmem:[#allocation3 + $0x68] sm:$0x1] %v415
      %v417 = vld [vmem:[#allocation3 + $0x74] sm:$0x1]
      %v418 = vsel %vm322, 0, %v417
      %419 = vst [vmem:[#allocation3 + $0x74] sm:$0x1] %v418
      %v420 = vld [vmem:[%s273] sm:$0xf]
      %v421 = vld [vmem:[%s273 + $0x4] sm:$0xf]
      %v422 = vld [vmem:[%s273 + $0x8] sm:$0xf]
      %v423 = vld [vmem:[%s273 + $0xc] sm:$0xf]
      %v424 = vld [vmem:[%s273 + $0x10] sm:$0xf]
      %v425 = vld [vmem:[%s273 + $0x14] sm:$0xf]
      %v426 = vld [vmem:[%s273 + $0x18] sm:$0xf]
      %v427 = vld [vmem:[%s273 + $0x1c] sm:$0xf]
      %v428 = vunpack.c.l.bf16 %v420
      %v429 = vunpack.c.l.bf16 %v421
      %v430 = vunpack.c.l.bf16 %v422
      %v431 = vunpack.c.l.bf16 %v423
      %v432 = vunpack.c.l.bf16 %v424
      %v433 = vunpack.c.l.bf16 %v425
      %v434 = vunpack.c.l.bf16 %v426
      %v435 = vunpack.c.l.bf16 %v427
      %v436 = vld [vmem:[%s1] sm:$0x1]
      %v438 = vlaneseq
      %v439 = vshrl.u32 %v438, 7
      %v440 = vsub.s32 0, %v439
      %v441 = vrot.slane %v436, %v440
      %v443 = vmul.f32 %v428, %v441
      %v444 = vmul.f32 %v429, %v441
      %v445 = vmul.f32 %v430, %v441
      %v446 = vmul.f32 %v431, %v441
      %v447 = vmul.f32 %v432, %v441
      %v448 = vmul.f32 %v433, %v441
      %v449 = vmul.f32 %v434, %v441
      %v450 = vmul.f32 %v435, %v441
      %v451 = vld [vmem:[%s2] sm:$0x1]
      %v453 = vlaneseq
      %v454 = vshrl.u32 %v453, 7
      %v455 = vsub.s32 0, %v454
      %v456 = vrot.slane %v451, %v455
      %v458 = vadd.f32 %v443, %v456
      %v459 = vadd.f32 %v444, %v456
      %v460 = vadd.f32 %v445, %v456
      %v461 = vadd.f32 %v446, %v456
      %v462 = vadd.f32 %v447, %v456
      %v463 = vadd.f32 %v448, %v456
      %v464 = vadd.f32 %v449, %v456
      %v465 = vadd.f32 %v450, %v456
      %v466 = vmax.f32 %v458, 0.0
      %v467 = vmax.f32 %v459, 0.0
      %v468 = vmax.f32 %v460, 0.0
      %v469 = vmax.f32 %v461, 0.0
      %v470 = vmax.f32 %v462, 0.0
      %v471 = vmax.f32 %v463, 0.0
      %v472 = vmax.f32 %v464, 0.0
      %v473 = vmax.f32 %v465, 0.0
      %v474 = vpack.c.bf16 %v466, %v466
      %v475 = vpack.c.bf16 %v467, %v467
      %v476 = vpack.c.bf16 %v468, %v468
      %v477 = vpack.c.bf16 %v469, %v469
      %v478 = vpack.c.bf16 %v470, %v470
      %v479 = vpack.c.bf16 %v471, %v471
      %v480 = vpack.c.bf16 %v472, %v472
      %v481 = vpack.c.bf16 %v473, %v473
      %s482 = scalar_lea.vmem [#allocation2], 12
      %483 = vst [vmem:[%s482 + $0x4] sm:$0xf] %v474
      %484 = vst [vmem:[%s482 + $0x10] sm:$0xf] %v475
      %485 = vst [vmem:[%s482 + $0x1c] sm:$0xf] %v476
      %486 = vst [vmem:[%s482 + $0x28] sm:$0xf] %v477
      %487 = vst [vmem:[%s482 + $0x34] sm:$0xf] %v478
      %488 = vst [vmem:[%s482 + $0x40] sm:$0xf] %v479
      %489 = vst [vmem:[%s482 + $0x4c] sm:$0xf] %v480
      %490 = vst [vmem:[%s482 + $0x58] sm:$0xf] %v481
      %v491 = vld [vmem:[#allocation2] sm:$0x8]
      %v492 = vld [vmem:[#allocation2 + $0x4] sm:$0xf]
      %v493 = vld [vmem:[#allocation2 + $0xc] sm:$0x8]
      %v494 = vld [vmem:[#allocation2 + $0x10] sm:$0xf]
      %v495 = vld [vmem:[#allocation2 + $0x18] sm:$0x8]
      %v496 = vld [vmem:[#allocation2 + $0x1c] sm:$0xf]
      %v497 = vld [vmem:[#allocation2 + $0x24] sm:$0x8]
      %v498 = vld [vmem:[#allocation2 + $0x28] sm:$0xf]
      %v499 = vld [vmem:[#allocation2 + $0x30] sm:$0x8]
      %v500 = vld [vmem:[#allocation2 + $0x34] sm:$0xf]
      %v501 = vld [vmem:[#allocation2 + $0x3c] sm:$0x8]
      %v502 = vld [vmem:[#allocation2 + $0x40] sm:$0xf]
      %v503 = vld [vmem:[#allocation2 + $0x48] sm:$0x8]
      %v504 = vld [vmem:[#allocation2 + $0x4c] sm:$0xf]
      %v505 = vld [vmem:[#allocation2 + $0x54] sm:$0x8]
      %v506 = vld [vmem:[#allocation2 + $0x58] sm:$0xf]
      %vm507 = vsmask.f32 4368
      %vm508 = vmor %vm321, %vm507
      %v510 = vshrl.u32 %v491, 16
      %v512 = vrot.slane %v510, 7
      %v513 = vrot.slane %v512, 4
      %v515 = vshrl.u32 %v492, 16
      %v517 = vrot.slane %v515, 7
      %v518 = vshll.u32 %v492, 16
      %v520 = vor.u32 %v517, %v518
      %v521 = vsel %vm508, %v513, %v520
      %v523 = vshrl.u32 %v493, 16
      %v525 = vrot.slane %v523, 7
      %v526 = vrot.slane %v525, 4
      %v528 = vshrl.u32 %v494, 16
      %v530 = vrot.slane %v528, 7
      %v531 = vshll.u32 %v494, 16
      %v533 = vor.u32 %v530, %v531
      %v534 = vsel %vm508, %v526, %v533
      %v536 = vshrl.u32 %v495, 16
      %v538 = vrot.slane %v536, 7
      %v539 = vrot.slane %v538, 4
      %v541 = vshrl.u32 %v496, 16
      %v543 = vrot.slane %v541, 7
      %v544 = vshll.u32 %v496, 16
      %v546 = vor.u32 %v543, %v544
      %v547 = vsel %vm508, %v539, %v546
      %v549 = vshrl.u32 %v497, 16
      %v551 = vrot.slane %v549, 7
      %v552 = vrot.slane %v551, 4
      %v554 = vshrl.u32 %v498, 16
      %v556 = vrot.slane %v554, 7
      %v557 = vshll.u32 %v498, 16
      %v559 = vor.u32 %v556, %v557
      %v560 = vsel %vm508, %v552, %v559
      %v562 = vshrl.u32 %v499, 16
      %v564 = vrot.slane %v562, 7
      %v565 = vrot.slane %v564, 4
      %v567 = vshrl.u32 %v500, 16
      %v569 = vrot.slane %v567, 7
      %v570 = vshll.u32 %v500, 16
      %v572 = vor.u32 %v569, %v570
      %v573 = vsel %vm508, %v565, %v572
      %v575 = vshrl.u32 %v501, 16
      %v577 = vrot.slane %v575, 7
      %v578 = vrot.slane %v577, 4
      %v580 = vshrl.u32 %v502, 16
      %v582 = vrot.slane %v580, 7
      %v583 = vshll.u32 %v502, 16
      %v585 = vor.u32 %v582, %v583
      %v586 = vsel %vm508, %v578, %v585
      %v588 = vshrl.u32 %v503, 16
      %v590 = vrot.slane %v588, 7
      %v591 = vrot.slane %v590, 4
      %v593 = vshrl.u32 %v504, 16
      %v595 = vrot.slane %v593, 7
      %v596 = vshll.u32 %v504, 16
      %v598 = vor.u32 %v595, %v596
      %v599 = vsel %vm508, %v591, %v598
      %v601 = vshrl.u32 %v505, 16
      %v603 = vrot.slane %v601, 7
      %v604 = vrot.slane %v603, 4
      %v606 = vshrl.u32 %v506, 16
      %v608 = vrot.slane %v606, 7
      %v609 = vshll.u32 %v506, 16
      %v611 = vor.u32 %v608, %v609
      %v612 = vsel %vm508, %v604, %v611
      %v613 = vld [vmem:[%s482] sm:$0x8]
      %v614 = vld [vmem:[%s482 + $0x4] sm:$0xf]
      %v615 = vld [vmem:[%s482 + $0xc] sm:$0x8]
      %v616 = vld [vmem:[%s482 + $0x10] sm:$0xf]
      %v617 = vld [vmem:[%s482 + $0x18] sm:$0x8]
      %v618 = vld [vmem:[%s482 + $0x1c] sm:$0xf]
      %v619 = vld [vmem:[%s482 + $0x24] sm:$0x8]
      %v620 = vld [vmem:[%s482 + $0x28] sm:$0xf]
      %v621 = vld [vmem:[%s482 + $0x30] sm:$0x8]
      %v622 = vld [vmem:[%s482 + $0x34] sm:$0xf]
      %v623 = vld [vmem:[%s482 + $0x3c] sm:$0x8]
      %v624 = vld [vmem:[%s482 + $0x40] sm:$0xf]
      %v625 = vld [vmem:[%s482 + $0x48] sm:$0x8]
      %v626 = vld [vmem:[%s482 + $0x4c] sm:$0xf]
      %v627 = vld [vmem:[%s482 + $0x54] sm:$0x8]
      %v628 = vld [vmem:[%s482 + $0x58] sm:$0xf]
      %v630 = vshrl.u32 %v613, 16
      %v632 = vrot.slane %v630, 7
      %v633 = vrot.slane %v632, 4
      %v635 = vshrl.u32 %v614, 16
      %v637 = vrot.slane %v635, 7
      %v638 = vshll.u32 %v614, 16
      %v640 = vor.u32 %v637, %v638
      %v641 = vsel %vm508, %v633, %v640
      %v643 = vshrl.u32 %v615, 16
      %v645 = vrot.slane %v643, 7
      %v646 = vrot.slane %v645, 4
      %v648 = vshrl.u32 %v616, 16
      %v650 = vrot.slane %v648, 7
      %v651 = vshll.u32 %v616, 16
      %v653 = vor.u32 %v650, %v651
      %v654 = vsel %vm508, %v646, %v653
      %v656 = vshrl.u32 %v617, 16
      %v658 = vrot.slane %v656, 7
      %v659 = vrot.slane %v658, 4
      %v661 = vshrl.u32 %v618, 16
      %v663 = vrot.slane %v661, 7
      %v664 = vshll.u32 %v618, 16
      %v666 = vor.u32 %v663, %v664
      %v667 = vsel %vm508, %v659, %v666
      %v669 = vshrl.u32 %v619, 16
      %v671 = vrot.slane %v669, 7
      %v672 = vrot.slane %v671, 4
      %v674 = vshrl.u32 %v620, 16
      %v676 = vrot.slane %v674, 7
      %v677 = vshll.u32 %v620, 16
      %v679 = vor.u32 %v676, %v677
      %v680 = vsel %vm508, %v672, %v679
      %v682 = vshrl.u32 %v621, 16
      %v684 = vrot.slane %v682, 7
      %v685 = vrot.slane %v684, 4
      %v687 = vshrl.u32 %v622, 16
      %v689 = vrot.slane %v687, 7
      %v690 = vshll.u32 %v622, 16
      %v692 = vor.u32 %v689, %v690
      %v693 = vsel %vm508, %v685, %v692
      %v695 = vshrl.u32 %v623, 16
      %v697 = vrot.slane %v695, 7
      %v698 = vrot.slane %v697, 4
      %v700 = vshrl.u32 %v624, 16
      %v702 = vrot.slane %v700, 7
      %v703 = vshll.u32 %v624, 16
      %v705 = vor.u32 %v702, %v703
      %v706 = vsel %vm508, %v698, %v705
      %v708 = vshrl.u32 %v625, 16
      %v710 = vrot.slane %v708, 7
      %v711 = vrot.slane %v710, 4
      %v713 = vshrl.u32 %v626, 16
      %v715 = vrot.slane %v713, 7
      %v716 = vshll.u32 %v626, 16
      %v718 = vor.u32 %v715, %v716
      %v719 = vsel %vm508, %v711, %v718
      %v721 = vshrl.u32 %v627, 16
      %v723 = vrot.slane %v721, 7
      %v724 = vrot.slane %v723, 4
      %v726 = vshrl.u32 %v628, 16
      %v728 = vrot.slane %v726, 7
      %v729 = vshll.u32 %v628, 16
      %v731 = vor.u32 %v728, %v729
      %v732 = vsel %vm508, %v724, %v731
      %s733 = scalar_lea.vmem [#allocation2], 24
      %v734 = vld [vmem:[%s733] sm:$0x8]
      %v735 = vld [vmem:[%s733 + $0x4] sm:$0xf]
      %v736 = vld [vmem:[%s733 + $0xc] sm:$0x8]
      %v737 = vld [vmem:[%s733 + $0x10] sm:$0xf]
      %v738 = vld [vmem:[%s733 + $0x18] sm:$0x8]
      %v739 = vld [vmem:[%s733 + $0x1c] sm:$0xf]
      %v740 = vld [vmem:[%s733 + $0x24] sm:$0x8]
      %v741 = vld [vmem:[%s733 + $0x28] sm:$0xf]
      %v742 = vld [vmem:[%s733 + $0x30] sm:$0x8]
      %v743 = vld [vmem:[%s733 + $0x34] sm:$0xf]
      %v744 = vld [vmem:[%s733 + $0x3c] sm:$0x8]
      %v745 = vld [vmem:[%s733 + $0x40] sm:$0xf]
      %v746 = vld [vmem:[%s733 + $0x48] sm:$0x8]
      %v747 = vld [vmem:[%s733 + $0x4c] sm:$0xf]
      %v748 = vld [vmem:[%s733 + $0x54] sm:$0x8]
      %v749 = vld [vmem:[%s733 + $0x58] sm:$0xf]
      %v751 = vshrl.u32 %v734, 16
      %v753 = vrot.slane %v751, 7
      %v754 = vrot.slane %v753, 4
      %v756 = vshrl.u32 %v735, 16
      %v758 = vrot.slane %v756, 7
      %v759 = vshll.u32 %v735, 16
      %v761 = vor.u32 %v758, %v759
      %v762 = vsel %vm508, %v754, %v761
      %v764 = vshrl.u32 %v736, 16
      %v766 = vrot.slane %v764, 7
      %v767 = vrot.slane %v766, 4
      %v769 = vshrl.u32 %v737, 16
      %v771 = vrot.slane %v769, 7
      %v772 = vshll.u32 %v737, 16
      %v774 = vor.u32 %v771, %v772
      %v775 = vsel %vm508, %v767, %v774
      %v777 = vshrl.u32 %v738, 16
      %v779 = vrot.slane %v777, 7
      %v780 = vrot.slane %v779, 4
      %v782 = vshrl.u32 %v739, 16
      %v784 = vrot.slane %v782, 7
      %v785 = vshll.u32 %v739, 16
      %v787 = vor.u32 %v784, %v785
      %v788 = vsel %vm508, %v780, %v787
      %v790 = vshrl.u32 %v740, 16
      %v792 = vrot.slane %v790, 7
      %v793 = vrot.slane %v792, 4
      %v795 = vshrl.u32 %v741, 16
      %v797 = vrot.slane %v795, 7
      %v798 = vshll.u32 %v741, 16
      %v800 = vor.u32 %v797, %v798
      %v801 = vsel %vm508, %v793, %v800
      %v803 = vshrl.u32 %v742, 16
      %v805 = vrot.slane %v803, 7
      %v806 = vrot.slane %v805, 4
      %v808 = vshrl.u32 %v743, 16
      %v810 = vrot.slane %v808, 7
      %v811 = vshll.u32 %v743, 16
      %v813 = vor.u32 %v810, %v811
      %v814 = vsel %vm508, %v806, %v813
      %v816 = vshrl.u32 %v744, 16
      %v818 = vrot.slane %v816, 7
      %v819 = vrot.slane %v818, 4
      %v821 = vshrl.u32 %v745, 16
      %v823 = vrot.slane %v821, 7
      %v824 = vshll.u32 %v745, 16
      %v826 = vor.u32 %v823, %v824
      %v827 = vsel %vm508, %v819, %v826
      %v829 = vshrl.u32 %v746, 16
      %v831 = vrot.slane %v829, 7
      %v832 = vrot.slane %v831, 4
      %v834 = vshrl.u32 %v747, 16
      %v836 = vrot.slane %v834, 7
      %v837 = vshll.u32 %v747, 16
      %v839 = vor.u32 %v836, %v837
      %v840 = vsel %vm508, %v832, %v839
      %v842 = vshrl.u32 %v748, 16
      %v844 = vrot.slane %v842, 7
      %v845 = vrot.slane %v844, 4
      %v847 = vshrl.u32 %v749, 16
      %v849 = vrot.slane %v847, 7
      %v850 = vshll.u32 %v749, 16
      %v852 = vor.u32 %v849, %v850
      %v853 = vsel %vm508, %v845, %v852
      %v854 = vunpack.c.l.b16 %v521
      %v855 = vunpack.c.l.b16 %v534
      %v856 = vunpack.c.l.b16 %v547
      %v857 = vunpack.c.l.b16 %v560
      %v858 = vunpack.c.l.b16 %v573
      %v859 = vunpack.c.l.b16 %v586
      %v860 = vunpack.c.l.b16 %v599
      %v861 = vunpack.c.l.b16 %v612
      %v862 = vpack.c.b16 %v855, %v854
      %v863 = vpack.c.b16 %v857, %v856
      %v864 = vpack.c.b16 %v859, %v858
      %v865 = vpack.c.b16 %v861, %v860
      %v870 = vunpack.c.l.b16 %v641
      %v871 = vunpack.c.l.b16 %v654
      %v872 = vunpack.c.l.b16 %v667
      %v873 = vunpack.c.l.b16 %v680
      %v874 = vunpack.c.l.b16 %v693
      %v875 = vunpack.c.l.b16 %v706
      %v876 = vunpack.c.l.b16 %v719
      %v877 = vunpack.c.l.b16 %v732
      %v878 = vpack.c.b16 %v871, %v870
      %v879 = vpack.c.b16 %v873, %v872
      %v880 = vpack.c.b16 %v875, %v874
      %v881 = vpack.c.b16 %v877, %v876
      %v886 = vunpack.c.l.b16 %v762
      %v887 = vunpack.c.l.b16 %v775
      %v888 = vunpack.c.l.b16 %v788
      %v889 = vunpack.c.l.b16 %v801
      %v890 = vunpack.c.l.b16 %v814
      %v891 = vunpack.c.l.b16 %v827
      %v892 = vunpack.c.l.b16 %v840
      %v893 = vunpack.c.l.b16 %v853
      %v894 = vpack.c.b16 %v887, %v886
      %v895 = vpack.c.b16 %v889, %v888
      %v896 = vpack.c.b16 %v891, %v890
      %v897 = vpack.c.b16 %v893, %v892
      %v902 = vld [vmem:[%s5] sm:$0xf]
      %v903 = vld [vmem:[%s5 + $0x4] sm:$0xf]
      %v904 = vld [vmem:[%s5 + $0x8] sm:$0xf]
      %v905 = vld [vmem:[%s5 + $0xc] sm:$0xf]
      %v906 = vld [vmem:[%s5 + $0x10] sm:$0xf]
      %v907 = vld [vmem:[%s5 + $0x14] sm:$0xf]
      %v908 = vld [vmem:[%s5 + $0x18] sm:$0xf]
      %v909 = vld [vmem:[%s5 + $0x1c] sm:$0xf]
      %v910 = vld [vmem:[%s5 + $0x20] sm:$0xf]
      %v911 = vld [vmem:[%s5 + $0x24] sm:$0xf]
      %v912 = vld [vmem:[%s5 + $0x28] sm:$0xf]
      %v913 = vld [vmem:[%s5 + $0x2c] sm:$0xf]
      %v914 = vld [vmem:[%s5 + $0x30] sm:$0xf]
      %v915 = vld [vmem:[%s5 + $0x34] sm:$0xf]
      %v916 = vld [vmem:[%s5 + $0x38] sm:$0xf]
      %v917 = vld [vmem:[%s5 + $0x3c] sm:$0xf]
      %v918 = vld [vmem:[%s5 + $0x40] sm:$0xf]
      %v919 = vld [vmem:[%s5 + $0x44] sm:$0xf]
      %v920 = vld [vmem:[%s5 + $0x48] sm:$0xf]
      %v921 = vld [vmem:[%s5 + $0x4c] sm:$0xf]
      %v922 = vld [vmem:[%s5 + $0x50] sm:$0xf]
      %v923 = vld [vmem:[%s5 + $0x54] sm:$0xf]
      %v924 = vld [vmem:[%s5 + $0x58] sm:$0xf]
      %v925 = vld [vmem:[%s5 + $0x5c] sm:$0xf]
      %v926 = vld [vmem:[%s5 + $0x60] sm:$0xf]
      %v927 = vld [vmem:[%s5 + $0x64] sm:$0xf]
      %v928 = vld [vmem:[%s5 + $0x68] sm:$0xf]
      %v929 = vld [vmem:[%s5 + $0x6c] sm:$0xf]
      %v930 = vld [vmem:[%s5 + $0x70] sm:$0xf]
      %v931 = vld [vmem:[%s5 + $0x74] sm:$0xf]
      %v932 = vld [vmem:[%s5 + $0x78] sm:$0xf]
      %v933 = vld [vmem:[%s5 + $0x7c] sm:$0xf]
      %v934 = vld [vmem:[%s5 + $0x80] sm:$0xf]
      %v935 = vld [vmem:[%s5 + $0x84] sm:$0xf]
      %v936 = vld [vmem:[%s5 + $0x88] sm:$0xf]
      %v937 = vld [vmem:[%s5 + $0x8c] sm:$0xf]
      %v938 = vld [vmem:[%s5 + $0x90] sm:$0xf]
      %v939 = vld [vmem:[%s5 + $0x94] sm:$0xf]
      %v940 = vld [vmem:[%s5 + $0x98] sm:$0xf]
      %v941 = vld [vmem:[%s5 + $0x9c] sm:$0xf]
      %v942 = vld [vmem:[%s5 + $0xa0] sm:$0xf]
      %v943 = vld [vmem:[%s5 + $0xa4] sm:$0xf]
      %v944 = vld [vmem:[%s5 + $0xa8] sm:$0xf]
      %v945 = vld [vmem:[%s5 + $0xac] sm:$0xf]
      %v946 = vld [vmem:[%s5 + $0xb0] sm:$0xf]
      %v947 = vld [vmem:[%s5 + $0xb4] sm:$0xf]
      %v948 = vld [vmem:[%s5 + $0xb8] sm:$0xf]
      %v949 = vld [vmem:[%s5 + $0xbc] sm:$0xf]
      %v958 = vunpack.c.l.b16 %v492
      %v959 = vunpack.c.l.b16 %v494
      %v960 = vunpack.c.l.b16 %v496
      %v961 = vunpack.c.l.b16 %v498
      %v962 = vunpack.c.l.b16 %v500
      %v963 = vunpack.c.l.b16 %v502
      %v964 = vunpack.c.l.b16 %v504
      %v965 = vunpack.c.l.b16 %v506
      %v966 = vpack.c.b16 %v959, %v958
      %v967 = vpack.c.b16 %v961, %v960
      %v968 = vpack.c.b16 %v963, %v962
      %v969 = vpack.c.b16 %v965, %v964
      %v982 = vunpack.c.l.b16 %v614
      %v983 = vunpack.c.l.b16 %v616
      %v984 = vunpack.c.l.b16 %v618
      %v985 = vunpack.c.l.b16 %v620
      %v986 = vunpack.c.l.b16 %v622
      %v987 = vunpack.c.l.b16 %v624
      %v988 = vunpack.c.l.b16 %v626
      %v989 = vunpack.c.l.b16 %v628
      %v990 = vpack.c.b16 %v983, %v982
      %v991 = vpack.c.b16 %v985, %v984
      %v992 = vpack.c.b16 %v987, %v986
      %v993 = vpack.c.b16 %v989, %v988
      %v1006 = vunpack.c.l.b16 %v735
      %v1007 = vunpack.c.l.b16 %v737
      %v1008 = vunpack.c.l.b16 %v739
      %v1009 = vunpack.c.l.b16 %v741
      %v1010 = vunpack.c.l.b16 %v743
      %v1011 = vunpack.c.l.b16 %v745
      %v1012 = vunpack.c.l.b16 %v747
      %v1013 = vunpack.c.l.b16 %v749
      %v1014 = vpack.c.b16 %v1007, %v1006
      %v1015 = vpack.c.b16 %v1009, %v1008
      %v1016 = vpack.c.b16 %v1011, %v1010
      %v1017 = vpack.c.b16 %v1013, %v1012
      %s1022 = scalar_lea.vmem %s5, 192
      %v1023 = vld [vmem:[%s1022] sm:$0xf]
      %v1024 = vld [vmem:[%s1022 + $0x4] sm:$0xf]
      %v1025 = vld [vmem:[%s1022 + $0x8] sm:$0xf]
      %v1026 = vld [vmem:[%s1022 + $0xc] sm:$0xf]
      %v1027 = vld [vmem:[%s1022 + $0x10] sm:$0xf]
      %v1028 = vld [vmem:[%s1022 + $0x14] sm:$0xf]
      %v1029 = vld [vmem:[%s1022 + $0x18] sm:$0xf]
      %v1030 = vld [vmem:[%s1022 + $0x1c] sm:$0xf]
      %v1031 = vld [vmem:[%s1022 + $0x20] sm:$0xf]
      %v1032 = vld [vmem:[%s1022 + $0x24] sm:$0xf]
      %v1033 = vld [vmem:[%s1022 + $0x28] sm:$0xf]
      %v1034 = vld [vmem:[%s1022 + $0x2c] sm:$0xf]
      %v1035 = vld [vmem:[%s1022 + $0x30] sm:$0xf]
      %v1036 = vld [vmem:[%s1022 + $0x34] sm:$0xf]
      %v1037 = vld [vmem:[%s1022 + $0x38] sm:$0xf]
      %v1038 = vld [vmem:[%s1022 + $0x3c] sm:$0xf]
      %v1039 = vld [vmem:[%s1022 + $0x40] sm:$0xf]
      %v1040 = vld [vmem:[%s1022 + $0x44] sm:$0xf]
      %v1041 = vld [vmem:[%s1022 + $0x48] sm:$0xf]
      %v1042 = vld [vmem:[%s1022 + $0x4c] sm:$0xf]
      %v1043 = vld [vmem:[%s1022 + $0x50] sm:$0xf]
      %v1044 = vld [vmem:[%s1022 + $0x54] sm:$0xf]
      %v1045 = vld [vmem:[%s1022 + $0x58] sm:$0xf]
      %v1046 = vld [vmem:[%s1022 + $0x5c] sm:$0xf]
      %v1047 = vld [vmem:[%s1022 + $0x60] sm:$0xf]
      %v1048 = vld [vmem:[%s1022 + $0x64] sm:$0xf]
      %v1049 = vld [vmem:[%s1022 + $0x68] sm:$0xf]
      %v1050 = vld [vmem:[%s1022 + $0x6c] sm:$0xf]
      %v1051 = vld [vmem:[%s1022 + $0x70] sm:$0xf]
      %v1052 = vld [vmem:[%s1022 + $0x74] sm:$0xf]
      %v1053 = vld [vmem:[%s1022 + $0x78] sm:$0xf]
      %v1054 = vld [vmem:[%s1022 + $0x7c] sm:$0xf]
      %v1055 = vld [vmem:[%s1022 + $0x80] sm:$0xf]
      %v1056 = vld [vmem:[%s1022 + $0x84] sm:$0xf]
      %v1057 = vld [vmem:[%s1022 + $0x88] sm:$0xf]
      %v1058 = vld [vmem:[%s1022 + $0x8c] sm:$0xf]
      %v1059 = vld [vmem:[%s1022 + $0x90] sm:$0xf]
      %v1060 = vld [vmem:[%s1022 + $0x94] sm:$0xf]
      %v1061 = vld [vmem:[%s1022 + $0x98] sm:$0xf]
      %v1062 = vld [vmem:[%s1022 + $0x9c] sm:$0xf]
      %v1063 = vld [vmem:[%s1022 + $0xa0] sm:$0xf]
      %v1064 = vld [vmem:[%s1022 + $0xa4] sm:$0xf]
      %v1065 = vld [vmem:[%s1022 + $0xa8] sm:$0xf]
      %v1066 = vld [vmem:[%s1022 + $0xac] sm:$0xf]
      %v1067 = vld [vmem:[%s1022 + $0xb0] sm:$0xf]
      %v1068 = vld [vmem:[%s1022 + $0xb4] sm:$0xf]
      %v1069 = vld [vmem:[%s1022 + $0xb8] sm:$0xf]
      %v1070 = vld [vmem:[%s1022 + $0xbc] sm:$0xf]
      %v1119 = vunpack.c.l.b16 %v1023
      %v1120 = vunpack.c.l.b16 %v1024
      %v1121 = vunpack.c.l.b16 %v1025
      %v1122 = vunpack.c.l.b16 %v1026
      %v1123 = vunpack.c.l.b16 %v1027
      %v1124 = vunpack.c.l.b16 %v1028
      %v1125 = vunpack.c.l.b16 %v1029
      %v1126 = vunpack.c.l.b16 %v1030
      %v1127 = vunpack.c.l.b16 %v1031
      %v1128 = vunpack.c.l.b16 %v1032
      %v1129 = vunpack.c.l.b16 %v1033
      %v1130 = vunpack.c.l.b16 %v1034
      %v1131 = vunpack.c.l.b16 %v1035
      %v1132 = vunpack.c.l.b16 %v1036
      %v1133 = vunpack.c.l.b16 %v1037
      %v1134 = vunpack.c.l.b16 %v1038
      %v1135 = vunpack.c.l.b16 %v1039
      %v1136 = vunpack.c.l.b16 %v1040
      %v1137 = vunpack.c.l.b16 %v1041
      %v1138 = vunpack.c.l.b16 %v1042
      %v1139 = vunpack.c.l.b16 %v1043
      %v1140 = vunpack.c.l.b16 %v1044
      %v1141 = vunpack.c.l.b16 %v1045
      %v1142 = vunpack.c.l.b16 %v1046
      %v1143 = vunpack.c.l.b16 %v1047
      %v1144 = vunpack.c.l.b16 %v1048
      %v1145 = vunpack.c.l.b16 %v1049
      %v1146 = vunpack.c.l.b16 %v1050
      %v1147 = vunpack.c.l.b16 %v1051
      %v1148 = vunpack.c.l.b16 %v1052
      %v1149 = vunpack.c.l.b16 %v1053
      %v1150 = vunpack.c.l.b16 %v1054
      %v1151 = vunpack.c.l.b16 %v1055
      %v1152 = vunpack.c.l.b16 %v1056
      %v1153 = vunpack.c.l.b16 %v1057
      %v1154 = vunpack.c.l.b16 %v1058
      %v1155 = vunpack.c.l.b16 %v1059
      %v1156 = vunpack.c.l.b16 %v1060
      %v1157 = vunpack.c.l.b16 %v1061
      %v1158 = vunpack.c.l.b16 %v1062
      %v1159 = vunpack.c.l.b16 %v1063
      %v1160 = vunpack.c.l.b16 %v1064
      %v1161 = vunpack.c.l.b16 %v1065
      %v1162 = vunpack.c.l.b16 %v1066
      %v1163 = vunpack.c.l.b16 %v1067
      %v1164 = vunpack.c.l.b16 %v1068
      %v1165 = vunpack.c.l.b16 %v1069
      %v1166 = vunpack.c.l.b16 %v1070
      %v1167 = vpack.c.b16 %v1120, %v1119
      %v1168 = vpack.c.b16 %v1122, %v1121
      %v1169 = vpack.c.b16 %v1124, %v1123
      %v1170 = vpack.c.b16 %v1126, %v1125
      %v1171 = vpack.c.b16 %v1128, %v1127
      %v1172 = vpack.c.b16 %v1130, %v1129
      %v1173 = vpack.c.b16 %v1132, %v1131
      %v1174 = vpack.c.b16 %v1134, %v1133
      %v1175 = vpack.c.b16 %v1136, %v1135
      %v1176 = vpack.c.b16 %v1138, %v1137
      %v1177 = vpack.c.b16 %v1140, %v1139
      %v1178 = vpack.c.b16 %v1142, %v1141
      %v1179 = vpack.c.b16 %v1144, %v1143
      %v1180 = vpack.c.b16 %v1146, %v1145
      %v1181 = vpack.c.b16 %v1148, %v1147
      %v1182 = vpack.c.b16 %v1150, %v1149
      %v1183 = vpack.c.b16 %v1152, %v1151
      %v1184 = vpack.c.b16 %v1154, %v1153
      %v1185 = vpack.c.b16 %v1156, %v1155
      %v1186 = vpack.c.b16 %v1158, %v1157
      %v1187 = vpack.c.b16 %v1160, %v1159
      %v1188 = vpack.c.b16 %v1162, %v1161
      %v1189 = vpack.c.b16 %v1164, %v1163
      %v1190 = vpack.c.b16 %v1166, %v1165
      %1215 = vmatprep.subr.bf16.mxu0 0
      %1216 = vmatpush1.bf16.msra.mxu0 %v1167
      %1217 = vmatprep.subr.bf16.mxu0 0
      %1218 = vmatpush1.bf16.msra.mxu0 %v1168
      %1219 = vmatprep.subr.bf16.mxu0 0
      %1220 = vmatpush1.bf16.msra.mxu0 %v1169
      %1221 = vmatprep.subr.bf16.mxu0 0
      %1222 = vmatpush1.bf16.msra.mxu0 %v1170
      %1223 = vmatprep.subr.bf16.mxu0 0
      %1224 = vmatpush1.bf16.msra.mxu0 %v1171
      %1225 = vmatprep.subr.bf16.mxu0 0
      %1226 = vmatpush1.bf16.msra.mxu0 %v1172
      %1227 = vmatprep.subr.bf16.mxu0 0
      %1228 = vmatpush1.bf16.msra.mxu0 %v1173
      %1229 = vmatprep.subr.bf16.mxu0 0
      %1230 = vmatpush1.bf16.msra.mxu0 %v1174
      %1231 = vmatprep.subr.bf16.mxu0 0
      %1232 = vmatpush1.bf16.msra.mxu0 %v1175
      %1233 = vmatprep.subr.bf16.mxu0 0
      %1234 = vmatpush1.bf16.msra.mxu0 %v1176
      %1235 = vmatprep.subr.bf16.mxu0 0
      %1236 = vmatpush1.bf16.msra.mxu0 %v1177
      %1237 = vmatprep.subr.bf16.mxu0 0
      %1238 = vmatpush1.bf16.msra.mxu0 %v1178
      %1239 = vmatprep.subr.bf16.mxu0 0
      %1240 = vmatpush1.bf16.msra.mxu0 %v1179
      %1241 = vmatprep.subr.bf16.mxu0 0
      %1242 = vmatpush1.bf16.msra.mxu0 %v1180
      %1243 = vmatprep.subr.bf16.mxu0 0
      %1244 = vmatpush1.bf16.msra.mxu0 %v1181
      %1245 = vmatprep.subr.bf16.mxu0 0
      %1246 = vmatpush1.bf16.msra.mxu0 %v1182
      %1247 = vmatprep.mubr.bf16.mxu0 %v990
      %1248 = vmatmul.mubr.bf16.gmra.mrb[0].mxu0 %v966
      %v1249 = vpop.f32.mrb[0].mxu0
      %v1250 = vadd.f32 0.0, %v1249
      %v1251 = vpop.f32.mrb[0].mxu0
      %v1252 = vpop.f32.mrb[0].mxu0
      %v1253 = vadd.f32 0.0, %v1252
      %v1254 = vpop.f32.mrb[0].mxu0
      %1255 = vmatprep.mubr.bf16.mxu0 %v991
      %1256 = vmatmul.mubr.bf16.gmra.mrb[0].mxu0 %v967
      %v1257 = vpop.f32.mrb[0].mxu0
      %v1258 = vadd.f32 0.0, %v1257
      %v1259 = vpop.f32.mrb[0].mxu0
      %v1260 = vpop.f32.mrb[0].mxu0
      %v1261 = vadd.f32 0.0, %v1260
      %v1262 = vpop.f32.mrb[0].mxu0
      %1263 = vmatprep.mubr.bf16.mxu0 %v992
      %1264 = vmatmul.mubr.bf16.gmra.mrb[0].mxu0 %v968
      %v1265 = vpop.f32.mrb[0].mxu0
      %v1266 = vadd.f32 0.0, %v1265
      %v1267 = vpop.f32.mrb[0].mxu0
      %v1268 = vpop.f32.mrb[0].mxu0
      %v1269 = vadd.f32 0.0, %v1268
      %v1270 = vpop.f32.mrb[0].mxu0
      %1271 = vmatprep.mubr.bf16.mxu0 %v993
      %1272 = vmatmul.mubr.bf16.gmra.mrb[0].mxu0 %v969
      %v1273 = vpop.f32.mrb[0].mxu0
      %v1274 = vadd.f32 0.0, %v1273
      %v1275 = vpop.f32.mrb[0].mxu0
      %v1276 = vpop.f32.mrb[0].mxu0
      %v1277 = vadd.f32 0.0, %v1276
      %v1278 = vpop.f32.mrb[0].mxu0
      %1279 = vdwg.mxu0
      %1280 = vmatprep.subr.bf16.mxu0 0
      %1281 = vmatpush1.bf16.msra.mxu0 %v1183
      %1282 = vmatprep.subr.bf16.mxu0 0
      %1283 = vmatpush1.bf16.msra.mxu0 %v1184
      %1284 = vmatprep.subr.bf16.mxu0 0
      %1285 = vmatpush1.bf16.msra.mxu0 %v1185
      %1286 = vmatprep.subr.bf16.mxu0 0
      %1287 = vmatpush1.bf16.msra.mxu0 %v1186
      %1288 = vmatprep.subr.bf16.mxu0 0
      %1289 = vmatpush1.bf16.msra.mxu0 %v1187
      %1290 = vmatprep.subr.bf16.mxu0 0
      %1291 = vmatpush1.bf16.msra.mxu0 %v1188
      %1292 = vmatprep.subr.bf16.mxu0 0
      %1293 = vmatpush1.bf16.msra.mxu0 %v1189
      %1294 = vmatprep.subr.bf16.mxu0 0
      %1295 = vmatpush1.bf16.msra.mxu0 %v1190
      %1296 = vmatprep.subr.bf16.mxu0 0
      %1297 = vmatpush1.bf16.msra.mxu0 0
      %1298 = vmatprep.subr.bf16.mxu0 0
      %1299 = vmatpush1.bf16.msra.mxu0 0
      %1300 = vmatprep.subr.bf16.mxu0 0
      %1301 = vmatpush1.bf16.msra.mxu0 0
      %1302 = vmatprep.subr.bf16.mxu0 0
      %1303 = vmatpush1.bf16.msra.mxu0 0
      %1304 = vmatprep.subr.bf16.mxu0 0
      %1305 = vmatpush1.bf16.msra.mxu0 0
      %1306 = vmatprep.subr.bf16.mxu0 0
      %1307 = vmatpush1.bf16.msra.mxu0 0
      %1308 = vmatprep.subr.bf16.mxu0 0
      %1309 = vmatpush1.bf16.msra.mxu0 0
      %1310 = vmatprep.subr.bf16.mxu0 0
      %1311 = vmatpush1.bf16.msra.mxu0 0
      %1312 = vmatprep.mubr.bf16.mxu0 0
      %1313 = vmatmul.mubr.bf16.gmra.mrb[0].mxu0 %v1014
      %v1314 = vpop.f32.mrb[0].mxu0
      %v1315 = vadd.f32 %v1250, %v1314
      %v1316 = vpop.f32.mrb[0].mxu0
      %v1317 = vpop.f32.mrb[0].mxu0
      %v1318 = vadd.f32 %v1253, %v1317
      %v1319 = vpop.f32.mrb[0].mxu0
      %1320 = vmatprep.mubr.bf16.mxu0 0
      %1321 = vmatmul.mubr.bf16.gmra.mrb[0].mxu0 %v1015
      %v1322 = vpop.f32.mrb[0].mxu0
      %v1323 = vadd.f32 %v1258, %v1322
      %v1324 = vpop.f32.mrb[0].mxu0
      %v1325 = vpop.f32.mrb[0].mxu0
      %v1326 = vadd.f32 %v1261, %v1325
      %v1327 = vpop.f32.mrb[0].mxu0
      %1328 = vmatprep.mubr.bf16.mxu0 0
      %1329 = vmatmul.mubr.bf16.gmra.mrb[0].mxu0 %v1016
      %v1330 = vpop.f32.mrb[0].mxu0
      %v1331 = vadd.f32 %v1266, %v1330
      %v1332 = vpop.f32.mrb[0].mxu0
      %v1333 = vpop.f32.mrb[0].mxu0
      %v1334 = vadd.f32 %v1269, %v1333
      %v1335 = vpop.f32.mrb[0].mxu0
      %1336 = vmatprep.mubr.bf16.mxu0 0
      %1337 = vmatmul.mubr.bf16.gmra.mrb[0].mxu0 %v1017
      %v1338 = vpop.f32.mrb[0].mxu0
      %v1339 = vadd.f32 %v1274, %v1338
      %v1340 = vpop.f32.mrb[0].mxu0
      %v1341 = vpop.f32.mrb[0].mxu0
      %v1342 = vadd.f32 %v1277, %v1341
      %v1343 = vpop.f32.mrb[0].mxu0
      %1344 = vdwg.mxu0
      %v1393 = vunpack.c.l.b16 %v902
      %v1394 = vunpack.c.l.b16 %v903
      %v1395 = vunpack.c.l.b16 %v904
      %v1396 = vunpack.c.l.b16 %v905
      %v1397 = vunpack.c.l.b16 %v906
      %v1398 = vunpack.c.l.b16 %v907
      %v1399 = vunpack.c.l.b16 %v908
      %v1400 = vunpack.c.l.b16 %v909
      %v1401 = vunpack.c.l.b16 %v910
      %v1402 = vunpack.c.l.b16 %v911
      %v1403 = vunpack.c.l.b16 %v912
      %v1404 = vunpack.c.l.b16 %v913
      %v1405 = vunpack.c.l.b16 %v914
      %v1406 = vunpack.c.l.b16 %v915
      %v1407 = vunpack.c.l.b16 %v916
      %v1408 = vunpack.c.l.b16 %v917
      %v1409 = vunpack.c.l.b16 %v918
      %v1410 = vunpack.c.l.b16 %v919
      %v1411 = vunpack.c.l.b16 %v920
      %v1412 = vunpack.c.l.b16 %v921
      %v1413 = vunpack.c.l.b16 %v922
      %v1414 = vunpack.c.l.b16 %v923
      %v1415 = vunpack.c.l.b16 %v924
      %v1416 = vunpack.c.l.b16 %v925
      %v1417 = vunpack.c.l.b16 %v926
      %v1418 = vunpack.c.l.b16 %v927
      %v1419 = vunpack.c.l.b16 %v928
      %v1420 = vunpack.c.l.b16 %v929
      %v1421 = vunpack.c.l.b16 %v930
      %v1422 = vunpack.c.l.b16 %v931
      %v1423 = vunpack.c.l.b16 %v932
      %v1424 = vunpack.c.l.b16 %v933
      %v1425 = vunpack.c.l.b16 %v934
      %v1426 = vunpack.c.l.b16 %v935
      %v1427 = vunpack.c.l.b16 %v936
      %v1428 = vunpack.c.l.b16 %v937
      %v1429 = vunpack.c.l.b16 %v938
      %v1430 = vunpack.c.l.b16 %v939
      %v1431 = vunpack.c.l.b16 %v940
      %v1432 = vunpack.c.l.b16 %v941
      %v1433 = vunpack.c.l.b16 %v942
      %v1434 = vunpack.c.l.b16 %v943
      %v1435 = vunpack.c.l.b16 %v944
      %v1436 = vunpack.c.l.b16 %v945
      %v1437 = vunpack.c.l.b16 %v946
      %v1438 = vunpack.c.l.b16 %v947
      %v1439 = vunpack.c.l.b16 %v948
      %v1440 = vunpack.c.l.b16 %v949
      %v1441 = vpack.c.b16 %v1394, %v1393
      %v1442 = vpack.c.b16 %v1396, %v1395
      %v1443 = vpack.c.b16 %v1398, %v1397
      %v1444 = vpack.c.b16 %v1400, %v1399
      %v1445 = vpack.c.b16 %v1402, %v1401
      %v1446 = vpack.c.b16 %v1404, %v1403
      %v1447 = vpack.c.b16 %v1406, %v1405
      %v1448 = vpack.c.b16 %v1408, %v1407
      %v1449 = vpack.c.b16 %v1410, %v1409
      %v1450 = vpack.c.b16 %v1412, %v1411
      %v1451 = vpack.c.b16 %v1414, %v1413
      %v1452 = vpack.c.b16 %v1416, %v1415
      %v1453 = vpack.c.b16 %v1418, %v1417
      %v1454 = vpack.c.b16 %v1420, %v1419
      %v1455 = vpack.c.b16 %v1422, %v1421
      %v1456 = vpack.c.b16 %v1424, %v1423
      %v1457 = vpack.c.b16 %v1426, %v1425
      %v1458 = vpack.c.b16 %v1428, %v1427
      %v1459 = vpack.c.b16 %v1430, %v1429
      %v1460 = vpack.c.b16 %v1432, %v1431
      %v1461 = vpack.c.b16 %v1434, %v1433
      %v1462 = vpack.c.b16 %v1436, %v1435
      %v1463 = vpack.c.b16 %v1438, %v1437
      %v1464 = vpack.c.b16 %v1440, %v1439
      %1489 = vmatprep.subr.bf16.mxu0 0
      %1490 = vmatpush1.bf16.msra.mxu0 %v1441
      %1491 = vmatprep.subr.bf16.mxu0 0
      %1492 = vmatpush1.bf16.msra.mxu0 %v1442
      %1493 = vmatprep.subr.bf16.mxu0 0
      %1494 = vmatpush1.bf16.msra.mxu0 %v1443
      %1495 = vmatprep.subr.bf16.mxu0 0
      %1496 = vmatpush1.bf16.msra.mxu0 %v1444
      %1497 = vmatprep.subr.bf16.mxu0 0
      %1498 = vmatpush1.bf16.msra.mxu0 %v1445
      %1499 = vmatprep.subr.bf16.mxu0 0
      %1500 = vmatpush1.bf16.msra.mxu0 %v1446
      %1501 = vmatprep.subr.bf16.mxu0 0
      %1502 = vmatpush1.bf16.msra.mxu0 %v1447
      %1503 = vmatprep.subr.bf16.mxu0 0
      %1504 = vmatpush1.bf16.msra.mxu0 %v1448
      %1505 = vmatprep.subr.bf16.mxu0 0
      %1506 = vmatpush1.bf16.msra.mxu0 %v1449
      %1507 = vmatprep.subr.bf16.mxu0 0
      %1508 = vmatpush1.bf16.msra.mxu0 %v1450
      %1509 = vmatprep.subr.bf16.mxu0 0
      %1510 = vmatpush1.bf16.msra.mxu0 %v1451
      %1511 = vmatprep.subr.bf16.mxu0 0
      %1512 = vmatpush1.bf16.msra.mxu0 %v1452
      %1513 = vmatprep.subr.bf16.mxu0 0
      %1514 = vmatpush1.bf16.msra.mxu0 %v1453
      %1515 = vmatprep.subr.bf16.mxu0 0
      %1516 = vmatpush1.bf16.msra.mxu0 %v1454
      %1517 = vmatprep.subr.bf16.mxu0 0
      %1518 = vmatpush1.bf16.msra.mxu0 %v1455
      %1519 = vmatprep.subr.bf16.mxu0 0
      %1520 = vmatpush1.bf16.msra.mxu0 %v1456
      %1521 = vmatprep.mubr.bf16.mxu0 %v878
      %1522 = vmatmul.mubr.bf16.gmra.mrb[0].mxu0 %v862
      %v1523 = vpop.f32.mrb[0].mxu0
      %v1524 = vadd.f32 %v1315, %v1523
      %v1525 = vpop.f32.mrb[0].mxu0
      %v1526 = vpop.f32.mrb[0].mxu0
      %v1527 = vadd.f32 %v1318, %v1526
      %v1528 = vpop.f32.mrb[0].mxu0
      %1529 = vmatprep.mubr.bf16.mxu0 %v879
      %1530 = vmatmul.mubr.bf16.gmra.mrb[0].mxu0 %v863
      %v1531 = vpop.f32.mrb[0].mxu0
      %v1532 = vadd.f32 %v1323, %v1531
      %v1533 = vpop.f32.mrb[0].mxu0
      %v1534 = vpop.f32.mrb[0].mxu0
      %v1535 = vadd.f32 %v1326, %v1534
      %v1536 = vpop.f32.mrb[0].mxu0
      %1537 = vmatprep.mubr.bf16.mxu0 %v880
      %1538 = vmatmul.mubr.bf16.gmra.mrb[0].mxu0 %v864
      %v1539 = vpop.f32.mrb[0].mxu0
      %v1540 = vadd.f32 %v1331, %v1539
      %v1541 = vpop.f32.mrb[0].mxu0
      %v1542 = vpop.f32.mrb[0].mxu0
      %v1543 = vadd.f32 %v1334, %v1542
      %v1544 = vpop.f32.mrb[0].mxu0
      %1545 = vmatprep.mubr.bf16.mxu0 %v881
      %1546 = vmatmul.mubr.bf16.gmra.mrb[0].mxu0 %v865
      %v1547 = vpop.f32.mrb[0].mxu0
      %v1548 = vadd.f32 %v1339, %v1547
      %v1549 = vpop.f32.mrb[0].mxu0
      %v1550 = vpop.f32.mrb[0].mxu0
      %v1551 = vadd.f32 %v1342, %v1550
      %v1552 = vpop.f32.mrb[0].mxu0
      %1553 = vdwg.mxu0
      %1554 = vmatprep.subr.bf16.mxu0 0
      %1555 = vmatpush1.bf16.msra.mxu0 %v1457
      %1556 = vmatprep.subr.bf16.mxu0 0
      %1557 = vmatpush1.bf16.msra.mxu0 %v1458
      %1558 = vmatprep.subr.bf16.mxu0 0
      %1559 = vmatpush1.bf16.msra.mxu0 %v1459
      %1560 = vmatprep.subr.bf16.mxu0 0
      %1561 = vmatpush1.bf16.msra.mxu0 %v1460
      %1562 = vmatprep.subr.bf16.mxu0 0
      %1563 = vmatpush1.bf16.msra.mxu0 %v1461
      %1564 = vmatprep.subr.bf16.mxu0 0
      %1565 = vmatpush1.bf16.msra.mxu0 %v1462
      %1566 = vmatprep.subr.bf16.mxu0 0
      %1567 = vmatpush1.bf16.msra.mxu0 %v1463
      %1568 = vmatprep.subr.bf16.mxu0 0
      %1569 = vmatpush1.bf16.msra.mxu0 %v1464
      %1570 = vmatprep.subr.bf16.mxu0 0
      %1571 = vmatpush1.bf16.msra.mxu0 0
      %1572 = vmatprep.subr.bf16.mxu0 0
      %1573 = vmatpush1.bf16.msra.mxu0 0
      %1574 = vmatprep.subr.bf16.mxu0 0
      %1575 = vmatpush1.bf16.msra.mxu0 0
      %1576 = vmatprep.subr.bf16.mxu0 0
      %1577 = vmatpush1.bf16.msra.mxu0 0
      %1578 = vmatprep.subr.bf16.mxu0 0
      %1579 = vmatpush1.bf16.msra.mxu0 0
      %1580 = vmatprep.subr.bf16.mxu0 0
      %1581 = vmatpush1.bf16.msra.mxu0 0
      %1582 = vmatprep.subr.bf16.mxu0 0
      %1583 = vmatpush1.bf16.msra.mxu0 0
      %1584 = vmatprep.subr.bf16.mxu0 0
      %1585 = vmatpush1.bf16.msra.mxu0 0
      %1586 = vmatprep.mubr.bf16.mxu0 0
      %1587 = vmatmul.mubr.bf16.gmra.mrb[0].mxu0 %v894
      %v1588 = vpop.f32.mrb[0].mxu0
      %v1589 = vadd.f32 %v1524, %v1588
      %v1590 = vpop.f32.mrb[0].mxu0
      %v1591 = vpop.f32.mrb[0].mxu0
      %v1592 = vadd.f32 %v1527, %v1591
      %v1593 = vpop.f32.mrb[0].mxu0
      %1594 = vmatprep.mubr.bf16.mxu0 0
      %1595 = vmatmul.mubr.bf16.gmra.mrb[0].mxu0 %v895
      %v1596 = vpop.f32.mrb[0].mxu0
      %v1597 = vadd.f32 %v1532, %v1596
      %v1598 = vpop.f32.mrb[0].mxu0
      %v1599 = vpop.f32.mrb[0].mxu0
      %v1600 = vadd.f32 %v1535, %v1599
      %v1601 = vpop.f32.mrb[0].mxu0
      %1602 = vmatprep.mubr.bf16.mxu0 0
      %1603 = vmatmul.mubr.bf16.gmra.mrb[0].mxu0 %v896
      %v1604 = vpop.f32.mrb[0].mxu0
      %v1605 = vadd.f32 %v1540, %v1604
      %v1606 = vpop.f32.mrb[0].mxu0
      %v1607 = vpop.f32.mrb[0].mxu0
      %v1608 = vadd.f32 %v1543, %v1607
      %v1609 = vpop.f32.mrb[0].mxu0
      %1610 = vmatprep.mubr.bf16.mxu0 0
      %1611 = vmatmul.mubr.bf16.gmra.mrb[0].mxu0 %v897
      %v1612 = vpop.f32.mrb[0].mxu0
      %v1613 = vadd.f32 %v1548, %v1612
      %v1614 = vpop.f32.mrb[0].mxu0
      %v1615 = vpop.f32.mrb[0].mxu0
      %v1616 = vadd.f32 %v1551, %v1615
      %v1617 = vpop.f32.mrb[0].mxu0
      %1618 = vdwg.mxu0
      %v1619 = vld [vmem:[#allocation2 + $0x4] sm:$0xf]
      %v1620 = vld [vmem:[#allocation2 + $0x8] sm:$0x1]
      %v1621 = vld [vmem:[#allocation2 + $0x10] sm:$0xf]
      %v1622 = vld [vmem:[#allocation2 + $0x14] sm:$0x1]
      %v1623 = vld [vmem:[#allocation2 + $0x1c] sm:$0xf]
      %v1624 = vld [vmem:[#allocation2 + $0x20] sm:$0x1]
      %v1625 = vld [vmem:[#allocation2 + $0x28] sm:$0xf]
      %v1626 = vld [vmem:[#allocation2 + $0x2c] sm:$0x1]
      %v1627 = vld [vmem:[#allocation2 + $0x34] sm:$0xf]
      %v1628 = vld [vmem:[#allocation2 + $0x38] sm:$0x1]
      %v1629 = vld [vmem:[#allocation2 + $0x40] sm:$0xf]
      %v1630 = vld [vmem:[#allocation2 + $0x44] sm:$0x1]
      %v1631 = vld [vmem:[#allocation2 + $0x4c] sm:$0xf]
      %v1632 = vld [vmem:[#allocation2 + $0x50] sm:$0x1]
      %v1633 = vld [vmem:[#allocation2 + $0x58] sm:$0xf]
      %v1634 = vld [vmem:[#allocation2 + $0x5c] sm:$0x1]
      %vm1635 = vsmask.f32 3328
      %vm1636 = vsmask.f32 7440
      %vm1637 = vmor %vm1635, %vm1636
      %v1639 = vshrl.u32 %v1619, 16
      %v1641 = vrot.slane %v1639, 4
      %v1642 = vshll.u32 %v1619, 16
      %v1644 = vrot.slane %v1642, 5
      %v1645 = vor.u32 %v1641, %v1644
      %v1646 = vrot.slane %v1645, 4
      %v1648 = vshll.u32 %v1620, 16
      %v1650 = vrot.slane %v1648, 5
      %v1651 = vsel %vm1637, %v1646, %v1650
      %v1653 = vshrl.u32 %v1621, 16
      %v1655 = vrot.slane %v1653, 4
      %v1656 = vshll.u32 %v1621, 16
      %v1658 = vrot.slane %v1656, 5
      %v1659 = vor.u32 %v1655, %v1658
      %v1660 = vrot.slane %v1659, 4
      %v1662 = vshll.u32 %v1622, 16
      %v1664 = vrot.slane %v1662, 5
      %v1665 = vsel %vm1637, %v1660, %v1664
      %v1667 = vshrl.u32 %v1623, 16
      %v1669 = vrot.slane %v1667, 4
      %v1670 = vshll.u32 %v1623, 16
      %v1672 = vrot.slane %v1670, 5
      %v1673 = vor.u32 %v1669, %v1672
      %v1674 = vrot.slane %v1673, 4
      %v1676 = vshll.u32 %v1624, 16
      %v1678 = vrot.slane %v1676, 5
      %v1679 = vsel %vm1637, %v1674, %v1678
      %v1681 = vshrl.u32 %v1625, 16
      %v1683 = vrot.slane %v1681, 4
      %v1684 = vshll.u32 %v1625, 16
      %v1686 = vrot.slane %v1684, 5
      %v1687 = vor.u32 %v1683, %v1686
      %v1688 = vrot.slane %v1687, 4
      %v1690 = vshll.u32 %v1626, 16
      %v1692 = vrot.slane %v1690, 5
      %v1693 = vsel %vm1637, %v1688, %v1692
      %v1695 = vshrl.u32 %v1627, 16
      %v1697 = vrot.slane %v1695, 4
      %v1698 = vshll.u32 %v1627, 16
      %v1700 = vrot.slane %v1698, 5
      %v1701 = vor.u32 %v1697, %v1700
      %v1702 = vrot.slane %v1701, 4
      %v1704 = vshll.u32 %v1628, 16
      %v1706 = vrot.slane %v1704, 5
      %v1707 = vsel %vm1637, %v1702, %v1706
      %v1709 = vshrl.u32 %v1629, 16
      %v1711 = vrot.slane %v1709, 4
      %v1712 = vshll.u32 %v1629, 16
      %v1714 = vrot.slane %v1712, 5
      %v1715 = vor.u32 %v1711, %v1714
      %v1716 = vrot.slane %v1715, 4
      %v1718 = vshll.u32 %v1630, 16
      %v1720 = vrot.slane %v1718, 5
      %v1721 = vsel %vm1637, %v1716, %v1720
      %v1723 = vshrl.u32 %v1631, 16
      %v1725 = vrot.slane %v1723, 4
      %v1726 = vshll.u32 %v1631, 16
      %v1728 = vrot.slane %v1726, 5
      %v1729 = vor.u32 %v1725, %v1728
      %v1730 = vrot.slane %v1729, 4
      %v1732 = vshll.u32 %v1632, 16
      %v1734 = vrot.slane %v1732, 5
      %v1735 = vsel %vm1637, %v1730, %v1734
      %v1737 = vshrl.u32 %v1633, 16
      %v1739 = vrot.slane %v1737, 4
      %v1740 = vshll.u32 %v1633, 16
      %v1742 = vrot.slane %v1740, 5
      %v1743 = vor.u32 %v1739, %v1742
      %v1744 = vrot.slane %v1743, 4
      %v1746 = vshll.u32 %v1634, 16
      %v1748 = vrot.slane %v1746, 5
      %v1749 = vsel %vm1637, %v1744, %v1748
      %v1750 = vld [vmem:[%s482 + $0x4] sm:$0xf]
      %v1751 = vld [vmem:[%s482 + $0x8] sm:$0x1]
      %v1752 = vld [vmem:[%s482 + $0x10] sm:$0xf]
      %v1753 = vld [vmem:[%s482 + $0x14] sm:$0x1]
      %v1754 = vld [vmem:[%s482 + $0x1c] sm:$0xf]
      %v1755 = vld [vmem:[%s482 + $0x20] sm:$0x1]
      %v1756 = vld [vmem:[%s482 + $0x28] sm:$0xf]
      %v1757 = vld [vmem:[%s482 + $0x2c] sm:$0x1]
      %v1758 = vld [vmem:[%s482 + $0x34] sm:$0xf]
      %v1759 = vld [vmem:[%s482 + $0x38] sm:$0x1]
      %v1760 = vld [vmem:[%s482 + $0x40] sm:$0xf]
      %v1761 = vld [vmem:[%s482 + $0x44] sm:$0x1]
      %v1762 = vld [vmem:[%s482 + $0x4c] sm:$0xf]
      %v1763 = vld [vmem:[%s482 + $0x50] sm:$0x1]
      %v1764 = vld [vmem:[%s482 + $0x58] sm:$0xf]
      %v1765 = vld [vmem:[%s482 + $0x5c] sm:$0x1]
      %v1767 = vshrl.u32 %v1750, 16
      %v1769 = vrot.slane %v1767, 4
      %v1770 = vshll.u32 %v1750, 16
      %v1772 = vrot.slane %v1770, 5
      %v1773 = vor.u32 %v1769, %v1772
      %v1774 = vrot.slane %v1773, 4
      %v1776 = vshll.u32 %v1751, 16
      %v1778 = vrot.slane %v1776, 5
      %v1779 = vsel %vm1637, %v1774, %v1778
      %v1781 = vshrl.u32 %v1752, 16
      %v1783 = vrot.slane %v1781, 4
      %v1784 = vshll.u32 %v1752, 16
      %v1786 = vrot.slane %v1784, 5
      %v1787 = vor.u32 %v1783, %v1786
      %v1788 = vrot.slane %v1787, 4
      %v1790 = vshll.u32 %v1753, 16
      %v1792 = vrot.slane %v1790, 5
      %v1793 = vsel %vm1637, %v1788, %v1792
      %v1795 = vshrl.u32 %v1754, 16
      %v1797 = vrot.slane %v1795, 4
      %v1798 = vshll.u32 %v1754, 16
      %v1800 = vrot.slane %v1798, 5
      %v1801 = vor.u32 %v1797, %v1800
      %v1802 = vrot.slane %v1801, 4
      %v1804 = vshll.u32 %v1755, 16
      %v1806 = vrot.slane %v1804, 5
      %v1807 = vsel %vm1637, %v1802, %v1806
      %v1809 = vshrl.u32 %v1756, 16
      %v1811 = vrot.slane %v1809, 4
      %v1812 = vshll.u32 %v1756, 16
      %v1814 = vrot.slane %v1812, 5
      %v1815 = vor.u32 %v1811, %v1814
      %v1816 = vrot.slane %v1815, 4
      %v1818 = vshll.u32 %v1757, 16
      %v1820 = vrot.slane %v1818, 5
      %v1821 = vsel %vm1637, %v1816, %v1820
      %v1823 = vshrl.u32 %v1758, 16
      %v1825 = vrot.slane %v1823, 4
      %v1826 = vshll.u32 %v1758, 16
      %v1828 = vrot.slane %v1826, 5
      %v1829 = vor.u32 %v1825, %v1828
      %v1830 = vrot.slane %v1829, 4
      %v1832 = vshll.u32 %v1759, 16
      %v1834 = vrot.slane %v1832, 5
      %v1835 = vsel %vm1637, %v1830, %v1834
      %v1837 = vshrl.u32 %v1760, 16
      %v1839 = vrot.slane %v1837, 4
      %v1840 = vshll.u32 %v1760, 16
      %v1842 = vrot.slane %v1840, 5
      %v1843 = vor.u32 %v1839, %v1842
      %v1844 = vrot.slane %v1843, 4
      %v1846 = vshll.u32 %v1761, 16
      %v1848 = vrot.slane %v1846, 5
      %v1849 = vsel %vm1637, %v1844, %v1848
      %v1851 = vshrl.u32 %v1762, 16
      %v1853 = vrot.slane %v1851, 4
      %v1854 = vshll.u32 %v1762, 16
      %v1856 = vrot.slane %v1854, 5
      %v1857 = vor.u32 %v1853, %v1856
      %v1858 = vrot.slane %v1857, 4
      %v1860 = vshll.u32 %v1763, 16
      %v1862 = vrot.slane %v1860, 5
      %v1863 = vsel %vm1637, %v1858, %v1862
      %v1865 = vshrl.u32 %v1764, 16
      %v1867 = vrot.slane %v1865, 4
      %v1868 = vshll.u32 %v1764, 16
      %v1870 = vrot.slane %v1868, 5
      %v1871 = vor.u32 %v1867, %v1870
      %v1872 = vrot.slane %v1871, 4
      %v1874 = vshll.u32 %v1765, 16
      %v1876 = vrot.slane %v1874, 5
      %v1877 = vsel %vm1637, %v1872, %v1876
      %v1878 = vld [vmem:[%s733 + $0x4] sm:$0xf]
      %v1879 = vld [vmem:[%s733 + $0x8] sm:$0x1]
      %v1880 = vld [vmem:[%s733 + $0x10] sm:$0xf]
      %v1881 = vld [vmem:[%s733 + $0x14] sm:$0x1]
      %v1882 = vld [vmem:[%s733 + $0x1c] sm:$0xf]
      %v1883 = vld [vmem:[%s733 + $0x20] sm:$0x1]
      %v1884 = vld [vmem:[%s733 + $0x28] sm:$0xf]
      %v1885 = vld [vmem:[%s733 + $0x2c] sm:$0x1]
      %v1886 = vld [vmem:[%s733 + $0x34] sm:$0xf]
      %v1887 = vld [vmem:[%s733 + $0x38] sm:$0x1]
      %v1888 = vld [vmem:[%s733 + $0x40] sm:$0xf]
      %v1889 = vld [vmem:[%s733 + $0x44] sm:$0x1]
      %v1890 = vld [vmem:[%s733 + $0x4c] sm:$0xf]
      %v1891 = vld [vmem:[%s733 + $0x50] sm:$0x1]
      %v1892 = vld [vmem:[%s733 + $0x58] sm:$0xf]
      %v1893 = vld [vmem:[%s733 + $0x5c] sm:$0x1]
      %v1895 = vshrl.u32 %v1878, 16
      %v1897 = vrot.slane %v1895, 4
      %v1898 = vshll.u32 %v1878, 16
      %v1900 = vrot.slane %v1898, 5
      %v1901 = vor.u32 %v1897, %v1900
      %v1902 = vrot.slane %v1901, 4
      %v1904 = vshll.u32 %v1879, 16
      %v1906 = vrot.slane %v1904, 5
      %v1907 = vsel %vm1637, %v1902, %v1906
      %v1909 = vshrl.u32 %v1880, 16
      %v1911 = vrot.slane %v1909, 4
      %v1912 = vshll.u32 %v1880, 16
      %v1914 = vrot.slane %v1912, 5
      %v1915 = vor.u32 %v1911, %v1914
      %v1916 = vrot.slane %v1915, 4
      %v1918 = vshll.u32 %v1881, 16
      %v1920 = vrot.slane %v1918, 5
      %v1921 = vsel %vm1637, %v1916, %v1920
      %v1923 = vshrl.u32 %v1882, 16
      %v1925 = vrot.slane %v1923, 4
      %v1926 = vshll.u32 %v1882, 16
      %v1928 = vrot.slane %v1926, 5
      %v1929 = vor.u32 %v1925, %v1928
      %v1930 = vrot.slane %v1929, 4
      %v1932 = vshll.u32 %v1883, 16
      %v1934 = vrot.slane %v1932, 5
      %v1935 = vsel %vm1637, %v1930, %v1934
      %v1937 = vshrl.u32 %v1884, 16
      %v1939 = vrot.slane %v1937, 4
      %v1940 = vshll.u32 %v1884, 16
      %v1942 = vrot.slane %v1940, 5
      %v1943 = vor.u32 %v1939, %v1942
      %v1944 = vrot.slane %v1943, 4
      %v1946 = vshll.u32 %v1885, 16
      %v1948 = vrot.slane %v1946, 5
      %v1949 = vsel %vm1637, %v1944, %v1948
      %v1951 = vshrl.u32 %v1886, 16
      %v1953 = vrot.slane %v1951, 4
      %v1954 = vshll.u32 %v1886, 16
      %v1956 = vrot.slane %v1954, 5
      %v1957 = vor.u32 %v1953, %v1956
      %v1958 = vrot.slane %v1957, 4
      %v1960 = vshll.u32 %v1887, 16
      %v1962 = vrot.slane %v1960, 5
      %v1963 = vsel %vm1637, %v1958, %v1962
      %v1965 = vshrl.u32 %v1888, 16
      %v1967 = vrot.slane %v1965, 4
      %v1968 = vshll.u32 %v1888, 16
      %v1970 = vrot.slane %v1968, 5
      %v1971 = vor.u32 %v1967, %v1970
      %v1972 = vrot.slane %v1971, 4
      %v1974 = vshll.u32 %v1889, 16
      %v1976 = vrot.slane %v1974, 5
      %v1977 = vsel %vm1637, %v1972, %v1976
      %v1979 = vshrl.u32 %v1890, 16
      %v1981 = vrot.slane %v1979, 4
      %v1982 = vshll.u32 %v1890, 16
      %v1984 = vrot.slane %v1982, 5
      %v1985 = vor.u32 %v1981, %v1984
      %v1986 = vrot.slane %v1985, 4
      %v1988 = vshll.u32 %v1891, 16
      %v1990 = vrot.slane %v1988, 5
      %v1991 = vsel %vm1637, %v1986, %v1990
      %v1993 = vshrl.u32 %v1892, 16
      %v1995 = vrot.slane %v1993, 4
      %v1996 = vshll.u32 %v1892, 16
      %v1998 = vrot.slane %v1996, 5
      %v1999 = vor.u32 %v1995, %v1998
      %v2000 = vrot.slane %v1999, 4
      %v2002 = vshll.u32 %v1893, 16
      %v2004 = vrot.slane %v2002, 5
      %v2005 = vsel %vm1637, %v2000, %v2004
      %v2006 = vunpack.c.l.b16 %v1651
      %v2007 = vunpack.c.l.b16 %v1665
      %v2008 = vunpack.c.l.b16 %v1679
      %v2009 = vunpack.c.l.b16 %v1693
      %v2010 = vunpack.c.l.b16 %v1707
      %v2011 = vunpack.c.l.b16 %v1721
      %v2012 = vunpack.c.l.b16 %v1735
      %v2013 = vunpack.c.l.b16 %v1749
      %v2014 = vpack.c.b16 %v2007, %v2006
      %v2015 = vpack.c.b16 %v2009, %v2008
      %v2016 = vpack.c.b16 %v2011, %v2010
      %v2017 = vpack.c.b16 %v2013, %v2012
      %v2022 = vunpack.c.l.b16 %v1779
      %v2023 = vunpack.c.l.b16 %v1793
      %v2024 = vunpack.c.l.b16 %v1807
      %v2025 = vunpack.c.l.b16 %v1821
      %v2026 = vunpack.c.l.b16 %v1835
      %v2027 = vunpack.c.l.b16 %v1849
      %v2028 = vunpack.c.l.b16 %v1863
      %v2029 = vunpack.c.l.b16 %v1877
      %v2030 = vpack.c.b16 %v2023, %v2022
      %v2031 = vpack.c.b16 %v2025, %v2024
      %v2032 = vpack.c.b16 %v2027, %v2026
      %v2033 = vpack.c.b16 %v2029, %v2028
      %v2038 = vunpack.c.l.b16 %v1907
      %v2039 = vunpack.c.l.b16 %v1921
      %v2040 = vunpack.c.l.b16 %v1935
      %v2041 = vunpack.c.l.b16 %v1949
      %v2042 = vunpack.c.l.b16 %v1963
      %v2043 = vunpack.c.l.b16 %v1977
      %v2044 = vunpack.c.l.b16 %v1991
      %v2045 = vunpack.c.l.b16 %v2005
      %v2046 = vpack.c.b16 %v2039, %v2038
      %v2047 = vpack.c.b16 %v2041, %v2040
      %v2048 = vpack.c.b16 %v2043, %v2042
      %v2049 = vpack.c.b16 %v2045, %v2044
      %s2054 = scalar_lea.vmem %s5, 384
      %v2055 = vld [vmem:[%s2054] sm:$0xf]
      %v2056 = vld [vmem:[%s2054 + $0x4] sm:$0xf]
      %v2057 = vld [vmem:[%s2054 + $0x8] sm:$0xf]
      %v2058 = vld [vmem:[%s2054 + $0xc] sm:$0xf]
      %v2059 = vld [vmem:[%s2054 + $0x10] sm:$0xf]
      %v2060 = vld [vmem:[%s2054 + $0x14] sm:$0xf]
      %v2061 = vld [vmem:[%s2054 + $0x18] sm:$0xf]
      %v2062 = vld [vmem:[%s2054 + $0x1c] sm:$0xf]
      %v2063 = vld [vmem:[%s2054 + $0x20] sm:$0xf]
      %v2064 = vld [vmem:[%s2054 + $0x24] sm:$0xf]
      %v2065 = vld [vmem:[%s2054 + $0x28] sm:$0xf]
      %v2066 = vld [vmem:[%s2054 + $0x2c] sm:$0xf]
      %v2067 = vld [vmem:[%s2054 + $0x30] sm:$0xf]
      %v2068 = vld [vmem:[%s2054 + $0x34] sm:$0xf]
      %v2069 = vld [vmem:[%s2054 + $0x38] sm:$0xf]
      %v2070 = vld [vmem:[%s2054 + $0x3c] sm:$0xf]
      %v2071 = vld [vmem:[%s2054 + $0x40] sm:$0xf]
      %v2072 = vld [vmem:[%s2054 + $0x44] sm:$0xf]
      %v2073 = vld [vmem:[%s2054 + $0x48] sm:$0xf]
      %v2074 = vld [vmem:[%s2054 + $0x4c] sm:$0xf]
      %v2075 = vld [vmem:[%s2054 + $0x50] sm:$0xf]
      %v2076 = vld [vmem:[%s2054 + $0x54] sm:$0xf]
      %v2077 = vld [vmem:[%s2054 + $0x58] sm:$0xf]
      %v2078 = vld [vmem:[%s2054 + $0x5c] sm:$0xf]
      %v2079 = vld [vmem:[%s2054 + $0x60] sm:$0xf]
      %v2080 = vld [vmem:[%s2054 + $0x64] sm:$0xf]
      %v2081 = vld [vmem:[%s2054 + $0x68] sm:$0xf]
      %v2082 = vld [vmem:[%s2054 + $0x6c] sm:$0xf]
      %v2083 = vld [vmem:[%s2054 + $0x70] sm:$0xf]
      %v2084 = vld [vmem:[%s2054 + $0x74] sm:$0xf]
      %v2085 = vld [vmem:[%s2054 + $0x78] sm:$0xf]
      %v2086 = vld [vmem:[%s2054 + $0x7c] sm:$0xf]
      %v2087 = vld [vmem:[%s2054 + $0x80] sm:$0xf]
      %v2088 = vld [vmem:[%s2054 + $0x84] sm:$0xf]
      %v2089 = vld [vmem:[%s2054 + $0x88] sm:$0xf]
      %v2090 = vld [vmem:[%s2054 + $0x8c] sm:$0xf]
      %v2091 = vld [vmem:[%s2054 + $0x90] sm:$0xf]
      %v2092 = vld [vmem:[%s2054 + $0x94] sm:$0xf]
      %v2093 = vld [vmem:[%s2054 + $0x98] sm:$0xf]
      %v2094 = vld [vmem:[%s2054 + $0x9c] sm:$0xf]
      %v2095 = vld [vmem:[%s2054 + $0xa0] sm:$0xf]
      %v2096 = vld [vmem:[%s2054 + $0xa4] sm:$0xf]
      %v2097 = vld [vmem:[%s2054 + $0xa8] sm:$0xf]
      %v2098 = vld [vmem:[%s2054 + $0xac] sm:$0xf]
      %v2099 = vld [vmem:[%s2054 + $0xb0] sm:$0xf]
      %v2100 = vld [vmem:[%s2054 + $0xb4] sm:$0xf]
      %v2101 = vld [vmem:[%s2054 + $0xb8] sm:$0xf]
      %v2102 = vld [vmem:[%s2054 + $0xbc] sm:$0xf]
      %v2151 = vunpack.c.l.b16 %v2055
      %v2152 = vunpack.c.l.b16 %v2056
      %v2153 = vunpack.c.l.b16 %v2057
      %v2154 = vunpack.c.l.b16 %v2058
      %v2155 = vunpack.c.l.b16 %v2059
      %v2156 = vunpack.c.l.b16 %v2060
      %v2157 = vunpack.c.l.b16 %v2061
      %v2158 = vunpack.c.l.b16 %v2062
      %v2159 = vunpack.c.l.b16 %v2063
      %v2160 = vunpack.c.l.b16 %v2064
      %v2161 = vunpack.c.l.b16 %v2065
      %v2162 = vunpack.c.l.b16 %v2066
      %v2163 = vunpack.c.l.b16 %v2067
      %v2164 = vunpack.c.l.b16 %v2068
      %v2165 = vunpack.c.l.b16 %v2069
      %v2166 = vunpack.c.l.b16 %v2070
      %v2167 = vunpack.c.l.b16 %v2071
      %v2168 = vunpack.c.l.b16 %v2072
      %v2169 = vunpack.c.l.b16 %v2073
      %v2170 = vunpack.c.l.b16 %v2074
      %v2171 = vunpack.c.l.b16 %v2075
      %v2172 = vunpack.c.l.b16 %v2076
      %v2173 = vunpack.c.l.b16 %v2077
      %v2174 = vunpack.c.l.b16 %v2078
      %v2175 = vunpack.c.l.b16 %v2079
      %v2176 = vunpack.c.l.b16 %v2080
      %v2177 = vunpack.c.l.b16 %v2081
      %v2178 = vunpack.c.l.b16 %v2082
      %v2179 = vunpack.c.l.b16 %v2083
      %v2180 = vunpack.c.l.b16 %v2084
      %v2181 = vunpack.c.l.b16 %v2085
      %v2182 = vunpack.c.l.b16 %v2086
      %v2183 = vunpack.c.l.b16 %v2087
      %v2184 = vunpack.c.l.b16 %v2088
      %v2185 = vunpack.c.l.b16 %v2089
      %v2186 = vunpack.c.l.b16 %v2090
      %v2187 = vunpack.c.l.b16 %v2091
      %v2188 = vunpack.c.l.b16 %v2092
      %v2189 = vunpack.c.l.b16 %v2093
      %v2190 = vunpack.c.l.b16 %v2094
      %v2191 = vunpack.c.l.b16 %v2095
      %v2192 = vunpack.c.l.b16 %v2096
      %v2193 = vunpack.c.l.b16 %v2097
      %v2194 = vunpack.c.l.b16 %v2098
      %v2195 = vunpack.c.l.b16 %v2099
      %v2196 = vunpack.c.l.b16 %v2100
      %v2197 = vunpack.c.l.b16 %v2101
      %v2198 = vunpack.c.l.b16 %v2102
      %v2199 = vpack.c.b16 %v2152, %v2151
      %v2200 = vpack.c.b16 %v2154, %v2153
      %v2201 = vpack.c.b16 %v2156, %v2155
      %v2202 = vpack.c.b16 %v2158, %v2157
      %v2203 = vpack.c.b16 %v2160, %v2159
      %v2204 = vpack.c.b16 %v2162, %v2161
      %v2205 = vpack.c.b16 %v2164, %v2163
      %v2206 = vpack.c.b16 %v2166, %v2165
      %v2207 = vpack.c.b16 %v2168, %v2167
      %v2208 = vpack.c.b16 %v2170, %v2169
      %v2209 = vpack.c.b16 %v2172, %v2171
      %v2210 = vpack.c.b16 %v2174, %v2173
      %v2211 = vpack.c.b16 %v2176, %v2175
      %v2212 = vpack.c.b16 %v2178, %v2177
      %v2213 = vpack.c.b16 %v2180, %v2179
      %v2214 = vpack.c.b16 %v2182, %v2181
      %v2215 = vpack.c.b16 %v2184, %v2183
      %v2216 = vpack.c.b16 %v2186, %v2185
      %v2217 = vpack.c.b16 %v2188, %v2187
      %v2218 = vpack.c.b16 %v2190, %v2189
      %v2219 = vpack.c.b16 %v2192, %v2191
      %v2220 = vpack.c.b16 %v2194, %v2193
      %v2221 = vpack.c.b16 %v2196, %v2195
      %v2222 = vpack.c.b16 %v2198, %v2197
      %2247 = vmatprep.subr.bf16.mxu0 0
      %2248 = vmatpush1.bf16.msra.mxu0 %v2199
      %2249 = vmatprep.subr.bf16.mxu0 0
      %2250 = vmatpush1.bf16.msra.mxu0 %v2200
      %2251 = vmatprep.subr.bf16.mxu0 0
      %2252 = vmatpush1.bf16.msra.mxu0 %v2201
      %2253 = vmatprep.subr.bf16.mxu0 0
      %2254 = vmatpush1.bf16.msra.mxu0 %v2202
      %2255 = vmatprep.subr.bf16.mxu0 0
      %2256 = vmatpush1.bf16.msra.mxu0 %v2203
      %2257 = vmatprep.subr.bf16.mxu0 0
      %2258 = vmatpush1.bf16.msra.mxu0 %v2204
      %2259 = vmatprep.subr.bf16.mxu0 0
      %2260 = vmatpush1.bf16.msra.mxu0 %v2205
      %2261 = vmatprep.subr.bf16.mxu0 0
      %2262 = vmatpush1.bf16.msra.mxu0 %v2206
      %2263 = vmatprep.subr.bf16.mxu0 0
      %2264 = vmatpush1.bf16.msra.mxu0 %v2207
      %2265 = vmatprep.subr.bf16.mxu0 0
      %2266 = vmatpush1.bf16.msra.mxu0 %v2208
      %2267 = vmatprep.subr.bf16.mxu0 0
      %2268 = vmatpush1.bf16.msra.mxu0 %v2209
      %2269 = vmatprep.subr.bf16.mxu0 0
      %2270 = vmatpush1.bf16.msra.mxu0 %v2210
      %2271 = vmatprep.subr.bf16.mxu0 0
      %2272 = vmatpush1.bf16.msra.mxu0 %v2211
      %2273 = vmatprep.subr.bf16.mxu0 0
      %2274 = vmatpush1.bf16.msra.mxu0 %v2212
      %2275 = vmatprep.subr.bf16.mxu0 0
      %2276 = vmatpush1.bf16.msra.mxu0 %v2213
      %2277 = vmatprep.subr.bf16.mxu0 0
      %2278 = vmatpush1.bf16.msra.mxu0 %v2214
      %2279 = vmatprep.mubr.bf16.mxu0 %v2030
      %2280 = vmatmul.mubr.bf16.gmra.mrb[0].mxu0 %v2014
      %v2281 = vpop.f32.mrb[0].mxu0
      %v2282 = vadd.f32 0.0, %v2281
      %v2283 = vpop.f32.mrb[0].mxu0
      %v2284 = vpop.f32.mrb[0].mxu0
      %v2285 = vadd.f32 0.0, %v2284
      %v2286 = vpop.f32.mrb[0].mxu0
      %2287 = vmatprep.mubr.bf16.mxu0 %v2031
      %2288 = vmatmul.mubr.bf16.gmra.mrb[0].mxu0 %v2015
      %v2289 = vpop.f32.mrb[0].mxu0
      %v2290 = vadd.f32 0.0, %v2289
      %v2291 = vpop.f32.mrb[0].mxu0
      %v2292 = vpop.f32.mrb[0].mxu0
      %v2293 = vadd.f32 0.0, %v2292
      %v2294 = vpop.f32.mrb[0].mxu0
      %2295 = vmatprep.mubr.bf16.mxu0 %v2032
      %2296 = vmatmul.mubr.bf16.gmra.mrb[0].mxu0 %v2016
      %v2297 = vpop.f32.mrb[0].mxu0
      %v2298 = vadd.f32 0.0, %v2297
      %v2299 = vpop.f32.mrb[0].mxu0
      %v2300 = vpop.f32.mrb[0].mxu0
      %v2301 = vadd.f32 0.0, %v2300
      %v2302 = vpop.f32.mrb[0].mxu0
      %2303 = vmatprep.mubr.bf16.mxu0 %v2033
      %2304 = vmatmul.mubr.bf16.gmra.mrb[0].mxu0 %v2017
      %v2305 = vpop.f32.mrb[0].mxu0
      %v2306 = vadd.f32 0.0, %v2305
      %v2307 = vpop.f32.mrb[0].mxu0
      %v2308 = vpop.f32.mrb[0].mxu0
      %v2309 = vadd.f32 0.0, %v2308
      %v2310 = vpop.f32.mrb[0].mxu0
      %2311 = vdwg.mxu0
      %2312 = vmatprep.subr.bf16.mxu0 0
      %2313 = vmatpush1.bf16.msra.mxu0 %v2215
      %2314 = vmatprep.subr.bf16.mxu0 0
      %2315 = vmatpush1.bf16.msra.mxu0 %v2216
      %2316 = vmatprep.subr.bf16.mxu0 0
      %2317 = vmatpush1.bf16.msra.mxu0 %v2217
      %2318 = vmatprep.subr.bf16.mxu0 0
      %2319 = vmatpush1.bf16.msra.mxu0 %v2218
      %2320 = vmatprep.subr.bf16.mxu0 0
      %2321 = vmatpush1.bf16.msra.mxu0 %v2219
      %2322 = vmatprep.subr.bf16.mxu0 0
      %2323 = vmatpush1.bf16.msra.mxu0 %v2220
      %2324 = vmatprep.subr.bf16.mxu0 0
      %2325 = vmatpush1.bf16.msra.mxu0 %v2221
      %2326 = vmatprep.subr.bf16.mxu0 0
      %2327 = vmatpush1.bf16.msra.mxu0 %v2222
      %2328 = vmatprep.subr.bf16.mxu0 0
      %2329 = vmatpush1.bf16.msra.mxu0 0
      %2330 = vmatprep.subr.bf16.mxu0 0
      %2331 = vmatpush1.bf16.msra.mxu0 0
      %2332 = vmatprep.subr.bf16.mxu0 0
      %2333 = vmatpush1.bf16.msra.mxu0 0
      %2334 = vmatprep.subr.bf16.mxu0 0
      %2335 = vmatpush1.bf16.msra.mxu0 0
      %2336 = vmatprep.subr.bf16.mxu0 0
      %2337 = vmatpush1.bf16.msra.mxu0 0
      %2338 = vmatprep.subr.bf16.mxu0 0
      %2339 = vmatpush1.bf16.msra.mxu0 0
      %2340 = vmatprep.subr.bf16.mxu0 0
      %2341 = vmatpush1.bf16.msra.mxu0 0
      %2342 = vmatprep.subr.bf16.mxu0 0
      %2343 = vmatpush1.bf16.msra.mxu0 0
      %2344 = vmatprep.mubr.bf16.mxu0 0
      %2345 = vmatmul.mubr.bf16.gmra.mrb[0].mxu0 %v2046
      %v2346 = vpop.f32.mrb[0].mxu0
      %v2347 = vadd.f32 %v2282, %v2346
      %v2348 = vpop.f32.mrb[0].mxu0
      %v2349 = vpop.f32.mrb[0].mxu0
      %v2350 = vadd.f32 %v2285, %v2349
      %v2351 = vpop.f32.mrb[0].mxu0
      %2352 = vmatprep.mubr.bf16.mxu0 0
      %2353 = vmatmul.mubr.bf16.gmra.mrb[0].mxu0 %v2047
      %v2354 = vpop.f32.mrb[0].mxu0
      %v2355 = vadd.f32 %v2290, %v2354
      %v2356 = vpop.f32.mrb[0].mxu0
      %v2357 = vpop.f32.mrb[0].mxu0
      %v2358 = vadd.f32 %v2293, %v2357
      %v2359 = vpop.f32.mrb[0].mxu0
      %2360 = vmatprep.mubr.bf16.mxu0 0
      %2361 = vmatmul.mubr.bf16.gmra.mrb[0].mxu0 %v2048
      %v2362 = vpop.f32.mrb[0].mxu0
      %v2363 = vadd.f32 %v2298, %v2362
      %v2364 = vpop.f32.mrb[0].mxu0
      %v2365 = vpop.f32.mrb[0].mxu0
      %v2366 = vadd.f32 %v2301, %v2365
      %v2367 = vpop.f32.mrb[0].mxu0
      %2368 = vmatprep.mubr.bf16.mxu0 0
      %2369 = vmatmul.mubr.bf16.gmra.mrb[0].mxu0 %v2049
      %v2370 = vpop.f32.mrb[0].mxu0
      %v2371 = vadd.f32 %v2306, %v2370
      %v2372 = vpop.f32.mrb[0].mxu0
      %v2373 = vpop.f32.mrb[0].mxu0
      %v2374 = vadd.f32 %v2309, %v2373
      %v2375 = vpop.f32.mrb[0].mxu0
      %2376 = vdwg.mxu0
      %v2377 = vadd.f32 %v1589, %v2347
      %v2378 = vadd.f32 %v1592, %v2350
      %v2379 = vadd.f32 %v1597, %v2355
      %v2380 = vadd.f32 %v1600, %v2358
      %v2381 = vadd.f32 %v1605, %v2363
      %v2382 = vadd.f32 %v1608, %v2366
      %v2383 = vadd.f32 %v1613, %v2371
      %v2384 = vadd.f32 %v1616, %v2374
      %v2385 = vld [vmem:[%s3] sm:$0x1]
      %v2387 = vlaneseq
      %v2388 = vshrl.u32 %v2387, 7
      %v2389 = vsub.s32 0, %v2388
      %v2390 = vrot.slane %v2385, %v2389
      %v2392 = vmul.f32 %v2377, %v2390
      %v2393 = vmul.f32 %v2378, %v2390
      %v2394 = vmul.f32 %v2379, %v2390
      %v2395 = vmul.f32 %v2380, %v2390
      %v2396 = vmul.f32 %v2381, %v2390
      %v2397 = vmul.f32 %v2382, %v2390
      %v2398 = vmul.f32 %v2383, %v2390
      %v2399 = vmul.f32 %v2384, %v2390
      %v2400 = vld [vmem:[%s4] sm:$0x1]
      %v2402 = vlaneseq
      %v2403 = vshrl.u32 %v2402, 7
      %v2404 = vsub.s32 0, %v2403
      %v2405 = vrot.slane %v2400, %v2404
      %v2407 = vadd.f32 %v2392, %v2405
      %v2408 = vadd.f32 %v2393, %v2405
      %v2409 = vadd.f32 %v2394, %v2405
      %v2410 = vadd.f32 %v2395, %v2405
      %v2411 = vadd.f32 %v2396, %v2405
      %v2412 = vadd.f32 %v2397, %v2405
      %v2413 = vadd.f32 %v2398, %v2405
      %v2414 = vadd.f32 %v2399, %v2405
      %v2415 = vmax.f32 %v2407, 0.0
      %v2416 = vmax.f32 %v2408, 0.0
      %v2417 = vmax.f32 %v2409, 0.0
      %v2418 = vmax.f32 %v2410, 0.0
      %v2419 = vmax.f32 %v2411, 0.0
      %v2420 = vmax.f32 %v2412, 0.0
      %v2421 = vmax.f32 %v2413, 0.0
      %v2422 = vmax.f32 %v2414, 0.0
      %v2423 = vpack.c.bf16 %v2415, %v2415
      %v2424 = vpack.c.bf16 %v2416, %v2416
      %v2425 = vpack.c.bf16 %v2417, %v2417
      %v2426 = vpack.c.bf16 %v2418, %v2418
      %v2427 = vpack.c.bf16 %v2419, %v2419
      %v2428 = vpack.c.bf16 %v2420, %v2420
      %v2429 = vpack.c.bf16 %v2421, %v2421
      %v2430 = vpack.c.bf16 %v2422, %v2422
      %s2431 = scalar_lea.vmem [#allocation3], 12
      %2432 = vst [vmem:[%s2431 + $0x4] sm:$0xf] %v2423
      %2433 = vst [vmem:[%s2431 + $0x10] sm:$0xf] %v2424
      %2434 = vst [vmem:[%s2431 + $0x1c] sm:$0xf] %v2425
      %2435 = vst [vmem:[%s2431 + $0x28] sm:$0xf] %v2426
      %2436 = vst [vmem:[%s2431 + $0x34] sm:$0xf] %v2427
      %2437 = vst [vmem:[%s2431 + $0x40] sm:$0xf] %v2428
      %2438 = vst [vmem:[%s2431 + $0x4c] sm:$0xf] %v2429
      %2439 = vst [vmem:[%s2431 + $0x58] sm:$0xf] %v2430
      %v2440 = vld [vmem:[#allocation3] sm:$0x8]
      %v2441 = vld [vmem:[#allocation3 + $0x4] sm:$0xf]
      %v2442 = vld [vmem:[#allocation3 + $0xc] sm:$0x8]
      %v2443 = vld [vmem:[#allocation3 + $0x10] sm:$0xf]
      %v2444 = vld [vmem:[#allocation3 + $0x18] sm:$0x8]
      %v2445 = vld [vmem:[#allocation3 + $0x1c] sm:$0xf]
      %v2446 = vld [vmem:[#allocation3 + $0x24] sm:$0x8]
      %v2447 = vld [vmem:[#allocation3 + $0x28] sm:$0xf]
      %v2448 = vld [vmem:[#allocation3 + $0x30] sm:$0x8]
      %v2449 = vld [vmem:[#allocation3 + $0x34] sm:$0xf]
      %v2450 = vld [vmem:[#allocation3 + $0x3c] sm:$0x8]
      %v2451 = vld [vmem:[#allocation3 + $0x40] sm:$0xf]
      %v2452 = vld [vmem:[#allocation3 + $0x48] sm:$0x8]
      %v2453 = vld [vmem:[#allocation3 + $0x4c] sm:$0xf]
      %v2454 = vld [vmem:[#allocation3 + $0x54] sm:$0x8]
      %v2455 = vld [vmem:[#allocation3 + $0x58] sm:$0xf]
      %v2457 = vshrl.u32 %v2440, 16
      %v2459 = vrot.slane %v2457, 7
      %v2460 = vrot.slane %v2459, 4
      %v2462 = vshrl.u32 %v2441, 16
      %v2464 = vrot.slane %v2462, 7
      %v2465 = vshll.u32 %v2441, 16
      %v2467 = vor.u32 %v2464, %v2465
      %v2468 = vsel %vm508, %v2460, %v2467
      %v2470 = vshrl.u32 %v2442, 16
      %v2472 = vrot.slane %v2470, 7
      %v2473 = vrot.slane %v2472, 4
      %v2475 = vshrl.u32 %v2443, 16
      %v2477 = vrot.slane %v2475, 7
      %v2478 = vshll.u32 %v2443, 16
      %v2480 = vor.u32 %v2477, %v2478
      %v2481 = vsel %vm508, %v2473, %v2480
      %v2483 = vshrl.u32 %v2444, 16
      %v2485 = vrot.slane %v2483, 7
      %v2486 = vrot.slane %v2485, 4
      %v2488 = vshrl.u32 %v2445, 16
      %v2490 = vrot.slane %v2488, 7
      %v2491 = vshll.u32 %v2445, 16
      %v2493 = vor.u32 %v2490, %v2491
      %v2494 = vsel %vm508, %v2486, %v2493
      %v2496 = vshrl.u32 %v2446, 16
      %v2498 = vrot.slane %v2496, 7
      %v2499 = vrot.slane %v2498, 4
      %v2501 = vshrl.u32 %v2447, 16
      %v2503 = vrot.slane %v2501, 7
      %v2504 = vshll.u32 %v2447, 16
      %v2506 = vor.u32 %v2503, %v2504
      %v2507 = vsel %vm508, %v2499, %v2506
      %v2509 = vshrl.u32 %v2448, 16
      %v2511 = vrot.slane %v2509, 7
      %v2512 = vrot.slane %v2511, 4
      %v2514 = vshrl.u32 %v2449, 16
      %v2516 = vrot.slane %v2514, 7
      %v2517 = vshll.u32 %v2449, 16
      %v2519 = vor.u32 %v2516, %v2517
      %v2520 = vsel %vm508, %v2512, %v2519
      %v2522 = vshrl.u32 %v2450, 16
      %v2524 = vrot.slane %v2522, 7
      %v2525 = vrot.slane %v2524, 4
      %v2527 = vshrl.u32 %v2451, 16
      %v2529 = vrot.slane %v2527, 7
      %v2530 = vshll.u32 %v2451, 16
      %v2532 = vor.u32 %v2529, %v2530
      %v2533 = vsel %vm508, %v2525, %v2532
      %v2535 = vshrl.u32 %v2452, 16
      %v2537 = vrot.slane %v2535, 7
      %v2538 = vrot.slane %v2537, 4
      %v2540 = vshrl.u32 %v2453, 16
      %v2542 = vrot.slane %v2540, 7
      %v2543 = vshll.u32 %v2453, 16
      %v2545 = vor.u32 %v2542, %v2543
      %v2546 = vsel %vm508, %v2538, %v2545
      %v2548 = vshrl.u32 %v2454, 16
      %v2550 = vrot.slane %v2548, 7
      %v2551 = vrot.slane %v2550, 4
      %v2553 = vshrl.u32 %v2455, 16
      %v2555 = vrot.slane %v2553, 7
      %v2556 = vshll.u32 %v2455, 16
      %v2558 = vor.u32 %v2555, %v2556
      %v2559 = vsel %vm508, %v2551, %v2558
      %v2560 = vld [vmem:[%s2431] sm:$0x8]
      %v2561 = vld [vmem:[%s2431 + $0x4] sm:$0xf]
      %v2562 = vld [vmem:[%s2431 + $0xc] sm:$0x8]
      %v2563 = vld [vmem:[%s2431 + $0x10] sm:$0xf]
      %v2564 = vld [vmem:[%s2431 + $0x18] sm:$0x8]
      %v2565 = vld [vmem:[%s2431 + $0x1c] sm:$0xf]
      %v2566 = vld [vmem:[%s2431 + $0x24] sm:$0x8]
      %v2567 = vld [vmem:[%s2431 + $0x28] sm:$0xf]
      %v2568 = vld [vmem:[%s2431 + $0x30] sm:$0x8]
      %v2569 = vld [vmem:[%s2431 + $0x34] sm:$0xf]
      %v2570 = vld [vmem:[%s2431 + $0x3c] sm:$0x8]
      %v2571 = vld [vmem:[%s2431 + $0x40] sm:$0xf]
      %v2572 = vld [vmem:[%s2431 + $0x48] sm:$0x8]
      %v2573 = vld [vmem:[%s2431 + $0x4c] sm:$0xf]
      %v2574 = vld [vmem:[%s2431 + $0x54] sm:$0x8]
      %v2575 = vld [vmem:[%s2431 + $0x58] sm:$0xf]
      %v2577 = vshrl.u32 %v2560, 16
      %v2579 = vrot.slane %v2577, 7
      %v2580 = vrot.slane %v2579, 4
      %v2582 = vshrl.u32 %v2561, 16
      %v2584 = vrot.slane %v2582, 7
      %v2585 = vshll.u32 %v2561, 16
      %v2587 = vor.u32 %v2584, %v2585
      %v2588 = vsel %vm508, %v2580, %v2587
      %v2590 = vshrl.u32 %v2562, 16
      %v2592 = vrot.slane %v2590, 7
      %v2593 = vrot.slane %v2592, 4
      %v2595 = vshrl.u32 %v2563, 16
      %v2597 = vrot.slane %v2595, 7
      %v2598 = vshll.u32 %v2563, 16
      %v2600 = vor.u32 %v2597, %v2598
      %v2601 = vsel %vm508, %v2593, %v2600
      %v2603 = vshrl.u32 %v2564, 16
      %v2605 = vrot.slane %v2603, 7
      %v2606 = vrot.slane %v2605, 4
      %v2608 = vshrl.u32 %v2565, 16
      %v2610 = vrot.slane %v2608, 7
      %v2611 = vshll.u32 %v2565, 16
      %v2613 = vor.u32 %v2610, %v2611
      %v2614 = vsel %vm508, %v2606, %v2613
      %v2616 = vshrl.u32 %v2566, 16
      %v2618 = vrot.slane %v2616, 7
      %v2619 = vrot.slane %v2618, 4
      %v2621 = vshrl.u32 %v2567, 16
      %v2623 = vrot.slane %v2621, 7
      %v2624 = vshll.u32 %v2567, 16
      %v2626 = vor.u32 %v2623, %v2624
      %v2627 = vsel %vm508, %v2619, %v2626
      %v2629 = vshrl.u32 %v2568, 16
      %v2631 = vrot.slane %v2629, 7
      %v2632 = vrot.slane %v2631, 4
      %v2634 = vshrl.u32 %v2569, 16
      %v2636 = vrot.slane %v2634, 7
      %v2637 = vshll.u32 %v2569, 16
      %v2639 = vor.u32 %v2636, %v2637
      %v2640 = vsel %vm508, %v2632, %v2639
      %v2642 = vshrl.u32 %v2570, 16
      %v2644 = vrot.slane %v2642, 7
      %v2645 = vrot.slane %v2644, 4
      %v2647 = vshrl.u32 %v2571, 16
      %v2649 = vrot.slane %v2647, 7
      %v2650 = vshll.u32 %v2571, 16
      %v2652 = vor.u32 %v2649, %v2650
      %v2653 = vsel %vm508, %v2645, %v2652
      %v2655 = vshrl.u32 %v2572, 16
      %v2657 = vrot.slane %v2655, 7
      %v2658 = vrot.slane %v2657, 4
      %v2660 = vshrl.u32 %v2573, 16
      %v2662 = vrot.slane %v2660, 7
      %v2663 = vshll.u32 %v2573, 16
      %v2665 = vor.u32 %v2662, %v2663
      %v2666 = vsel %vm508, %v2658, %v2665
      %v2668 = vshrl.u32 %v2574, 16
      %v2670 = vrot.slane %v2668, 7
      %v2671 = vrot.slane %v2670, 4
      %v2673 = vshrl.u32 %v2575, 16
      %v2675 = vrot.slane %v2673, 7
      %v2676 = vshll.u32 %v2575, 16
      %v2678 = vor.u32 %v2675, %v2676
      %v2679 = vsel %vm508, %v2671, %v2678
      %s2680 = scalar_lea.vmem [#allocation3], 24
      %v2681 = vld [vmem:[%s2680] sm:$0x8]
      %v2682 = vld [vmem:[%s2680 + $0x4] sm:$0xf]
      %v2683 = vld [vmem:[%s2680 + $0xc] sm:$0x8]
      %v2684 = vld [vmem:[%s2680 + $0x10] sm:$0xf]
      %v2685 = vld [vmem:[%s2680 + $0x18] sm:$0x8]
      %v2686 = vld [vmem:[%s2680 + $0x1c] sm:$0xf]
      %v2687 = vld [vmem:[%s2680 + $0x24] sm:$0x8]
      %v2688 = vld [vmem:[%s2680 + $0x28] sm:$0xf]
      %v2689 = vld [vmem:[%s2680 + $0x30] sm:$0x8]
      %v2690 = vld [vmem:[%s2680 + $0x34] sm:$0xf]
      %v2691 = vld [vmem:[%s2680 + $0x3c] sm:$0x8]
      %v2692 = vld [vmem:[%s2680 + $0x40] sm:$0xf]
      %v2693 = vld [vmem:[%s2680 + $0x48] sm:$0x8]
      %v2694 = vld [vmem:[%s2680 + $0x4c] sm:$0xf]
      %v2695 = vld [vmem:[%s2680 + $0x54] sm:$0x8]
      %v2696 = vld [vmem:[%s2680 + $0x58] sm:$0xf]
      %v2698 = vshrl.u32 %v2681, 16
      %v2700 = vrot.slane %v2698, 7
      %v2701 = vrot.slane %v2700, 4
      %v2703 = vshrl.u32 %v2682, 16
      %v2705 = vrot.slane %v2703, 7
      %v2706 = vshll.u32 %v2682, 16
      %v2708 = vor.u32 %v2705, %v2706
      %v2709 = vsel %vm508, %v2701, %v2708
      %v2711 = vshrl.u32 %v2683, 16
      %v2713 = vrot.slane %v2711, 7
      %v2714 = vrot.slane %v2713, 4
      %v2716 = vshrl.u32 %v2684, 16
      %v2718 = vrot.slane %v2716, 7
      %v2719 = vshll.u32 %v2684, 16
      %v2721 = vor.u32 %v2718, %v2719
      %v2722 = vsel %vm508, %v2714, %v2721
      %v2724 = vshrl.u32 %v2685, 16
      %v2726 = vrot.slane %v2724, 7
      %v2727 = vrot.slane %v2726, 4
      %v2729 = vshrl.u32 %v2686, 16
      %v2731 = vrot.slane %v2729, 7
      %v2732 = vshll.u32 %v2686, 16
      %v2734 = vor.u32 %v2731, %v2732
      %v2735 = vsel %vm508, %v2727, %v2734
      %v2737 = vshrl.u32 %v2687, 16
      %v2739 = vrot.slane %v2737, 7
      %v2740 = vrot.slane %v2739, 4
      %v2742 = vshrl.u32 %v2688, 16
      %v2744 = vrot.slane %v2742, 7
      %v2745 = vshll.u32 %v2688, 16
      %v2747 = vor.u32 %v2744, %v2745
      %v2748 = vsel %vm508, %v2740, %v2747
      %v2750 = vshrl.u32 %v2689, 16
      %v2752 = vrot.slane %v2750, 7
      %v2753 = vrot.slane %v2752, 4
      %v2755 = vshrl.u32 %v2690, 16
      %v2757 = vrot.slane %v2755, 7
      %v2758 = vshll.u32 %v2690, 16
      %v2760 = vor.u32 %v2757, %v2758
      %v2761 = vsel %vm508, %v2753, %v2760
      %v2763 = vshrl.u32 %v2691, 16
      %v2765 = vrot.slane %v2763, 7
      %v2766 = vrot.slane %v2765, 4
      %v2768 = vshrl.u32 %v2692, 16
      %v2770 = vrot.slane %v2768, 7
      %v2771 = vshll.u32 %v2692, 16
      %v2773 = vor.u32 %v2770, %v2771
      %v2774 = vsel %vm508, %v2766, %v2773
      %v2776 = vshrl.u32 %v2693, 16
      %v2778 = vrot.slane %v2776, 7
      %v2779 = vrot.slane %v2778, 4
      %v2781 = vshrl.u32 %v2694, 16
      %v2783 = vrot.slane %v2781, 7
      %v2784 = vshll.u32 %v2694, 16
      %v2786 = vor.u32 %v2783, %v2784
      %v2787 = vsel %vm508, %v2779, %v2786
      %v2789 = vshrl.u32 %v2695, 16
      %v2791 = vrot.slane %v2789, 7
      %v2792 = vrot.slane %v2791, 4
      %v2794 = vshrl.u32 %v2696, 16
      %v2796 = vrot.slane %v2794, 7
      %v2797 = vshll.u32 %v2696, 16
      %v2799 = vor.u32 %v2796, %v2797
      %v2800 = vsel %vm508, %v2792, %v2799
      %v2801 = vunpack.c.l.b16 %v2468
      %v2802 = vunpack.c.l.b16 %v2481
      %v2803 = vunpack.c.l.b16 %v2494
      %v2804 = vunpack.c.l.b16 %v2507
      %v2805 = vunpack.c.l.b16 %v2520
      %v2806 = vunpack.c.l.b16 %v2533
      %v2807 = vunpack.c.l.b16 %v2546
      %v2808 = vunpack.c.l.b16 %v2559
      %v2809 = vpack.c.b16 %v2802, %v2801
      %v2810 = vpack.c.b16 %v2804, %v2803
      %v2811 = vpack.c.b16 %v2806, %v2805
      %v2812 = vpack.c.b16 %v2808, %v2807
      %v2817 = vunpack.c.l.b16 %v2588
      %v2818 = vunpack.c.l.b16 %v2601
      %v2819 = vunpack.c.l.b16 %v2614
      %v2820 = vunpack.c.l.b16 %v2627
      %v2821 = vunpack.c.l.b16 %v2640
      %v2822 = vunpack.c.l.b16 %v2653
      %v2823 = vunpack.c.l.b16 %v2666
      %v2824 = vunpack.c.l.b16 %v2679
      %v2825 = vpack.c.b16 %v2818, %v2817
      %v2826 = vpack.c.b16 %v2820, %v2819
      %v2827 = vpack.c.b16 %v2822, %v2821
      %v2828 = vpack.c.b16 %v2824, %v2823
      %v2833 = vunpack.c.l.b16 %v2709
      %v2834 = vunpack.c.l.b16 %v2722
      %v2835 = vunpack.c.l.b16 %v2735
      %v2836 = vunpack.c.l.b16 %v2748
      %v2837 = vunpack.c.l.b16 %v2761
      %v2838 = vunpack.c.l.b16 %v2774
      %v2839 = vunpack.c.l.b16 %v2787
      %v2840 = vunpack.c.l.b16 %v2800
      %v2841 = vpack.c.b16 %v2834, %v2833
      %v2842 = vpack.c.b16 %v2836, %v2835
      %v2843 = vpack.c.b16 %v2838, %v2837
      %v2844 = vpack.c.b16 %v2840, %v2839
      %v2849 = vld [vmem:[%s6] sm:$0xf]
      %v2850 = vld [vmem:[%s6 + $0x4] sm:$0xf]
      %v2851 = vld [vmem:[%s6 + $0x8] sm:$0xf]
      %v2852 = vld [vmem:[%s6 + $0xc] sm:$0xf]
      %v2853 = vld [vmem:[%s6 + $0x10] sm:$0xf]
      %v2854 = vld [vmem:[%s6 + $0x14] sm:$0xf]
      %v2855 = vld [vmem:[%s6 + $0x18] sm:$0xf]
      %v2856 = vld [vmem:[%s6 + $0x1c] sm:$0xf]
      %v2857 = vld [vmem:[%s6 + $0x20] sm:$0xf]
      %v2858 = vld [vmem:[%s6 + $0x24] sm:$0xf]
      %v2859 = vld [vmem:[%s6 + $0x28] sm:$0xf]
      %v2860 = vld [vmem:[%s6 + $0x2c] sm:$0xf]
      %v2861 = vld [vmem:[%s6 + $0x30] sm:$0xf]
      %v2862 = vld [vmem:[%s6 + $0x34] sm:$0xf]
      %v2863 = vld [vmem:[%s6 + $0x38] sm:$0xf]
      %v2864 = vld [vmem:[%s6 + $0x3c] sm:$0xf]
      %v2865 = vld [vmem:[%s6 + $0x40] sm:$0xf]
      %v2866 = vld [vmem:[%s6 + $0x44] sm:$0xf]
      %v2867 = vld [vmem:[%s6 + $0x48] sm:$0xf]
      %v2868 = vld [vmem:[%s6 + $0x4c] sm:$0xf]
      %v2869 = vld [vmem:[%s6 + $0x50] sm:$0xf]
      %v2870 = vld [vmem:[%s6 + $0x54] sm:$0xf]
      %v2871 = vld [vmem:[%s6 + $0x58] sm:$0xf]
      %v2872 = vld [vmem:[%s6 + $0x5c] sm:$0xf]
      %v2873 = vld [vmem:[%s6 + $0x60] sm:$0xf]
      %v2874 = vld [vmem:[%s6 + $0x64] sm:$0xf]
      %v2875 = vld [vmem:[%s6 + $0x68] sm:$0xf]
      %v2876 = vld [vmem:[%s6 + $0x6c] sm:$0xf]
      %v2877 = vld [vmem:[%s6 + $0x70] sm:$0xf]
      %v2878 = vld [vmem:[%s6 + $0x74] sm:$0xf]
      %v2879 = vld [vmem:[%s6 + $0x78] sm:$0xf]
      %v2880 = vld [vmem:[%s6 + $0x7c] sm:$0xf]
      %v2881 = vld [vmem:[%s6 + $0x80] sm:$0xf]
      %v2882 = vld [vmem:[%s6 + $0x84] sm:$0xf]
      %v2883 = vld [vmem:[%s6 + $0x88] sm:$0xf]
      %v2884 = vld [vmem:[%s6 + $0x8c] sm:$0xf]
      %v2885 = vld [vmem:[%s6 + $0x90] sm:$0xf]
      %v2886 = vld [vmem:[%s6 + $0x94] sm:$0xf]
      %v2887 = vld [vmem:[%s6 + $0x98] sm:$0xf]
      %v2888 = vld [vmem:[%s6 + $0x9c] sm:$0xf]
      %v2889 = vld [vmem:[%s6 + $0xa0] sm:$0xf]
      %v2890 = vld [vmem:[%s6 + $0xa4] sm:$0xf]
      %v2891 = vld [vmem:[%s6 + $0xa8] sm:$0xf]
      %v2892 = vld [vmem:[%s6 + $0xac] sm:$0xf]
      %v2893 = vld [vmem:[%s6 + $0xb0] sm:$0xf]
      %v2894 = vld [vmem:[%s6 + $0xb4] sm:$0xf]
      %v2895 = vld [vmem:[%s6 + $0xb8] sm:$0xf]
      %v2896 = vld [vmem:[%s6 + $0xbc] sm:$0xf]
      %v2905 = vunpack.c.l.b16 %v2441
      %v2906 = vunpack.c.l.b16 %v2443
      %v2907 = vunpack.c.l.b16 %v2445
      %v2908 = vunpack.c.l.b16 %v2447
      %v2909 = vunpack.c.l.b16 %v2449
      %v2910 = vunpack.c.l.b16 %v2451
      %v2911 = vunpack.c.l.b16 %v2453
      %v2912 = vunpack.c.l.b16 %v2455
      %v2913 = vpack.c.b16 %v2906, %v2905
      %v2914 = vpack.c.b16 %v2908, %v2907
      %v2915 = vpack.c.b16 %v2910, %v2909
      %v2916 = vpack.c.b16 %v2912, %v2911
      %v2929 = vunpack.c.l.b16 %v2561
      %v2930 = vunpack.c.l.b16 %v2563
      %v2931 = vunpack.c.l.b16 %v2565
      %v2932 = vunpack.c.l.b16 %v2567
      %v2933 = vunpack.c.l.b16 %v2569
      %v2934 = vunpack.c.l.b16 %v2571
      %v2935 = vunpack.c.l.b16 %v2573
      %v2936 = vunpack.c.l.b16 %v2575
      %v2937 = vpack.c.b16 %v2930, %v2929
      %v2938 = vpack.c.b16 %v2932, %v2931
      %v2939 = vpack.c.b16 %v2934, %v2933
      %v2940 = vpack.c.b16 %v2936, %v2935
      %v2953 = vunpack.c.l.b16 %v2682
      %v2954 = vunpack.c.l.b16 %v2684
      %v2955 = vunpack.c.l.b16 %v2686
      %v2956 = vunpack.c.l.b16 %v2688
      %v2957 = vunpack.c.l.b16 %v2690
      %v2958 = vunpack.c.l.b16 %v2692
      %v2959 = vunpack.c.l.b16 %v2694
      %v2960 = vunpack.c.l.b16 %v2696
      %v2961 = vpack.c.b16 %v2954, %v2953
      %v2962 = vpack.c.b16 %v2956, %v2955
      %v2963 = vpack.c.b16 %v2958, %v2957
      %v2964 = vpack.c.b16 %v2960, %v2959
      %s2969 = scalar_lea.vmem %s6, 192
      %v2970 = vld [vmem:[%s2969] sm:$0xf]
      %v2971 = vld [vmem:[%s2969 + $0x4] sm:$0xf]
      %v2972 = vld [vmem:[%s2969 + $0x8] sm:$0xf]
      %v2973 = vld [vmem:[%s2969 + $0xc] sm:$0xf]
      %v2974 = vld [vmem:[%s2969 + $0x10] sm:$0xf]
      %v2975 = vld [vmem:[%s2969 + $0x14] sm:$0xf]
      %v2976 = vld [vmem:[%s2969 + $0x18] sm:$0xf]
      %v2977 = vld [vmem:[%s2969 + $0x1c] sm:$0xf]
      %v2978 = vld [vmem:[%s2969 + $0x20] sm:$0xf]
      %v2979 = vld [vmem:[%s2969 + $0x24] sm:$0xf]
      %v2980 = vld [vmem:[%s2969 + $0x28] sm:$0xf]
      %v2981 = vld [vmem:[%s2969 + $0x2c] sm:$0xf]
      %v2982 = vld [vmem:[%s2969 + $0x30] sm:$0xf]
      %v2983 = vld [vmem:[%s2969 + $0x34] sm:$0xf]
      %v2984 = vld [vmem:[%s2969 + $0x38] sm:$0xf]
      %v2985 = vld [vmem:[%s2969 + $0x3c] sm:$0xf]
      %v2986 = vld [vmem:[%s2969 + $0x40] sm:$0xf]
      %v2987 = vld [vmem:[%s2969 + $0x44] sm:$0xf]
      %v2988 = vld [vmem:[%s2969 + $0x48] sm:$0xf]
      %v2989 = vld [vmem:[%s2969 + $0x4c] sm:$0xf]
      %v2990 = vld [vmem:[%s2969 + $0x50] sm:$0xf]
      %v2991 = vld [vmem:[%s2969 + $0x54] sm:$0xf]
      %v2992 = vld [vmem:[%s2969 + $0x58] sm:$0xf]
      %v2993 = vld [vmem:[%s2969 + $0x5c] sm:$0xf]
      %v2994 = vld [vmem:[%s2969 + $0x60] sm:$0xf]
      %v2995 = vld [vmem:[%s2969 + $0x64] sm:$0xf]
      %v2996 = vld [vmem:[%s2969 + $0x68] sm:$0xf]
      %v2997 = vld [vmem:[%s2969 + $0x6c] sm:$0xf]
      %v2998 = vld [vmem:[%s2969 + $0x70] sm:$0xf]
      %v2999 = vld [vmem:[%s2969 + $0x74] sm:$0xf]
      %v3000 = vld [vmem:[%s2969 + $0x78] sm:$0xf]
      %v3001 = vld [vmem:[%s2969 + $0x7c] sm:$0xf]
      %v3002 = vld [vmem:[%s2969 + $0x80] sm:$0xf]
      %v3003 = vld [vmem:[%s2969 + $0x84] sm:$0xf]
      %v3004 = vld [vmem:[%s2969 + $0x88] sm:$0xf]
      %v3005 = vld [vmem:[%s2969 + $0x8c] sm:$0xf]
      %v3006 = vld [vmem:[%s2969 + $0x90] sm:$0xf]
      %v3007 = vld [vmem:[%s2969 + $0x94] sm:$0xf]
      %v3008 = vld [vmem:[%s2969 + $0x98] sm:$0xf]
      %v3009 = vld [vmem:[%s2969 + $0x9c] sm:$0xf]
      %v3010 = vld [vmem:[%s2969 + $0xa0] sm:$0xf]
      %v3011 = vld [vmem:[%s2969 + $0xa4] sm:$0xf]
      %v3012 = vld [vmem:[%s2969 + $0xa8] sm:$0xf]
      %v3013 = vld [vmem:[%s2969 + $0xac] sm:$0xf]
      %v3014 = vld [vmem:[%s2969 + $0xb0] sm:$0xf]
      %v3015 = vld [vmem:[%s2969 + $0xb4] sm:$0xf]
      %v3016 = vld [vmem:[%s2969 + $0xb8] sm:$0xf]
      %v3017 = vld [vmem:[%s2969 + $0xbc] sm:$0xf]
      %v3066 = vunpack.c.l.b16 %v2970
      %v3067 = vunpack.c.l.b16 %v2971
      %v3068 = vunpack.c.l.b16 %v2972
      %v3069 = vunpack.c.l.b16 %v2973
      %v3070 = vunpack.c.l.b16 %v2974
      %v3071 = vunpack.c.l.b16 %v2975
      %v3072 = vunpack.c.l.b16 %v2976
      %v3073 = vunpack.c.l.b16 %v2977
      %v3074 = vunpack.c.l.b16 %v2978
      %v3075 = vunpack.c.l.b16 %v2979
      %v3076 = vunpack.c.l.b16 %v2980
      %v3077 = vunpack.c.l.b16 %v2981
      %v3078 = vunpack.c.l.b16 %v2982
      %v3079 = vunpack.c.l.b16 %v2983
      %v3080 = vunpack.c.l.b16 %v2984
      %v3081 = vunpack.c.l.b16 %v2985
      %v3082 = vunpack.c.l.b16 %v2986
      %v3083 = vunpack.c.l.b16 %v2987
      %v3084 = vunpack.c.l.b16 %v2988
      %v3085 = vunpack.c.l.b16 %v2989
      %v3086 = vunpack.c.l.b16 %v2990
      %v3087 = vunpack.c.l.b16 %v2991
      %v3088 = vunpack.c.l.b16 %v2992
      %v3089 = vunpack.c.l.b16 %v2993
      %v3090 = vunpack.c.l.b16 %v2994
      %v3091 = vunpack.c.l.b16 %v2995
      %v3092 = vunpack.c.l.b16 %v2996
      %v3093 = vunpack.c.l.b16 %v2997
      %v3094 = vunpack.c.l.b16 %v2998
      %v3095 = vunpack.c.l.b16 %v2999
      %v3096 = vunpack.c.l.b16 %v3000
      %v3097 = vunpack.c.l.b16 %v3001
      %v3098 = vunpack.c.l.b16 %v3002
      %v3099 = vunpack.c.l.b16 %v3003
      %v3100 = vunpack.c.l.b16 %v3004
      %v3101 = vunpack.c.l.b16 %v3005
      %v3102 = vunpack.c.l.b16 %v3006
      %v3103 = vunpack.c.l.b16 %v3007
      %v3104 = vunpack.c.l.b16 %v3008
      %v3105 = vunpack.c.l.b16 %v3009
      %v3106 = vunpack.c.l.b16 %v3010
      %v3107 = vunpack.c.l.b16 %v3011
      %v3108 = vunpack.c.l.b16 %v3012
      %v3109 = vunpack.c.l.b16 %v3013
      %v3110 = vunpack.c.l.b16 %v3014
      %v3111 = vunpack.c.l.b16 %v3015
      %v3112 = vunpack.c.l.b16 %v3016
      %v3113 = vunpack.c.l.b16 %v3017
      %v3114 = vpack.c.b16 %v3067, %v3066
      %v3115 = vpack.c.b16 %v3069, %v3068
      %v3116 = vpack.c.b16 %v3071, %v3070
      %v3117 = vpack.c.b16 %v3073, %v3072
      %v3118 = vpack.c.b16 %v3075, %v3074
      %v3119 = vpack.c.b16 %v3077, %v3076
      %v3120 = vpack.c.b16 %v3079, %v3078
      %v3121 = vpack.c.b16 %v3081, %v3080
      %v3122 = vpack.c.b16 %v3083, %v3082
      %v3123 = vpack.c.b16 %v3085, %v3084
      %v3124 = vpack.c.b16 %v3087, %v3086
      %v3125 = vpack.c.b16 %v3089, %v3088
      %v3126 = vpack.c.b16 %v3091, %v3090
      %v3127 = vpack.c.b16 %v3093, %v3092
      %v3128 = vpack.c.b16 %v3095, %v3094
      %v3129 = vpack.c.b16 %v3097, %v3096
      %v3130 = vpack.c.b16 %v3099, %v3098
      %v3131 = vpack.c.b16 %v3101, %v3100
      %v3132 = vpack.c.b16 %v3103, %v3102
      %v3133 = vpack.c.b16 %v3105, %v3104
      %v3134 = vpack.c.b16 %v3107, %v3106
      %v3135 = vpack.c.b16 %v3109, %v3108
      %v3136 = vpack.c.b16 %v3111, %v3110
      %v3137 = vpack.c.b16 %v3113, %v3112
      %3162 = vmatprep.subr.bf16.mxu0 0
      %3163 = vmatpush1.bf16.msra.mxu0 %v3114
      %3164 = vmatprep.subr.bf16.mxu0 0
      %3165 = vmatpush1.bf16.msra.mxu0 %v3115
      %3166 = vmatprep.subr.bf16.mxu0 0
      %3167 = vmatpush1.bf16.msra.mxu0 %v3116
      %3168 = vmatprep.subr.bf16.mxu0 0
      %3169 = vmatpush1.bf16.msra.mxu0 %v3117
      %3170 = vmatprep.subr.bf16.mxu0 0
      %3171 = vmatpush1.bf16.msra.mxu0 %v3118
      %3172 = vmatprep.subr.bf16.mxu0 0
      %3173 = vmatpush1.bf16.msra.mxu0 %v3119
      %3174 = vmatprep.subr.bf16.mxu0 0
      %3175 = vmatpush1.bf16.msra.mxu0 %v3120
      %3176 = vmatprep.subr.bf16.mxu0 0
      %3177 = vmatpush1.bf16.msra.mxu0 %v3121
      %3178 = vmatprep.subr.bf16.mxu0 0
      %3179 = vmatpush1.bf16.msra.mxu0 %v3122
      %3180 = vmatprep.subr.bf16.mxu0 0
      %3181 = vmatpush1.bf16.msra.mxu0 %v3123
      %3182 = vmatprep.subr.bf16.mxu0 0
      %3183 = vmatpush1.bf16.msra.mxu0 %v3124
      %3184 = vmatprep.subr.bf16.mxu0 0
      %3185 = vmatpush1.bf16.msra.mxu0 %v3125
      %3186 = vmatprep.subr.bf16.mxu0 0
      %3187 = vmatpush1.bf16.msra.mxu0 %v3126
      %3188 = vmatprep.subr.bf16.mxu0 0
      %3189 = vmatpush1.bf16.msra.mxu0 %v3127
      %3190 = vmatprep.subr.bf16.mxu0 0
      %3191 = vmatpush1.bf16.msra.mxu0 %v3128
      %3192 = vmatprep.subr.bf16.mxu0 0
      %3193 = vmatpush1.bf16.msra.mxu0 %v3129
      %3194 = vmatprep.mubr.bf16.mxu0 %v2937
      %3195 = vmatmul.mubr.bf16.gmra.mrb[0].mxu0 %v2913
      %v3196 = vpop.f32.mrb[0].mxu0
      %v3197 = vadd.f32 0.0, %v3196
      %v3198 = vpop.f32.mrb[0].mxu0
      %v3199 = vpop.f32.mrb[0].mxu0
      %v3200 = vadd.f32 0.0, %v3199
      %v3201 = vpop.f32.mrb[0].mxu0
      %3202 = vmatprep.mubr.bf16.mxu0 %v2938
      %3203 = vmatmul.mubr.bf16.gmra.mrb[0].mxu0 %v2914
      %v3204 = vpop.f32.mrb[0].mxu0
      %v3205 = vadd.f32 0.0, %v3204
      %v3206 = vpop.f32.mrb[0].mxu0
      %v3207 = vpop.f32.mrb[0].mxu0
      %v3208 = vadd.f32 0.0, %v3207
      %v3209 = vpop.f32.mrb[0].mxu0
      %3210 = vmatprep.mubr.bf16.mxu0 %v2939
      %3211 = vmatmul.mubr.bf16.gmra.mrb[0].mxu0 %v2915
      %v3212 = vpop.f32.mrb[0].mxu0
      %v3213 = vadd.f32 0.0, %v3212
      %v3214 = vpop.f32.mrb[0].mxu0
      %v3215 = vpop.f32.mrb[0].mxu0
      %v3216 = vadd.f32 0.0, %v3215
      %v3217 = vpop.f32.mrb[0].mxu0
      %3218 = vmatprep.mubr.bf16.mxu0 %v2940
      %3219 = vmatmul.mubr.bf16.gmra.mrb[0].mxu0 %v2916
      %v3220 = vpop.f32.mrb[0].mxu0
      %v3221 = vadd.f32 0.0, %v3220
      %v3222 = vpop.f32.mrb[0].mxu0
      %v3223 = vpop.f32.mrb[0].mxu0
      %v3224 = vadd.f32 0.0, %v3223
      %v3225 = vpop.f32.mrb[0].mxu0
      %3226 = vdwg.mxu0
      %3227 = vmatprep.subr.bf16.mxu0 0
      %3228 = vmatpush1.bf16.msra.mxu0 %v3130
      %3229 = vmatprep.subr.bf16.mxu0 0
      %3230 = vmatpush1.bf16.msra.mxu0 %v3131
      %3231 = vmatprep.subr.bf16.mxu0 0
      %3232 = vmatpush1.bf16.msra.mxu0 %v3132
      %3233 = vmatprep.subr.bf16.mxu0 0
      %3234 = vmatpush1.bf16.msra.mxu0 %v3133
      %3235 = vmatprep.subr.bf16.mxu0 0
      %3236 = vmatpush1.bf16.msra.mxu0 %v3134
      %3237 = vmatprep.subr.bf16.mxu0 0
      %3238 = vmatpush1.bf16.msra.mxu0 %v3135
      %3239 = vmatprep.subr.bf16.mxu0 0
      %3240 = vmatpush1.bf16.msra.mxu0 %v3136
      %3241 = vmatprep.subr.bf16.mxu0 0
      %3242 = vmatpush1.bf16.msra.mxu0 %v3137
      %3243 = vmatprep.subr.bf16.mxu0 0
      %3244 = vmatpush1.bf16.msra.mxu0 0
      %3245 = vmatprep.subr.bf16.mxu0 0
      %3246 = vmatpush1.bf16.msra.mxu0 0
      %3247 = vmatprep.subr.bf16.mxu0 0
      %3248 = vmatpush1.bf16.msra.mxu0 0
      %3249 = vmatprep.subr.bf16.mxu0 0
      %3250 = vmatpush1.bf16.msra.mxu0 0
      %3251 = vmatprep.subr.bf16.mxu0 0
      %3252 = vmatpush1.bf16.msra.mxu0 0
      %3253 = vmatprep.subr.bf16.mxu0 0
      %3254 = vmatpush1.bf16.msra.mxu0 0
      %3255 = vmatprep.subr.bf16.mxu0 0
      %3256 = vmatpush1.bf16.msra.mxu0 0
      %3257 = vmatprep.subr.bf16.mxu0 0
      %3258 = vmatpush1.bf16.msra.mxu0 0
      %3259 = vmatprep.mubr.bf16.mxu0 0
      %3260 = vmatmul.mubr.bf16.gmra.mrb[0].mxu0 %v2961
      %v3261 = vpop.f32.mrb[0].mxu0
      %v3262 = vadd.f32 %v3197, %v3261
      %v3263 = vpop.f32.mrb[0].mxu0
      %v3264 = vpop.f32.mrb[0].mxu0
      %v3265 = vadd.f32 %v3200, %v3264
      %v3266 = vpop.f32.mrb[0].mxu0
      %3267 = vmatprep.mubr.bf16.mxu0 0
      %3268 = vmatmul.mubr.bf16.gmra.mrb[0].mxu0 %v2962
      %v3269 = vpop.f32.mrb[0].mxu0
      %v3270 = vadd.f32 %v3205, %v3269
      %v3271 = vpop.f32.mrb[0].mxu0
      %v3272 = vpop.f32.mrb[0].mxu0
      %v3273 = vadd.f32 %v3208, %v3272
      %v3274 = vpop.f32.mrb[0].mxu0
      %3275 = vmatprep.mubr.bf16.mxu0 0
      %3276 = vmatmul.mubr.bf16.gmra.mrb[0].mxu0 %v2963
      %v3277 = vpop.f32.mrb[0].mxu0
      %v3278 = vadd.f32 %v3213, %v3277
      %v3279 = vpop.f32.mrb[0].mxu0
      %v3280 = vpop.f32.mrb[0].mxu0
      %v3281 = vadd.f32 %v3216, %v3280
      %v3282 = vpop.f32.mrb[0].mxu0
      %3283 = vmatprep.mubr.bf16.mxu0 0
      %3284 = vmatmul.mubr.bf16.gmra.mrb[0].mxu0 %v2964
      %v3285 = vpop.f32.mrb[0].mxu0
      %v3286 = vadd.f32 %v3221, %v3285
      %v3287 = vpop.f32.mrb[0].mxu0
      %v3288 = vpop.f32.mrb[0].mxu0
      %v3289 = vadd.f32 %v3224, %v3288
      %v3290 = vpop.f32.mrb[0].mxu0
      %3291 = vdwg.mxu0
      %v3340 = vunpack.c.l.b16 %v2849
      %v3341 = vunpack.c.l.b16 %v2850
      %v3342 = vunpack.c.l.b16 %v2851
      %v3343 = vunpack.c.l.b16 %v2852
      %v3344 = vunpack.c.l.b16 %v2853
      %v3345 = vunpack.c.l.b16 %v2854
      %v3346 = vunpack.c.l.b16 %v2855
      %v3347 = vunpack.c.l.b16 %v2856
      %v3348 = vunpack.c.l.b16 %v2857
      %v3349 = vunpack.c.l.b16 %v2858
      %v3350 = vunpack.c.l.b16 %v2859
      %v3351 = vunpack.c.l.b16 %v2860
      %v3352 = vunpack.c.l.b16 %v2861
      %v3353 = vunpack.c.l.b16 %v2862
      %v3354 = vunpack.c.l.b16 %v2863
      %v3355 = vunpack.c.l.b16 %v2864
      %v3356 = vunpack.c.l.b16 %v2865
      %v3357 = vunpack.c.l.b16 %v2866
      %v3358 = vunpack.c.l.b16 %v2867
      %v3359 = vunpack.c.l.b16 %v2868
      %v3360 = vunpack.c.l.b16 %v2869
      %v3361 = vunpack.c.l.b16 %v2870
      %v3362 = vunpack.c.l.b16 %v2871
      %v3363 = vunpack.c.l.b16 %v2872
      %v3364 = vunpack.c.l.b16 %v2873
      %v3365 = vunpack.c.l.b16 %v2874
      %v3366 = vunpack.c.l.b16 %v2875
      %v3367 = vunpack.c.l.b16 %v2876
      %v3368 = vunpack.c.l.b16 %v2877
      %v3369 = vunpack.c.l.b16 %v2878
      %v3370 = vunpack.c.l.b16 %v2879
      %v3371 = vunpack.c.l.b16 %v2880
      %v3372 = vunpack.c.l.b16 %v2881
      %v3373 = vunpack.c.l.b16 %v2882
      %v3374 = vunpack.c.l.b16 %v2883
      %v3375 = vunpack.c.l.b16 %v2884
      %v3376 = vunpack.c.l.b16 %v2885
      %v3377 = vunpack.c.l.b16 %v2886
      %v3378 = vunpack.c.l.b16 %v2887
      %v3379 = vunpack.c.l.b16 %v2888
      %v3380 = vunpack.c.l.b16 %v2889
      %v3381 = vunpack.c.l.b16 %v2890
      %v3382 = vunpack.c.l.b16 %v2891
      %v3383 = vunpack.c.l.b16 %v2892
      %v3384 = vunpack.c.l.b16 %v2893
      %v3385 = vunpack.c.l.b16 %v2894
      %v3386 = vunpack.c.l.b16 %v2895
      %v3387 = vunpack.c.l.b16 %v2896
      %v3388 = vpack.c.b16 %v3341, %v3340
      %v3389 = vpack.c.b16 %v3343, %v3342
      %v3390 = vpack.c.b16 %v3345, %v3344
      %v3391 = vpack.c.b16 %v3347, %v3346
      %v3392 = vpack.c.b16 %v3349, %v3348
      %v3393 = vpack.c.b16 %v3351, %v3350
      %v3394 = vpack.c.b16 %v3353, %v3352
      %v3395 = vpack.c.b16 %v3355, %v3354
      %v3396 = vpack.c.b16 %v3357, %v3356
      %v3397 = vpack.c.b16 %v3359, %v3358
      %v3398 = vpack.c.b16 %v3361, %v3360
      %v3399 = vpack.c.b16 %v3363, %v3362
      %v3400 = vpack.c.b16 %v3365, %v3364
      %v3401 = vpack.c.b16 %v3367, %v3366
      %v3402 = vpack.c.b16 %v3369, %v3368
      %v3403 = vpack.c.b16 %v3371, %v3370
      %v3404 = vpack.c.b16 %v3373, %v3372
      %v3405 = vpack.c.b16 %v3375, %v3374
      %v3406 = vpack.c.b16 %v3377, %v3376
      %v3407 = vpack.c.b16 %v3379, %v3378
      %v3408 = vpack.c.b16 %v3381, %v3380
      %v3409 = vpack.c.b16 %v3383, %v3382
      %v3410 = vpack.c.b16 %v3385, %v3384
      %v3411 = vpack.c.b16 %v3387, %v3386
      %3436 = vmatprep.subr.bf16.mxu0 0
      %3437 = vmatpush1.bf16.msra.mxu0 %v3388
      %3438 = vmatprep.subr.bf16.mxu0 0
      %3439 = vmatpush1.bf16.msra.mxu0 %v3389
      %3440 = vmatprep.subr.bf16.mxu0 0
      %3441 = vmatpush1.bf16.msra.mxu0 %v3390
      %3442 = vmatprep.subr.bf16.mxu0 0
      %3443 = vmatpush1.bf16.msra.mxu0 %v3391
      %3444 = vmatprep.subr.bf16.mxu0 0
      %3445 = vmatpush1.bf16.msra.mxu0 %v3392
      %3446 = vmatprep.subr.bf16.mxu0 0
      %3447 = vmatpush1.bf16.msra.mxu0 %v3393
      %3448 = vmatprep.subr.bf16.mxu0 0
      %3449 = vmatpush1.bf16.msra.mxu0 %v3394
      %3450 = vmatprep.subr.bf16.mxu0 0
      %3451 = vmatpush1.bf16.msra.mxu0 %v3395
      %3452 = vmatprep.subr.bf16.mxu0 0
      %3453 = vmatpush1.bf16.msra.mxu0 %v3396
      %3454 = vmatprep.subr.bf16.mxu0 0
      %3455 = vmatpush1.bf16.msra.mxu0 %v3397
      %3456 = vmatprep.subr.bf16.mxu0 0
      %3457 = vmatpush1.bf16.msra.mxu0 %v3398
      %3458 = vmatprep.subr.bf16.mxu0 0
      %3459 = vmatpush1.bf16.msra.mxu0 %v3399
      %3460 = vmatprep.subr.bf16.mxu0 0
      %3461 = vmatpush1.bf16.msra.mxu0 %v3400
      %3462 = vmatprep.subr.bf16.mxu0 0
      %3463 = vmatpush1.bf16.msra.mxu0 %v3401
      %3464 = vmatprep.subr.bf16.mxu0 0
      %3465 = vmatpush1.bf16.msra.mxu0 %v3402
      %3466 = vmatprep.subr.bf16.mxu0 0
      %3467 = vmatpush1.bf16.msra.mxu0 %v3403
      %3468 = vmatprep.mubr.bf16.mxu0 %v2825
      %3469 = vmatmul.mubr.bf16.gmra.mrb[0].mxu0 %v2809
      %v3470 = vpop.f32.mrb[0].mxu0
      %v3471 = vadd.f32 %v3262, %v3470
      %v3472 = vpop.f32.mrb[0].mxu0
      %v3473 = vpop.f32.mrb[0].mxu0
      %v3474 = vadd.f32 %v3265, %v3473
      %v3475 = vpop.f32.mrb[0].mxu0
      %3476 = vmatprep.mubr.bf16.mxu0 %v2826
      %3477 = vmatmul.mubr.bf16.gmra.mrb[0].mxu0 %v2810
      %v3478 = vpop.f32.mrb[0].mxu0
      %v3479 = vadd.f32 %v3270, %v3478
      %v3480 = vpop.f32.mrb[0].mxu0
      %v3481 = vpop.f32.mrb[0].mxu0
      %v3482 = vadd.f32 %v3273, %v3481
      %v3483 = vpop.f32.mrb[0].mxu0
      %3484 = vmatprep.mubr.bf16.mxu0 %v2827
      %3485 = vmatmul.mubr.bf16.gmra.mrb[0].mxu0 %v2811
      %v3486 = vpop.f32.mrb[0].mxu0
      %v3487 = vadd.f32 %v3278, %v3486
      %v3488 = vpop.f32.mrb[0].mxu0
      %v3489 = vpop.f32.mrb[0].mxu0
      %v3490 = vadd.f32 %v3281, %v3489
      %v3491 = vpop.f32.mrb[0].mxu0
      %3492 = vmatprep.mubr.bf16.mxu0 %v2828
      %3493 = vmatmul.mubr.bf16.gmra.mrb[0].mxu0 %v2812
      %v3494 = vpop.f32.mrb[0].mxu0
      %v3495 = vadd.f32 %v3286, %v3494
      %v3496 = vpop.f32.mrb[0].mxu0
      %v3497 = vpop.f32.mrb[0].mxu0
      %v3498 = vadd.f32 %v3289, %v3497
      %v3499 = vpop.f32.mrb[0].mxu0
      %3500 = vdwg.mxu0
      %3501 = vmatprep.subr.bf16.mxu0 0
      %3502 = vmatpush1.bf16.msra.mxu0 %v3404
      %3503 = vmatprep.subr.bf16.mxu0 0
      %3504 = vmatpush1.bf16.msra.mxu0 %v3405
      %3505 = vmatprep.subr.bf16.mxu0 0
      %3506 = vmatpush1.bf16.msra.mxu0 %v3406
      %3507 = vmatprep.subr.bf16.mxu0 0
      %3508 = vmatpush1.bf16.msra.mxu0 %v3407
      %3509 = vmatprep.subr.bf16.mxu0 0
      %3510 = vmatpush1.bf16.msra.mxu0 %v3408
      %3511 = vmatprep.subr.bf16.mxu0 0
      %3512 = vmatpush1.bf16.msra.mxu0 %v3409
      %3513 = vmatprep.subr.bf16.mxu0 0
      %3514 = vmatpush1.bf16.msra.mxu0 %v3410
      %3515 = vmatprep.subr.bf16.mxu0 0
      %3516 = vmatpush1.bf16.msra.mxu0 %v3411
      %3517 = vmatprep.subr.bf16.mxu0 0
      %3518 = vmatpush1.bf16.msra.mxu0 0
      %3519 = vmatprep.subr.bf16.mxu0 0
      %3520 = vmatpush1.bf16.msra.mxu0 0
      %3521 = vmatprep.subr.bf16.mxu0 0
      %3522 = vmatpush1.bf16.msra.mxu0 0
      %3523 = vmatprep.subr.bf16.mxu0 0
      %3524 = vmatpush1.bf16.msra.mxu0 0
      %3525 = vmatprep.subr.bf16.mxu0 0
      %3526 = vmatpush1.bf16.msra.mxu0 0
      %3527 = vmatprep.subr.bf16.mxu0 0
      %3528 = vmatpush1.bf16.msra.mxu0 0
      %3529 = vmatprep.subr.bf16.mxu0 0
      %3530 = vmatpush1.bf16.msra.mxu0 0
      %3531 = vmatprep.subr.bf16.mxu0 0
      %3532 = vmatpush1.bf16.msra.mxu0 0
      %3533 = vmatprep.mubr.bf16.mxu0 0
      %3534 = vmatmul.mubr.bf16.gmra.mrb[0].mxu0 %v2841
      %v3535 = vpop.f32.mrb[0].mxu0
      %v3536 = vadd.f32 %v3471, %v3535
      %v3537 = vpop.f32.mrb[0].mxu0
      %v3538 = vpop.f32.mrb[0].mxu0
      %v3539 = vadd.f32 %v3474, %v3538
      %v3540 = vpop.f32.mrb[0].mxu0
      %3541 = vmatprep.mubr.bf16.mxu0 0
      %3542 = vmatmul.mubr.bf16.gmra.mrb[0].mxu0 %v2842
      %v3543 = vpop.f32.mrb[0].mxu0
      %v3544 = vadd.f32 %v3479, %v3543
      %v3545 = vpop.f32.mrb[0].mxu0
      %v3546 = vpop.f32.mrb[0].mxu0
      %v3547 = vadd.f32 %v3482, %v3546
      %v3548 = vpop.f32.mrb[0].mxu0
      %3549 = vmatprep.mubr.bf16.mxu0 0
      %3550 = vmatmul.mubr.bf16.gmra.mrb[0].mxu0 %v2843
      %v3551 = vpop.f32.mrb[0].mxu0
      %v3552 = vadd.f32 %v3487, %v3551
      %v3553 = vpop.f32.mrb[0].mxu0
      %v3554 = vpop.f32.mrb[0].mxu0
      %v3555 = vadd.f32 %v3490, %v3554
      %v3556 = vpop.f32.mrb[0].mxu0
      %3557 = vmatprep.mubr.bf16.mxu0 0
      %3558 = vmatmul.mubr.bf16.gmra.mrb[0].mxu0 %v2844
      %v3559 = vpop.f32.mrb[0].mxu0
      %v3560 = vadd.f32 %v3495, %v3559
      %v3561 = vpop.f32.mrb[0].mxu0
      %v3562 = vpop.f32.mrb[0].mxu0
      %v3563 = vadd.f32 %v3498, %v3562
      %v3564 = vpop.f32.mrb[0].mxu0
      %3565 = vdwg.mxu0
      %v3566 = vld [vmem:[#allocation3 + $0x4] sm:$0xf]
      %v3567 = vld [vmem:[#allocation3 + $0x8] sm:$0x1]
      %v3568 = vld [vmem:[#allocation3 + $0x10] sm:$0xf]
      %v3569 = vld [vmem:[#allocation3 + $0x14] sm:$0x1]
      %v3570 = vld [vmem:[#allocation3 + $0x1c] sm:$0xf]
      %v3571 = vld [vmem:[#allocation3 + $0x20] sm:$0x1]
      %v3572 = vld [vmem:[#allocation3 + $0x28] sm:$0xf]
      %v3573 = vld [vmem:[#allocation3 + $0x2c] sm:$0x1]
      %v3574 = vld [vmem:[#allocation3 + $0x34] sm:$0xf]
      %v3575 = vld [vmem:[#allocation3 + $0x38] sm:$0x1]
      %v3576 = vld [vmem:[#allocation3 + $0x40] sm:$0xf]
      %v3577 = vld [vmem:[#allocation3 + $0x44] sm:$0x1]
      %v3578 = vld [vmem:[#allocation3 + $0x4c] sm:$0xf]
      %v3579 = vld [vmem:[#allocation3 + $0x50] sm:$0x1]
      %v3580 = vld [vmem:[#allocation3 + $0x58] sm:$0xf]
      %v3581 = vld [vmem:[#allocation3 + $0x5c] sm:$0x1]
      %v3583 = vshrl.u32 %v3566, 16
      %v3585 = vrot.slane %v3583, 4
      %v3586 = vshll.u32 %v3566, 16
      %v3588 = vrot.slane %v3586, 5
      %v3589 = vor.u32 %v3585, %v3588
      %v3590 = vrot.slane %v3589, 4
      %v3592 = vshll.u32 %v3567, 16
      %v3594 = vrot.slane %v3592, 5
      %v3595 = vsel %vm1637, %v3590, %v3594
      %v3597 = vshrl.u32 %v3568, 16
      %v3599 = vrot.slane %v3597, 4
      %v3600 = vshll.u32 %v3568, 16
      %v3602 = vrot.slane %v3600, 5
      %v3603 = vor.u32 %v3599, %v3602
      %v3604 = vrot.slane %v3603, 4
      %v3606 = vshll.u32 %v3569, 16
      %v3608 = vrot.slane %v3606, 5
      %v3609 = vsel %vm1637, %v3604, %v3608
      %v3611 = vshrl.u32 %v3570, 16
      %v3613 = vrot.slane %v3611, 4
      %v3614 = vshll.u32 %v3570, 16
      %v3616 = vrot.slane %v3614, 5
      %v3617 = vor.u32 %v3613, %v3616
      %v3618 = vrot.slane %v3617, 4
      %v3620 = vshll.u32 %v3571, 16
      %v3622 = vrot.slane %v3620, 5
      %v3623 = vsel %vm1637, %v3618, %v3622
      %v3625 = vshrl.u32 %v3572, 16
      %v3627 = vrot.slane %v3625, 4
      %v3628 = vshll.u32 %v3572, 16
      %v3630 = vrot.slane %v3628, 5
      %v3631 = vor.u32 %v3627, %v3630
      %v3632 = vrot.slane %v3631, 4
      %v3634 = vshll.u32 %v3573, 16
      %v3636 = vrot.slane %v3634, 5
      %v3637 = vsel %vm1637, %v3632, %v3636
      %v3639 = vshrl.u32 %v3574, 16
      %v3641 = vrot.slane %v3639, 4
      %v3642 = vshll.u32 %v3574, 16
      %v3644 = vrot.slane %v3642, 5
      %v3645 = vor.u32 %v3641, %v3644
      %v3646 = vrot.slane %v3645, 4
      %v3648 = vshll.u32 %v3575, 16
      %v3650 = vrot.slane %v3648, 5
      %v3651 = vsel %vm1637, %v3646, %v3650
      %v3653 = vshrl.u32 %v3576, 16
      %v3655 = vrot.slane %v3653, 4
      %v3656 = vshll.u32 %v3576, 16
      %v3658 = vrot.slane %v3656, 5
      %v3659 = vor.u32 %v3655, %v3658
      %v3660 = vrot.slane %v3659, 4
      %v3662 = vshll.u32 %v3577, 16
      %v3664 = vrot.slane %v3662, 5
      %v3665 = vsel %vm1637, %v3660, %v3664
      %v3667 = vshrl.u32 %v3578, 16
      %v3669 = vrot.slane %v3667, 4
      %v3670 = vshll.u32 %v3578, 16
      %v3672 = vrot.slane %v3670, 5
      %v3673 = vor.u32 %v3669, %v3672
      %v3674 = vrot.slane %v3673, 4
      %v3676 = vshll.u32 %v3579, 16
      %v3678 = vrot.slane %v3676, 5
      %v3679 = vsel %vm1637, %v3674, %v3678
      %v3681 = vshrl.u32 %v3580, 16
      %v3683 = vrot.slane %v3681, 4
      %v3684 = vshll.u32 %v3580, 16
      %v3686 = vrot.slane %v3684, 5
      %v3687 = vor.u32 %v3683, %v3686
      %v3688 = vrot.slane %v3687, 4
      %v3690 = vshll.u32 %v3581, 16
      %v3692 = vrot.slane %v3690, 5
      %v3693 = vsel %vm1637, %v3688, %v3692
      %v3694 = vld [vmem:[%s2431 + $0x4] sm:$0xf]
      %v3695 = vld [vmem:[%s2431 + $0x8] sm:$0x1]
      %v3696 = vld [vmem:[%s2431 + $0x10] sm:$0xf]
      %v3697 = vld [vmem:[%s2431 + $0x14] sm:$0x1]
      %v3698 = vld [vmem:[%s2431 + $0x1c] sm:$0xf]
      %v3699 = vld [vmem:[%s2431 + $0x20] sm:$0x1]
      %v3700 = vld [vmem:[%s2431 + $0x28] sm:$0xf]
      %v3701 = vld [vmem:[%s2431 + $0x2c] sm:$0x1]
      %v3702 = vld [vmem:[%s2431 + $0x34] sm:$0xf]
      %v3703 = vld [vmem:[%s2431 + $0x38] sm:$0x1]
      %v3704 = vld [vmem:[%s2431 + $0x40] sm:$0xf]
      %v3705 = vld [vmem:[%s2431 + $0x44] sm:$0x1]
      %v3706 = vld [vmem:[%s2431 + $0x4c] sm:$0xf]
      %v3707 = vld [vmem:[%s2431 + $0x50] sm:$0x1]
      %v3708 = vld [vmem:[%s2431 + $0x58] sm:$0xf]
      %v3709 = vld [vmem:[%s2431 + $0x5c] sm:$0x1]
      %v3711 = vshrl.u32 %v3694, 16
      %v3713 = vrot.slane %v3711, 4
      %v3714 = vshll.u32 %v3694, 16
      %v3716 = vrot.slane %v3714, 5
      %v3717 = vor.u32 %v3713, %v3716
      %v3718 = vrot.slane %v3717, 4
      %v3720 = vshll.u32 %v3695, 16
      %v3722 = vrot.slane %v3720, 5
      %v3723 = vsel %vm1637, %v3718, %v3722
      %v3725 = vshrl.u32 %v3696, 16
      %v3727 = vrot.slane %v3725, 4
      %v3728 = vshll.u32 %v3696, 16
      %v3730 = vrot.slane %v3728, 5
      %v3731 = vor.u32 %v3727, %v3730
      %v3732 = vrot.slane %v3731, 4
      %v3734 = vshll.u32 %v3697, 16
      %v3736 = vrot.slane %v3734, 5
      %v3737 = vsel %vm1637, %v3732, %v3736
      %v3739 = vshrl.u32 %v3698, 16
      %v3741 = vrot.slane %v3739, 4
      %v3742 = vshll.u32 %v3698, 16
      %v3744 = vrot.slane %v3742, 5
      %v3745 = vor.u32 %v3741, %v3744
      %v3746 = vrot.slane %v3745, 4
      %v3748 = vshll.u32 %v3699, 16
      %v3750 = vrot.slane %v3748, 5
      %v3751 = vsel %vm1637, %v3746, %v3750
      %v3753 = vshrl.u32 %v3700, 16
      %v3755 = vrot.slane %v3753, 4
      %v3756 = vshll.u32 %v3700, 16
      %v3758 = vrot.slane %v3756, 5
      %v3759 = vor.u32 %v3755, %v3758
      %v3760 = vrot.slane %v3759, 4
      %v3762 = vshll.u32 %v3701, 16
      %v3764 = vrot.slane %v3762, 5
      %v3765 = vsel %vm1637, %v3760, %v3764
      %v3767 = vshrl.u32 %v3702, 16
      %v3769 = vrot.slane %v3767, 4
      %v3770 = vshll.u32 %v3702, 16
      %v3772 = vrot.slane %v3770, 5
      %v3773 = vor.u32 %v3769, %v3772
      %v3774 = vrot.slane %v3773, 4
      %v3776 = vshll.u32 %v3703, 16
      %v3778 = vrot.slane %v3776, 5
      %v3779 = vsel %vm1637, %v3774, %v3778
      %v3781 = vshrl.u32 %v3704, 16
      %v3783 = vrot.slane %v3781, 4
      %v3784 = vshll.u32 %v3704, 16
      %v3786 = vrot.slane %v3784, 5
      %v3787 = vor.u32 %v3783, %v3786
      %v3788 = vrot.slane %v3787, 4
      %v3790 = vshll.u32 %v3705, 16
      %v3792 = vrot.slane %v3790, 5
      %v3793 = vsel %vm1637, %v3788, %v3792
      %v3795 = vshrl.u32 %v3706, 16
      %v3797 = vrot.slane %v3795, 4
      %v3798 = vshll.u32 %v3706, 16
      %v3800 = vrot.slane %v3798, 5
      %v3801 = vor.u32 %v3797, %v3800
      %v3802 = vrot.slane %v3801, 4
      %v3804 = vshll.u32 %v3707, 16
      %v3806 = vrot.slane %v3804, 5
      %v3807 = vsel %vm1637, %v3802, %v3806
      %v3809 = vshrl.u32 %v3708, 16
      %v3811 = vrot.slane %v3809, 4
      %v3812 = vshll.u32 %v3708, 16
      %v3814 = vrot.slane %v3812, 5
      %v3815 = vor.u32 %v3811, %v3814
      %v3816 = vrot.slane %v3815, 4
      %v3818 = vshll.u32 %v3709, 16
      %v3820 = vrot.slane %v3818, 5
      %v3821 = vsel %vm1637, %v3816, %v3820
      %v3822 = vld [vmem:[%s2680 + $0x4] sm:$0xf]
      %v3823 = vld [vmem:[%s2680 + $0x8] sm:$0x1]
      %v3824 = vld [vmem:[%s2680 + $0x10] sm:$0xf]
      %v3825 = vld [vmem:[%s2680 + $0x14] sm:$0x1]
      %v3826 = vld [vmem:[%s2680 + $0x1c] sm:$0xf]
      %v3827 = vld [vmem:[%s2680 + $0x20] sm:$0x1]
      %v3828 = vld [vmem:[%s2680 + $0x28] sm:$0xf]
      %v3829 = vld [vmem:[%s2680 + $0x2c] sm:$0x1]
      %v3830 = vld [vmem:[%s2680 + $0x34] sm:$0xf]
      %v3831 = vld [vmem:[%s2680 + $0x38] sm:$0x1]
      %v3832 = vld [vmem:[%s2680 + $0x40] sm:$0xf]
      %v3833 = vld [vmem:[%s2680 + $0x44] sm:$0x1]
      %v3834 = vld [vmem:[%s2680 + $0x4c] sm:$0xf]
      %v3835 = vld [vmem:[%s2680 + $0x50] sm:$0x1]
      %v3836 = vld [vmem:[%s2680 + $0x58] sm:$0xf]
      %v3837 = vld [vmem:[%s2680 + $0x5c] sm:$0x1]
      %v3839 = vshrl.u32 %v3822, 16
      %v3841 = vrot.slane %v3839, 4
      %v3842 = vshll.u32 %v3822, 16
      %v3844 = vrot.slane %v3842, 5
      %v3845 = vor.u32 %v3841, %v3844
      %v3846 = vrot.slane %v3845, 4
      %v3848 = vshll.u32 %v3823, 16
      %v3850 = vrot.slane %v3848, 5
      %v3851 = vsel %vm1637, %v3846, %v3850
      %v3853 = vshrl.u32 %v3824, 16
      %v3855 = vrot.slane %v3853, 4
      %v3856 = vshll.u32 %v3824, 16
      %v3858 = vrot.slane %v3856, 5
      %v3859 = vor.u32 %v3855, %v3858
      %v3860 = vrot.slane %v3859, 4
      %v3862 = vshll.u32 %v3825, 16
      %v3864 = vrot.slane %v3862, 5
      %v3865 = vsel %vm1637, %v3860, %v3864
      %v3867 = vshrl.u32 %v3826, 16
      %v3869 = vrot.slane %v3867, 4
      %v3870 = vshll.u32 %v3826, 16
      %v3872 = vrot.slane %v3870, 5
      %v3873 = vor.u32 %v3869, %v3872
      %v3874 = vrot.slane %v3873, 4
      %v3876 = vshll.u32 %v3827, 16
      %v3878 = vrot.slane %v3876, 5
      %v3879 = vsel %vm1637, %v3874, %v3878
      %v3881 = vshrl.u32 %v3828, 16
      %v3883 = vrot.slane %v3881, 4
      %v3884 = vshll.u32 %v3828, 16
      %v3886 = vrot.slane %v3884, 5
      %v3887 = vor.u32 %v3883, %v3886
      %v3888 = vrot.slane %v3887, 4
      %v3890 = vshll.u32 %v3829, 16
      %v3892 = vrot.slane %v3890, 5
      %v3893 = vsel %vm1637, %v3888, %v3892
      %v3895 = vshrl.u32 %v3830, 16
      %v3897 = vrot.slane %v3895, 4
      %v3898 = vshll.u32 %v3830, 16
      %v3900 = vrot.slane %v3898, 5
      %v3901 = vor.u32 %v3897, %v3900
      %v3902 = vrot.slane %v3901, 4
      %v3904 = vshll.u32 %v3831, 16
      %v3906 = vrot.slane %v3904, 5
      %v3907 = vsel %vm1637, %v3902, %v3906
      %v3909 = vshrl.u32 %v3832, 16
      %v3911 = vrot.slane %v3909, 4
      %v3912 = vshll.u32 %v3832, 16
      %v3914 = vrot.slane %v3912, 5
      %v3915 = vor.u32 %v3911, %v3914
      %v3916 = vrot.slane %v3915, 4
      %v3918 = vshll.u32 %v3833, 16
      %v3920 = vrot.slane %v3918, 5
      %v3921 = vsel %vm1637, %v3916, %v3920
      %v3923 = vshrl.u32 %v3834, 16
      %v3925 = vrot.slane %v3923, 4
      %v3926 = vshll.u32 %v3834, 16
      %v3928 = vrot.slane %v3926, 5
      %v3929 = vor.u32 %v3925, %v3928
      %v3930 = vrot.slane %v3929, 4
      %v3932 = vshll.u32 %v3835, 16
      %v3934 = vrot.slane %v3932, 5
      %v3935 = vsel %vm1637, %v3930, %v3934
      %v3937 = vshrl.u32 %v3836, 16
      %v3939 = vrot.slane %v3937, 4
      %v3940 = vshll.u32 %v3836, 16
      %v3942 = vrot.slane %v3940, 5
      %v3943 = vor.u32 %v3939, %v3942
      %v3944 = vrot.slane %v3943, 4
      %v3946 = vshll.u32 %v3837, 16
      %v3948 = vrot.slane %v3946, 5
      %v3949 = vsel %vm1637, %v3944, %v3948
      %v3950 = vunpack.c.l.b16 %v3595
      %v3951 = vunpack.c.l.b16 %v3609
      %v3952 = vunpack.c.l.b16 %v3623
      %v3953 = vunpack.c.l.b16 %v3637
      %v3954 = vunpack.c.l.b16 %v3651
      %v3955 = vunpack.c.l.b16 %v3665
      %v3956 = vunpack.c.l.b16 %v3679
      %v3957 = vunpack.c.l.b16 %v3693
      %v3958 = vpack.c.b16 %v3951, %v3950
      %v3959 = vpack.c.b16 %v3953, %v3952
      %v3960 = vpack.c.b16 %v3955, %v3954
      %v3961 = vpack.c.b16 %v3957, %v3956
      %v3966 = vunpack.c.l.b16 %v3723
      %v3967 = vunpack.c.l.b16 %v3737
      %v3968 = vunpack.c.l.b16 %v3751
      %v3969 = vunpack.c.l.b16 %v3765
      %v3970 = vunpack.c.l.b16 %v3779
      %v3971 = vunpack.c.l.b16 %v3793
      %v3972 = vunpack.c.l.b16 %v3807
      %v3973 = vunpack.c.l.b16 %v3821
      %v3974 = vpack.c.b16 %v3967, %v3966
      %v3975 = vpack.c.b16 %v3969, %v3968
      %v3976 = vpack.c.b16 %v3971, %v3970
      %v3977 = vpack.c.b16 %v3973, %v3972
      %v3982 = vunpack.c.l.b16 %v3851
      %v3983 = vunpack.c.l.b16 %v3865
      %v3984 = vunpack.c.l.b16 %v3879
      %v3985 = vunpack.c.l.b16 %v3893
      %v3986 = vunpack.c.l.b16 %v3907
      %v3987 = vunpack.c.l.b16 %v3921
      %v3988 = vunpack.c.l.b16 %v3935
      %v3989 = vunpack.c.l.b16 %v3949
      %v3990 = vpack.c.b16 %v3983, %v3982
      %v3991 = vpack.c.b16 %v3985, %v3984
      %v3992 = vpack.c.b16 %v3987, %v3986
      %v3993 = vpack.c.b16 %v3989, %v3988
      %s3998 = scalar_lea.vmem %s6, 384
      %v3999 = vld [vmem:[%s3998] sm:$0xf]
      %v4000 = vld [vmem:[%s3998 + $0x4] sm:$0xf]
      %v4001 = vld [vmem:[%s3998 + $0x8] sm:$0xf]
      %v4002 = vld [vmem:[%s3998 + $0xc] sm:$0xf]
      %v4003 = vld [vmem:[%s3998 + $0x10] sm:$0xf]
      %v4004 = vld [vmem:[%s3998 + $0x14] sm:$0xf]
      %v4005 = vld [vmem:[%s3998 + $0x18] sm:$0xf]
      %v4006 = vld [vmem:[%s3998 + $0x1c] sm:$0xf]
      %v4007 = vld [vmem:[%s3998 + $0x20] sm:$0xf]
      %v4008 = vld [vmem:[%s3998 + $0x24] sm:$0xf]
      %v4009 = vld [vmem:[%s3998 + $0x28] sm:$0xf]
      %v4010 = vld [vmem:[%s3998 + $0x2c] sm:$0xf]
      %v4011 = vld [vmem:[%s3998 + $0x30] sm:$0xf]
      %v4012 = vld [vmem:[%s3998 + $0x34] sm:$0xf]
      %v4013 = vld [vmem:[%s3998 + $0x38] sm:$0xf]
      %v4014 = vld [vmem:[%s3998 + $0x3c] sm:$0xf]
      %v4015 = vld [vmem:[%s3998 + $0x40] sm:$0xf]
      %v4016 = vld [vmem:[%s3998 + $0x44] sm:$0xf]
      %v4017 = vld [vmem:[%s3998 + $0x48] sm:$0xf]
      %v4018 = vld [vmem:[%s3998 + $0x4c] sm:$0xf]
      %v4019 = vld [vmem:[%s3998 + $0x50] sm:$0xf]
      %v4020 = vld [vmem:[%s3998 + $0x54] sm:$0xf]
      %v4021 = vld [vmem:[%s3998 + $0x58] sm:$0xf]
      %v4022 = vld [vmem:[%s3998 + $0x5c] sm:$0xf]
      %v4023 = vld [vmem:[%s3998 + $0x60] sm:$0xf]
      %v4024 = vld [vmem:[%s3998 + $0x64] sm:$0xf]
      %v4025 = vld [vmem:[%s3998 + $0x68] sm:$0xf]
      %v4026 = vld [vmem:[%s3998 + $0x6c] sm:$0xf]
      %v4027 = vld [vmem:[%s3998 + $0x70] sm:$0xf]
      %v4028 = vld [vmem:[%s3998 + $0x74] sm:$0xf]
      %v4029 = vld [vmem:[%s3998 + $0x78] sm:$0xf]
      %v4030 = vld [vmem:[%s3998 + $0x7c] sm:$0xf]
      %v4031 = vld [vmem:[%s3998 + $0x80] sm:$0xf]
      %v4032 = vld [vmem:[%s3998 + $0x84] sm:$0xf]
      %v4033 = vld [vmem:[%s3998 + $0x88] sm:$0xf]
      %v4034 = vld [vmem:[%s3998 + $0x8c] sm:$0xf]
      %v4035 = vld [vmem:[%s3998 + $0x90] sm:$0xf]
      %v4036 = vld [vmem:[%s3998 + $0x94] sm:$0xf]
      %v4037 = vld [vmem:[%s3998 + $0x98] sm:$0xf]
      %v4038 = vld [vmem:[%s3998 + $0x9c] sm:$0xf]
      %v4039 = vld [vmem:[%s3998 + $0xa0] sm:$0xf]
      %v4040 = vld [vmem:[%s3998 + $0xa4] sm:$0xf]
      %v4041 = vld [vmem:[%s3998 + $0xa8] sm:$0xf]
      %v4042 = vld [vmem:[%s3998 + $0xac] sm:$0xf]
      %v4043 = vld [vmem:[%s3998 + $0xb0] sm:$0xf]
      %v4044 = vld [vmem:[%s3998 + $0xb4] sm:$0xf]
      %v4045 = vld [vmem:[%s3998 + $0xb8] sm:$0xf]
      %v4046 = vld [vmem:[%s3998 + $0xbc] sm:$0xf]
      %v4095 = vunpack.c.l.b16 %v3999
      %v4096 = vunpack.c.l.b16 %v4000
      %v4097 = vunpack.c.l.b16 %v4001
      %v4098 = vunpack.c.l.b16 %v4002
      %v4099 = vunpack.c.l.b16 %v4003
      %v4100 = vunpack.c.l.b16 %v4004
      %v4101 = vunpack.c.l.b16 %v4005
      %v4102 = vunpack.c.l.b16 %v4006
      %v4103 = vunpack.c.l.b16 %v4007
      %v4104 = vunpack.c.l.b16 %v4008
      %v4105 = vunpack.c.l.b16 %v4009
      %v4106 = vunpack.c.l.b16 %v4010
      %v4107 = vunpack.c.l.b16 %v4011
      %v4108 = vunpack.c.l.b16 %v4012
      %v4109 = vunpack.c.l.b16 %v4013
      %v4110 = vunpack.c.l.b16 %v4014
      %v4111 = vunpack.c.l.b16 %v4015
      %v4112 = vunpack.c.l.b16 %v4016
      %v4113 = vunpack.c.l.b16 %v4017
      %v4114 = vunpack.c.l.b16 %v4018
      %v4115 = vunpack.c.l.b16 %v4019
      %v4116 = vunpack.c.l.b16 %v4020
      %v4117 = vunpack.c.l.b16 %v4021
      %v4118 = vunpack.c.l.b16 %v4022
      %v4119 = vunpack.c.l.b16 %v4023
      %v4120 = vunpack.c.l.b16 %v4024
      %v4121 = vunpack.c.l.b16 %v4025
      %v4122 = vunpack.c.l.b16 %v4026
      %v4123 = vunpack.c.l.b16 %v4027
      %v4124 = vunpack.c.l.b16 %v4028
      %v4125 = vunpack.c.l.b16 %v4029
      %v4126 = vunpack.c.l.b16 %v4030
      %v4127 = vunpack.c.l.b16 %v4031
      %v4128 = vunpack.c.l.b16 %v4032
      %v4129 = vunpack.c.l.b16 %v4033
      %v4130 = vunpack.c.l.b16 %v4034
      %v4131 = vunpack.c.l.b16 %v4035
      %v4132 = vunpack.c.l.b16 %v4036
      %v4133 = vunpack.c.l.b16 %v4037
      %v4134 = vunpack.c.l.b16 %v4038
      %v4135 = vunpack.c.l.b16 %v4039
      %v4136 = vunpack.c.l.b16 %v4040
      %v4137 = vunpack.c.l.b16 %v4041
      %v4138 = vunpack.c.l.b16 %v4042
      %v4139 = vunpack.c.l.b16 %v4043
      %v4140 = vunpack.c.l.b16 %v4044
      %v4141 = vunpack.c.l.b16 %v4045
      %v4142 = vunpack.c.l.b16 %v4046
      %v4143 = vpack.c.b16 %v4096, %v4095
      %v4144 = vpack.c.b16 %v4098, %v4097
      %v4145 = vpack.c.b16 %v4100, %v4099
      %v4146 = vpack.c.b16 %v4102, %v4101
      %v4147 = vpack.c.b16 %v4104, %v4103
      %v4148 = vpack.c.b16 %v4106, %v4105
      %v4149 = vpack.c.b16 %v4108, %v4107
      %v4150 = vpack.c.b16 %v4110, %v4109
      %v4151 = vpack.c.b16 %v4112, %v4111
      %v4152 = vpack.c.b16 %v4114, %v4113
      %v4153 = vpack.c.b16 %v4116, %v4115
      %v4154 = vpack.c.b16 %v4118, %v4117
      %v4155 = vpack.c.b16 %v4120, %v4119
      %v4156 = vpack.c.b16 %v4122, %v4121
      %v4157 = vpack.c.b16 %v4124, %v4123
      %v4158 = vpack.c.b16 %v4126, %v4125
      %v4159 = vpack.c.b16 %v4128, %v4127
      %v4160 = vpack.c.b16 %v4130, %v4129
      %v4161 = vpack.c.b16 %v4132, %v4131
      %v4162 = vpack.c.b16 %v4134, %v4133
      %v4163 = vpack.c.b16 %v4136, %v4135
      %v4164 = vpack.c.b16 %v4138, %v4137
      %v4165 = vpack.c.b16 %v4140, %v4139
      %v4166 = vpack.c.b16 %v4142, %v4141
      %4191 = vmatprep.subr.bf16.mxu0 0
      %4192 = vmatpush1.bf16.msra.mxu0 %v4143
      %4193 = vmatprep.subr.bf16.mxu0 0
      %4194 = vmatpush1.bf16.msra.mxu0 %v4144
      %4195 = vmatprep.subr.bf16.mxu0 0
      %4196 = vmatpush1.bf16.msra.mxu0 %v4145
      %4197 = vmatprep.subr.bf16.mxu0 0
      %4198 = vmatpush1.bf16.msra.mxu0 %v4146
      %4199 = vmatprep.subr.bf16.mxu0 0
      %4200 = vmatpush1.bf16.msra.mxu0 %v4147
      %4201 = vmatprep.subr.bf16.mxu0 0
      %4202 = vmatpush1.bf16.msra.mxu0 %v4148
      %4203 = vmatprep.subr.bf16.mxu0 0
      %4204 = vmatpush1.bf16.msra.mxu0 %v4149
      %4205 = vmatprep.subr.bf16.mxu0 0
      %4206 = vmatpush1.bf16.msra.mxu0 %v4150
      %4207 = vmatprep.subr.bf16.mxu0 0
      %4208 = vmatpush1.bf16.msra.mxu0 %v4151
      %4209 = vmatprep.subr.bf16.mxu0 0
      %4210 = vmatpush1.bf16.msra.mxu0 %v4152
      %4211 = vmatprep.subr.bf16.mxu0 0
      %4212 = vmatpush1.bf16.msra.mxu0 %v4153
      %4213 = vmatprep.subr.bf16.mxu0 0
      %4214 = vmatpush1.bf16.msra.mxu0 %v4154
      %4215 = vmatprep.subr.bf16.mxu0 0
      %4216 = vmatpush1.bf16.msra.mxu0 %v4155
      %4217 = vmatprep.subr.bf16.mxu0 0
      %4218 = vmatpush1.bf16.msra.mxu0 %v4156
      %4219 = vmatprep.subr.bf16.mxu0 0
      %4220 = vmatpush1.bf16.msra.mxu0 %v4157
      %4221 = vmatprep.subr.bf16.mxu0 0
      %4222 = vmatpush1.bf16.msra.mxu0 %v4158
      %4223 = vmatprep.mubr.bf16.mxu0 %v3974
      %4224 = vmatmul.mubr.bf16.gmra.mrb[0].mxu0 %v3958
      %v4225 = vpop.f32.mrb[0].mxu0
      %v4226 = vadd.f32 0.0, %v4225
      %v4227 = vpop.f32.mrb[0].mxu0
      %v4228 = vpop.f32.mrb[0].mxu0
      %v4229 = vadd.f32 0.0, %v4228
      %v4230 = vpop.f32.mrb[0].mxu0
      %4231 = vmatprep.mubr.bf16.mxu0 %v3975
      %4232 = vmatmul.mubr.bf16.gmra.mrb[0].mxu0 %v3959
      %v4233 = vpop.f32.mrb[0].mxu0
      %v4234 = vadd.f32 0.0, %v4233
      %v4235 = vpop.f32.mrb[0].mxu0
      %v4236 = vpop.f32.mrb[0].mxu0
      %v4237 = vadd.f32 0.0, %v4236
      %v4238 = vpop.f32.mrb[0].mxu0
      %4239 = vmatprep.mubr.bf16.mxu0 %v3976
      %4240 = vmatmul.mubr.bf16.gmra.mrb[0].mxu0 %v3960
      %v4241 = vpop.f32.mrb[0].mxu0
      %v4242 = vadd.f32 0.0, %v4241
      %v4243 = vpop.f32.mrb[0].mxu0
      %v4244 = vpop.f32.mrb[0].mxu0
      %v4245 = vadd.f32 0.0, %v4244
      %v4246 = vpop.f32.mrb[0].mxu0
      %4247 = vmatprep.mubr.bf16.mxu0 %v3977
      %4248 = vmatmul.mubr.bf16.gmra.mrb[0].mxu0 %v3961
      %v4249 = vpop.f32.mrb[0].mxu0
      %v4250 = vadd.f32 0.0, %v4249
      %v4251 = vpop.f32.mrb[0].mxu0
      %v4252 = vpop.f32.mrb[0].mxu0
      %v4253 = vadd.f32 0.0, %v4252
      %v4254 = vpop.f32.mrb[0].mxu0
      %4255 = vdwg.mxu0
      %4256 = vmatprep.subr.bf16.mxu0 0
      %4257 = vmatpush1.bf16.msra.mxu0 %v4159
      %4258 = vmatprep.subr.bf16.mxu0 0
      %4259 = vmatpush1.bf16.msra.mxu0 %v4160
      %4260 = vmatprep.subr.bf16.mxu0 0
      %4261 = vmatpush1.bf16.msra.mxu0 %v4161
      %4262 = vmatprep.subr.bf16.mxu0 0
      %4263 = vmatpush1.bf16.msra.mxu0 %v4162
      %4264 = vmatprep.subr.bf16.mxu0 0
      %4265 = vmatpush1.bf16.msra.mxu0 %v4163
      %4266 = vmatprep.subr.bf16.mxu0 0
      %4267 = vmatpush1.bf16.msra.mxu0 %v4164
      %4268 = vmatprep.subr.bf16.mxu0 0
      %4269 = vmatpush1.bf16.msra.mxu0 %v4165
      %4270 = vmatprep.subr.bf16.mxu0 0
      %4271 = vmatpush1.bf16.msra.mxu0 %v4166
      %4272 = vmatprep.subr.bf16.mxu0 0
      %4273 = vmatpush1.bf16.msra.mxu0 0
      %4274 = vmatprep.subr.bf16.mxu0 0
      %4275 = vmatpush1.bf16.msra.mxu0 0
      %4276 = vmatprep.subr.bf16.mxu0 0
      %4277 = vmatpush1.bf16.msra.mxu0 0
      %4278 = vmatprep.subr.bf16.mxu0 0
      %4279 = vmatpush1.bf16.msra.mxu0 0
      %4280 = vmatprep.subr.bf16.mxu0 0
      %4281 = vmatpush1.bf16.msra.mxu0 0
      %4282 = vmatprep.subr.bf16.mxu0 0
      %4283 = vmatpush1.bf16.msra.mxu0 0
      %4284 = vmatprep.subr.bf16.mxu0 0
      %4285 = vmatpush1.bf16.msra.mxu0 0
      %4286 = vmatprep.subr.bf16.mxu0 0
      %4287 = vmatpush1.bf16.msra.mxu0 0
      %4288 = vmatprep.mubr.bf16.mxu0 0
      %4289 = vmatmul.mubr.bf16.gmra.mrb[0].mxu0 %v3990
      %v4290 = vpop.f32.mrb[0].mxu0
      %v4291 = vadd.f32 %v4226, %v4290
      %v4292 = vpop.f32.mrb[0].mxu0
      %v4293 = vpop.f32.mrb[0].mxu0
      %v4294 = vadd.f32 %v4229, %v4293
      %v4295 = vpop.f32.mrb[0].mxu0
      %4296 = vmatprep.mubr.bf16.mxu0 0
      %4297 = vmatmul.mubr.bf16.gmra.mrb[0].mxu0 %v3991
      %v4298 = vpop.f32.mrb[0].mxu0
      %v4299 = vadd.f32 %v4234, %v4298
      %v4300 = vpop.f32.mrb[0].mxu0
      %v4301 = vpop.f32.mrb[0].mxu0
      %v4302 = vadd.f32 %v4237, %v4301
      %v4303 = vpop.f32.mrb[0].mxu0
      %4304 = vmatprep.mubr.bf16.mxu0 0
      %4305 = vmatmul.mubr.bf16.gmra.mrb[0].mxu0 %v3992
      %v4306 = vpop.f32.mrb[0].mxu0
      %v4307 = vadd.f32 %v4242, %v4306
      %v4308 = vpop.f32.mrb[0].mxu0
      %v4309 = vpop.f32.mrb[0].mxu0
      %v4310 = vadd.f32 %v4245, %v4309
      %v4311 = vpop.f32.mrb[0].mxu0
      %4312 = vmatprep.mubr.bf16.mxu0 0
      %4313 = vmatmul.mubr.bf16.gmra.mrb[0].mxu0 %v3993
      %v4314 = vpop.f32.mrb[0].mxu0
      %v4315 = vadd.f32 %v4250, %v4314
      %v4316 = vpop.f32.mrb[0].mxu0
      %v4317 = vpop.f32.mrb[0].mxu0
      %v4318 = vadd.f32 %v4253, %v4317
      %v4319 = vpop.f32.mrb[0].mxu0
      %4320 = vdwg.mxu0
      %v4321 = vadd.f32 %v3536, %v4291
      %v4322 = vadd.f32 %v3539, %v4294
      %v4323 = vadd.f32 %v3544, %v4299
      %v4324 = vadd.f32 %v3547, %v4302
      %v4325 = vadd.f32 %v3552, %v4307
      %v4326 = vadd.f32 %v3555, %v4310
      %v4327 = vadd.f32 %v3560, %v4315
      %v4328 = vadd.f32 %v3563, %v4318
      %v4329 = vadd.f32 %v4321, %v428
      %v4330 = vadd.f32 %v4322, %v429
      %v4331 = vadd.f32 %v4323, %v430
      %v4332 = vadd.f32 %v4324, %v431
      %v4333 = vadd.f32 %v4325, %v432
      %v4334 = vadd.f32 %v4326, %v433
      %v4335 = vadd.f32 %v4327, %v434
      %v4336 = vadd.f32 %v4328, %v435
      %v4337 = vpack.c.bf16 %v4329, %v4329
      %v4338 = vpack.c.bf16 %v4330, %v4330
      %v4339 = vpack.c.bf16 %v4331, %v4331
      %v4340 = vpack.c.bf16 %v4332, %v4332
      %v4341 = vpack.c.bf16 %v4333, %v4333
      %v4342 = vpack.c.bf16 %v4334, %v4334
      %v4343 = vpack.c.bf16 %v4335, %v4335
      %v4344 = vpack.c.bf16 %v4336, %v4336
      %4345 = vst [vmem:[%s278] sm:$0xf] %v4337
      %4346 = vst [vmem:[%s278 + $0x4] sm:$0xf] %v4338
      %4347 = vst [vmem:[%s278 + $0x8] sm:$0xf] %v4339
      %4348 = vst [vmem:[%s278 + $0xc] sm:$0xf] %v4340
      %4349 = vst [vmem:[%s278 + $0x10] sm:$0xf] %v4341
      %4350 = vst [vmem:[%s278 + $0x14] sm:$0xf] %v4342
      %4351 = vst [vmem:[%s278 + $0x18] sm:$0xf] %v4343
      %4352 = vst [vmem:[%s278 + $0x1c] sm:$0xf] %v4344
      %p4353 = scmp.lt.s32.totalorder %s18, 1
      %s4354 = scalar_select %p4353, %s18, 1
      %s4355 = smul.addr %s4354, 8
      %s4356 = smul.addr %s4355, 4
      %s4357 = scalar_lea.vmem %s7, %s4356
      // Predicated region
      $region49: #{network_block_forward.3} parent=47 // pred_check
        %p4358 = pneg %p188
      $region50: #{network_block_forward.3} parent=47 // pred_check_branch
        %4360 = sbr.rel (%p4358) target = $region52
      $region51: #{network_block_forward.3} parent=47 // pred_region
        _
      $region52: #{network_block_forward.3} parent=47 // pred_fallthru
        _
    $region48: #{network_block_forward.3} parent=5 // pred_fallthru
      _
    %p4361 = scmp.le.s32.totalorder 2, %s13
    // Predicated region
    $region53: #{network_block_forward.3} parent=5 // pred_check
      %p4362 = pneg %p4361
    $region54: #{network_block_forward.3} parent=5 // pred_check_branch
      %4364 = sbr.rel (%p4362) target = $region56
    $region55: #{network_block_forward.3} parent=5 // pred_region
      %s4365 = ssub.s32 %s13, 2
      // Predicated region
      $region57: #{network_block_forward.3} parent=55 // pred_check
        %p4366 = pneg %p194
      $region58: #{network_block_forward.3} parent=55 // pred_check_branch
        %4368 = sbr.rel (%p4366) target = $region60
      $region59: #{network_block_forward.3} parent=55 // pred_region
        %p4369 = scmp.lt.s32.totalorder %s19, 1
        %s4370 = scalar_select %p4369, %s19, 1
        %s4371 = smul.addr %s4370, 8
        %s4372 = smul.addr %s4371, 4
        %s4373 = scalar_lea.vmem %s7, %s4372
      $region60: #{network_block_forward.3} parent=55 // pred_fallthru
        _
    $region56: #{network_block_forward.3} parent=5 // pred_fallthru
      _
  $region6: #{network_block_forward.3} parent=0 // loop_footer
    %s17 = sadd.s32 1, %s13
  $region7: #{network_block_forward.3} parent=0 // loop_footer_branch
    %12 = sbr.rel target = $region3
  $region8: #{network_block_forward.3} parent=0 // loop_exit
    _

</llo_original>
